<compile_context>
chip_gen: v7x
topology: tpu7x:2x2x1
jax: 0.10.0
libtpu: 0.0.40
codegen_flags: <defaults>
</compile_context>

<pallas_src>
import numpy as np
import jax
import jax.numpy as jnp
from jax.experimental import pallas as pl
from jax.experimental.pallas import tpu as pltpu


# ------------------------------ fused kernel ------------------------------- #

def build_evaluator(N, H, W, CIN, C, K, batch_tile=None):
    """Builds a pallas_call computing (logits, loss, accuracy) for the batch."""
    TN = N if batch_tile is None else batch_tile
    assert N % TN == 0, "batch must divide evenly into batch tiles"
    n_tiles = N // TN
    NHW = TN * H * W
    CMAX = max(CIN, C)

    def kernel(x_ref, y_ref, w1_ref, b1_ref, w2a_ref, b2a_ref,
               w2b_ref, b2b_ref, wfc_ref, bfc_ref,
               logits_ref, loss_ref, acc_ref, pad_scr):
        # Zero the padded scratch; the halo ring stays zero for the whole tile,
        # the interior is rewritten by every conv.
        pad_scr[...] = jnp.zeros_like(pad_scr)

        def conv3x3(src, w_flat_ref, b_ref, cin):
            # src: (TN, H, W, cin) f32.  One im2col matmul on the MXU:
            #   patches (TN*H*W, 9*cin) bf16 @ w (9*cin, C) bf16 -> f32 acc.
            pad_scr[:, 1:H + 1, 1:W + 1, 0:cin] = src
            taps = [pad_scr[:, kh:kh + H, kw:kw + W, 0:cin].reshape(NHW, cin)
                    for kh in range(3) for kw in range(3)]
            patches = jnp.concatenate(taps, axis=-1)            # (NHW, 9*cin)
            out = jnp.dot(patches.astype(jnp.bfloat16), w_flat_ref[...],
                          preferred_element_type=jnp.float32)
            return (out + b_ref[...]).reshape(TN, H, W, C)

        x = x_ref[...]
        h1 = jnp.maximum(conv3x3(x, w1_ref, b1_ref, CIN), 0.0)          # stem
        h2 = jnp.maximum(conv3x3(h1, w2a_ref, b2a_ref, C), 0.0)         # block a
        h3 = jnp.maximum(conv3x3(h2, w2b_ref, b2b_ref, C) + h1, 0.0)    # b + skip

        # Global average pool (1/(H*W) folded into wfc) + f32 FC classifier.
        pooled = jnp.sum(h3.reshape(TN, H * W, C), axis=1)              # (TN, C)
        logits = jnp.dot(pooled, wfc_ref[...],
                         preferred_element_type=jnp.float32) + bfc_ref[...]
        logits_ref[...] = logits

        # CrossEntropyLoss (mean over the GLOBAL batch) + accuracy (torch sem.).
        y_lab = y_ref[...]                                              # (TN,1) i32
        m = jnp.max(logits, axis=1, keepdims=True)
        z = logits - m
        lse = jnp.log(jnp.sum(jnp.exp(z), axis=1, keepdims=True))
        logp = z - lse                                                  # log-softmax
        cls = jax.lax.broadcasted_iota(jnp.int32, (TN, K), 1)
        onehot = (cls == y_lab).astype(jnp.float32)
        tile_loss = -jnp.sum(onehot * logp, keepdims=True)              # (1,1) sum
        idx = jnp.where(logits == m, cls, K)                            # first max
        pred = jnp.min(idx, axis=1, keepdims=True)                      # (TN,1)
        tile_correct = jnp.sum((pred == y_lab).astype(jnp.float32),
                               keepdims=True)                           # (1,1)

        @pl.when(pl.program_id(0) == 0)
        def _():
            loss_ref[...] = jnp.zeros_like(loss_ref)
            acc_ref[...] = jnp.zeros_like(acc_ref)

        loss_ref[...] += tile_loss / N
        acc_ref[...] += tile_correct / N

    def full_spec(shape):
        nd = len(shape)
        return pl.BlockSpec(shape, lambda i: (0,) * nd)    # resident in VMEM

    grid_spec = pltpu.PrefetchScalarGridSpec(
        num_scalar_prefetch=0,
        grid=(n_tiles,),
        in_specs=[
            pl.BlockSpec((TN, H, W, CIN), lambda i: (i, 0, 0, 0)),   # x tile
            pl.BlockSpec((TN, 1), lambda i: (i, 0)),                 # labels tile
            full_spec((9 * CIN, C)), full_spec((1, C)),              # w1, b1
            full_spec((9 * C, C)), full_spec((1, C)),                # w2a, b2a
            full_spec((9 * C, C)), full_spec((1, C)),                # w2b, b2b
            full_spec((C, K)), full_spec((1, K)),                    # wfc, bfc
        ],
        out_specs=(
            pl.BlockSpec((TN, K), lambda i: (i, 0)),                 # logits
            pl.BlockSpec((1, 1), lambda i: (0, 0)),                  # loss accum
            pl.BlockSpec((1, 1), lambda i: (0, 0)),                  # acc accum
        ),
        scratch_shapes=[pltpu.VMEM((TN, H + 2, W + 2, CMAX), jnp.float32)],
    )

    return pl.pallas_call(
        kernel,
        out_shape=(jax.ShapeDtypeStruct((N, K), jnp.float32),
                   jax.ShapeDtypeStruct((1, 1), jnp.float32),
                   jax.ShapeDtypeStruct((1, 1), jnp.float32)),
        grid_spec=grid_spec,
        # Batch axis carries resident loss/acc accumulators -> "arbitrary".
        # (VMEM use is far below the scoped default, so no vmem_limit_bytes.)
        compiler_params=pltpu.CompilerParams(
            dimension_semantics=("arbitrary",)),
    )


# -------------------------------- wrappers --------------------------------- #

def evaluator_forward(params, x_nchw, y):
    x = jnp.transpose(x_nchw, (0, 2, 3, 1)).astype(jnp.float32)   # NCHW -> NHWC
    N, H, W, CIN = x.shape
    C = params["w1"].shape[-1]
    K = params["wfc"].shape[-1]

    # Trace-time weight prep (done once, outside the kernel):
    #  - im2col-flatten 3x3 conv weights to (9*Cin, Cout), cast matmul operands
    #    to bf16 (f32 accumulation happens in-kernel)
    #  - fold the 1/(H*W) global-average-pool scale into the f32 FC weight
    w1f = params["w1"].reshape(9 * CIN, C).astype(jnp.bfloat16)
    w2af = params["w2a"].reshape(9 * C, C).astype(jnp.bfloat16)
    w2bf = params["w2b"].reshape(9 * C, C).astype(jnp.bfloat16)
    b1 = params["b1"].reshape(1, C).astype(jnp.float32)
    b2a = params["b2a"].reshape(1, C).astype(jnp.float32)
    b2b = params["b2b"].reshape(1, C).astype(jnp.float32)
    wfc = (params["wfc"] / float(H * W)).astype(jnp.float32)
    bfc = params["bfc"].reshape(1, K).astype(jnp.float32)

    fused = build_evaluator(N, H, W, CIN, C, K)
    logits, loss, acc = fused(x, y.reshape(-1, 1).astype(jnp.int32),
                              w1f, b1, w2af, b2a, w2bf, b2b, wfc, bfc)
    return loss[0, 0], acc[0, 0], logits


def reference_forward(params, x_nchw, y):
    # pure-JAX f32 reference for verification
    x = jnp.transpose(x_nchw, (0, 2, 3, 1)).astype(jnp.float32)

    def conv(t, w, b):
        out = jax.lax.conv_general_dilated(
            t, w, (1, 1), "SAME",
            dimension_numbers=("NHWC", "HWIO", "NHWC"))
        return out + b

    h = jax.nn.relu(conv(x, params["w1"], params["b1"]))
    idn = h
    h = jax.nn.relu(conv(h, params["w2a"], params["b2a"]))
    h = jax.nn.relu(conv(h, params["w2b"], params["b2b"]) + idn)
    pooled = h.mean(axis=(1, 2))
    logits = pooled @ params["wfc"] + params["bfc"]
    logp = jax.nn.log_softmax(logits, axis=-1)
    loss = -jnp.take_along_axis(logp, y[:, None], axis=1).mean()
    acc = (jnp.argmax(logits, axis=1) == y).mean()
    return loss, acc, logits


def init_params(key, cin=3, c=8, num_classes=10):
    k1, k2, k3, k4 = jax.random.split(key, 4)
    s = 0.1
    return {
        "w1": s * jax.random.normal(k1, (3, 3, cin, c), jnp.float32),
        "b1": jnp.zeros((1, 1, 1, c), jnp.float32),
        "w2a": s * jax.random.normal(k2, (3, 3, c, c), jnp.float32),
        "b2a": jnp.zeros((1, 1, 1, c), jnp.float32),
        "w2b": s * jax.random.normal(k3, (3, 3, c, c), jnp.float32),
        "b2b": jnp.zeros((1, 1, 1, c), jnp.float32),
        "wfc": s * jax.random.normal(k4, (c, num_classes), jnp.float32),
        "bfc": jnp.zeros((1, num_classes), jnp.float32),
    }


if __name__ == "__main__":
    key = jax.random.PRNGKey(0)
    kx, ky, kp = jax.random.split(key, 3)
    N, CIN, HW, NCLS = 2, 3, 16, 10
    x = jax.random.normal(kx, (N, CIN, HW, HW), jnp.float32)   # NCHW like PyTorch
    y = jax.random.randint(ky, (N,), 0, NCLS, jnp.int32)
    params = init_params(kp, cin=CIN, c=8, num_classes=NCLS)

    loss, acc, logits = jax.jit(evaluator_forward)(params, x, y)
    jax.block_until_ready((loss, acc, logits))

    # (1) tight check of the in-kernel softmax / CE / argmax math against the
    #     kernel's own logits (independent of bf16 conv drift).
    kl = np.asarray(logits, dtype=np.float64)
    y_np = np.asarray(y)
    z = kl - kl.max(axis=1, keepdims=True)
    logp = z - np.log(np.exp(z).sum(axis=1, keepdims=True))
    loss_from_logits = float(-logp[np.arange(N), y_np].mean())
    acc_from_logits = float((kl.argmax(axis=1) == y_np).mean())
    np.testing.assert_allclose(float(loss), loss_from_logits,
                               rtol=1e-4, atol=1e-4)
    assert float(acc) == acc_from_logits

    # (2) end-to-end check against a pure-JAX f32 reference (bf16 conv operands
    #     in the kernel -> loose tolerance on logits/loss; accuracy is already
    #     verified exactly against the kernel's logits above, since bf16
    #     near-ties could legitimately flip an argmax vs. the f32 reference).
    ref_loss, ref_acc, ref_logits = reference_forward(params, x, y)
    np.testing.assert_allclose(np.asarray(logits), np.asarray(ref_logits),
                               rtol=1e-2, atol=1e-2)
    np.testing.assert_allclose(float(loss), float(ref_loss),
                               rtol=1e-2, atol=1e-2)

    print("KERNEL_OK")
</pallas_src>

<mosaic_0001>
module attributes {stable_mosaic.version = 11 : i64} {
  func.func @kernel(%arg0: i32, %arg1: memref<2x16x16x3xf32, #tpu.memory_space<vmem>>, %arg2: memref<2x1xi32, #tpu.memory_space<vmem>>, %arg3: memref<27x8xbf16, #tpu.memory_space<vmem>>, %arg4: memref<1x8xf32, #tpu.memory_space<vmem>>, %arg5: memref<72x8xbf16, #tpu.memory_space<vmem>>, %arg6: memref<1x8xf32, #tpu.memory_space<vmem>>, %arg7: memref<72x8xbf16, #tpu.memory_space<vmem>>, %arg8: memref<1x8xf32, #tpu.memory_space<vmem>>, %arg9: memref<8x10xf32, #tpu.memory_space<vmem>>, %arg10: memref<1x10xf32, #tpu.memory_space<vmem>>, %arg11: memref<2x10xf32, #tpu.memory_space<vmem>>, %arg12: memref<1x1xf32, #tpu.memory_space<vmem>>, %arg13: memref<1x1xf32, #tpu.memory_space<vmem>>, %arg14: memref<2x18x18x8xf32, #tpu.memory_space<vmem>>) attributes {dimension_semantics = [#tpu.dimension_semantics<arbitrary>], iteration_bounds = array<i64: 1>, scalar_prefetch = 0 : i64, scratch_operands = 1 : i64, tpu.core_type = #tpu.core_type<tc>, window_params = [{transform_indices = @transform_0, window_bounds = array<i64: 2, 16, 16, 3>}, {transform_indices = @transform_1, window_bounds = array<i64: 2, 1>}, {pipeline_mode = #tpu.pipeline_mode<synchronous>, transform_indices = @transform_2, window_bounds = array<i64: 27, 8>}, {pipeline_mode = #tpu.pipeline_mode<synchronous>, transform_indices = @transform_3, window_bounds = array<i64: 1, 8>}, {pipeline_mode = #tpu.pipeline_mode<synchronous>, transform_indices = @transform_4, window_bounds = array<i64: 72, 8>}, {pipeline_mode = #tpu.pipeline_mode<synchronous>, transform_indices = @transform_5, window_bounds = array<i64: 1, 8>}, {pipeline_mode = #tpu.pipeline_mode<synchronous>, transform_indices = @transform_6, window_bounds = array<i64: 72, 8>}, {pipeline_mode = #tpu.pipeline_mode<synchronous>, transform_indices = @transform_7, window_bounds = array<i64: 1, 8>}, {pipeline_mode = #tpu.pipeline_mode<synchronous>, transform_indices = @transform_8, window_bounds = array<i64: 8, 10>}, {pipeline_mode = #tpu.pipeline_mode<synchronous>, transform_indices = @transform_9, window_bounds = array<i64: 1, 10>}, {transform_indices = @transform_10, window_bounds = array<i64: 2, 10>}, {pipeline_mode = #tpu.pipeline_mode<synchronous>, transform_indices = @transform_11, window_bounds = array<i64: 1, 1>}, {pipeline_mode = #tpu.pipeline_mode<synchronous>, transform_indices = @transform_12, window_bounds = array<i64: 1, 1>}]} {
    %cst = arith.constant 0.000000e+00 : f32
    %0 = vector.broadcast %cst : f32 to vector<2x18x18x8xf32>
    %c0 = arith.constant 0 : index
    %c0_0 = arith.constant 0 : index
    %c0_1 = arith.constant 0 : index
    %c0_2 = arith.constant 0 : index
    %1 = vector.load %arg14[%c0, %c0_0, %c0_1, %c0_2] : memref<2x18x18x8xf32, #tpu.memory_space<vmem>>, vector<2x18x18x8xf32>
    tpu.vector_store %arg14[%c0, %c0_0, %c0_1, %c0_2], %0 {strides = array<i32>} : memref<2x18x18x8xf32, #tpu.memory_space<vmem>>, vector<2x18x18x8xf32>,
    %c0_3 = arith.constant 0 : index
    %c0_4 = arith.constant 0 : index
    %c0_5 = arith.constant 0 : index
    %c0_6 = arith.constant 0 : index
    %2 = vector.load %arg1[%c0_3, %c0_4, %c0_5, %c0_6] : memref<2x16x16x3xf32, #tpu.memory_space<vmem>>, vector<2x16x16x3xf32>
    %c0_7 = arith.constant 0 : index
    %c1 = arith.constant 1 : index
    %c1_8 = arith.constant 1 : index
    %c0_9 = arith.constant 0 : index
    %3 = vector.load %arg14[%c0_7, %c1, %c1_8, %c0_9] : memref<2x18x18x8xf32, #tpu.memory_space<vmem>>, vector<2x16x16x3xf32>
    tpu.vector_store %arg14[%c0_7, %c1, %c1_8, %c0_9], %2 {strides = array<i32>} : memref<2x18x18x8xf32, #tpu.memory_space<vmem>>, vector<2x16x16x3xf32>,
    %c0_10 = arith.constant 0 : index
    %c0_11 = arith.constant 0 : index
    %c0_12 = arith.constant 0 : index
    %c0_13 = arith.constant 0 : index
    %4 = vector.load %arg14[%c0_10, %c0_11, %c0_12, %c0_13] : memref<2x18x18x8xf32, #tpu.memory_space<vmem>>, vector<2x16x16x3xf32>
    %5 = vector.shape_cast %4 : vector<2x16x16x3xf32> to vector<512x3xf32>
    %c0_14 = arith.constant 0 : index
    %c0_15 = arith.constant 0 : index
    %c1_16 = arith.constant 1 : index
    %c0_17 = arith.constant 0 : index
    %6 = vector.load %arg14[%c0_14, %c0_15, %c1_16, %c0_17] : memref<2x18x18x8xf32, #tpu.memory_space<vmem>>, vector<2x16x16x3xf32>
    %7 = vector.shape_cast %6 : vector<2x16x16x3xf32> to vector<512x3xf32>
    %c0_18 = arith.constant 0 : index
    %c0_19 = arith.constant 0 : index
    %c2 = arith.constant 2 : index
    %c0_20 = arith.constant 0 : index
    %8 = vector.load %arg14[%c0_18, %c0_19, %c2, %c0_20] : memref<2x18x18x8xf32, #tpu.memory_space<vmem>>, vector<2x16x16x3xf32>
    %9 = vector.shape_cast %8 : vector<2x16x16x3xf32> to vector<512x3xf32>
    %c0_21 = arith.constant 0 : index
    %c1_22 = arith.constant 1 : index
    %c0_23 = arith.constant 0 : index
    %c0_24 = arith.constant 0 : index
    %10 = vector.load %arg14[%c0_21, %c1_22, %c0_23, %c0_24] : memref<2x18x18x8xf32, #tpu.memory_space<vmem>>, vector<2x16x16x3xf32>
    %11 = vector.shape_cast %10 : vector<2x16x16x3xf32> to vector<512x3xf32>
    %c0_25 = arith.constant 0 : index
    %c1_26 = arith.constant 1 : index
    %c1_27 = arith.constant 1 : index
    %c0_28 = arith.constant 0 : index
    %12 = vector.load %arg14[%c0_25, %c1_26, %c1_27, %c0_28] : memref<2x18x18x8xf32, #tpu.memory_space<vmem>>, vector<2x16x16x3xf32>
    %13 = vector.shape_cast %12 : vector<2x16x16x3xf32> to vector<512x3xf32>
    %c0_29 = arith.constant 0 : index
    %c1_30 = arith.constant 1 : index
    %c2_31 = arith.constant 2 : index
    %c0_32 = arith.constant 0 : index
    %14 = vector.load %arg14[%c0_29, %c1_30, %c2_31, %c0_32] : memref<2x18x18x8xf32, #tpu.memory_space<vmem>>, vector<2x16x16x3xf32>
    %15 = vector.shape_cast %14 : vector<2x16x16x3xf32> to vector<512x3xf32>
    %c0_33 = arith.constant 0 : index
    %c2_34 = arith.constant 2 : index
    %c0_35 = arith.constant 0 : index
    %c0_36 = arith.constant 0 : index
    %16 = vector.load %arg14[%c0_33, %c2_34, %c0_35, %c0_36] : memref<2x18x18x8xf32, #tpu.memory_space<vmem>>, vector<2x16x16x3xf32>
    %17 = vector.shape_cast %16 : vector<2x16x16x3xf32> to vector<512x3xf32>
    %c0_37 = arith.constant 0 : index
    %c2_38 = arith.constant 2 : index
    %c1_39 = arith.constant 1 : index
    %c0_40 = arith.constant 0 : index
    %18 = vector.load %arg14[%c0_37, %c2_38, %c1_39, %c0_40] : memref<2x18x18x8xf32, #tpu.memory_space<vmem>>, vector<2x16x16x3xf32>
    %19 = vector.shape_cast %18 : vector<2x16x16x3xf32> to vector<512x3xf32>
    %c0_41 = arith.constant 0 : index
    %c2_42 = arith.constant 2 : index
    %c2_43 = arith.constant 2 : index
    %c0_44 = arith.constant 0 : index
    %20 = vector.load %arg14[%c0_41, %c2_42, %c2_43, %c0_44] : memref<2x18x18x8xf32, #tpu.memory_space<vmem>>, vector<2x16x16x3xf32>
    %21 = vector.shape_cast %20 : vector<2x16x16x3xf32> to vector<512x3xf32>
    %22 = tpu.concatenate %5, %7, %9, %11, %13, %15, %17, %19, %21 in 1 : vector<512x3xf32>, vector<512x3xf32>, vector<512x3xf32>, vector<512x3xf32>, vector<512x3xf32>, vector<512x3xf32>, vector<512x3xf32>, vector<512x3xf32>, vector<512x3xf32> -> vector<512x27xf32>
    %23 = arith.truncf %22 : vector<512x27xf32> to vector<512x27xbf16>
    %c0_45 = arith.constant 0 : index
    %c0_46 = arith.constant 0 : index
    %24 = vector.load %arg3[%c0_45, %c0_46] : memref<27x8xbf16, #tpu.memory_space<vmem>>, vector<27x8xbf16>
    %cst_47 = arith.constant dense<0.000000e+00> : vector<512x8xf32>
    %25 = tpu.matmul %23, %24, %cst_47 {dimension_numbers = #tpu.dot_dimension_numbers<[1], [0], [0], [1], [0, 0, 1, 1], [], []>} : vector<512x27xbf16>, vector<27x8xbf16>, vector<512x8xf32> -> vector<512x8xf32>
    %c0_48 = arith.constant 0 : index
    %c0_49 = arith.constant 0 : index
    %26 = vector.load %arg4[%c0_48, %c0_49] : memref<1x8xf32, #tpu.memory_space<vmem>>, vector<1x8xf32>
    %27 = vector.broadcast %26 : vector<1x8xf32> to vector<512x8xf32>
    %28 = arith.addf %25, %27 : vector<512x8xf32>
    %29 = vector.shape_cast %28 : vector<512x8xf32> to vector<2x16x16x8xf32>
    %cst_50 = arith.constant 0.000000e+00 : f32
    %30 = vector.broadcast %cst_50 : f32 to vector<2x16x16x8xf32>
    %31 = arith.maximumf %29, %30 : vector<2x16x16x8xf32>
    %c0_51 = arith.constant 0 : index
    %c1_52 = arith.constant 1 : index
    %c1_53 = arith.constant 1 : index
    %c0_54 = arith.constant 0 : index
    %32 = vector.load %arg14[%c0_51, %c1_52, %c1_53, %c0_54] : memref<2x18x18x8xf32, #tpu.memory_space<vmem>>, vector<2x16x16x8xf32>
    tpu.vector_store %arg14[%c0_51, %c1_52, %c1_53, %c0_54], %31 {strides = array<i32>} : memref<2x18x18x8xf32, #tpu.memory_space<vmem>>, vector<2x16x16x8xf32>,
    %c0_55 = arith.constant 0 : index
    %c0_56 = arith.constant 0 : index
    %c0_57 = arith.constant 0 : index
    %c0_58 = arith.constant 0 : index
    %33 = vector.load %arg14[%c0_55, %c0_56, %c0_57, %c0_58] : memref<2x18x18x8xf32, #tpu.memory_space<vmem>>, vector<2x16x16x8xf32>
    %34 = vector.shape_cast %33 : vector<2x16x16x8xf32> to vector<512x8xf32>
    %c0_59 = arith.constant 0 : index
    %c0_60 = arith.constant 0 : index
    %c1_61 = arith.constant 1 : index
    %c0_62 = arith.constant 0 : index
    %35 = vector.load %arg14[%c0_59, %c0_60, %c1_61, %c0_62] : memref<2x18x18x8xf32, #tpu.memory_space<vmem>>, vector<2x16x16x8xf32>
    %36 = vector.shape_cast %35 : vector<2x16x16x8xf32> to vector<512x8xf32>
    %c0_63 = arith.constant 0 : index
    %c0_64 = arith.constant 0 : index
    %c2_65 = arith.constant 2 : index
    %c0_66 = arith.constant 0 : index
    %37 = vector.load %arg14[%c0_63, %c0_64, %c2_65, %c0_66] : memref<2x18x18x8xf32, #tpu.memory_space<vmem>>, vector<2x16x16x8xf32>
    %38 = vector.shape_cast %37 : vector<2x16x16x8xf32> to vector<512x8xf32>
    %c0_67 = arith.constant 0 : index
    %c1_68 = arith.constant 1 : index
    %c0_69 = arith.constant 0 : index
    %c0_70 = arith.constant 0 : index
    %39 = vector.load %arg14[%c0_67, %c1_68, %c0_69, %c0_70] : memref<2x18x18x8xf32, #tpu.memory_space<vmem>>, vector<2x16x16x8xf32>
    %40 = vector.shape_cast %39 : vector<2x16x16x8xf32> to vector<512x8xf32>
    %c0_71 = arith.constant 0 : index
    %c1_72 = arith.constant 1 : index
    %c1_73 = arith.constant 1 : index
    %c0_74 = arith.constant 0 : index
    %41 = vector.load %arg14[%c0_71, %c1_72, %c1_73, %c0_74] : memref<2x18x18x8xf32, #tpu.memory_space<vmem>>, vector<2x16x16x8xf32>
    %42 = vector.shape_cast %41 : vector<2x16x16x8xf32> to vector<512x8xf32>
    %c0_75 = arith.constant 0 : index
    %c1_76 = arith.constant 1 : index
    %c2_77 = arith.constant 2 : index
    %c0_78 = arith.constant 0 : index
    %43 = vector.load %arg14[%c0_75, %c1_76, %c2_77, %c0_78] : memref<2x18x18x8xf32, #tpu.memory_space<vmem>>, vector<2x16x16x8xf32>
    %44 = vector.shape_cast %43 : vector<2x16x16x8xf32> to vector<512x8xf32>
    %c0_79 = arith.constant 0 : index
    %c2_80 = arith.constant 2 : index
    %c0_81 = arith.constant 0 : index
    %c0_82 = arith.constant 0 : index
    %45 = vector.load %arg14[%c0_79, %c2_80, %c0_81, %c0_82] : memref<2x18x18x8xf32, #tpu.memory_space<vmem>>, vector<2x16x16x8xf32>
    %46 = vector.shape_cast %45 : vector<2x16x16x8xf32> to vector<512x8xf32>
    %c0_83 = arith.constant 0 : index
    %c2_84 = arith.constant 2 : index
    %c1_85 = arith.constant 1 : index
    %c0_86 = arith.constant 0 : index
    %47 = vector.load %arg14[%c0_83, %c2_84, %c1_85, %c0_86] : memref<2x18x18x8xf32, #tpu.memory_space<vmem>>, vector<2x16x16x8xf32>
    %48 = vector.shape_cast %47 : vector<2x16x16x8xf32> to vector<512x8xf32>
    %c0_87 = arith.constant 0 : index
    %c2_88 = arith.constant 2 : index
    %c2_89 = arith.constant 2 : index
    %c0_90 = arith.constant 0 : index
    %49 = vector.load %arg14[%c0_87, %c2_88, %c2_89, %c0_90] : memref<2x18x18x8xf32, #tpu.memory_space<vmem>>, vector<2x16x16x8xf32>
    %50 = vector.shape_cast %49 : vector<2x16x16x8xf32> to vector<512x8xf32>
    %51 = tpu.concatenate %34, %36, %38, %40, %42, %44, %46, %48, %50 in 1 : vector<512x8xf32>, vector<512x8xf32>, vector<512x8xf32>, vector<512x8xf32>, vector<512x8xf32>, vector<512x8xf32>, vector<512x8xf32>, vector<512x8xf32>, vector<512x8xf32> -> vector<512x72xf32>
    %52 = arith.truncf %51 : vector<512x72xf32> to vector<512x72xbf16>
    %c0_91 = arith.constant 0 : index
    %c0_92 = arith.constant 0 : index
    %53 = vector.load %arg5[%c0_91, %c0_92] : memref<72x8xbf16, #tpu.memory_space<vmem>>, vector<72x8xbf16>
    %cst_93 = arith.constant dense<0.000000e+00> : vector<512x8xf32>
    %54 = tpu.matmul %52, %53, %cst_93 {dimension_numbers = #tpu.dot_dimension_numbers<[1], [0], [0], [1], [0, 0, 1, 1], [], []>} : vector<512x72xbf16>, vector<72x8xbf16>, vector<512x8xf32> -> vector<512x8xf32>
    %c0_94 = arith.constant 0 : index
    %c0_95 = arith.constant 0 : index
    %55 = vector.load %arg6[%c0_94, %c0_95] : memref<1x8xf32, #tpu.memory_space<vmem>>, vector<1x8xf32>
    %56 = vector.broadcast %55 : vector<1x8xf32> to vector<512x8xf32>
    %57 = arith.addf %54, %56 : vector<512x8xf32>
    %58 = vector.shape_cast %57 : vector<512x8xf32> to vector<2x16x16x8xf32>
    %cst_96 = arith.constant 0.000000e+00 : f32
    %59 = vector.broadcast %cst_96 : f32 to vector<2x16x16x8xf32>
    %60 = arith.maximumf %58, %59 : vector<2x16x16x8xf32>
    %c0_97 = arith.constant 0 : index
    %c1_98 = arith.constant 1 : index
    %c1_99 = arith.constant 1 : index
    %c0_100 = arith.constant 0 : index
    %61 = vector.load %arg14[%c0_97, %c1_98, %c1_99, %c0_100] : memref<2x18x18x8xf32, #tpu.memory_space<vmem>>, vector<2x16x16x8xf32>
    tpu.vector_store %arg14[%c0_97, %c1_98, %c1_99, %c0_100], %60 {strides = array<i32>} : memref<2x18x18x8xf32, #tpu.memory_space<vmem>>, vector<2x16x16x8xf32>,
    %c0_101 = arith.constant 0 : index
    %c0_102 = arith.constant 0 : index
    %c0_103 = arith.constant 0 : index
    %c0_104 = arith.constant 0 : index
    %62 = vector.load %arg14[%c0_101, %c0_102, %c0_103, %c0_104] : memref<2x18x18x8xf32, #tpu.memory_space<vmem>>, vector<2x16x16x8xf32>
    %63 = vector.shape_cast %62 : vector<2x16x16x8xf32> to vector<512x8xf32>
    %c0_105 = arith.constant 0 : index
    %c0_106 = arith.constant 0 : index
    %c1_107 = arith.constant 1 : index
    %c0_108 = arith.constant 0 : index
    %64 = vector.load %arg14[%c0_105, %c0_106, %c1_107, %c0_108] : memref<2x18x18x8xf32, #tpu.memory_space<vmem>>, vector<2x16x16x8xf32>
    %65 = vector.shape_cast %64 : vector<2x16x16x8xf32> to vector<512x8xf32>
    %c0_109 = arith.constant 0 : index
    %c0_110 = arith.constant 0 : index
    %c2_111 = arith.constant 2 : index
    %c0_112 = arith.constant 0 : index
    %66 = vector.load %arg14[%c0_109, %c0_110, %c2_111, %c0_112] : memref<2x18x18x8xf32, #tpu.memory_space<vmem>>, vector<2x16x16x8xf32>
    %67 = vector.shape_cast %66 : vector<2x16x16x8xf32> to vector<512x8xf32>
    %c0_113 = arith.constant 0 : index
    %c1_114 = arith.constant 1 : index
    %c0_115 = arith.constant 0 : index
    %c0_116 = arith.constant 0 : index
    %68 = vector.load %arg14[%c0_113, %c1_114, %c0_115, %c0_116] : memref<2x18x18x8xf32, #tpu.memory_space<vmem>>, vector<2x16x16x8xf32>
    %69 = vector.shape_cast %68 : vector<2x16x16x8xf32> to vector<512x8xf32>
    %c0_117 = arith.constant 0 : index
    %c1_118 = arith.constant 1 : index
    %c1_119 = arith.constant 1 : index
    %c0_120 = arith.constant 0 : index
    %70 = vector.load %arg14[%c0_117, %c1_118, %c1_119, %c0_120] : memref<2x18x18x8xf32, #tpu.memory_space<vmem>>, vector<2x16x16x8xf32>
    %71 = vector.shape_cast %70 : vector<2x16x16x8xf32> to vector<512x8xf32>
    %c0_121 = arith.constant 0 : index
    %c1_122 = arith.constant 1 : index
    %c2_123 = arith.constant 2 : index
    %c0_124 = arith.constant 0 : index
    %72 = vector.load %arg14[%c0_121, %c1_122, %c2_123, %c0_124] : memref<2x18x18x8xf32, #tpu.memory_space<vmem>>, vector<2x16x16x8xf32>
    %73 = vector.shape_cast %72 : vector<2x16x16x8xf32> to vector<512x8xf32>
    %c0_125 = arith.constant 0 : index
    %c2_126 = arith.constant 2 : index
    %c0_127 = arith.constant 0 : index
    %c0_128 = arith.constant 0 : index
    %74 = vector.load %arg14[%c0_125, %c2_126, %c0_127, %c0_128] : memref<2x18x18x8xf32, #tpu.memory_space<vmem>>, vector<2x16x16x8xf32>
    %75 = vector.shape_cast %74 : vector<2x16x16x8xf32> to vector<512x8xf32>
    %c0_129 = arith.constant 0 : index
    %c2_130 = arith.constant 2 : index
    %c1_131 = arith.constant 1 : index
    %c0_132 = arith.constant 0 : index
    %76 = vector.load %arg14[%c0_129, %c2_130, %c1_131, %c0_132] : memref<2x18x18x8xf32, #tpu.memory_space<vmem>>, vector<2x16x16x8xf32>
    %77 = vector.shape_cast %76 : vector<2x16x16x8xf32> to vector<512x8xf32>
    %c0_133 = arith.constant 0 : index
    %c2_134 = arith.constant 2 : index
    %c2_135 = arith.constant 2 : index
    %c0_136 = arith.constant 0 : index
    %78 = vector.load %arg14[%c0_133, %c2_134, %c2_135, %c0_136] : memref<2x18x18x8xf32, #tpu.memory_space<vmem>>, vector<2x16x16x8xf32>
    %79 = vector.shape_cast %78 : vector<2x16x16x8xf32> to vector<512x8xf32>
    %80 = tpu.concatenate %63, %65, %67, %69, %71, %73, %75, %77, %79 in 1 : vector<512x8xf32>, vector<512x8xf32>, vector<512x8xf32>, vector<512x8xf32>, vector<512x8xf32>, vector<512x8xf32>, vector<512x8xf32>, vector<512x8xf32>, vector<512x8xf32> -> vector<512x72xf32>
    %81 = arith.truncf %80 : vector<512x72xf32> to vector<512x72xbf16>
    %c0_137 = arith.constant 0 : index
    %c0_138 = arith.constant 0 : index
    %82 = vector.load %arg7[%c0_137, %c0_138] : memref<72x8xbf16, #tpu.memory_space<vmem>>, vector<72x8xbf16>
    %cst_139 = arith.constant dense<0.000000e+00> : vector<512x8xf32>
    %83 = tpu.matmul %81, %82, %cst_139 {dimension_numbers = #tpu.dot_dimension_numbers<[1], [0], [0], [1], [0, 0, 1, 1], [], []>} : vector<512x72xbf16>, vector<72x8xbf16>, vector<512x8xf32> -> vector<512x8xf32>
    %c0_140 = arith.constant 0 : index
    %c0_141 = arith.constant 0 : index
    %84 = vector.load %arg8[%c0_140, %c0_141] : memref<1x8xf32, #tpu.memory_space<vmem>>, vector<1x8xf32>
    %85 = vector.broadcast %84 : vector<1x8xf32> to vector<512x8xf32>
    %86 = arith.addf %83, %85 : vector<512x8xf32>
    %87 = vector.shape_cast %86 : vector<512x8xf32> to vector<2x16x16x8xf32>
    %88 = arith.addf %87, %31 : vector<2x16x16x8xf32>
    %cst_142 = arith.constant 0.000000e+00 : f32
    %89 = vector.broadcast %cst_142 : f32 to vector<2x16x16x8xf32>
    %90 = arith.maximumf %88, %89 : vector<2x16x16x8xf32>
    %91 = vector.shape_cast %90 : vector<2x16x16x8xf32> to vector<2x256x8xf32>
    %cst_143 = arith.constant dense<0.000000e+00> : vector<2x8xf32>
    %92 = vector.multi_reduction <add>, %91, %cst_143 [1] : vector<2x256x8xf32> to vector<2x8xf32>
    %c0_144 = arith.constant 0 : index
    %c0_145 = arith.constant 0 : index
    %93 = vector.load %arg9[%c0_144, %c0_145] : memref<8x10xf32, #tpu.memory_space<vmem>>, vector<8x10xf32>
    %cst_146 = arith.constant dense<0.000000e+00> : vector<2x10xf32>
    %94 = tpu.matmul %92, %93, %cst_146 {dimension_numbers = #tpu.dot_dimension_numbers<[1], [0], [0], [1], [0, 0, 1, 1], [], []>} : vector<2x8xf32>, vector<8x10xf32>, vector<2x10xf32> -> vector<2x10xf32>
    %c0_147 = arith.constant 0 : index
    %c0_148 = arith.constant 0 : index
    %95 = vector.load %arg10[%c0_147, %c0_148] : memref<1x10xf32, #tpu.memory_space<vmem>>, vector<1x10xf32>
    %96 = vector.broadcast %95 : vector<1x10xf32> to vector<2x10xf32>
    %97 = arith.addf %94, %96 : vector<2x10xf32>
    %c0_149 = arith.constant 0 : index
    %c0_150 = arith.constant 0 : index
    %98 = vector.load %arg11[%c0_149, %c0_150] : memref<2x10xf32, #tpu.memory_space<vmem>>, vector<2x10xf32>
    tpu.vector_store %arg11[%c0_149, %c0_150], %97 {strides = array<i32>} : memref<2x10xf32, #tpu.memory_space<vmem>>, vector<2x10xf32>,
    %c0_151 = arith.constant 0 : index
    %c0_152 = arith.constant 0 : index
    %99 = vector.load %arg2[%c0_151, %c0_152] : memref<2x1xi32, #tpu.memory_space<vmem>>, vector<2x1xi32>
    %cst_153 = arith.constant dense<0xFF800000> : vector<2xf32>
    %100 = vector.multi_reduction <maximumf>, %97, %cst_153 [1] : vector<2x10xf32> to vector<2xf32>
    %101 = vector.shape_cast %100 : vector<2xf32> to vector<2x1xf32>
    %102 = vector.broadcast %101 : vector<2x1xf32> to vector<2x10xf32>
    %103 = arith.subf %97, %102 : vector<2x10xf32>
    %104 = math.exp %103 : vector<2x10xf32>
    %cst_154 = arith.constant dense<0.000000e+00> : vector<2xf32>
    %105 = vector.multi_reduction <add>, %104, %cst_154 [1] : vector<2x10xf32> to vector<2xf32>
    %106 = vector.shape_cast %105 : vector<2xf32> to vector<2x1xf32>
    %107 = math.log %106 : vector<2x1xf32>
    %108 = vector.broadcast %107 : vector<2x1xf32> to vector<2x10xf32>
    %109 = arith.subf %103, %108 : vector<2x10xf32>
    %110 = tpu.iota {dimensions = array<i32: 1>} : vector<2x10xi32>
    %111 = vector.broadcast %99 : vector<2x1xi32> to vector<2x10xi32>
    %112 = arith.cmpi eq, %110, %111 : vector<2x10xi32>
    %113 = arith.extui %112 : vector<2x10xi1> to vector<2x10xi32>
    %114 = arith.sitofp %113 : vector<2x10xi32> to vector<2x10xf32>
    %115 = arith.mulf %114, %109 : vector<2x10xf32>
    %116 = vector.shape_cast %115 : vector<2x10xf32> to vector<1x2x10xf32>
    %cst_155 = arith.constant dense<0.000000e+00> : vector<1xf32>
    %117 = vector.multi_reduction <add>, %116, %cst_155 [1, 2] : vector<1x2x10xf32> to vector<1xf32>
    %118 = vector.shape_cast %117 : vector<1xf32> to vector<1x1x1xf32>
    %119 = vector.extract %118[0, 0, 0] : f32 from vector<1x1x1xf32>
    %120 = vector.broadcast %119 : f32 to vector<1x1xf32>
    %cst_156 = arith.constant 0.000000e+00 : f32
    %121 = vector.broadcast %cst_156 : f32 to vector<1x1xf32>
    %122 = arith.subf %121, %120 : vector<1x1xf32>
    %123 = vector.broadcast %101 : vector<2x1xf32> to vector<2x10xf32>
    %124 = arith.cmpf oeq, %97, %123 : vector<2x10xf32>
    %c10_i32 = arith.constant 10 : i32
    %125 = vector.broadcast %c10_i32 : i32 to vector<2x10xi32>
    %126 = arith.select %124, %110, %125 : vector<2x10xi1>, vector<2x10xi32>
    %cst_157 = arith.constant dense<2147483647> : vector<2xi32>
    %127 = vector.multi_reduction <minsi>, %126, %cst_157 [1] : vector<2x10xi32> to vector<2xi32>
    %128 = vector.shape_cast %127 : vector<2xi32> to vector<2x1xi32>
    %129 = arith.cmpi eq, %128, %99 : vector<2x1xi32>
    %130 = arith.extui %129 : vector<2x1xi1> to vector<2x1xi32>
    %131 = arith.sitofp %130 : vector<2x1xi32> to vector<2x1xf32>
    %132 = vector.shape_cast %131 : vector<2x1xf32> to vector<1x2x1xf32>
    %cst_158 = arith.constant dense<0.000000e+00> : vector<1xf32>
    %133 = vector.multi_reduction <add>, %132, %cst_158 [1, 2] : vector<1x2x1xf32> to vector<1xf32>
    %134 = vector.shape_cast %133 : vector<1xf32> to vector<1x1x1xf32>
    %135 = vector.extract %134[0, 0, 0] : f32 from vector<1x1x1xf32>
    %136 = vector.broadcast %135 : f32 to vector<1x1xf32>
    %c0_i32 = arith.constant 0 : i32
    %137 = arith.cmpi eq, %arg0, %c0_i32 : i32
    %138 = arith.extui %137 : i1 to i32
    %c0_i32_159 = arith.constant 0 : i32
    %139 = arith.cmpi ne, %138, %c0_i32_159 : i32
    scf.if %139 {
      %cst_170 = arith.constant 0.000000e+00 : f32
      %150 = vector.broadcast %cst_170 : f32 to vector<1x1xf32>
      %c0_171 = arith.constant 0 : index
      %c0_172 = arith.constant 0 : index
      %151 = vector.load %arg12[%c0_171, %c0_172] : memref<1x1xf32, #tpu.memory_space<vmem>>, vector<1x1xf32>
      tpu.vector_store %arg12[%c0_171, %c0_172], %150 {strides = array<i32>} : memref<1x1xf32, #tpu.memory_space<vmem>>, vector<1x1xf32>,
      %cst_173 = arith.constant 0.000000e+00 : f32
      %152 = vector.broadcast %cst_173 : f32 to vector<1x1xf32>
      %c0_174 = arith.constant 0 : index
      %c0_175 = arith.constant 0 : index
      %153 = vector.load %arg13[%c0_174, %c0_175] : memref<1x1xf32, #tpu.memory_space<vmem>>, vector<1x1xf32>
      tpu.vector_store %arg13[%c0_174, %c0_175], %152 {strides = array<i32>} : memref<1x1xf32, #tpu.memory_space<vmem>>, vector<1x1xf32>,
    } else {
    }
    %c0_160 = arith.constant 0 : index
    %c0_161 = arith.constant 0 : index
    %140 = vector.load %arg12[%c0_160, %c0_161] : memref<1x1xf32, #tpu.memory_space<vmem>>, vector<1x1xf32>
    %cst_162 = arith.constant 2.000000e+00 : f32
    %141 = vector.broadcast %cst_162 : f32 to vector<1x1xf32>
    %142 = arith.divf %122, %141 : vector<1x1xf32>
    %143 = arith.addf %140, %142 : vector<1x1xf32>
    %c0_163 = arith.constant 0 : index
    %c0_164 = arith.constant 0 : index
    %144 = vector.load %arg12[%c0_163, %c0_164] : memref<1x1xf32, #tpu.memory_space<vmem>>, vector<1x1xf32>
    tpu.vector_store %arg12[%c0_163, %c0_164], %143 {strides = array<i32>} : memref<1x1xf32, #tpu.memory_space<vmem>>, vector<1x1xf32>,
    %c0_165 = arith.constant 0 : index
    %c0_166 = arith.constant 0 : index
    %145 = vector.load %arg13[%c0_165, %c0_166] : memref<1x1xf32, #tpu.memory_space<vmem>>, vector<1x1xf32>
    %cst_167 = arith.constant 2.000000e+00 : f32
    %146 = vector.broadcast %cst_167 : f32 to vector<1x1xf32>
    %147 = arith.divf %136, %146 : vector<1x1xf32>
    %148 = arith.addf %145, %147 : vector<1x1xf32>
    %c0_168 = arith.constant 0 : index
    %c0_169 = arith.constant 0 : index
    %149 = vector.load %arg13[%c0_168, %c0_169] : memref<1x1xf32, #tpu.memory_space<vmem>>, vector<1x1xf32>
    tpu.vector_store %arg13[%c0_168, %c0_169], %148 {strides = array<i32>} : memref<1x1xf32, #tpu.memory_space<vmem>>, vector<1x1xf32>,
    return
  }
  func.func @transform_0(%arg0: i32) -> (i32, i32, i32, i32) {
    %c0_i32 = arith.constant 0 : i32
    %c0_i32_0 = arith.constant 0 : i32
    %c0_i32_1 = arith.constant 0 : i32
    %c0_i32_2 = arith.constant 0 : i32
    return %arg0, %c0_i32, %c0_i32_0, %c0_i32_1 : i32, i32, i32, i32
  }
  func.func @transform_1(%arg0: i32) -> (i32, i32) {
    %c0_i32 = arith.constant 0 : i32
    %c0_i32_0 = arith.constant 0 : i32
    return %arg0, %c0_i32 : i32, i32
  }
  func.func @transform_2(%arg0: i32) -> (i32, i32) {
    %c0_i32 = arith.constant 0 : i32
    %c0_i32_0 = arith.constant 0 : i32
    %c0_i32_1 = arith.constant 0 : i32
    return %c0_i32, %c0_i32_0 : i32, i32
  }
  func.func @transform_3(%arg0: i32) -> (i32, i32) {
    %c0_i32 = arith.constant 0 : i32
    %c0_i32_0 = arith.constant 0 : i32
    %c0_i32_1 = arith.constant 0 : i32
    return %c0_i32, %c0_i32_0 : i32, i32
  }
  func.func @transform_4(%arg0: i32) -> (i32, i32) {
    %c0_i32 = arith.constant 0 : i32
    %c0_i32_0 = arith.constant 0 : i32
    %c0_i32_1 = arith.constant 0 : i32
    return %c0_i32, %c0_i32_0 : i32, i32
  }
  func.func @transform_5(%arg0: i32) -> (i32, i32) {
    %c0_i32 = arith.constant 0 : i32
    %c0_i32_0 = arith.constant 0 : i32
    %c0_i32_1 = arith.constant 0 : i32
    return %c0_i32, %c0_i32_0 : i32, i32
  }
  func.func @transform_6(%arg0: i32) -> (i32, i32) {
    %c0_i32 = arith.constant 0 : i32
    %c0_i32_0 = arith.constant 0 : i32
    %c0_i32_1 = arith.constant 0 : i32
    return %c0_i32, %c0_i32_0 : i32, i32
  }
  func.func @transform_7(%arg0: i32) -> (i32, i32) {
    %c0_i32 = arith.constant 0 : i32
    %c0_i32_0 = arith.constant 0 : i32
    %c0_i32_1 = arith.constant 0 : i32
    return %c0_i32, %c0_i32_0 : i32, i32
  }
  func.func @transform_8(%arg0: i32) -> (i32, i32) {
    %c0_i32 = arith.constant 0 : i32
    %c0_i32_0 = arith.constant 0 : i32
    %c0_i32_1 = arith.constant 0 : i32
    return %c0_i32, %c0_i32_0 : i32, i32
  }
  func.func @transform_9(%arg0: i32) -> (i32, i32) {
    %c0_i32 = arith.constant 0 : i32
    %c0_i32_0 = arith.constant 0 : i32
    %c0_i32_1 = arith.constant 0 : i32
    return %c0_i32, %c0_i32_0 : i32, i32
  }
  func.func @transform_10(%arg0: i32) -> (i32, i32) {
    %c0_i32 = arith.constant 0 : i32
    %c0_i32_0 = arith.constant 0 : i32
    return %arg0, %c0_i32 : i32, i32
  }
  func.func @transform_11(%arg0: i32) -> (i32, i32) {
    %c0_i32 = arith.constant 0 : i32
    %c0_i32_0 = arith.constant 0 : i32
    %c0_i32_1 = arith.constant 0 : i32
    return %c0_i32, %c0_i32_0 : i32, i32
  }
  func.func @transform_12(%arg0: i32) -> (i32, i32) {
    %c0_i32 = arith.constant 0 : i32
    %c0_i32_0 = arith.constant 0 : i32
    %c0_i32_1 = arith.constant 0 : i32
    return %c0_i32, %c0_i32_0 : i32, i32
  }
}

</mosaic_0001>

<llo_original>
// kernel: evaluator_forward.1
$region0: #{evaluator_forward.1}
  #allocation0 [shape = 'u32[]', space=smem, size = 0x4, offset = 0x4, fixed_abs, tag = 'smem constant byte address 0x4 - core index']
  #allocation1 [shape = 'u32[144,128]{1,0:T(1,128)}', space=vmem, size = 0x12000, scoped, tag = 'internal scratch']
  #allocation2 [shape = 'f32[2,18,18,8]{3,2,1,0:T(8,128)}', space=vmem, size = 0x6c000, scoped, tag = 'scratch operand']
  %s0 = inlined_call_operand.vmem [shape: f32[2,16,16,3], index: 0, kind: input, shape index: {}]
  %s1 = inlined_call_operand.vmem [shape: s32[2,1], index: 1, kind: input, shape index: {}]
  %s2 = inlined_call_operand.vmem [shape: bf16[27,8], index: 2, kind: input, shape index: {}]
  %s3 = inlined_call_operand.vmem [shape: f32[1,8], index: 3, kind: input, shape index: {}]
  %s4 = inlined_call_operand.vmem [shape: bf16[72,8], index: 4, kind: input, shape index: {}]
  %s5 = inlined_call_operand.vmem [shape: f32[1,8], index: 5, kind: input, shape index: {}]
  %s6 = inlined_call_operand.vmem [shape: bf16[72,8], index: 6, kind: input, shape index: {}]
  %s7 = inlined_call_operand.vmem [shape: f32[1,8], index: 7, kind: input, shape index: {}]
  %s8 = inlined_call_operand.vmem [shape: f32[8,10], index: 8, kind: input, shape index: {}]
  %s9 = inlined_call_operand.vmem [shape: f32[1,10], index: 9, kind: input, shape index: {}]
  %s10 = inlined_call_operand.hbm [shape: f32[2,10], index: 10, kind: output, shape index: {0}]
  %s11 = inlined_call_operand.hbm [shape: f32[1,1], index: 11, kind: output, shape index: {1}]
  %s12 = inlined_call_operand.hbm [shape: f32[1,1], index: 12, kind: output, shape index: {2}]
  %13 = xla_tuple %s10, %s11, %s12
  %s14 = sld [smem:[#allocation0]]
  $region70: #{evaluator_forward.1} parent=0
    _
  %s16 = ssub.s32 1, %s14
  %s17 = scalar_select 0, %s16, %s14
  $region1: #{evaluator_forward.1} parent=0
    #allocation3 [shape = 'u8[1024]{0}', space=vmem, size = 0x400, scoped, tag = 'output window, operand 0, single buffered']
    #allocation4 [shape = 's32[1]{0}', space=sflag, size = 0x4, scoped, tag = 'scoped memory for evaluator_forward.1']
    #allocation5 [shape = 'u8[512]{0}', space=vmem, size = 0x400, scoped, tag = 'output window, operand 1, single buffered']
    #allocation6 [shape = 's32[1]{0}', space=sflag, size = 0x4, scoped, tag = 'scoped memory for evaluator_forward.1']
    #allocation7 [shape = 'u8[512]{0}', space=vmem, size = 0x400, scoped, tag = 'output window, operand 2, single buffered']
    %18 = vsyncpa [#allocation4], 0
    %19 = vsyncpa [#allocation6], 0
    // Predicated region
    $region2: #{evaluator_forward.1} parent=1 // pred_check
      _
    $region3: #{evaluator_forward.1} parent=1 // pred_check_branch
      %21 = sbr.rel (0) target = $region5
    $region4: #{evaluator_forward.1} parent=1 // pred_region
      _
    $region5: #{evaluator_forward.1} parent=1 // pred_fallthru
      _
    // Predicated region
    $region6: #{evaluator_forward.1} parent=1 // pred_check
      _
    $region7: #{evaluator_forward.1} parent=1 // pred_check_branch
      %23 = sbr.rel (0) target = $region9
    $region8: #{evaluator_forward.1} parent=1 // pred_region
      _
    $region9: #{evaluator_forward.1} parent=1 // pred_fallthru
      _
    // Predicated region
    $region10: #{evaluator_forward.1} parent=1 // pred_check
      _
    $region11: #{evaluator_forward.1} parent=1 // pred_check_branch
      %25 = sbr.rel (0) target = $region13
    $region12: #{evaluator_forward.1} parent=1 // pred_region
      _
    $region13: #{evaluator_forward.1} parent=1 // pred_fallthru
      _
    // Predicated region
    $region14: #{evaluator_forward.1} parent=1 // pred_check
      _
    $region15: #{evaluator_forward.1} parent=1 // pred_check_branch
      %27 = sbr.rel (0) target = $region17
    $region16: #{evaluator_forward.1} parent=1 // pred_region
      _
    $region17: #{evaluator_forward.1} parent=1 // pred_fallthru
      _
    // Predicated region
    $region18: #{evaluator_forward.1} parent=1 // pred_check
      _
    $region19: #{evaluator_forward.1} parent=1 // pred_check_branch
      %29 = sbr.rel (0) target = $region21
    $region20: #{evaluator_forward.1} parent=1 // pred_region
      _
    $region21: #{evaluator_forward.1} parent=1 // pred_fallthru
      _
    // Predicated region
    $region22: #{evaluator_forward.1} parent=1 // pred_check
      _
    $region23: #{evaluator_forward.1} parent=1 // pred_check_branch
      %31 = sbr.rel (0) target = $region25
    $region24: #{evaluator_forward.1} parent=1 // pred_region
      _
    $region25: #{evaluator_forward.1} parent=1 // pred_fallthru
      _
    // Predicated region
    $region26: #{evaluator_forward.1} parent=1 // pred_check
      _
    $region27: #{evaluator_forward.1} parent=1 // pred_check_branch
      %33 = sbr.rel (0) target = $region29
    $region28: #{evaluator_forward.1} parent=1 // pred_region
      _
    $region29: #{evaluator_forward.1} parent=1 // pred_fallthru
      _
    // Predicated region
    $region30: #{evaluator_forward.1} parent=1 // pred_check
      _
    $region31: #{evaluator_forward.1} parent=1 // pred_check_branch
      %35 = sbr.rel (0) target = $region33
    $region32: #{evaluator_forward.1} parent=1 // pred_region
      _
    $region33: #{evaluator_forward.1} parent=1 // pred_fallthru
      _
    // Predicated region
    $region34: #{evaluator_forward.1} parent=1 // pred_check
      _
    $region35: #{evaluator_forward.1} parent=1 // pred_check_branch
      %37 = sbr.rel (0) target = $region37
    $region36: #{evaluator_forward.1} parent=1 // pred_region
      _
    $region37: #{evaluator_forward.1} parent=1 // pred_fallthru
      _
    // Predicated region
    $region38: #{evaluator_forward.1} parent=1 // pred_check
      _
    $region39: #{evaluator_forward.1} parent=1 // pred_check_branch
      %39 = sbr.rel (0) target = $region41
    $region40: #{evaluator_forward.1} parent=1 // pred_region
      _
    $region41: #{evaluator_forward.1} parent=1 // pred_fallthru
      _
    %vm41 = vcmask 64512
    %42 = vst.msk [vmem:[#allocation2] sm:$0xff] %vm41, 0.0
    %43 = vst.msk [vmem:[#allocation2 + $0x8] sm:$0xff] %vm41, 0.0
    %vm44 = vcmask 58368
    %45 = vst.msk [vmem:[#allocation2 + $0x10] sm:$0x3] %vm44, 0.0
    %46 = vst.msk [vmem:[#allocation2 + $0x18] sm:$0xff] %vm41, 0.0
    %47 = vst.msk [vmem:[#allocation2 + $0x20] sm:$0xff] %vm41, 0.0
    %48 = vst.msk [vmem:[#allocation2 + $0x28] sm:$0x3] %vm44, 0.0
    %49 = vst.msk [vmem:[#allocation2 + $0x30] sm:$0xff] %vm41, 0.0
    %50 = vst.msk [vmem:[#allocation2 + $0x38] sm:$0xff] %vm41, 0.0
    %51 = vst.msk [vmem:[#allocation2 + $0x40] sm:$0x3] %vm44, 0.0
    %52 = vst.msk [vmem:[#allocation2 + $0x48] sm:$0xff] %vm41, 0.0
    %53 = vst.msk [vmem:[#allocation2 + $0x50] sm:$0xff] %vm41, 0.0
    %54 = vst.msk [vmem:[#allocation2 + $0x58] sm:$0x3] %vm44, 0.0
    %55 = vst.msk [vmem:[#allocation2 + $0x60] sm:$0xff] %vm41, 0.0
    %56 = vst.msk [vmem:[#allocation2 + $0x68] sm:$0xff] %vm41, 0.0
    %57 = vst.msk [vmem:[#allocation2 + $0x70] sm:$0x3] %vm44, 0.0
    %58 = vst.msk [vmem:[#allocation2 + $0x78] sm:$0xff] %vm41, 0.0
    %59 = vst.msk [vmem:[#allocation2 + $0x80] sm:$0xff] %vm41, 0.0
    %60 = vst.msk [vmem:[#allocation2 + $0x88] sm:$0x3] %vm44, 0.0
    %61 = vst.msk [vmem:[#allocation2 + $0x90] sm:$0xff] %vm41, 0.0
    %62 = vst.msk [vmem:[#allocation2 + $0x98] sm:$0xff] %vm41, 0.0
    %63 = vst.msk [vmem:[#allocation2 + $0xa0] sm:$0x3] %vm44, 0.0
    %64 = vst.msk [vmem:[#allocation2 + $0xa8] sm:$0xff] %vm41, 0.0
    %65 = vst.msk [vmem:[#allocation2 + $0xb0] sm:$0xff] %vm41, 0.0
    %66 = vst.msk [vmem:[#allocation2 + $0xb8] sm:$0x3] %vm44, 0.0
    %67 = vst.msk [vmem:[#allocation2 + $0xc0] sm:$0xff] %vm41, 0.0
    %68 = vst.msk [vmem:[#allocation2 + $0xc8] sm:$0xff] %vm41, 0.0
    %69 = vst.msk [vmem:[#allocation2 + $0xd0] sm:$0x3] %vm44, 0.0
    %70 = vst.msk [vmem:[#allocation2 + $0xd8] sm:$0xff] %vm41, 0.0
    %71 = vst.msk [vmem:[#allocation2 + $0xe0] sm:$0xff] %vm41, 0.0
    %72 = vst.msk [vmem:[#allocation2 + $0xe8] sm:$0x3] %vm44, 0.0
    %73 = vst.msk [vmem:[#allocation2 + $0xf0] sm:$0xff] %vm41, 0.0
    %74 = vst.msk [vmem:[#allocation2 + $0xf8] sm:$0xff] %vm41, 0.0
    %75 = vst.msk [vmem:[#allocation2 + $0x100] sm:$0x3] %vm44, 0.0
    %76 = vst.msk [vmem:[#allocation2 + $0x108] sm:$0xff] %vm41, 0.0
    %77 = vst.msk [vmem:[#allocation2 + $0x110] sm:$0xff] %vm41, 0.0
    %78 = vst.msk [vmem:[#allocation2 + $0x118] sm:$0x3] %vm44, 0.0
    %79 = vst.msk [vmem:[#allocation2 + $0x120] sm:$0xff] %vm41, 0.0
    %80 = vst.msk [vmem:[#allocation2 + $0x128] sm:$0xff] %vm41, 0.0
    %81 = vst.msk [vmem:[#allocation2 + $0x130] sm:$0x3] %vm44, 0.0
    %82 = vst.msk [vmem:[#allocation2 + $0x138] sm:$0xff] %vm41, 0.0
    %83 = vst.msk [vmem:[#allocation2 + $0x140] sm:$0xff] %vm41, 0.0
    %84 = vst.msk [vmem:[#allocation2 + $0x148] sm:$0x3] %vm44, 0.0
    %85 = vst.msk [vmem:[#allocation2 + $0x150] sm:$0xff] %vm41, 0.0
    %86 = vst.msk [vmem:[#allocation2 + $0x158] sm:$0xff] %vm41, 0.0
    %87 = vst.msk [vmem:[#allocation2 + $0x160] sm:$0x3] %vm44, 0.0
    %88 = vst.msk [vmem:[#allocation2 + $0x168] sm:$0xff] %vm41, 0.0
    %89 = vst.msk [vmem:[#allocation2 + $0x170] sm:$0xff] %vm41, 0.0
    %90 = vst.msk [vmem:[#allocation2 + $0x178] sm:$0x3] %vm44, 0.0
    %91 = vst.msk [vmem:[#allocation2 + $0x180] sm:$0xff] %vm41, 0.0
    %92 = vst.msk [vmem:[#allocation2 + $0x188] sm:$0xff] %vm41, 0.0
    %93 = vst.msk [vmem:[#allocation2 + $0x190] sm:$0x3] %vm44, 0.0
    %94 = vst.msk [vmem:[#allocation2 + $0x198] sm:$0xff] %vm41, 0.0
    %95 = vst.msk [vmem:[#allocation2 + $0x1a0] sm:$0xff] %vm41, 0.0
    %96 = vst.msk [vmem:[#allocation2 + $0x1a8] sm:$0x3] %vm44, 0.0
    %97 = vst.msk [vmem:[#allocation2 + $0x1b0] sm:$0xff] %vm41, 0.0
    %98 = vst.msk [vmem:[#allocation2 + $0x1b8] sm:$0xff] %vm41, 0.0
    %99 = vst.msk [vmem:[#allocation2 + $0x1c0] sm:$0x3] %vm44, 0.0
    %100 = vst.msk [vmem:[#allocation2 + $0x1c8] sm:$0xff] %vm41, 0.0
    %101 = vst.msk [vmem:[#allocation2 + $0x1d0] sm:$0xff] %vm41, 0.0
    %102 = vst.msk [vmem:[#allocation2 + $0x1d8] sm:$0x3] %vm44, 0.0
    %103 = vst.msk [vmem:[#allocation2 + $0x1e0] sm:$0xff] %vm41, 0.0
    %104 = vst.msk [vmem:[#allocation2 + $0x1e8] sm:$0xff] %vm41, 0.0
    %105 = vst.msk [vmem:[#allocation2 + $0x1f0] sm:$0x3] %vm44, 0.0
    %106 = vst.msk [vmem:[#allocation2 + $0x1f8] sm:$0xff] %vm41, 0.0
    %107 = vst.msk [vmem:[#allocation2 + $0x200] sm:$0xff] %vm41, 0.0
    %108 = vst.msk [vmem:[#allocation2 + $0x208] sm:$0x3] %vm44, 0.0
    %109 = vst.msk [vmem:[#allocation2 + $0x210] sm:$0xff] %vm41, 0.0
    %110 = vst.msk [vmem:[#allocation2 + $0x218] sm:$0xff] %vm41, 0.0
    %111 = vst.msk [vmem:[#allocation2 + $0x220] sm:$0x3] %vm44, 0.0
    %112 = vst.msk [vmem:[#allocation2 + $0x228] sm:$0xff] %vm41, 0.0
    %113 = vst.msk [vmem:[#allocation2 + $0x230] sm:$0xff] %vm41, 0.0
    %114 = vst.msk [vmem:[#allocation2 + $0x238] sm:$0x3] %vm44, 0.0
    %115 = vst.msk [vmem:[#allocation2 + $0x240] sm:$0xff] %vm41, 0.0
    %116 = vst.msk [vmem:[#allocation2 + $0x248] sm:$0xff] %vm41, 0.0
    %117 = vst.msk [vmem:[#allocation2 + $0x250] sm:$0x3] %vm44, 0.0
    %118 = vst.msk [vmem:[#allocation2 + $0x258] sm:$0xff] %vm41, 0.0
    %119 = vst.msk [vmem:[#allocation2 + $0x260] sm:$0xff] %vm41, 0.0
    %120 = vst.msk [vmem:[#allocation2 + $0x268] sm:$0x3] %vm44, 0.0
    %121 = vst.msk [vmem:[#allocation2 + $0x270] sm:$0xff] %vm41, 0.0
    %122 = vst.msk [vmem:[#allocation2 + $0x278] sm:$0xff] %vm41, 0.0
    %123 = vst.msk [vmem:[#allocation2 + $0x280] sm:$0x3] %vm44, 0.0
    %124 = vst.msk [vmem:[#allocation2 + $0x288] sm:$0xff] %vm41, 0.0
    %125 = vst.msk [vmem:[#allocation2 + $0x290] sm:$0xff] %vm41, 0.0
    %126 = vst.msk [vmem:[#allocation2 + $0x298] sm:$0x3] %vm44, 0.0
    %127 = vst.msk [vmem:[#allocation2 + $0x2a0] sm:$0xff] %vm41, 0.0
    %128 = vst.msk [vmem:[#allocation2 + $0x2a8] sm:$0xff] %vm41, 0.0
    %129 = vst.msk [vmem:[#allocation2 + $0x2b0] sm:$0x3] %vm44, 0.0
    %130 = vst.msk [vmem:[#allocation2 + $0x2b8] sm:$0xff] %vm41, 0.0
    %131 = vst.msk [vmem:[#allocation2 + $0x2c0] sm:$0xff] %vm41, 0.0
    %132 = vst.msk [vmem:[#allocation2 + $0x2c8] sm:$0x3] %vm44, 0.0
    %133 = vst.msk [vmem:[#allocation2 + $0x2d0] sm:$0xff] %vm41, 0.0
    %134 = vst.msk [vmem:[#allocation2 + $0x2d8] sm:$0xff] %vm41, 0.0
    %135 = vst.msk [vmem:[#allocation2 + $0x2e0] sm:$0x3] %vm44, 0.0
    %136 = vst.msk [vmem:[#allocation2 + $0x2e8] sm:$0xff] %vm41, 0.0
    %137 = vst.msk [vmem:[#allocation2 + $0x2f0] sm:$0xff] %vm41, 0.0
    %138 = vst.msk [vmem:[#allocation2 + $0x2f8] sm:$0x3] %vm44, 0.0
    %139 = vst.msk [vmem:[#allocation2 + $0x300] sm:$0xff] %vm41, 0.0
    %140 = vst.msk [vmem:[#allocation2 + $0x308] sm:$0xff] %vm41, 0.0
    %141 = vst.msk [vmem:[#allocation2 + $0x310] sm:$0x3] %vm44, 0.0
    %142 = vst.msk [vmem:[#allocation2 + $0x318] sm:$0xff] %vm41, 0.0
    %143 = vst.msk [vmem:[#allocation2 + $0x320] sm:$0xff] %vm41, 0.0
    %144 = vst.msk [vmem:[#allocation2 + $0x328] sm:$0x3] %vm44, 0.0
    %145 = vst.msk [vmem:[#allocation2 + $0x330] sm:$0xff] %vm41, 0.0
    %146 = vst.msk [vmem:[#allocation2 + $0x338] sm:$0xff] %vm41, 0.0
    %147 = vst.msk [vmem:[#allocation2 + $0x340] sm:$0x3] %vm44, 0.0
    %148 = vst.msk [vmem:[#allocation2 + $0x348] sm:$0xff] %vm41, 0.0
    %149 = vst.msk [vmem:[#allocation2 + $0x350] sm:$0xff] %vm41, 0.0
    %150 = vst.msk [vmem:[#allocation2 + $0x358] sm:$0x3] %vm44, 0.0
    %v151 = vld [vmem:[%s0] sm:$0xff]
    %v152 = vld [vmem:[%s0 + $0x8] sm:$0xff]
    %v153 = vld [vmem:[%s0 + $0x10] sm:$0xff]
    %v154 = vld [vmem:[%s0 + $0x18] sm:$0xff]
    %v155 = vld [vmem:[%s0 + $0x20] sm:$0xff]
    %v156 = vld [vmem:[%s0 + $0x28] sm:$0xff]
    %v157 = vld [vmem:[%s0 + $0x30] sm:$0xff]
    %v158 = vld [vmem:[%s0 + $0x38] sm:$0xff]
    %v159 = vld [vmem:[%s0 + $0x40] sm:$0xff]
    %v160 = vld [vmem:[%s0 + $0x48] sm:$0xff]
    %v161 = vld [vmem:[%s0 + $0x50] sm:$0xff]
    %v162 = vld [vmem:[%s0 + $0x58] sm:$0xff]
    %v163 = vld [vmem:[%s0 + $0x60] sm:$0xff]
    %v164 = vld [vmem:[%s0 + $0x68] sm:$0xff]
    %v165 = vld [vmem:[%s0 + $0x70] sm:$0xff]
    %v166 = vld [vmem:[%s0 + $0x78] sm:$0xff]
    %v167 = vld [vmem:[%s0 + $0x80] sm:$0xff]
    %v168 = vld [vmem:[%s0 + $0x88] sm:$0xff]
    %v169 = vld [vmem:[%s0 + $0x90] sm:$0xff]
    %v170 = vld [vmem:[%s0 + $0x98] sm:$0xff]
    %v171 = vld [vmem:[%s0 + $0xa0] sm:$0xff]
    %v172 = vld [vmem:[%s0 + $0xa8] sm:$0xff]
    %v173 = vld [vmem:[%s0 + $0xb0] sm:$0xff]
    %v174 = vld [vmem:[%s0 + $0xb8] sm:$0xff]
    %v175 = vld [vmem:[%s0 + $0xc0] sm:$0xff]
    %v176 = vld [vmem:[%s0 + $0xc8] sm:$0xff]
    %v177 = vld [vmem:[%s0 + $0xd0] sm:$0xff]
    %v178 = vld [vmem:[%s0 + $0xd8] sm:$0xff]
    %v179 = vld [vmem:[%s0 + $0xe0] sm:$0xff]
    %v180 = vld [vmem:[%s0 + $0xe8] sm:$0xff]
    %v181 = vld [vmem:[%s0 + $0xf0] sm:$0xff]
    %v182 = vld [vmem:[%s0 + $0xf8] sm:$0xff]
    %v183 = vld [vmem:[%s0 + $0x100] sm:$0xff]
    %v184 = vld [vmem:[%s0 + $0x108] sm:$0xff]
    %v185 = vld [vmem:[%s0 + $0x110] sm:$0xff]
    %v186 = vld [vmem:[%s0 + $0x118] sm:$0xff]
    %v187 = vld [vmem:[%s0 + $0x120] sm:$0xff]
    %v188 = vld [vmem:[%s0 + $0x128] sm:$0xff]
    %v189 = vld [vmem:[%s0 + $0x130] sm:$0xff]
    %v190 = vld [vmem:[%s0 + $0x138] sm:$0xff]
    %v191 = vld [vmem:[%s0 + $0x140] sm:$0xff]
    %v192 = vld [vmem:[%s0 + $0x148] sm:$0xff]
    %v193 = vld [vmem:[%s0 + $0x150] sm:$0xff]
    %v194 = vld [vmem:[%s0 + $0x158] sm:$0xff]
    %v195 = vld [vmem:[%s0 + $0x160] sm:$0xff]
    %v196 = vld [vmem:[%s0 + $0x168] sm:$0xff]
    %v197 = vld [vmem:[%s0 + $0x170] sm:$0xff]
    %v198 = vld [vmem:[%s0 + $0x178] sm:$0xff]
    %v199 = vld [vmem:[%s0 + $0x180] sm:$0xff]
    %v200 = vld [vmem:[%s0 + $0x188] sm:$0xff]
    %v201 = vld [vmem:[%s0 + $0x190] sm:$0xff]
    %v202 = vld [vmem:[%s0 + $0x198] sm:$0xff]
    %v203 = vld [vmem:[%s0 + $0x1a0] sm:$0xff]
    %v204 = vld [vmem:[%s0 + $0x1a8] sm:$0xff]
    %v205 = vld [vmem:[%s0 + $0x1b0] sm:$0xff]
    %v206 = vld [vmem:[%s0 + $0x1b8] sm:$0xff]
    %v207 = vld [vmem:[%s0 + $0x1c0] sm:$0xff]
    %v208 = vld [vmem:[%s0 + $0x1c8] sm:$0xff]
    %v209 = vld [vmem:[%s0 + $0x1d0] sm:$0xff]
    %v210 = vld [vmem:[%s0 + $0x1d8] sm:$0xff]
    %v211 = vld [vmem:[%s0 + $0x1e0] sm:$0xff]
    %v212 = vld [vmem:[%s0 + $0x1e8] sm:$0xff]
    %v213 = vld [vmem:[%s0 + $0x1f0] sm:$0xff]
    %v214 = vld [vmem:[%s0 + $0x1f8] sm:$0xff]
    %s215 = scalar_lea.vmem [#allocation2], 24
    %vm216 = vcmask 23552
    %217 = vst.msk [vmem:[%s215 + $0x1] sm:$0xff] %vm216, %v151
    %218 = vst.msk [vmem:[%s215 + $0x9] sm:$0xff] %vm216, %v152
    %219 = vst.msk [vmem:[%s215 + $0x19] sm:$0xff] %vm216, %v153
    %220 = vst.msk [vmem:[%s215 + $0x21] sm:$0xff] %vm216, %v154
    %221 = vst.msk [vmem:[%s215 + $0x31] sm:$0xff] %vm216, %v155
    %222 = vst.msk [vmem:[%s215 + $0x39] sm:$0xff] %vm216, %v156
    %223 = vst.msk [vmem:[%s215 + $0x49] sm:$0xff] %vm216, %v157
    %224 = vst.msk [vmem:[%s215 + $0x51] sm:$0xff] %vm216, %v158
    %225 = vst.msk [vmem:[%s215 + $0x61] sm:$0xff] %vm216, %v159
    %226 = vst.msk [vmem:[%s215 + $0x69] sm:$0xff] %vm216, %v160
    %227 = vst.msk [vmem:[%s215 + $0x79] sm:$0xff] %vm216, %v161
    %228 = vst.msk [vmem:[%s215 + $0x81] sm:$0xff] %vm216, %v162
    %229 = vst.msk [vmem:[%s215 + $0x91] sm:$0xff] %vm216, %v163
    %230 = vst.msk [vmem:[%s215 + $0x99] sm:$0xff] %vm216, %v164
    %231 = vst.msk [vmem:[%s215 + $0xa9] sm:$0xff] %vm216, %v165
    %232 = vst.msk [vmem:[%s215 + $0xb1] sm:$0xff] %vm216, %v166
    %233 = vst.msk [vmem:[%s215 + $0xc1] sm:$0xff] %vm216, %v167
    %234 = vst.msk [vmem:[%s215 + $0xc9] sm:$0xff] %vm216, %v168
    %235 = vst.msk [vmem:[%s215 + $0xd9] sm:$0xff] %vm216, %v169
    %236 = vst.msk [vmem:[%s215 + $0xe1] sm:$0xff] %vm216, %v170
    %237 = vst.msk [vmem:[%s215 + $0xf1] sm:$0xff] %vm216, %v171
    %238 = vst.msk [vmem:[%s215 + $0xf9] sm:$0xff] %vm216, %v172
    %239 = vst.msk [vmem:[%s215 + $0x109] sm:$0xff] %vm216, %v173
    %240 = vst.msk [vmem:[%s215 + $0x111] sm:$0xff] %vm216, %v174
    %241 = vst.msk [vmem:[%s215 + $0x121] sm:$0xff] %vm216, %v175
    %242 = vst.msk [vmem:[%s215 + $0x129] sm:$0xff] %vm216, %v176
    %243 = vst.msk [vmem:[%s215 + $0x139] sm:$0xff] %vm216, %v177
    %244 = vst.msk [vmem:[%s215 + $0x141] sm:$0xff] %vm216, %v178
    %245 = vst.msk [vmem:[%s215 + $0x151] sm:$0xff] %vm216, %v179
    %246 = vst.msk [vmem:[%s215 + $0x159] sm:$0xff] %vm216, %v180
    %247 = vst.msk [vmem:[%s215 + $0x169] sm:$0xff] %vm216, %v181
    %248 = vst.msk [vmem:[%s215 + $0x171] sm:$0xff] %vm216, %v182
    %249 = vst.msk [vmem:[%s215 + $0x1b1] sm:$0xff] %vm216, %v183
    %250 = vst.msk [vmem:[%s215 + $0x1b9] sm:$0xff] %vm216, %v184
    %251 = vst.msk [vmem:[%s215 + $0x1c9] sm:$0xff] %vm216, %v185
    %252 = vst.msk [vmem:[%s215 + $0x1d1] sm:$0xff] %vm216, %v186
    %253 = vst.msk [vmem:[%s215 + $0x1e1] sm:$0xff] %vm216, %v187
    %254 = vst.msk [vmem:[%s215 + $0x1e9] sm:$0xff] %vm216, %v188
    %255 = vst.msk [vmem:[%s215 + $0x1f9] sm:$0xff] %vm216, %v189
    %256 = vst.msk [vmem:[%s215 + $0x201] sm:$0xff] %vm216, %v190
    %257 = vst.msk [vmem:[%s215 + $0x211] sm:$0xff] %vm216, %v191
    %258 = vst.msk [vmem:[%s215 + $0x219] sm:$0xff] %vm216, %v192
    %259 = vst.msk [vmem:[%s215 + $0x229] sm:$0xff] %vm216, %v193
    %260 = vst.msk [vmem:[%s215 + $0x231] sm:$0xff] %vm216, %v194
    %261 = vst.msk [vmem:[%s215 + $0x241] sm:$0xff] %vm216, %v195
    %262 = vst.msk [vmem:[%s215 + $0x249] sm:$0xff] %vm216, %v196
    %263 = vst.msk [vmem:[%s215 + $0x259] sm:$0xff] %vm216, %v197
    %264 = vst.msk [vmem:[%s215 + $0x261] sm:$0xff] %vm216, %v198
    %265 = vst.msk [vmem:[%s215 + $0x271] sm:$0xff] %vm216, %v199
    %266 = vst.msk [vmem:[%s215 + $0x279] sm:$0xff] %vm216, %v200
    %267 = vst.msk [vmem:[%s215 + $0x289] sm:$0xff] %vm216, %v201
    %268 = vst.msk [vmem:[%s215 + $0x291] sm:$0xff] %vm216, %v202
    %269 = vst.msk [vmem:[%s215 + $0x2a1] sm:$0xff] %vm216, %v203
    %270 = vst.msk [vmem:[%s215 + $0x2a9] sm:$0xff] %vm216, %v204
    %271 = vst.msk [vmem:[%s215 + $0x2b9] sm:$0xff] %vm216, %v205
    %272 = vst.msk [vmem:[%s215 + $0x2c1] sm:$0xff] %vm216, %v206
    %273 = vst.msk [vmem:[%s215 + $0x2d1] sm:$0xff] %vm216, %v207
    %274 = vst.msk [vmem:[%s215 + $0x2d9] sm:$0xff] %vm216, %v208
    %275 = vst.msk [vmem:[%s215 + $0x2e9] sm:$0xff] %vm216, %v209
    %276 = vst.msk [vmem:[%s215 + $0x2f1] sm:$0xff] %vm216, %v210
    %277 = vst.msk [vmem:[%s215 + $0x301] sm:$0xff] %vm216, %v211
    %278 = vst.msk [vmem:[%s215 + $0x309] sm:$0xff] %vm216, %v212
    %279 = vst.msk [vmem:[%s215 + $0x319] sm:$0xff] %vm216, %v213
    %280 = vst.msk [vmem:[%s215 + $0x321] sm:$0xff] %vm216, %v214
    %v281 = vld [vmem:[#allocation2] sm:$0xff]
    %v282 = vld [vmem:[#allocation2 + $0x8] sm:$0xff]
    %v283 = vld [vmem:[#allocation2 + $0x18] sm:$0xff]
    %v284 = vld [vmem:[#allocation2 + $0x20] sm:$0xff]
    %v285 = vld [vmem:[#allocation2 + $0x30] sm:$0xff]
    %v286 = vld [vmem:[#allocation2 + $0x38] sm:$0xff]
    %v287 = vld [vmem:[#allocation2 + $0x48] sm:$0xff]
    %v288 = vld [vmem:[#allocation2 + $0x50] sm:$0xff]
    %v289 = vld [vmem:[#allocation2 + $0x60] sm:$0xff]
    %v290 = vld [vmem:[#allocation2 + $0x68] sm:$0xff]
    %v291 = vld [vmem:[#allocation2 + $0x78] sm:$0xff]
    %v292 = vld [vmem:[#allocation2 + $0x80] sm:$0xff]
    %v293 = vld [vmem:[#allocation2 + $0x90] sm:$0xff]
    %v294 = vld [vmem:[#allocation2 + $0x98] sm:$0xff]
    %v295 = vld [vmem:[#allocation2 + $0xa8] sm:$0xff]
    %v296 = vld [vmem:[#allocation2 + $0xb0] sm:$0xff]
    %v297 = vld [vmem:[#allocation2 + $0xc0] sm:$0xff]
    %v298 = vld [vmem:[#allocation2 + $0xc8] sm:$0xff]
    %v299 = vld [vmem:[#allocation2 + $0xd8] sm:$0xff]
    %v300 = vld [vmem:[#allocation2 + $0xe0] sm:$0xff]
    %v301 = vld [vmem:[#allocation2 + $0xf0] sm:$0xff]
    %v302 = vld [vmem:[#allocation2 + $0xf8] sm:$0xff]
    %v303 = vld [vmem:[#allocation2 + $0x108] sm:$0xff]
    %v304 = vld [vmem:[#allocation2 + $0x110] sm:$0xff]
    %v305 = vld [vmem:[#allocation2 + $0x120] sm:$0xff]
    %v306 = vld [vmem:[#allocation2 + $0x128] sm:$0xff]
    %v307 = vld [vmem:[#allocation2 + $0x138] sm:$0xff]
    %v308 = vld [vmem:[#allocation2 + $0x140] sm:$0xff]
    %v309 = vld [vmem:[#allocation2 + $0x150] sm:$0xff]
    %v310 = vld [vmem:[#allocation2 + $0x158] sm:$0xff]
    %v311 = vld [vmem:[#allocation2 + $0x168] sm:$0xff]
    %v312 = vld [vmem:[#allocation2 + $0x170] sm:$0xff]
    %v313 = vld [vmem:[#allocation2 + $0x1b0] sm:$0xff]
    %v314 = vld [vmem:[#allocation2 + $0x1b8] sm:$0xff]
    %v315 = vld [vmem:[#allocation2 + $0x1c8] sm:$0xff]
    %v316 = vld [vmem:[#allocation2 + $0x1d0] sm:$0xff]
    %v317 = vld [vmem:[#allocation2 + $0x1e0] sm:$0xff]
    %v318 = vld [vmem:[#allocation2 + $0x1e8] sm:$0xff]
    %v319 = vld [vmem:[#allocation2 + $0x1f8] sm:$0xff]
    %v320 = vld [vmem:[#allocation2 + $0x200] sm:$0xff]
    %v321 = vld [vmem:[#allocation2 + $0x210] sm:$0xff]
    %v322 = vld [vmem:[#allocation2 + $0x218] sm:$0xff]
    %v323 = vld [vmem:[#allocation2 + $0x228] sm:$0xff]
    %v324 = vld [vmem:[#allocation2 + $0x230] sm:$0xff]
    %v325 = vld [vmem:[#allocation2 + $0x240] sm:$0xff]
    %v326 = vld [vmem:[#allocation2 + $0x248] sm:$0xff]
    %v327 = vld [vmem:[#allocation2 + $0x258] sm:$0xff]
    %v328 = vld [vmem:[#allocation2 + $0x260] sm:$0xff]
    %v329 = vld [vmem:[#allocation2 + $0x270] sm:$0xff]
    %v330 = vld [vmem:[#allocation2 + $0x278] sm:$0xff]
    %v331 = vld [vmem:[#allocation2 + $0x288] sm:$0xff]
    %v332 = vld [vmem:[#allocation2 + $0x290] sm:$0xff]
    %v333 = vld [vmem:[#allocation2 + $0x2a0] sm:$0xff]
    %v334 = vld [vmem:[#allocation2 + $0x2a8] sm:$0xff]
    %v335 = vld [vmem:[#allocation2 + $0x2b8] sm:$0xff]
    %v336 = vld [vmem:[#allocation2 + $0x2c0] sm:$0xff]
    %v337 = vld [vmem:[#allocation2 + $0x2d0] sm:$0xff]
    %v338 = vld [vmem:[#allocation2 + $0x2d8] sm:$0xff]
    %v339 = vld [vmem:[#allocation2 + $0x2e8] sm:$0xff]
    %v340 = vld [vmem:[#allocation2 + $0x2f0] sm:$0xff]
    %v341 = vld [vmem:[#allocation2 + $0x300] sm:$0xff]
    %v342 = vld [vmem:[#allocation2 + $0x308] sm:$0xff]
    %v343 = vld [vmem:[#allocation2 + $0x318] sm:$0xff]
    %v344 = vld [vmem:[#allocation2 + $0x320] sm:$0xff]
    %v345 = vld [vmem:[#allocation2 + $0x1] sm:$0xff]
    %v346 = vld [vmem:[#allocation2 + $0x9] sm:$0xff]
    %v347 = vld [vmem:[#allocation2 + $0x19] sm:$0xff]
    %v348 = vld [vmem:[#allocation2 + $0x21] sm:$0xff]
    %v349 = vld [vmem:[#allocation2 + $0x31] sm:$0xff]
    %v350 = vld [vmem:[#allocation2 + $0x39] sm:$0xff]
    %v351 = vld [vmem:[#allocation2 + $0x49] sm:$0xff]
    %v352 = vld [vmem:[#allocation2 + $0x51] sm:$0xff]
    %v353 = vld [vmem:[#allocation2 + $0x61] sm:$0xff]
    %v354 = vld [vmem:[#allocation2 + $0x69] sm:$0xff]
    %v355 = vld [vmem:[#allocation2 + $0x79] sm:$0xff]
    %v356 = vld [vmem:[#allocation2 + $0x81] sm:$0xff]
    %v357 = vld [vmem:[#allocation2 + $0x91] sm:$0xff]
    %v358 = vld [vmem:[#allocation2 + $0x99] sm:$0xff]
    %v359 = vld [vmem:[#allocation2 + $0xa9] sm:$0xff]
    %v360 = vld [vmem:[#allocation2 + $0xb1] sm:$0xff]
    %v361 = vld [vmem:[#allocation2 + $0xc1] sm:$0xff]
    %v362 = vld [vmem:[#allocation2 + $0xc9] sm:$0xff]
    %v363 = vld [vmem:[#allocation2 + $0xd9] sm:$0xff]
    %v364 = vld [vmem:[#allocation2 + $0xe1] sm:$0xff]
    %v365 = vld [vmem:[#allocation2 + $0xf1] sm:$0xff]
    %v366 = vld [vmem:[#allocation2 + $0xf9] sm:$0xff]
    %v367 = vld [vmem:[#allocation2 + $0x109] sm:$0xff]
    %v368 = vld [vmem:[#allocation2 + $0x111] sm:$0xff]
    %v369 = vld [vmem:[#allocation2 + $0x121] sm:$0xff]
    %v370 = vld [vmem:[#allocation2 + $0x129] sm:$0xff]
    %v371 = vld [vmem:[#allocation2 + $0x139] sm:$0xff]
    %v372 = vld [vmem:[#allocation2 + $0x141] sm:$0xff]
    %v373 = vld [vmem:[#allocation2 + $0x151] sm:$0xff]
    %v374 = vld [vmem:[#allocation2 + $0x159] sm:$0xff]
    %v375 = vld [vmem:[#allocation2 + $0x169] sm:$0xff]
    %v376 = vld [vmem:[#allocation2 + $0x171] sm:$0xff]
    %v377 = vld [vmem:[#allocation2 + $0x1b1] sm:$0xff]
    %v378 = vld [vmem:[#allocation2 + $0x1b9] sm:$0xff]
    %v379 = vld [vmem:[#allocation2 + $0x1c9] sm:$0xff]
    %v380 = vld [vmem:[#allocation2 + $0x1d1] sm:$0xff]
    %v381 = vld [vmem:[#allocation2 + $0x1e1] sm:$0xff]
    %v382 = vld [vmem:[#allocation2 + $0x1e9] sm:$0xff]
    %v383 = vld [vmem:[#allocation2 + $0x1f9] sm:$0xff]
    %v384 = vld [vmem:[#allocation2 + $0x201] sm:$0xff]
    %v385 = vld [vmem:[#allocation2 + $0x211] sm:$0xff]
    %v386 = vld [vmem:[#allocation2 + $0x219] sm:$0xff]
    %v387 = vld [vmem:[#allocation2 + $0x229] sm:$0xff]
    %v388 = vld [vmem:[#allocation2 + $0x231] sm:$0xff]
    %v389 = vld [vmem:[#allocation2 + $0x241] sm:$0xff]
    %v390 = vld [vmem:[#allocation2 + $0x249] sm:$0xff]
    %v391 = vld [vmem:[#allocation2 + $0x259] sm:$0xff]
    %v392 = vld [vmem:[#allocation2 + $0x261] sm:$0xff]
    %v393 = vld [vmem:[#allocation2 + $0x271] sm:$0xff]
    %v394 = vld [vmem:[#allocation2 + $0x279] sm:$0xff]
    %v395 = vld [vmem:[#allocation2 + $0x289] sm:$0xff]
    %v396 = vld [vmem:[#allocation2 + $0x291] sm:$0xff]
    %v397 = vld [vmem:[#allocation2 + $0x2a1] sm:$0xff]
    %v398 = vld [vmem:[#allocation2 + $0x2a9] sm:$0xff]
    %v399 = vld [vmem:[#allocation2 + $0x2b9] sm:$0xff]
    %v400 = vld [vmem:[#allocation2 + $0x2c1] sm:$0xff]
    %v401 = vld [vmem:[#allocation2 + $0x2d1] sm:$0xff]
    %v402 = vld [vmem:[#allocation2 + $0x2d9] sm:$0xff]
    %v403 = vld [vmem:[#allocation2 + $0x2e9] sm:$0xff]
    %v404 = vld [vmem:[#allocation2 + $0x2f1] sm:$0xff]
    %v405 = vld [vmem:[#allocation2 + $0x301] sm:$0xff]
    %v406 = vld [vmem:[#allocation2 + $0x309] sm:$0xff]
    %v407 = vld [vmem:[#allocation2 + $0x319] sm:$0xff]
    %v408 = vld [vmem:[#allocation2 + $0x321] sm:$0xff]
    %v409 = vld [vmem:[#allocation2 + $0x2] sm:$0xff]
    %v410 = vld [vmem:[#allocation2 + $0xa] sm:$0xff]
    %v411 = vld [vmem:[#allocation2 + $0x1a] sm:$0xff]
    %v412 = vld [vmem:[#allocation2 + $0x22] sm:$0xff]
    %v413 = vld [vmem:[#allocation2 + $0x32] sm:$0xff]
    %v414 = vld [vmem:[#allocation2 + $0x3a] sm:$0xff]
    %v415 = vld [vmem:[#allocation2 + $0x4a] sm:$0xff]
    %v416 = vld [vmem:[#allocation2 + $0x52] sm:$0xff]
    %v417 = vld [vmem:[#allocation2 + $0x62] sm:$0xff]
    %v418 = vld [vmem:[#allocation2 + $0x6a] sm:$0xff]
    %v419 = vld [vmem:[#allocation2 + $0x7a] sm:$0xff]
    %v420 = vld [vmem:[#allocation2 + $0x82] sm:$0xff]
    %v421 = vld [vmem:[#allocation2 + $0x92] sm:$0xff]
    %v422 = vld [vmem:[#allocation2 + $0x9a] sm:$0xff]
    %v423 = vld [vmem:[#allocation2 + $0xaa] sm:$0xff]
    %v424 = vld [vmem:[#allocation2 + $0xb2] sm:$0xff]
    %v425 = vld [vmem:[#allocation2 + $0xc2] sm:$0xff]
    %v426 = vld [vmem:[#allocation2 + $0xca] sm:$0xff]
    %v427 = vld [vmem:[#allocation2 + $0xda] sm:$0xff]
    %v428 = vld [vmem:[#allocation2 + $0xe2] sm:$0xff]
    %v429 = vld [vmem:[#allocation2 + $0xf2] sm:$0xff]
    %v430 = vld [vmem:[#allocation2 + $0xfa] sm:$0xff]
    %v431 = vld [vmem:[#allocation2 + $0x10a] sm:$0xff]
    %v432 = vld [vmem:[#allocation2 + $0x112] sm:$0xff]
    %v433 = vld [vmem:[#allocation2 + $0x122] sm:$0xff]
    %v434 = vld [vmem:[#allocation2 + $0x12a] sm:$0xff]
    %v435 = vld [vmem:[#allocation2 + $0x13a] sm:$0xff]
    %v436 = vld [vmem:[#allocation2 + $0x142] sm:$0xff]
    %v437 = vld [vmem:[#allocation2 + $0x152] sm:$0xff]
    %v438 = vld [vmem:[#allocation2 + $0x15a] sm:$0xff]
    %v439 = vld [vmem:[#allocation2 + $0x16a] sm:$0xff]
    %v440 = vld [vmem:[#allocation2 + $0x172] sm:$0xff]
    %v441 = vld [vmem:[#allocation2 + $0x1b2] sm:$0xff]
    %v442 = vld [vmem:[#allocation2 + $0x1ba] sm:$0xff]
    %v443 = vld [vmem:[#allocation2 + $0x1ca] sm:$0xff]
    %v444 = vld [vmem:[#allocation2 + $0x1d2] sm:$0xff]
    %v445 = vld [vmem:[#allocation2 + $0x1e2] sm:$0xff]
    %v446 = vld [vmem:[#allocation2 + $0x1ea] sm:$0xff]
    %v447 = vld [vmem:[#allocation2 + $0x1fa] sm:$0xff]
    %v448 = vld [vmem:[#allocation2 + $0x202] sm:$0xff]
    %v449 = vld [vmem:[#allocation2 + $0x212] sm:$0xff]
    %v450 = vld [vmem:[#allocation2 + $0x21a] sm:$0xff]
    %v451 = vld [vmem:[#allocation2 + $0x22a] sm:$0xff]
    %v452 = vld [vmem:[#allocation2 + $0x232] sm:$0xff]
    %v453 = vld [vmem:[#allocation2 + $0x242] sm:$0xff]
    %v454 = vld [vmem:[#allocation2 + $0x24a] sm:$0xff]
    %v455 = vld [vmem:[#allocation2 + $0x25a] sm:$0xff]
    %v456 = vld [vmem:[#allocation2 + $0x262] sm:$0xff]
    %v457 = vld [vmem:[#allocation2 + $0x272] sm:$0xff]
    %v458 = vld [vmem:[#allocation2 + $0x27a] sm:$0xff]
    %v459 = vld [vmem:[#allocation2 + $0x28a] sm:$0xff]
    %v460 = vld [vmem:[#allocation2 + $0x292] sm:$0xff]
    %v461 = vld [vmem:[#allocation2 + $0x2a2] sm:$0xff]
    %v462 = vld [vmem:[#allocation2 + $0x2aa] sm:$0xff]
    %v463 = vld [vmem:[#allocation2 + $0x2ba] sm:$0xff]
    %v464 = vld [vmem:[#allocation2 + $0x2c2] sm:$0xff]
    %v465 = vld [vmem:[#allocation2 + $0x2d2] sm:$0xff]
    %v466 = vld [vmem:[#allocation2 + $0x2da] sm:$0xff]
    %v467 = vld [vmem:[#allocation2 + $0x2ea] sm:$0xff]
    %v468 = vld [vmem:[#allocation2 + $0x2f2] sm:$0xff]
    %v469 = vld [vmem:[#allocation2 + $0x302] sm:$0xff]
    %v470 = vld [vmem:[#allocation2 + $0x30a] sm:$0xff]
    %v471 = vld [vmem:[#allocation2 + $0x31a] sm:$0xff]
    %v472 = vld [vmem:[#allocation2 + $0x322] sm:$0xff]
    %v473 = vld [vmem:[%s215] sm:$0xff]
    %v474 = vld [vmem:[%s215 + $0x8] sm:$0xff]
    %v475 = vld [vmem:[%s215 + $0x18] sm:$0xff]
    %v476 = vld [vmem:[%s215 + $0x20] sm:$0xff]
    %v477 = vld [vmem:[%s215 + $0x30] sm:$0xff]
    %v478 = vld [vmem:[%s215 + $0x38] sm:$0xff]
    %v479 = vld [vmem:[%s215 + $0x48] sm:$0xff]
    %v480 = vld [vmem:[%s215 + $0x50] sm:$0xff]
    %v481 = vld [vmem:[%s215 + $0x60] sm:$0xff]
    %v482 = vld [vmem:[%s215 + $0x68] sm:$0xff]
    %v483 = vld [vmem:[%s215 + $0x78] sm:$0xff]
    %v484 = vld [vmem:[%s215 + $0x80] sm:$0xff]
    %v485 = vld [vmem:[%s215 + $0x90] sm:$0xff]
    %v486 = vld [vmem:[%s215 + $0x98] sm:$0xff]
    %v487 = vld [vmem:[%s215 + $0xa8] sm:$0xff]
    %v488 = vld [vmem:[%s215 + $0xb0] sm:$0xff]
    %v489 = vld [vmem:[%s215 + $0xc0] sm:$0xff]
    %v490 = vld [vmem:[%s215 + $0xc8] sm:$0xff]
    %v491 = vld [vmem:[%s215 + $0xd8] sm:$0xff]
    %v492 = vld [vmem:[%s215 + $0xe0] sm:$0xff]
    %v493 = vld [vmem:[%s215 + $0xf0] sm:$0xff]
    %v494 = vld [vmem:[%s215 + $0xf8] sm:$0xff]
    %v495 = vld [vmem:[%s215 + $0x108] sm:$0xff]
    %v496 = vld [vmem:[%s215 + $0x110] sm:$0xff]
    %v497 = vld [vmem:[%s215 + $0x120] sm:$0xff]
    %v498 = vld [vmem:[%s215 + $0x128] sm:$0xff]
    %v499 = vld [vmem:[%s215 + $0x138] sm:$0xff]
    %v500 = vld [vmem:[%s215 + $0x140] sm:$0xff]
    %v501 = vld [vmem:[%s215 + $0x150] sm:$0xff]
    %v502 = vld [vmem:[%s215 + $0x158] sm:$0xff]
    %v503 = vld [vmem:[%s215 + $0x168] sm:$0xff]
    %v504 = vld [vmem:[%s215 + $0x170] sm:$0xff]
    %v505 = vld [vmem:[%s215 + $0x1b0] sm:$0xff]
    %v506 = vld [vmem:[%s215 + $0x1b8] sm:$0xff]
    %v507 = vld [vmem:[%s215 + $0x1c8] sm:$0xff]
    %v508 = vld [vmem:[%s215 + $0x1d0] sm:$0xff]
    %v509 = vld [vmem:[%s215 + $0x1e0] sm:$0xff]
    %v510 = vld [vmem:[%s215 + $0x1e8] sm:$0xff]
    %v511 = vld [vmem:[%s215 + $0x1f8] sm:$0xff]
    %v512 = vld [vmem:[%s215 + $0x200] sm:$0xff]
    %v513 = vld [vmem:[%s215 + $0x210] sm:$0xff]
    %v514 = vld [vmem:[%s215 + $0x218] sm:$0xff]
    %v515 = vld [vmem:[%s215 + $0x228] sm:$0xff]
    %v516 = vld [vmem:[%s215 + $0x230] sm:$0xff]
    %v517 = vld [vmem:[%s215 + $0x240] sm:$0xff]
    %v518 = vld [vmem:[%s215 + $0x248] sm:$0xff]
    %v519 = vld [vmem:[%s215 + $0x258] sm:$0xff]
    %v520 = vld [vmem:[%s215 + $0x260] sm:$0xff]
    %v521 = vld [vmem:[%s215 + $0x270] sm:$0xff]
    %v522 = vld [vmem:[%s215 + $0x278] sm:$0xff]
    %v523 = vld [vmem:[%s215 + $0x288] sm:$0xff]
    %v524 = vld [vmem:[%s215 + $0x290] sm:$0xff]
    %v525 = vld [vmem:[%s215 + $0x2a0] sm:$0xff]
    %v526 = vld [vmem:[%s215 + $0x2a8] sm:$0xff]
    %v527 = vld [vmem:[%s215 + $0x2b8] sm:$0xff]
    %v528 = vld [vmem:[%s215 + $0x2c0] sm:$0xff]
    %v529 = vld [vmem:[%s215 + $0x2d0] sm:$0xff]
    %v530 = vld [vmem:[%s215 + $0x2d8] sm:$0xff]
    %v531 = vld [vmem:[%s215 + $0x2e8] sm:$0xff]
    %v532 = vld [vmem:[%s215 + $0x2f0] sm:$0xff]
    %v533 = vld [vmem:[%s215 + $0x300] sm:$0xff]
    %v534 = vld [vmem:[%s215 + $0x308] sm:$0xff]
    %v535 = vld [vmem:[%s215 + $0x318] sm:$0xff]
    %v536 = vld [vmem:[%s215 + $0x320] sm:$0xff]
    %v537 = vld [vmem:[%s215 + $0x1] sm:$0xff]
    %v538 = vld [vmem:[%s215 + $0x9] sm:$0xff]
    %v539 = vld [vmem:[%s215 + $0x19] sm:$0xff]
    %v540 = vld [vmem:[%s215 + $0x21] sm:$0xff]
    %v541 = vld [vmem:[%s215 + $0x31] sm:$0xff]
    %v542 = vld [vmem:[%s215 + $0x39] sm:$0xff]
    %v543 = vld [vmem:[%s215 + $0x49] sm:$0xff]
    %v544 = vld [vmem:[%s215 + $0x51] sm:$0xff]
    %v545 = vld [vmem:[%s215 + $0x61] sm:$0xff]
    %v546 = vld [vmem:[%s215 + $0x69] sm:$0xff]
    %v547 = vld [vmem:[%s215 + $0x79] sm:$0xff]
    %v548 = vld [vmem:[%s215 + $0x81] sm:$0xff]
    %v549 = vld [vmem:[%s215 + $0x91] sm:$0xff]
    %v550 = vld [vmem:[%s215 + $0x99] sm:$0xff]
    %v551 = vld [vmem:[%s215 + $0xa9] sm:$0xff]
    %v552 = vld [vmem:[%s215 + $0xb1] sm:$0xff]
    %v553 = vld [vmem:[%s215 + $0xc1] sm:$0xff]
    %v554 = vld [vmem:[%s215 + $0xc9] sm:$0xff]
    %v555 = vld [vmem:[%s215 + $0xd9] sm:$0xff]
    %v556 = vld [vmem:[%s215 + $0xe1] sm:$0xff]
    %v557 = vld [vmem:[%s215 + $0xf1] sm:$0xff]
    %v558 = vld [vmem:[%s215 + $0xf9] sm:$0xff]
    %v559 = vld [vmem:[%s215 + $0x109] sm:$0xff]
    %v560 = vld [vmem:[%s215 + $0x111] sm:$0xff]
    %v561 = vld [vmem:[%s215 + $0x121] sm:$0xff]
    %v562 = vld [vmem:[%s215 + $0x129] sm:$0xff]
    %v563 = vld [vmem:[%s215 + $0x139] sm:$0xff]
    %v564 = vld [vmem:[%s215 + $0x141] sm:$0xff]
    %v565 = vld [vmem:[%s215 + $0x151] sm:$0xff]
    %v566 = vld [vmem:[%s215 + $0x159] sm:$0xff]
    %v567 = vld [vmem:[%s215 + $0x169] sm:$0xff]
    %v568 = vld [vmem:[%s215 + $0x171] sm:$0xff]
    %v569 = vld [vmem:[%s215 + $0x1b1] sm:$0xff]
    %v570 = vld [vmem:[%s215 + $0x1b9] sm:$0xff]
    %v571 = vld [vmem:[%s215 + $0x1c9] sm:$0xff]
    %v572 = vld [vmem:[%s215 + $0x1d1] sm:$0xff]
    %v573 = vld [vmem:[%s215 + $0x1e1] sm:$0xff]
    %v574 = vld [vmem:[%s215 + $0x1e9] sm:$0xff]
    %v575 = vld [vmem:[%s215 + $0x1f9] sm:$0xff]
    %v576 = vld [vmem:[%s215 + $0x201] sm:$0xff]
    %v577 = vld [vmem:[%s215 + $0x211] sm:$0xff]
    %v578 = vld [vmem:[%s215 + $0x219] sm:$0xff]
    %v579 = vld [vmem:[%s215 + $0x229] sm:$0xff]
    %v580 = vld [vmem:[%s215 + $0x231] sm:$0xff]
    %v581 = vld [vmem:[%s215 + $0x241] sm:$0xff]
    %v582 = vld [vmem:[%s215 + $0x249] sm:$0xff]
    %v583 = vld [vmem:[%s215 + $0x259] sm:$0xff]
    %v584 = vld [vmem:[%s215 + $0x261] sm:$0xff]
    %v585 = vld [vmem:[%s215 + $0x271] sm:$0xff]
    %v586 = vld [vmem:[%s215 + $0x279] sm:$0xff]
    %v587 = vld [vmem:[%s215 + $0x289] sm:$0xff]
    %v588 = vld [vmem:[%s215 + $0x291] sm:$0xff]
    %v589 = vld [vmem:[%s215 + $0x2a1] sm:$0xff]
    %v590 = vld [vmem:[%s215 + $0x2a9] sm:$0xff]
    %v591 = vld [vmem:[%s215 + $0x2b9] sm:$0xff]
    %v592 = vld [vmem:[%s215 + $0x2c1] sm:$0xff]
    %v593 = vld [vmem:[%s215 + $0x2d1] sm:$0xff]
    %v594 = vld [vmem:[%s215 + $0x2d9] sm:$0xff]
    %v595 = vld [vmem:[%s215 + $0x2e9] sm:$0xff]
    %v596 = vld [vmem:[%s215 + $0x2f1] sm:$0xff]
    %v597 = vld [vmem:[%s215 + $0x301] sm:$0xff]
    %v598 = vld [vmem:[%s215 + $0x309] sm:$0xff]
    %v599 = vld [vmem:[%s215 + $0x319] sm:$0xff]
    %v600 = vld [vmem:[%s215 + $0x321] sm:$0xff]
    %v601 = vld [vmem:[%s215 + $0x2] sm:$0xff]
    %v602 = vld [vmem:[%s215 + $0xa] sm:$0xff]
    %v603 = vld [vmem:[%s215 + $0x1a] sm:$0xff]
    %v604 = vld [vmem:[%s215 + $0x22] sm:$0xff]
    %v605 = vld [vmem:[%s215 + $0x32] sm:$0xff]
    %v606 = vld [vmem:[%s215 + $0x3a] sm:$0xff]
    %v607 = vld [vmem:[%s215 + $0x4a] sm:$0xff]
    %v608 = vld [vmem:[%s215 + $0x52] sm:$0xff]
    %v609 = vld [vmem:[%s215 + $0x62] sm:$0xff]
    %v610 = vld [vmem:[%s215 + $0x6a] sm:$0xff]
    %v611 = vld [vmem:[%s215 + $0x7a] sm:$0xff]
    %v612 = vld [vmem:[%s215 + $0x82] sm:$0xff]
    %v613 = vld [vmem:[%s215 + $0x92] sm:$0xff]
    %v614 = vld [vmem:[%s215 + $0x9a] sm:$0xff]
    %v615 = vld [vmem:[%s215 + $0xaa] sm:$0xff]
    %v616 = vld [vmem:[%s215 + $0xb2] sm:$0xff]
    %v617 = vld [vmem:[%s215 + $0xc2] sm:$0xff]
    %v618 = vld [vmem:[%s215 + $0xca] sm:$0xff]
    %v619 = vld [vmem:[%s215 + $0xda] sm:$0xff]
    %v620 = vld [vmem:[%s215 + $0xe2] sm:$0xff]
    %v621 = vld [vmem:[%s215 + $0xf2] sm:$0xff]
    %v622 = vld [vmem:[%s215 + $0xfa] sm:$0xff]
    %v623 = vld [vmem:[%s215 + $0x10a] sm:$0xff]
    %v624 = vld [vmem:[%s215 + $0x112] sm:$0xff]
    %v625 = vld [vmem:[%s215 + $0x122] sm:$0xff]
    %v626 = vld [vmem:[%s215 + $0x12a] sm:$0xff]
    %v627 = vld [vmem:[%s215 + $0x13a] sm:$0xff]
    %v628 = vld [vmem:[%s215 + $0x142] sm:$0xff]
    %v629 = vld [vmem:[%s215 + $0x152] sm:$0xff]
    %v630 = vld [vmem:[%s215 + $0x15a] sm:$0xff]
    %v631 = vld [vmem:[%s215 + $0x16a] sm:$0xff]
    %v632 = vld [vmem:[%s215 + $0x172] sm:$0xff]
    %v633 = vld [vmem:[%s215 + $0x1b2] sm:$0xff]
    %v634 = vld [vmem:[%s215 + $0x1ba] sm:$0xff]
    %v635 = vld [vmem:[%s215 + $0x1ca] sm:$0xff]
    %v636 = vld [vmem:[%s215 + $0x1d2] sm:$0xff]
    %v637 = vld [vmem:[%s215 + $0x1e2] sm:$0xff]
    %v638 = vld [vmem:[%s215 + $0x1ea] sm:$0xff]
    %v639 = vld [vmem:[%s215 + $0x1fa] sm:$0xff]
    %v640 = vld [vmem:[%s215 + $0x202] sm:$0xff]
    %v641 = vld [vmem:[%s215 + $0x212] sm:$0xff]
    %v642 = vld [vmem:[%s215 + $0x21a] sm:$0xff]
    %v643 = vld [vmem:[%s215 + $0x22a] sm:$0xff]
    %v644 = vld [vmem:[%s215 + $0x232] sm:$0xff]
    %v645 = vld [vmem:[%s215 + $0x242] sm:$0xff]
    %v646 = vld [vmem:[%s215 + $0x24a] sm:$0xff]
    %v647 = vld [vmem:[%s215 + $0x25a] sm:$0xff]
    %v648 = vld [vmem:[%s215 + $0x262] sm:$0xff]
    %v649 = vld [vmem:[%s215 + $0x272] sm:$0xff]
    %v650 = vld [vmem:[%s215 + $0x27a] sm:$0xff]
    %v651 = vld [vmem:[%s215 + $0x28a] sm:$0xff]
    %v652 = vld [vmem:[%s215 + $0x292] sm:$0xff]
    %v653 = vld [vmem:[%s215 + $0x2a2] sm:$0xff]
    %v654 = vld [vmem:[%s215 + $0x2aa] sm:$0xff]
    %v655 = vld [vmem:[%s215 + $0x2ba] sm:$0xff]
    %v656 = vld [vmem:[%s215 + $0x2c2] sm:$0xff]
    %v657 = vld [vmem:[%s215 + $0x2d2] sm:$0xff]
    %v658 = vld [vmem:[%s215 + $0x2da] sm:$0xff]
    %v659 = vld [vmem:[%s215 + $0x2ea] sm:$0xff]
    %v660 = vld [vmem:[%s215 + $0x2f2] sm:$0xff]
    %v661 = vld [vmem:[%s215 + $0x302] sm:$0xff]
    %v662 = vld [vmem:[%s215 + $0x30a] sm:$0xff]
    %v663 = vld [vmem:[%s215 + $0x31a] sm:$0xff]
    %v664 = vld [vmem:[%s215 + $0x322] sm:$0xff]
    %s665 = scalar_lea.vmem [#allocation2], 48
    %v666 = vld [vmem:[%s665] sm:$0xff]
    %v667 = vld [vmem:[%s665 + $0x8] sm:$0xff]
    %v668 = vld [vmem:[%s665 + $0x18] sm:$0xff]
    %v669 = vld [vmem:[%s665 + $0x20] sm:$0xff]
    %v670 = vld [vmem:[%s665 + $0x30] sm:$0xff]
    %v671 = vld [vmem:[%s665 + $0x38] sm:$0xff]
    %v672 = vld [vmem:[%s665 + $0x48] sm:$0xff]
    %v673 = vld [vmem:[%s665 + $0x50] sm:$0xff]
    %v674 = vld [vmem:[%s665 + $0x60] sm:$0xff]
    %v675 = vld [vmem:[%s665 + $0x68] sm:$0xff]
    %v676 = vld [vmem:[%s665 + $0x78] sm:$0xff]
    %v677 = vld [vmem:[%s665 + $0x80] sm:$0xff]
    %v678 = vld [vmem:[%s665 + $0x90] sm:$0xff]
    %v679 = vld [vmem:[%s665 + $0x98] sm:$0xff]
    %v680 = vld [vmem:[%s665 + $0xa8] sm:$0xff]
    %v681 = vld [vmem:[%s665 + $0xb0] sm:$0xff]
    %v682 = vld [vmem:[%s665 + $0xc0] sm:$0xff]
    %v683 = vld [vmem:[%s665 + $0xc8] sm:$0xff]
    %v684 = vld [vmem:[%s665 + $0xd8] sm:$0xff]
    %v685 = vld [vmem:[%s665 + $0xe0] sm:$0xff]
    %v686 = vld [vmem:[%s665 + $0xf0] sm:$0xff]
    %v687 = vld [vmem:[%s665 + $0xf8] sm:$0xff]
    %v688 = vld [vmem:[%s665 + $0x108] sm:$0xff]
    %v689 = vld [vmem:[%s665 + $0x110] sm:$0xff]
    %v690 = vld [vmem:[%s665 + $0x120] sm:$0xff]
    %v691 = vld [vmem:[%s665 + $0x128] sm:$0xff]
    %v692 = vld [vmem:[%s665 + $0x138] sm:$0xff]
    %v693 = vld [vmem:[%s665 + $0x140] sm:$0xff]
    %v694 = vld [vmem:[%s665 + $0x150] sm:$0xff]
    %v695 = vld [vmem:[%s665 + $0x158] sm:$0xff]
    %v696 = vld [vmem:[%s665 + $0x168] sm:$0xff]
    %v697 = vld [vmem:[%s665 + $0x170] sm:$0xff]
    %v698 = vld [vmem:[%s665 + $0x1b0] sm:$0xff]
    %v699 = vld [vmem:[%s665 + $0x1b8] sm:$0xff]
    %v700 = vld [vmem:[%s665 + $0x1c8] sm:$0xff]
    %v701 = vld [vmem:[%s665 + $0x1d0] sm:$0xff]
    %v702 = vld [vmem:[%s665 + $0x1e0] sm:$0xff]
    %v703 = vld [vmem:[%s665 + $0x1e8] sm:$0xff]
    %v704 = vld [vmem:[%s665 + $0x1f8] sm:$0xff]
    %v705 = vld [vmem:[%s665 + $0x200] sm:$0xff]
    %v706 = vld [vmem:[%s665 + $0x210] sm:$0xff]
    %v707 = vld [vmem:[%s665 + $0x218] sm:$0xff]
    %v708 = vld [vmem:[%s665 + $0x228] sm:$0xff]
    %v709 = vld [vmem:[%s665 + $0x230] sm:$0xff]
    %v710 = vld [vmem:[%s665 + $0x240] sm:$0xff]
    %v711 = vld [vmem:[%s665 + $0x248] sm:$0xff]
    %v712 = vld [vmem:[%s665 + $0x258] sm:$0xff]
    %v713 = vld [vmem:[%s665 + $0x260] sm:$0xff]
    %v714 = vld [vmem:[%s665 + $0x270] sm:$0xff]
    %v715 = vld [vmem:[%s665 + $0x278] sm:$0xff]
    %v716 = vld [vmem:[%s665 + $0x288] sm:$0xff]
    %v717 = vld [vmem:[%s665 + $0x290] sm:$0xff]
    %v718 = vld [vmem:[%s665 + $0x2a0] sm:$0xff]
    %v719 = vld [vmem:[%s665 + $0x2a8] sm:$0xff]
    %v720 = vld [vmem:[%s665 + $0x2b8] sm:$0xff]
    %v721 = vld [vmem:[%s665 + $0x2c0] sm:$0xff]
    %v722 = vld [vmem:[%s665 + $0x2d0] sm:$0xff]
    %v723 = vld [vmem:[%s665 + $0x2d8] sm:$0xff]
    %v724 = vld [vmem:[%s665 + $0x2e8] sm:$0xff]
    %v725 = vld [vmem:[%s665 + $0x2f0] sm:$0xff]
    %v726 = vld [vmem:[%s665 + $0x300] sm:$0xff]
    %v727 = vld [vmem:[%s665 + $0x308] sm:$0xff]
    %v728 = vld [vmem:[%s665 + $0x318] sm:$0xff]
    %v729 = vld [vmem:[%s665 + $0x320] sm:$0xff]
    %v730 = vld [vmem:[%s665 + $0x1] sm:$0xff]
    %v731 = vld [vmem:[%s665 + $0x9] sm:$0xff]
    %v732 = vld [vmem:[%s665 + $0x19] sm:$0xff]
    %v733 = vld [vmem:[%s665 + $0x21] sm:$0xff]
    %v734 = vld [vmem:[%s665 + $0x31] sm:$0xff]
    %v735 = vld [vmem:[%s665 + $0x39] sm:$0xff]
    %v736 = vld [vmem:[%s665 + $0x49] sm:$0xff]
    %v737 = vld [vmem:[%s665 + $0x51] sm:$0xff]
    %v738 = vld [vmem:[%s665 + $0x61] sm:$0xff]
    %v739 = vld [vmem:[%s665 + $0x69] sm:$0xff]
    %v740 = vld [vmem:[%s665 + $0x79] sm:$0xff]
    %v741 = vld [vmem:[%s665 + $0x81] sm:$0xff]
    %v742 = vld [vmem:[%s665 + $0x91] sm:$0xff]
    %v743 = vld [vmem:[%s665 + $0x99] sm:$0xff]
    %v744 = vld [vmem:[%s665 + $0xa9] sm:$0xff]
    %v745 = vld [vmem:[%s665 + $0xb1] sm:$0xff]
    %v746 = vld [vmem:[%s665 + $0xc1] sm:$0xff]
    %v747 = vld [vmem:[%s665 + $0xc9] sm:$0xff]
    %v748 = vld [vmem:[%s665 + $0xd9] sm:$0xff]
    %v749 = vld [vmem:[%s665 + $0xe1] sm:$0xff]
    %v750 = vld [vmem:[%s665 + $0xf1] sm:$0xff]
    %v751 = vld [vmem:[%s665 + $0xf9] sm:$0xff]
    %v752 = vld [vmem:[%s665 + $0x109] sm:$0xff]
    %v753 = vld [vmem:[%s665 + $0x111] sm:$0xff]
    %v754 = vld [vmem:[%s665 + $0x121] sm:$0xff]
    %v755 = vld [vmem:[%s665 + $0x129] sm:$0xff]
    %v756 = vld [vmem:[%s665 + $0x139] sm:$0xff]
    %v757 = vld [vmem:[%s665 + $0x141] sm:$0xff]
    %v758 = vld [vmem:[%s665 + $0x151] sm:$0xff]
    %v759 = vld [vmem:[%s665 + $0x159] sm:$0xff]
    %v760 = vld [vmem:[%s665 + $0x169] sm:$0xff]
    %v761 = vld [vmem:[%s665 + $0x171] sm:$0xff]
    %v762 = vld [vmem:[%s665 + $0x1b1] sm:$0xff]
    %v763 = vld [vmem:[%s665 + $0x1b9] sm:$0xff]
    %v764 = vld [vmem:[%s665 + $0x1c9] sm:$0xff]
    %v765 = vld [vmem:[%s665 + $0x1d1] sm:$0xff]
    %v766 = vld [vmem:[%s665 + $0x1e1] sm:$0xff]
    %v767 = vld [vmem:[%s665 + $0x1e9] sm:$0xff]
    %v768 = vld [vmem:[%s665 + $0x1f9] sm:$0xff]
    %v769 = vld [vmem:[%s665 + $0x201] sm:$0xff]
    %v770 = vld [vmem:[%s665 + $0x211] sm:$0xff]
    %v771 = vld [vmem:[%s665 + $0x219] sm:$0xff]
    %v772 = vld [vmem:[%s665 + $0x229] sm:$0xff]
    %v773 = vld [vmem:[%s665 + $0x231] sm:$0xff]
    %v774 = vld [vmem:[%s665 + $0x241] sm:$0xff]
    %v775 = vld [vmem:[%s665 + $0x249] sm:$0xff]
    %v776 = vld [vmem:[%s665 + $0x259] sm:$0xff]
    %v777 = vld [vmem:[%s665 + $0x261] sm:$0xff]
    %v778 = vld [vmem:[%s665 + $0x271] sm:$0xff]
    %v779 = vld [vmem:[%s665 + $0x279] sm:$0xff]
    %v780 = vld [vmem:[%s665 + $0x289] sm:$0xff]
    %v781 = vld [vmem:[%s665 + $0x291] sm:$0xff]
    %v782 = vld [vmem:[%s665 + $0x2a1] sm:$0xff]
    %v783 = vld [vmem:[%s665 + $0x2a9] sm:$0xff]
    %v784 = vld [vmem:[%s665 + $0x2b9] sm:$0xff]
    %v785 = vld [vmem:[%s665 + $0x2c1] sm:$0xff]
    %v786 = vld [vmem:[%s665 + $0x2d1] sm:$0xff]
    %v787 = vld [vmem:[%s665 + $0x2d9] sm:$0xff]
    %v788 = vld [vmem:[%s665 + $0x2e9] sm:$0xff]
    %v789 = vld [vmem:[%s665 + $0x2f1] sm:$0xff]
    %v790 = vld [vmem:[%s665 + $0x301] sm:$0xff]
    %v791 = vld [vmem:[%s665 + $0x309] sm:$0xff]
    %v792 = vld [vmem:[%s665 + $0x319] sm:$0xff]
    %v793 = vld [vmem:[%s665 + $0x321] sm:$0xff]
    %v794 = vld [vmem:[%s665 + $0x2] sm:$0xff]
    %v795 = vld [vmem:[%s665 + $0xa] sm:$0xff]
    %v796 = vld [vmem:[%s665 + $0x1a] sm:$0xff]
    %v797 = vld [vmem:[%s665 + $0x22] sm:$0xff]
    %v798 = vld [vmem:[%s665 + $0x32] sm:$0xff]
    %v799 = vld [vmem:[%s665 + $0x3a] sm:$0xff]
    %v800 = vld [vmem:[%s665 + $0x4a] sm:$0xff]
    %v801 = vld [vmem:[%s665 + $0x52] sm:$0xff]
    %v802 = vld [vmem:[%s665 + $0x62] sm:$0xff]
    %v803 = vld [vmem:[%s665 + $0x6a] sm:$0xff]
    %v804 = vld [vmem:[%s665 + $0x7a] sm:$0xff]
    %v805 = vld [vmem:[%s665 + $0x82] sm:$0xff]
    %v806 = vld [vmem:[%s665 + $0x92] sm:$0xff]
    %v807 = vld [vmem:[%s665 + $0x9a] sm:$0xff]
    %v808 = vld [vmem:[%s665 + $0xaa] sm:$0xff]
    %v809 = vld [vmem:[%s665 + $0xb2] sm:$0xff]
    %v810 = vld [vmem:[%s665 + $0xc2] sm:$0xff]
    %v811 = vld [vmem:[%s665 + $0xca] sm:$0xff]
    %v812 = vld [vmem:[%s665 + $0xda] sm:$0xff]
    %v813 = vld [vmem:[%s665 + $0xe2] sm:$0xff]
    %v814 = vld [vmem:[%s665 + $0xf2] sm:$0xff]
    %v815 = vld [vmem:[%s665 + $0xfa] sm:$0xff]
    %v816 = vld [vmem:[%s665 + $0x10a] sm:$0xff]
    %v817 = vld [vmem:[%s665 + $0x112] sm:$0xff]
    %v818 = vld [vmem:[%s665 + $0x122] sm:$0xff]
    %v819 = vld [vmem:[%s665 + $0x12a] sm:$0xff]
    %v820 = vld [vmem:[%s665 + $0x13a] sm:$0xff]
    %v821 = vld [vmem:[%s665 + $0x142] sm:$0xff]
    %v822 = vld [vmem:[%s665 + $0x152] sm:$0xff]
    %v823 = vld [vmem:[%s665 + $0x15a] sm:$0xff]
    %v824 = vld [vmem:[%s665 + $0x16a] sm:$0xff]
    %v825 = vld [vmem:[%s665 + $0x172] sm:$0xff]
    %v826 = vld [vmem:[%s665 + $0x1b2] sm:$0xff]
    %v827 = vld [vmem:[%s665 + $0x1ba] sm:$0xff]
    %v828 = vld [vmem:[%s665 + $0x1ca] sm:$0xff]
    %v829 = vld [vmem:[%s665 + $0x1d2] sm:$0xff]
    %v830 = vld [vmem:[%s665 + $0x1e2] sm:$0xff]
    %v831 = vld [vmem:[%s665 + $0x1ea] sm:$0xff]
    %v832 = vld [vmem:[%s665 + $0x1fa] sm:$0xff]
    %v833 = vld [vmem:[%s665 + $0x202] sm:$0xff]
    %v834 = vld [vmem:[%s665 + $0x212] sm:$0xff]
    %v835 = vld [vmem:[%s665 + $0x21a] sm:$0xff]
    %v836 = vld [vmem:[%s665 + $0x22a] sm:$0xff]
    %v837 = vld [vmem:[%s665 + $0x232] sm:$0xff]
    %v838 = vld [vmem:[%s665 + $0x242] sm:$0xff]
    %v839 = vld [vmem:[%s665 + $0x24a] sm:$0xff]
    %v840 = vld [vmem:[%s665 + $0x25a] sm:$0xff]
    %v841 = vld [vmem:[%s665 + $0x262] sm:$0xff]
    %v842 = vld [vmem:[%s665 + $0x272] sm:$0xff]
    %v843 = vld [vmem:[%s665 + $0x27a] sm:$0xff]
    %v844 = vld [vmem:[%s665 + $0x28a] sm:$0xff]
    %v845 = vld [vmem:[%s665 + $0x292] sm:$0xff]
    %v846 = vld [vmem:[%s665 + $0x2a2] sm:$0xff]
    %v847 = vld [vmem:[%s665 + $0x2aa] sm:$0xff]
    %v848 = vld [vmem:[%s665 + $0x2ba] sm:$0xff]
    %v849 = vld [vmem:[%s665 + $0x2c2] sm:$0xff]
    %v850 = vld [vmem:[%s665 + $0x2d2] sm:$0xff]
    %v851 = vld [vmem:[%s665 + $0x2da] sm:$0xff]
    %v852 = vld [vmem:[%s665 + $0x2ea] sm:$0xff]
    %v853 = vld [vmem:[%s665 + $0x2f2] sm:$0xff]
    %v854 = vld [vmem:[%s665 + $0x302] sm:$0xff]
    %v855 = vld [vmem:[%s665 + $0x30a] sm:$0xff]
    %v856 = vld [vmem:[%s665 + $0x31a] sm:$0xff]
    %v857 = vld [vmem:[%s665 + $0x322] sm:$0xff]
    %922 = vrot.lane.b32.xlu0 %v345, 3
    %v923 = vpop.permute.xlu0 %922
    %924 = vrot.lane.b32.xlu0 %v346, 3
    %v925 = vpop.permute.xlu0 %924
    %926 = vrot.lane.b32.xlu0 %v347, 3
    %v927 = vpop.permute.xlu0 %926
    %928 = vrot.lane.b32.xlu0 %v348, 3
    %v929 = vpop.permute.xlu0 %928
    %930 = vrot.lane.b32.xlu0 %v349, 3
    %v931 = vpop.permute.xlu0 %930
    %932 = vrot.lane.b32.xlu0 %v350, 3
    %v933 = vpop.permute.xlu0 %932
    %934 = vrot.lane.b32.xlu0 %v351, 3
    %v935 = vpop.permute.xlu0 %934
    %936 = vrot.lane.b32.xlu0 %v352, 3
    %v937 = vpop.permute.xlu0 %936
    %938 = vrot.lane.b32.xlu0 %v353, 3
    %v939 = vpop.permute.xlu0 %938
    %940 = vrot.lane.b32.xlu0 %v354, 3
    %v941 = vpop.permute.xlu0 %940
    %942 = vrot.lane.b32.xlu0 %v355, 3
    %v943 = vpop.permute.xlu0 %942
    %944 = vrot.lane.b32.xlu0 %v356, 3
    %v945 = vpop.permute.xlu0 %944
    %946 = vrot.lane.b32.xlu0 %v357, 3
    %v947 = vpop.permute.xlu0 %946
    %948 = vrot.lane.b32.xlu0 %v358, 3
    %v949 = vpop.permute.xlu0 %948
    %950 = vrot.lane.b32.xlu0 %v359, 3
    %v951 = vpop.permute.xlu0 %950
    %952 = vrot.lane.b32.xlu0 %v360, 3
    %v953 = vpop.permute.xlu0 %952
    %954 = vrot.lane.b32.xlu0 %v361, 3
    %v955 = vpop.permute.xlu0 %954
    %956 = vrot.lane.b32.xlu0 %v362, 3
    %v957 = vpop.permute.xlu0 %956
    %958 = vrot.lane.b32.xlu0 %v363, 3
    %v959 = vpop.permute.xlu0 %958
    %960 = vrot.lane.b32.xlu0 %v364, 3
    %v961 = vpop.permute.xlu0 %960
    %962 = vrot.lane.b32.xlu0 %v365, 3
    %v963 = vpop.permute.xlu0 %962
    %964 = vrot.lane.b32.xlu0 %v366, 3
    %v965 = vpop.permute.xlu0 %964
    %966 = vrot.lane.b32.xlu0 %v367, 3
    %v967 = vpop.permute.xlu0 %966
    %968 = vrot.lane.b32.xlu0 %v368, 3
    %v969 = vpop.permute.xlu0 %968
    %970 = vrot.lane.b32.xlu0 %v369, 3
    %v971 = vpop.permute.xlu0 %970
    %972 = vrot.lane.b32.xlu0 %v370, 3
    %v973 = vpop.permute.xlu0 %972
    %974 = vrot.lane.b32.xlu0 %v371, 3
    %v975 = vpop.permute.xlu0 %974
    %976 = vrot.lane.b32.xlu0 %v372, 3
    %v977 = vpop.permute.xlu0 %976
    %978 = vrot.lane.b32.xlu0 %v373, 3
    %v979 = vpop.permute.xlu0 %978
    %980 = vrot.lane.b32.xlu0 %v374, 3
    %v981 = vpop.permute.xlu0 %980
    %982 = vrot.lane.b32.xlu0 %v375, 3
    %v983 = vpop.permute.xlu0 %982
    %984 = vrot.lane.b32.xlu0 %v376, 3
    %v985 = vpop.permute.xlu0 %984
    %986 = vrot.lane.b32.xlu0 %v377, 3
    %v987 = vpop.permute.xlu0 %986
    %988 = vrot.lane.b32.xlu0 %v378, 3
    %v989 = vpop.permute.xlu0 %988
    %990 = vrot.lane.b32.xlu0 %v379, 3
    %v991 = vpop.permute.xlu0 %990
    %992 = vrot.lane.b32.xlu0 %v380, 3
    %v993 = vpop.permute.xlu0 %992
    %994 = vrot.lane.b32.xlu0 %v381, 3
    %v995 = vpop.permute.xlu0 %994
    %996 = vrot.lane.b32.xlu0 %v382, 3
    %v997 = vpop.permute.xlu0 %996
    %998 = vrot.lane.b32.xlu0 %v383, 3
    %v999 = vpop.permute.xlu0 %998
    %1000 = vrot.lane.b32.xlu0 %v384, 3
    %v1001 = vpop.permute.xlu0 %1000
    %1002 = vrot.lane.b32.xlu0 %v385, 3
    %v1003 = vpop.permute.xlu0 %1002
    %1004 = vrot.lane.b32.xlu0 %v386, 3
    %v1005 = vpop.permute.xlu0 %1004
    %1006 = vrot.lane.b32.xlu0 %v387, 3
    %v1007 = vpop.permute.xlu0 %1006
    %1008 = vrot.lane.b32.xlu0 %v388, 3
    %v1009 = vpop.permute.xlu0 %1008
    %1010 = vrot.lane.b32.xlu0 %v389, 3
    %v1011 = vpop.permute.xlu0 %1010
    %1012 = vrot.lane.b32.xlu0 %v390, 3
    %v1013 = vpop.permute.xlu0 %1012
    %1014 = vrot.lane.b32.xlu0 %v391, 3
    %v1015 = vpop.permute.xlu0 %1014
    %1016 = vrot.lane.b32.xlu0 %v392, 3
    %v1017 = vpop.permute.xlu0 %1016
    %1018 = vrot.lane.b32.xlu0 %v393, 3
    %v1019 = vpop.permute.xlu0 %1018
    %1020 = vrot.lane.b32.xlu0 %v394, 3
    %v1021 = vpop.permute.xlu0 %1020
    %1022 = vrot.lane.b32.xlu0 %v395, 3
    %v1023 = vpop.permute.xlu0 %1022
    %1024 = vrot.lane.b32.xlu0 %v396, 3
    %v1025 = vpop.permute.xlu0 %1024
    %1026 = vrot.lane.b32.xlu0 %v397, 3
    %v1027 = vpop.permute.xlu0 %1026
    %1028 = vrot.lane.b32.xlu0 %v398, 3
    %v1029 = vpop.permute.xlu0 %1028
    %1030 = vrot.lane.b32.xlu0 %v399, 3
    %v1031 = vpop.permute.xlu0 %1030
    %1032 = vrot.lane.b32.xlu0 %v400, 3
    %v1033 = vpop.permute.xlu0 %1032
    %1034 = vrot.lane.b32.xlu0 %v401, 3
    %v1035 = vpop.permute.xlu0 %1034
    %1036 = vrot.lane.b32.xlu0 %v402, 3
    %v1037 = vpop.permute.xlu0 %1036
    %1038 = vrot.lane.b32.xlu0 %v403, 3
    %v1039 = vpop.permute.xlu0 %1038
    %1040 = vrot.lane.b32.xlu0 %v404, 3
    %v1041 = vpop.permute.xlu0 %1040
    %1042 = vrot.lane.b32.xlu0 %v405, 3
    %v1043 = vpop.permute.xlu0 %1042
    %1044 = vrot.lane.b32.xlu0 %v406, 3
    %v1045 = vpop.permute.xlu0 %1044
    %1046 = vrot.lane.b32.xlu0 %v407, 3
    %v1047 = vpop.permute.xlu0 %1046
    %1048 = vrot.lane.b32.xlu0 %v408, 3
    %v1049 = vpop.permute.xlu0 %1048
    %1178 = vrot.lane.b32.xlu0 %v409, 6
    %v1179 = vpop.permute.xlu0 %1178
    %1180 = vrot.lane.b32.xlu0 %v410, 6
    %v1181 = vpop.permute.xlu0 %1180
    %1182 = vrot.lane.b32.xlu0 %v411, 6
    %v1183 = vpop.permute.xlu0 %1182
    %1184 = vrot.lane.b32.xlu0 %v412, 6
    %v1185 = vpop.permute.xlu0 %1184
    %1186 = vrot.lane.b32.xlu0 %v413, 6
    %v1187 = vpop.permute.xlu0 %1186
    %1188 = vrot.lane.b32.xlu0 %v414, 6
    %v1189 = vpop.permute.xlu0 %1188
    %1190 = vrot.lane.b32.xlu0 %v415, 6
    %v1191 = vpop.permute.xlu0 %1190
    %1192 = vrot.lane.b32.xlu0 %v416, 6
    %v1193 = vpop.permute.xlu0 %1192
    %1194 = vrot.lane.b32.xlu0 %v417, 6
    %v1195 = vpop.permute.xlu0 %1194
    %1196 = vrot.lane.b32.xlu0 %v418, 6
    %v1197 = vpop.permute.xlu0 %1196
    %1198 = vrot.lane.b32.xlu0 %v419, 6
    %v1199 = vpop.permute.xlu0 %1198
    %1200 = vrot.lane.b32.xlu0 %v420, 6
    %v1201 = vpop.permute.xlu0 %1200
    %1202 = vrot.lane.b32.xlu0 %v421, 6
    %v1203 = vpop.permute.xlu0 %1202
    %1204 = vrot.lane.b32.xlu0 %v422, 6
    %v1205 = vpop.permute.xlu0 %1204
    %1206 = vrot.lane.b32.xlu0 %v423, 6
    %v1207 = vpop.permute.xlu0 %1206
    %1208 = vrot.lane.b32.xlu0 %v424, 6
    %v1209 = vpop.permute.xlu0 %1208
    %1210 = vrot.lane.b32.xlu0 %v425, 6
    %v1211 = vpop.permute.xlu0 %1210
    %1212 = vrot.lane.b32.xlu0 %v426, 6
    %v1213 = vpop.permute.xlu0 %1212
    %1214 = vrot.lane.b32.xlu0 %v427, 6
    %v1215 = vpop.permute.xlu0 %1214
    %1216 = vrot.lane.b32.xlu0 %v428, 6
    %v1217 = vpop.permute.xlu0 %1216
    %1218 = vrot.lane.b32.xlu0 %v429, 6
    %v1219 = vpop.permute.xlu0 %1218
    %1220 = vrot.lane.b32.xlu0 %v430, 6
    %v1221 = vpop.permute.xlu0 %1220
    %1222 = vrot.lane.b32.xlu0 %v431, 6
    %v1223 = vpop.permute.xlu0 %1222
    %1224 = vrot.lane.b32.xlu0 %v432, 6
    %v1225 = vpop.permute.xlu0 %1224
    %1226 = vrot.lane.b32.xlu0 %v433, 6
    %v1227 = vpop.permute.xlu0 %1226
    %1228 = vrot.lane.b32.xlu0 %v434, 6
    %v1229 = vpop.permute.xlu0 %1228
    %1230 = vrot.lane.b32.xlu0 %v435, 6
    %v1231 = vpop.permute.xlu0 %1230
    %1232 = vrot.lane.b32.xlu0 %v436, 6
    %v1233 = vpop.permute.xlu0 %1232
    %1234 = vrot.lane.b32.xlu0 %v437, 6
    %v1235 = vpop.permute.xlu0 %1234
    %1236 = vrot.lane.b32.xlu0 %v438, 6
    %v1237 = vpop.permute.xlu0 %1236
    %1238 = vrot.lane.b32.xlu0 %v439, 6
    %v1239 = vpop.permute.xlu0 %1238
    %1240 = vrot.lane.b32.xlu0 %v440, 6
    %v1241 = vpop.permute.xlu0 %1240
    %1242 = vrot.lane.b32.xlu0 %v441, 6
    %v1243 = vpop.permute.xlu0 %1242
    %1244 = vrot.lane.b32.xlu0 %v442, 6
    %v1245 = vpop.permute.xlu0 %1244
    %1246 = vrot.lane.b32.xlu0 %v443, 6
    %v1247 = vpop.permute.xlu0 %1246
    %1248 = vrot.lane.b32.xlu0 %v444, 6
    %v1249 = vpop.permute.xlu0 %1248
    %1250 = vrot.lane.b32.xlu0 %v445, 6
    %v1251 = vpop.permute.xlu0 %1250
    %1252 = vrot.lane.b32.xlu0 %v446, 6
    %v1253 = vpop.permute.xlu0 %1252
    %1254 = vrot.lane.b32.xlu0 %v447, 6
    %v1255 = vpop.permute.xlu0 %1254
    %1256 = vrot.lane.b32.xlu0 %v448, 6
    %v1257 = vpop.permute.xlu0 %1256
    %1258 = vrot.lane.b32.xlu0 %v449, 6
    %v1259 = vpop.permute.xlu0 %1258
    %1260 = vrot.lane.b32.xlu0 %v450, 6
    %v1261 = vpop.permute.xlu0 %1260
    %1262 = vrot.lane.b32.xlu0 %v451, 6
    %v1263 = vpop.permute.xlu0 %1262
    %1264 = vrot.lane.b32.xlu0 %v452, 6
    %v1265 = vpop.permute.xlu0 %1264
    %1266 = vrot.lane.b32.xlu0 %v453, 6
    %v1267 = vpop.permute.xlu0 %1266
    %1268 = vrot.lane.b32.xlu0 %v454, 6
    %v1269 = vpop.permute.xlu0 %1268
    %1270 = vrot.lane.b32.xlu0 %v455, 6
    %v1271 = vpop.permute.xlu0 %1270
    %1272 = vrot.lane.b32.xlu0 %v456, 6
    %v1273 = vpop.permute.xlu0 %1272
    %1274 = vrot.lane.b32.xlu0 %v457, 6
    %v1275 = vpop.permute.xlu0 %1274
    %1276 = vrot.lane.b32.xlu0 %v458, 6
    %v1277 = vpop.permute.xlu0 %1276
    %1278 = vrot.lane.b32.xlu0 %v459, 6
    %v1279 = vpop.permute.xlu0 %1278
    %1280 = vrot.lane.b32.xlu0 %v460, 6
    %v1281 = vpop.permute.xlu0 %1280
    %1282 = vrot.lane.b32.xlu0 %v461, 6
    %v1283 = vpop.permute.xlu0 %1282
    %1284 = vrot.lane.b32.xlu0 %v462, 6
    %v1285 = vpop.permute.xlu0 %1284
    %1286 = vrot.lane.b32.xlu0 %v463, 6
    %v1287 = vpop.permute.xlu0 %1286
    %1288 = vrot.lane.b32.xlu0 %v464, 6
    %v1289 = vpop.permute.xlu0 %1288
    %1290 = vrot.lane.b32.xlu0 %v465, 6
    %v1291 = vpop.permute.xlu0 %1290
    %1292 = vrot.lane.b32.xlu0 %v466, 6
    %v1293 = vpop.permute.xlu0 %1292
    %1294 = vrot.lane.b32.xlu0 %v467, 6
    %v1295 = vpop.permute.xlu0 %1294
    %1296 = vrot.lane.b32.xlu0 %v468, 6
    %v1297 = vpop.permute.xlu0 %1296
    %1298 = vrot.lane.b32.xlu0 %v469, 6
    %v1299 = vpop.permute.xlu0 %1298
    %1300 = vrot.lane.b32.xlu0 %v470, 6
    %v1301 = vpop.permute.xlu0 %1300
    %1302 = vrot.lane.b32.xlu0 %v471, 6
    %v1303 = vpop.permute.xlu0 %1302
    %1304 = vrot.lane.b32.xlu0 %v472, 6
    %v1305 = vpop.permute.xlu0 %1304
    %1434 = vrot.lane.b32.xlu0 %v473, 9
    %v1435 = vpop.permute.xlu0 %1434
    %1436 = vrot.lane.b32.xlu0 %v474, 9
    %v1437 = vpop.permute.xlu0 %1436
    %1438 = vrot.lane.b32.xlu0 %v475, 9
    %v1439 = vpop.permute.xlu0 %1438
    %1440 = vrot.lane.b32.xlu0 %v476, 9
    %v1441 = vpop.permute.xlu0 %1440
    %1442 = vrot.lane.b32.xlu0 %v477, 9
    %v1443 = vpop.permute.xlu0 %1442
    %1444 = vrot.lane.b32.xlu0 %v478, 9
    %v1445 = vpop.permute.xlu0 %1444
    %1446 = vrot.lane.b32.xlu0 %v479, 9
    %v1447 = vpop.permute.xlu0 %1446
    %1448 = vrot.lane.b32.xlu0 %v480, 9
    %v1449 = vpop.permute.xlu0 %1448
    %1450 = vrot.lane.b32.xlu0 %v481, 9
    %v1451 = vpop.permute.xlu0 %1450
    %1452 = vrot.lane.b32.xlu0 %v482, 9
    %v1453 = vpop.permute.xlu0 %1452
    %1454 = vrot.lane.b32.xlu0 %v483, 9
    %v1455 = vpop.permute.xlu0 %1454
    %1456 = vrot.lane.b32.xlu0 %v484, 9
    %v1457 = vpop.permute.xlu0 %1456
    %1458 = vrot.lane.b32.xlu0 %v485, 9
    %v1459 = vpop.permute.xlu0 %1458
    %1460 = vrot.lane.b32.xlu0 %v486, 9
    %v1461 = vpop.permute.xlu0 %1460
    %1462 = vrot.lane.b32.xlu0 %v487, 9
    %v1463 = vpop.permute.xlu0 %1462
    %1464 = vrot.lane.b32.xlu0 %v488, 9
    %v1465 = vpop.permute.xlu0 %1464
    %1466 = vrot.lane.b32.xlu0 %v489, 9
    %v1467 = vpop.permute.xlu0 %1466
    %1468 = vrot.lane.b32.xlu0 %v490, 9
    %v1469 = vpop.permute.xlu0 %1468
    %1470 = vrot.lane.b32.xlu0 %v491, 9
    %v1471 = vpop.permute.xlu0 %1470
    %1472 = vrot.lane.b32.xlu0 %v492, 9
    %v1473 = vpop.permute.xlu0 %1472
    %1474 = vrot.lane.b32.xlu0 %v493, 9
    %v1475 = vpop.permute.xlu0 %1474
    %1476 = vrot.lane.b32.xlu0 %v494, 9
    %v1477 = vpop.permute.xlu0 %1476
    %1478 = vrot.lane.b32.xlu0 %v495, 9
    %v1479 = vpop.permute.xlu0 %1478
    %1480 = vrot.lane.b32.xlu0 %v496, 9
    %v1481 = vpop.permute.xlu0 %1480
    %1482 = vrot.lane.b32.xlu0 %v497, 9
    %v1483 = vpop.permute.xlu0 %1482
    %1484 = vrot.lane.b32.xlu0 %v498, 9
    %v1485 = vpop.permute.xlu0 %1484
    %1486 = vrot.lane.b32.xlu0 %v499, 9
    %v1487 = vpop.permute.xlu0 %1486
    %1488 = vrot.lane.b32.xlu0 %v500, 9
    %v1489 = vpop.permute.xlu0 %1488
    %1490 = vrot.lane.b32.xlu0 %v501, 9
    %v1491 = vpop.permute.xlu0 %1490
    %1492 = vrot.lane.b32.xlu0 %v502, 9
    %v1493 = vpop.permute.xlu0 %1492
    %1494 = vrot.lane.b32.xlu0 %v503, 9
    %v1495 = vpop.permute.xlu0 %1494
    %1496 = vrot.lane.b32.xlu0 %v504, 9
    %v1497 = vpop.permute.xlu0 %1496
    %1498 = vrot.lane.b32.xlu0 %v505, 9
    %v1499 = vpop.permute.xlu0 %1498
    %1500 = vrot.lane.b32.xlu0 %v506, 9
    %v1501 = vpop.permute.xlu0 %1500
    %1502 = vrot.lane.b32.xlu0 %v507, 9
    %v1503 = vpop.permute.xlu0 %1502
    %1504 = vrot.lane.b32.xlu0 %v508, 9
    %v1505 = vpop.permute.xlu0 %1504
    %1506 = vrot.lane.b32.xlu0 %v509, 9
    %v1507 = vpop.permute.xlu0 %1506
    %1508 = vrot.lane.b32.xlu0 %v510, 9
    %v1509 = vpop.permute.xlu0 %1508
    %1510 = vrot.lane.b32.xlu0 %v511, 9
    %v1511 = vpop.permute.xlu0 %1510
    %1512 = vrot.lane.b32.xlu0 %v512, 9
    %v1513 = vpop.permute.xlu0 %1512
    %1514 = vrot.lane.b32.xlu0 %v513, 9
    %v1515 = vpop.permute.xlu0 %1514
    %1516 = vrot.lane.b32.xlu0 %v514, 9
    %v1517 = vpop.permute.xlu0 %1516
    %1518 = vrot.lane.b32.xlu0 %v515, 9
    %v1519 = vpop.permute.xlu0 %1518
    %1520 = vrot.lane.b32.xlu0 %v516, 9
    %v1521 = vpop.permute.xlu0 %1520
    %1522 = vrot.lane.b32.xlu0 %v517, 9
    %v1523 = vpop.permute.xlu0 %1522
    %1524 = vrot.lane.b32.xlu0 %v518, 9
    %v1525 = vpop.permute.xlu0 %1524
    %1526 = vrot.lane.b32.xlu0 %v519, 9
    %v1527 = vpop.permute.xlu0 %1526
    %1528 = vrot.lane.b32.xlu0 %v520, 9
    %v1529 = vpop.permute.xlu0 %1528
    %1530 = vrot.lane.b32.xlu0 %v521, 9
    %v1531 = vpop.permute.xlu0 %1530
    %1532 = vrot.lane.b32.xlu0 %v522, 9
    %v1533 = vpop.permute.xlu0 %1532
    %1534 = vrot.lane.b32.xlu0 %v523, 9
    %v1535 = vpop.permute.xlu0 %1534
    %1536 = vrot.lane.b32.xlu0 %v524, 9
    %v1537 = vpop.permute.xlu0 %1536
    %1538 = vrot.lane.b32.xlu0 %v525, 9
    %v1539 = vpop.permute.xlu0 %1538
    %1540 = vrot.lane.b32.xlu0 %v526, 9
    %v1541 = vpop.permute.xlu0 %1540
    %1542 = vrot.lane.b32.xlu0 %v527, 9
    %v1543 = vpop.permute.xlu0 %1542
    %1544 = vrot.lane.b32.xlu0 %v528, 9
    %v1545 = vpop.permute.xlu0 %1544
    %1546 = vrot.lane.b32.xlu0 %v529, 9
    %v1547 = vpop.permute.xlu0 %1546
    %1548 = vrot.lane.b32.xlu0 %v530, 9
    %v1549 = vpop.permute.xlu0 %1548
    %1550 = vrot.lane.b32.xlu0 %v531, 9
    %v1551 = vpop.permute.xlu0 %1550
    %1552 = vrot.lane.b32.xlu0 %v532, 9
    %v1553 = vpop.permute.xlu0 %1552
    %1554 = vrot.lane.b32.xlu0 %v533, 9
    %v1555 = vpop.permute.xlu0 %1554
    %1556 = vrot.lane.b32.xlu0 %v534, 9
    %v1557 = vpop.permute.xlu0 %1556
    %1558 = vrot.lane.b32.xlu0 %v535, 9
    %v1559 = vpop.permute.xlu0 %1558
    %1560 = vrot.lane.b32.xlu0 %v536, 9
    %v1561 = vpop.permute.xlu0 %1560
    %1690 = vrot.lane.b32.xlu0 %v537, 12
    %v1691 = vpop.permute.xlu0 %1690
    %1692 = vrot.lane.b32.xlu0 %v538, 12
    %v1693 = vpop.permute.xlu0 %1692
    %1694 = vrot.lane.b32.xlu0 %v539, 12
    %v1695 = vpop.permute.xlu0 %1694
    %1696 = vrot.lane.b32.xlu0 %v540, 12
    %v1697 = vpop.permute.xlu0 %1696
    %1698 = vrot.lane.b32.xlu0 %v541, 12
    %v1699 = vpop.permute.xlu0 %1698
    %1700 = vrot.lane.b32.xlu0 %v542, 12
    %v1701 = vpop.permute.xlu0 %1700
    %1702 = vrot.lane.b32.xlu0 %v543, 12
    %v1703 = vpop.permute.xlu0 %1702
    %1704 = vrot.lane.b32.xlu0 %v544, 12
    %v1705 = vpop.permute.xlu0 %1704
    %1706 = vrot.lane.b32.xlu0 %v545, 12
    %v1707 = vpop.permute.xlu0 %1706
    %1708 = vrot.lane.b32.xlu0 %v546, 12
    %v1709 = vpop.permute.xlu0 %1708
    %1710 = vrot.lane.b32.xlu0 %v547, 12
    %v1711 = vpop.permute.xlu0 %1710
    %1712 = vrot.lane.b32.xlu0 %v548, 12
    %v1713 = vpop.permute.xlu0 %1712
    %1714 = vrot.lane.b32.xlu0 %v549, 12
    %v1715 = vpop.permute.xlu0 %1714
    %1716 = vrot.lane.b32.xlu0 %v550, 12
    %v1717 = vpop.permute.xlu0 %1716
    %1718 = vrot.lane.b32.xlu0 %v551, 12
    %v1719 = vpop.permute.xlu0 %1718
    %1720 = vrot.lane.b32.xlu0 %v552, 12
    %v1721 = vpop.permute.xlu0 %1720
    %1722 = vrot.lane.b32.xlu0 %v553, 12
    %v1723 = vpop.permute.xlu0 %1722
    %1724 = vrot.lane.b32.xlu0 %v554, 12
    %v1725 = vpop.permute.xlu0 %1724
    %1726 = vrot.lane.b32.xlu0 %v555, 12
    %v1727 = vpop.permute.xlu0 %1726
    %1728 = vrot.lane.b32.xlu0 %v556, 12
    %v1729 = vpop.permute.xlu0 %1728
    %1730 = vrot.lane.b32.xlu0 %v557, 12
    %v1731 = vpop.permute.xlu0 %1730
    %1732 = vrot.lane.b32.xlu0 %v558, 12
    %v1733 = vpop.permute.xlu0 %1732
    %1734 = vrot.lane.b32.xlu0 %v559, 12
    %v1735 = vpop.permute.xlu0 %1734
    %1736 = vrot.lane.b32.xlu0 %v560, 12
    %v1737 = vpop.permute.xlu0 %1736
    %1738 = vrot.lane.b32.xlu0 %v561, 12
    %v1739 = vpop.permute.xlu0 %1738
    %1740 = vrot.lane.b32.xlu0 %v562, 12
    %v1741 = vpop.permute.xlu0 %1740
    %1742 = vrot.lane.b32.xlu0 %v563, 12
    %v1743 = vpop.permute.xlu0 %1742
    %1744 = vrot.lane.b32.xlu0 %v564, 12
    %v1745 = vpop.permute.xlu0 %1744
    %1746 = vrot.lane.b32.xlu0 %v565, 12
    %v1747 = vpop.permute.xlu0 %1746
    %1748 = vrot.lane.b32.xlu0 %v566, 12
    %v1749 = vpop.permute.xlu0 %1748
    %1750 = vrot.lane.b32.xlu0 %v567, 12
    %v1751 = vpop.permute.xlu0 %1750
    %1752 = vrot.lane.b32.xlu0 %v568, 12
    %v1753 = vpop.permute.xlu0 %1752
    %1754 = vrot.lane.b32.xlu0 %v569, 12
    %v1755 = vpop.permute.xlu0 %1754
    %1756 = vrot.lane.b32.xlu0 %v570, 12
    %v1757 = vpop.permute.xlu0 %1756
    %1758 = vrot.lane.b32.xlu0 %v571, 12
    %v1759 = vpop.permute.xlu0 %1758
    %1760 = vrot.lane.b32.xlu0 %v572, 12
    %v1761 = vpop.permute.xlu0 %1760
    %1762 = vrot.lane.b32.xlu0 %v573, 12
    %v1763 = vpop.permute.xlu0 %1762
    %1764 = vrot.lane.b32.xlu0 %v574, 12
    %v1765 = vpop.permute.xlu0 %1764
    %1766 = vrot.lane.b32.xlu0 %v575, 12
    %v1767 = vpop.permute.xlu0 %1766
    %1768 = vrot.lane.b32.xlu0 %v576, 12
    %v1769 = vpop.permute.xlu0 %1768
    %1770 = vrot.lane.b32.xlu0 %v577, 12
    %v1771 = vpop.permute.xlu0 %1770
    %1772 = vrot.lane.b32.xlu0 %v578, 12
    %v1773 = vpop.permute.xlu0 %1772
    %1774 = vrot.lane.b32.xlu0 %v579, 12
    %v1775 = vpop.permute.xlu0 %1774
    %1776 = vrot.lane.b32.xlu0 %v580, 12
    %v1777 = vpop.permute.xlu0 %1776
    %1778 = vrot.lane.b32.xlu0 %v581, 12
    %v1779 = vpop.permute.xlu0 %1778
    %1780 = vrot.lane.b32.xlu0 %v582, 12
    %v1781 = vpop.permute.xlu0 %1780
    %1782 = vrot.lane.b32.xlu0 %v583, 12
    %v1783 = vpop.permute.xlu0 %1782
    %1784 = vrot.lane.b32.xlu0 %v584, 12
    %v1785 = vpop.permute.xlu0 %1784
    %1786 = vrot.lane.b32.xlu0 %v585, 12
    %v1787 = vpop.permute.xlu0 %1786
    %1788 = vrot.lane.b32.xlu0 %v586, 12
    %v1789 = vpop.permute.xlu0 %1788
    %1790 = vrot.lane.b32.xlu0 %v587, 12
    %v1791 = vpop.permute.xlu0 %1790
    %1792 = vrot.lane.b32.xlu0 %v588, 12
    %v1793 = vpop.permute.xlu0 %1792
    %1794 = vrot.lane.b32.xlu0 %v589, 12
    %v1795 = vpop.permute.xlu0 %1794
    %1796 = vrot.lane.b32.xlu0 %v590, 12
    %v1797 = vpop.permute.xlu0 %1796
    %1798 = vrot.lane.b32.xlu0 %v591, 12
    %v1799 = vpop.permute.xlu0 %1798
    %1800 = vrot.lane.b32.xlu0 %v592, 12
    %v1801 = vpop.permute.xlu0 %1800
    %1802 = vrot.lane.b32.xlu0 %v593, 12
    %v1803 = vpop.permute.xlu0 %1802
    %1804 = vrot.lane.b32.xlu0 %v594, 12
    %v1805 = vpop.permute.xlu0 %1804
    %1806 = vrot.lane.b32.xlu0 %v595, 12
    %v1807 = vpop.permute.xlu0 %1806
    %1808 = vrot.lane.b32.xlu0 %v596, 12
    %v1809 = vpop.permute.xlu0 %1808
    %1810 = vrot.lane.b32.xlu0 %v597, 12
    %v1811 = vpop.permute.xlu0 %1810
    %1812 = vrot.lane.b32.xlu0 %v598, 12
    %v1813 = vpop.permute.xlu0 %1812
    %1814 = vrot.lane.b32.xlu0 %v599, 12
    %v1815 = vpop.permute.xlu0 %1814
    %1816 = vrot.lane.b32.xlu0 %v600, 12
    %v1817 = vpop.permute.xlu0 %1816
    %1946 = vrot.lane.b32.xlu0 %v601, 15
    %v1947 = vpop.permute.xlu0 %1946
    %1948 = vrot.lane.b32.xlu0 %v602, 15
    %v1949 = vpop.permute.xlu0 %1948
    %1950 = vrot.lane.b32.xlu0 %v603, 15
    %v1951 = vpop.permute.xlu0 %1950
    %1952 = vrot.lane.b32.xlu0 %v604, 15
    %v1953 = vpop.permute.xlu0 %1952
    %1954 = vrot.lane.b32.xlu0 %v605, 15
    %v1955 = vpop.permute.xlu0 %1954
    %1956 = vrot.lane.b32.xlu0 %v606, 15
    %v1957 = vpop.permute.xlu0 %1956
    %1958 = vrot.lane.b32.xlu0 %v607, 15
    %v1959 = vpop.permute.xlu0 %1958
    %1960 = vrot.lane.b32.xlu0 %v608, 15
    %v1961 = vpop.permute.xlu0 %1960
    %1962 = vrot.lane.b32.xlu0 %v609, 15
    %v1963 = vpop.permute.xlu0 %1962
    %1964 = vrot.lane.b32.xlu0 %v610, 15
    %v1965 = vpop.permute.xlu0 %1964
    %1966 = vrot.lane.b32.xlu0 %v611, 15
    %v1967 = vpop.permute.xlu0 %1966
    %1968 = vrot.lane.b32.xlu0 %v612, 15
    %v1969 = vpop.permute.xlu0 %1968
    %1970 = vrot.lane.b32.xlu0 %v613, 15
    %v1971 = vpop.permute.xlu0 %1970
    %1972 = vrot.lane.b32.xlu0 %v614, 15
    %v1973 = vpop.permute.xlu0 %1972
    %1974 = vrot.lane.b32.xlu0 %v615, 15
    %v1975 = vpop.permute.xlu0 %1974
    %1976 = vrot.lane.b32.xlu0 %v616, 15
    %v1977 = vpop.permute.xlu0 %1976
    %1978 = vrot.lane.b32.xlu0 %v617, 15
    %v1979 = vpop.permute.xlu0 %1978
    %1980 = vrot.lane.b32.xlu0 %v618, 15
    %v1981 = vpop.permute.xlu0 %1980
    %1982 = vrot.lane.b32.xlu0 %v619, 15
    %v1983 = vpop.permute.xlu0 %1982
    %1984 = vrot.lane.b32.xlu0 %v620, 15
    %v1985 = vpop.permute.xlu0 %1984
    %1986 = vrot.lane.b32.xlu0 %v621, 15
    %v1987 = vpop.permute.xlu0 %1986
    %1988 = vrot.lane.b32.xlu0 %v622, 15
    %v1989 = vpop.permute.xlu0 %1988
    %1990 = vrot.lane.b32.xlu0 %v623, 15
    %v1991 = vpop.permute.xlu0 %1990
    %1992 = vrot.lane.b32.xlu0 %v624, 15
    %v1993 = vpop.permute.xlu0 %1992
    %1994 = vrot.lane.b32.xlu0 %v625, 15
    %v1995 = vpop.permute.xlu0 %1994
    %1996 = vrot.lane.b32.xlu0 %v626, 15
    %v1997 = vpop.permute.xlu0 %1996
    %1998 = vrot.lane.b32.xlu0 %v627, 15
    %v1999 = vpop.permute.xlu0 %1998
    %2000 = vrot.lane.b32.xlu0 %v628, 15
    %v2001 = vpop.permute.xlu0 %2000
    %2002 = vrot.lane.b32.xlu0 %v629, 15
    %v2003 = vpop.permute.xlu0 %2002
    %2004 = vrot.lane.b32.xlu0 %v630, 15
    %v2005 = vpop.permute.xlu0 %2004
    %2006 = vrot.lane.b32.xlu0 %v631, 15
    %v2007 = vpop.permute.xlu0 %2006
    %2008 = vrot.lane.b32.xlu0 %v632, 15
    %v2009 = vpop.permute.xlu0 %2008
    %2010 = vrot.lane.b32.xlu0 %v633, 15
    %v2011 = vpop.permute.xlu0 %2010
    %2012 = vrot.lane.b32.xlu0 %v634, 15
    %v2013 = vpop.permute.xlu0 %2012
    %2014 = vrot.lane.b32.xlu0 %v635, 15
    %v2015 = vpop.permute.xlu0 %2014
    %2016 = vrot.lane.b32.xlu0 %v636, 15
    %v2017 = vpop.permute.xlu0 %2016
    %2018 = vrot.lane.b32.xlu0 %v637, 15
    %v2019 = vpop.permute.xlu0 %2018
    %2020 = vrot.lane.b32.xlu0 %v638, 15
    %v2021 = vpop.permute.xlu0 %2020
    %2022 = vrot.lane.b32.xlu0 %v639, 15
    %v2023 = vpop.permute.xlu0 %2022
    %2024 = vrot.lane.b32.xlu0 %v640, 15
    %v2025 = vpop.permute.xlu0 %2024
    %2026 = vrot.lane.b32.xlu0 %v641, 15
    %v2027 = vpop.permute.xlu0 %2026
    %2028 = vrot.lane.b32.xlu0 %v642, 15
    %v2029 = vpop.permute.xlu0 %2028
    %2030 = vrot.lane.b32.xlu0 %v643, 15
    %v2031 = vpop.permute.xlu0 %2030
    %2032 = vrot.lane.b32.xlu0 %v644, 15
    %v2033 = vpop.permute.xlu0 %2032
    %2034 = vrot.lane.b32.xlu0 %v645, 15
    %v2035 = vpop.permute.xlu0 %2034
    %2036 = vrot.lane.b32.xlu0 %v646, 15
    %v2037 = vpop.permute.xlu0 %2036
    %2038 = vrot.lane.b32.xlu0 %v647, 15
    %v2039 = vpop.permute.xlu0 %2038
    %2040 = vrot.lane.b32.xlu0 %v648, 15
    %v2041 = vpop.permute.xlu0 %2040
    %2042 = vrot.lane.b32.xlu0 %v649, 15
    %v2043 = vpop.permute.xlu0 %2042
    %2044 = vrot.lane.b32.xlu0 %v650, 15
    %v2045 = vpop.permute.xlu0 %2044
    %2046 = vrot.lane.b32.xlu0 %v651, 15
    %v2047 = vpop.permute.xlu0 %2046
    %2048 = vrot.lane.b32.xlu0 %v652, 15
    %v2049 = vpop.permute.xlu0 %2048
    %2050 = vrot.lane.b32.xlu0 %v653, 15
    %v2051 = vpop.permute.xlu0 %2050
    %2052 = vrot.lane.b32.xlu0 %v654, 15
    %v2053 = vpop.permute.xlu0 %2052
    %2054 = vrot.lane.b32.xlu0 %v655, 15
    %v2055 = vpop.permute.xlu0 %2054
    %2056 = vrot.lane.b32.xlu0 %v656, 15
    %v2057 = vpop.permute.xlu0 %2056
    %2058 = vrot.lane.b32.xlu0 %v657, 15
    %v2059 = vpop.permute.xlu0 %2058
    %2060 = vrot.lane.b32.xlu0 %v658, 15
    %v2061 = vpop.permute.xlu0 %2060
    %2062 = vrot.lane.b32.xlu0 %v659, 15
    %v2063 = vpop.permute.xlu0 %2062
    %2064 = vrot.lane.b32.xlu0 %v660, 15
    %v2065 = vpop.permute.xlu0 %2064
    %2066 = vrot.lane.b32.xlu0 %v661, 15
    %v2067 = vpop.permute.xlu0 %2066
    %2068 = vrot.lane.b32.xlu0 %v662, 15
    %v2069 = vpop.permute.xlu0 %2068
    %2070 = vrot.lane.b32.xlu0 %v663, 15
    %v2071 = vpop.permute.xlu0 %2070
    %2072 = vrot.lane.b32.xlu0 %v664, 15
    %v2073 = vpop.permute.xlu0 %2072
    %2202 = vrot.lane.b32.xlu0 %v666, 18
    %v2203 = vpop.permute.xlu0 %2202
    %2204 = vrot.lane.b32.xlu0 %v667, 18
    %v2205 = vpop.permute.xlu0 %2204
    %2206 = vrot.lane.b32.xlu0 %v668, 18
    %v2207 = vpop.permute.xlu0 %2206
    %2208 = vrot.lane.b32.xlu0 %v669, 18
    %v2209 = vpop.permute.xlu0 %2208
    %2210 = vrot.lane.b32.xlu0 %v670, 18
    %v2211 = vpop.permute.xlu0 %2210
    %2212 = vrot.lane.b32.xlu0 %v671, 18
    %v2213 = vpop.permute.xlu0 %2212
    %2214 = vrot.lane.b32.xlu0 %v672, 18
    %v2215 = vpop.permute.xlu0 %2214
    %2216 = vrot.lane.b32.xlu0 %v673, 18
    %v2217 = vpop.permute.xlu0 %2216
    %2218 = vrot.lane.b32.xlu0 %v674, 18
    %v2219 = vpop.permute.xlu0 %2218
    %2220 = vrot.lane.b32.xlu0 %v675, 18
    %v2221 = vpop.permute.xlu0 %2220
    %2222 = vrot.lane.b32.xlu0 %v676, 18
    %v2223 = vpop.permute.xlu0 %2222
    %2224 = vrot.lane.b32.xlu0 %v677, 18
    %v2225 = vpop.permute.xlu0 %2224
    %2226 = vrot.lane.b32.xlu0 %v678, 18
    %v2227 = vpop.permute.xlu0 %2226
    %2228 = vrot.lane.b32.xlu0 %v679, 18
    %v2229 = vpop.permute.xlu0 %2228
    %2230 = vrot.lane.b32.xlu0 %v680, 18
    %v2231 = vpop.permute.xlu0 %2230
    %2232 = vrot.lane.b32.xlu0 %v681, 18
    %v2233 = vpop.permute.xlu0 %2232
    %2234 = vrot.lane.b32.xlu0 %v682, 18
    %v2235 = vpop.permute.xlu0 %2234
    %2236 = vrot.lane.b32.xlu0 %v683, 18
    %v2237 = vpop.permute.xlu0 %2236
    %2238 = vrot.lane.b32.xlu0 %v684, 18
    %v2239 = vpop.permute.xlu0 %2238
    %2240 = vrot.lane.b32.xlu0 %v685, 18
    %v2241 = vpop.permute.xlu0 %2240
    %2242 = vrot.lane.b32.xlu0 %v686, 18
    %v2243 = vpop.permute.xlu0 %2242
    %2244 = vrot.lane.b32.xlu0 %v687, 18
    %v2245 = vpop.permute.xlu0 %2244
    %2246 = vrot.lane.b32.xlu0 %v688, 18
    %v2247 = vpop.permute.xlu0 %2246
    %2248 = vrot.lane.b32.xlu0 %v689, 18
    %v2249 = vpop.permute.xlu0 %2248
    %2250 = vrot.lane.b32.xlu0 %v690, 18
    %v2251 = vpop.permute.xlu0 %2250
    %2252 = vrot.lane.b32.xlu0 %v691, 18
    %v2253 = vpop.permute.xlu0 %2252
    %2254 = vrot.lane.b32.xlu0 %v692, 18
    %v2255 = vpop.permute.xlu0 %2254
    %2256 = vrot.lane.b32.xlu0 %v693, 18
    %v2257 = vpop.permute.xlu0 %2256
    %2258 = vrot.lane.b32.xlu0 %v694, 18
    %v2259 = vpop.permute.xlu0 %2258
    %2260 = vrot.lane.b32.xlu0 %v695, 18
    %v2261 = vpop.permute.xlu0 %2260
    %2262 = vrot.lane.b32.xlu0 %v696, 18
    %v2263 = vpop.permute.xlu0 %2262
    %2264 = vrot.lane.b32.xlu0 %v697, 18
    %v2265 = vpop.permute.xlu0 %2264
    %2266 = vrot.lane.b32.xlu0 %v698, 18
    %v2267 = vpop.permute.xlu0 %2266
    %2268 = vrot.lane.b32.xlu0 %v699, 18
    %v2269 = vpop.permute.xlu0 %2268
    %2270 = vrot.lane.b32.xlu0 %v700, 18
    %v2271 = vpop.permute.xlu0 %2270
    %2272 = vrot.lane.b32.xlu0 %v701, 18
    %v2273 = vpop.permute.xlu0 %2272
    %2274 = vrot.lane.b32.xlu0 %v702, 18
    %v2275 = vpop.permute.xlu0 %2274
    %2276 = vrot.lane.b32.xlu0 %v703, 18
    %v2277 = vpop.permute.xlu0 %2276
    %2278 = vrot.lane.b32.xlu0 %v704, 18
    %v2279 = vpop.permute.xlu0 %2278
    %2280 = vrot.lane.b32.xlu0 %v705, 18
    %v2281 = vpop.permute.xlu0 %2280
    %2282 = vrot.lane.b32.xlu0 %v706, 18
    %v2283 = vpop.permute.xlu0 %2282
    %2284 = vrot.lane.b32.xlu0 %v707, 18
    %v2285 = vpop.permute.xlu0 %2284
    %2286 = vrot.lane.b32.xlu0 %v708, 18
    %v2287 = vpop.permute.xlu0 %2286
    %2288 = vrot.lane.b32.xlu0 %v709, 18
    %v2289 = vpop.permute.xlu0 %2288
    %2290 = vrot.lane.b32.xlu0 %v710, 18
    %v2291 = vpop.permute.xlu0 %2290
    %2292 = vrot.lane.b32.xlu0 %v711, 18
    %v2293 = vpop.permute.xlu0 %2292
    %2294 = vrot.lane.b32.xlu0 %v712, 18
    %v2295 = vpop.permute.xlu0 %2294
    %2296 = vrot.lane.b32.xlu0 %v713, 18
    %v2297 = vpop.permute.xlu0 %2296
    %2298 = vrot.lane.b32.xlu0 %v714, 18
    %v2299 = vpop.permute.xlu0 %2298
    %2300 = vrot.lane.b32.xlu0 %v715, 18
    %v2301 = vpop.permute.xlu0 %2300
    %2302 = vrot.lane.b32.xlu0 %v716, 18
    %v2303 = vpop.permute.xlu0 %2302
    %2304 = vrot.lane.b32.xlu0 %v717, 18
    %v2305 = vpop.permute.xlu0 %2304
    %2306 = vrot.lane.b32.xlu0 %v718, 18
    %v2307 = vpop.permute.xlu0 %2306
    %2308 = vrot.lane.b32.xlu0 %v719, 18
    %v2309 = vpop.permute.xlu0 %2308
    %2310 = vrot.lane.b32.xlu0 %v720, 18
    %v2311 = vpop.permute.xlu0 %2310
    %2312 = vrot.lane.b32.xlu0 %v721, 18
    %v2313 = vpop.permute.xlu0 %2312
    %2314 = vrot.lane.b32.xlu0 %v722, 18
    %v2315 = vpop.permute.xlu0 %2314
    %2316 = vrot.lane.b32.xlu0 %v723, 18
    %v2317 = vpop.permute.xlu0 %2316
    %2318 = vrot.lane.b32.xlu0 %v724, 18
    %v2319 = vpop.permute.xlu0 %2318
    %2320 = vrot.lane.b32.xlu0 %v725, 18
    %v2321 = vpop.permute.xlu0 %2320
    %2322 = vrot.lane.b32.xlu0 %v726, 18
    %v2323 = vpop.permute.xlu0 %2322
    %2324 = vrot.lane.b32.xlu0 %v727, 18
    %v2325 = vpop.permute.xlu0 %2324
    %2326 = vrot.lane.b32.xlu0 %v728, 18
    %v2327 = vpop.permute.xlu0 %2326
    %2328 = vrot.lane.b32.xlu0 %v729, 18
    %v2329 = vpop.permute.xlu0 %2328
    %2458 = vrot.lane.b32.xlu0 %v730, 21
    %v2459 = vpop.permute.xlu0 %2458
    %2460 = vrot.lane.b32.xlu0 %v731, 21
    %v2461 = vpop.permute.xlu0 %2460
    %2462 = vrot.lane.b32.xlu0 %v732, 21
    %v2463 = vpop.permute.xlu0 %2462
    %2464 = vrot.lane.b32.xlu0 %v733, 21
    %v2465 = vpop.permute.xlu0 %2464
    %2466 = vrot.lane.b32.xlu0 %v734, 21
    %v2467 = vpop.permute.xlu0 %2466
    %2468 = vrot.lane.b32.xlu0 %v735, 21
    %v2469 = vpop.permute.xlu0 %2468
    %2470 = vrot.lane.b32.xlu0 %v736, 21
    %v2471 = vpop.permute.xlu0 %2470
    %2472 = vrot.lane.b32.xlu0 %v737, 21
    %v2473 = vpop.permute.xlu0 %2472
    %2474 = vrot.lane.b32.xlu0 %v738, 21
    %v2475 = vpop.permute.xlu0 %2474
    %2476 = vrot.lane.b32.xlu0 %v739, 21
    %v2477 = vpop.permute.xlu0 %2476
    %2478 = vrot.lane.b32.xlu0 %v740, 21
    %v2479 = vpop.permute.xlu0 %2478
    %2480 = vrot.lane.b32.xlu0 %v741, 21
    %v2481 = vpop.permute.xlu0 %2480
    %2482 = vrot.lane.b32.xlu0 %v742, 21
    %v2483 = vpop.permute.xlu0 %2482
    %2484 = vrot.lane.b32.xlu0 %v743, 21
    %v2485 = vpop.permute.xlu0 %2484
    %2486 = vrot.lane.b32.xlu0 %v744, 21
    %v2487 = vpop.permute.xlu0 %2486
    %2488 = vrot.lane.b32.xlu0 %v745, 21
    %v2489 = vpop.permute.xlu0 %2488
    %2490 = vrot.lane.b32.xlu0 %v746, 21
    %v2491 = vpop.permute.xlu0 %2490
    %2492 = vrot.lane.b32.xlu0 %v747, 21
    %v2493 = vpop.permute.xlu0 %2492
    %2494 = vrot.lane.b32.xlu0 %v748, 21
    %v2495 = vpop.permute.xlu0 %2494
    %2496 = vrot.lane.b32.xlu0 %v749, 21
    %v2497 = vpop.permute.xlu0 %2496
    %2498 = vrot.lane.b32.xlu0 %v750, 21
    %v2499 = vpop.permute.xlu0 %2498
    %2500 = vrot.lane.b32.xlu0 %v751, 21
    %v2501 = vpop.permute.xlu0 %2500
    %2502 = vrot.lane.b32.xlu0 %v752, 21
    %v2503 = vpop.permute.xlu0 %2502
    %2504 = vrot.lane.b32.xlu0 %v753, 21
    %v2505 = vpop.permute.xlu0 %2504
    %2506 = vrot.lane.b32.xlu0 %v754, 21
    %v2507 = vpop.permute.xlu0 %2506
    %2508 = vrot.lane.b32.xlu0 %v755, 21
    %v2509 = vpop.permute.xlu0 %2508
    %2510 = vrot.lane.b32.xlu0 %v756, 21
    %v2511 = vpop.permute.xlu0 %2510
    %2512 = vrot.lane.b32.xlu0 %v757, 21
    %v2513 = vpop.permute.xlu0 %2512
    %2514 = vrot.lane.b32.xlu0 %v758, 21
    %v2515 = vpop.permute.xlu0 %2514
    %2516 = vrot.lane.b32.xlu0 %v759, 21
    %v2517 = vpop.permute.xlu0 %2516
    %2518 = vrot.lane.b32.xlu0 %v760, 21
    %v2519 = vpop.permute.xlu0 %2518
    %2520 = vrot.lane.b32.xlu0 %v761, 21
    %v2521 = vpop.permute.xlu0 %2520
    %2522 = vrot.lane.b32.xlu0 %v762, 21
    %v2523 = vpop.permute.xlu0 %2522
    %2524 = vrot.lane.b32.xlu0 %v763, 21
    %v2525 = vpop.permute.xlu0 %2524
    %2526 = vrot.lane.b32.xlu0 %v764, 21
    %v2527 = vpop.permute.xlu0 %2526
    %2528 = vrot.lane.b32.xlu0 %v765, 21
    %v2529 = vpop.permute.xlu0 %2528
    %2530 = vrot.lane.b32.xlu0 %v766, 21
    %v2531 = vpop.permute.xlu0 %2530
    %2532 = vrot.lane.b32.xlu0 %v767, 21
    %v2533 = vpop.permute.xlu0 %2532
    %2534 = vrot.lane.b32.xlu0 %v768, 21
    %v2535 = vpop.permute.xlu0 %2534
    %2536 = vrot.lane.b32.xlu0 %v769, 21
    %v2537 = vpop.permute.xlu0 %2536
    %2538 = vrot.lane.b32.xlu0 %v770, 21
    %v2539 = vpop.permute.xlu0 %2538
    %2540 = vrot.lane.b32.xlu0 %v771, 21
    %v2541 = vpop.permute.xlu0 %2540
    %2542 = vrot.lane.b32.xlu0 %v772, 21
    %v2543 = vpop.permute.xlu0 %2542
    %2544 = vrot.lane.b32.xlu0 %v773, 21
    %v2545 = vpop.permute.xlu0 %2544
    %2546 = vrot.lane.b32.xlu0 %v774, 21
    %v2547 = vpop.permute.xlu0 %2546
    %2548 = vrot.lane.b32.xlu0 %v775, 21
    %v2549 = vpop.permute.xlu0 %2548
    %2550 = vrot.lane.b32.xlu0 %v776, 21
    %v2551 = vpop.permute.xlu0 %2550
    %2552 = vrot.lane.b32.xlu0 %v777, 21
    %v2553 = vpop.permute.xlu0 %2552
    %2554 = vrot.lane.b32.xlu0 %v778, 21
    %v2555 = vpop.permute.xlu0 %2554
    %2556 = vrot.lane.b32.xlu0 %v779, 21
    %v2557 = vpop.permute.xlu0 %2556
    %2558 = vrot.lane.b32.xlu0 %v780, 21
    %v2559 = vpop.permute.xlu0 %2558
    %2560 = vrot.lane.b32.xlu0 %v781, 21
    %v2561 = vpop.permute.xlu0 %2560
    %2562 = vrot.lane.b32.xlu0 %v782, 21
    %v2563 = vpop.permute.xlu0 %2562
    %2564 = vrot.lane.b32.xlu0 %v783, 21
    %v2565 = vpop.permute.xlu0 %2564
    %2566 = vrot.lane.b32.xlu0 %v784, 21
    %v2567 = vpop.permute.xlu0 %2566
    %2568 = vrot.lane.b32.xlu0 %v785, 21
    %v2569 = vpop.permute.xlu0 %2568
    %2570 = vrot.lane.b32.xlu0 %v786, 21
    %v2571 = vpop.permute.xlu0 %2570
    %2572 = vrot.lane.b32.xlu0 %v787, 21
    %v2573 = vpop.permute.xlu0 %2572
    %2574 = vrot.lane.b32.xlu0 %v788, 21
    %v2575 = vpop.permute.xlu0 %2574
    %2576 = vrot.lane.b32.xlu0 %v789, 21
    %v2577 = vpop.permute.xlu0 %2576
    %2578 = vrot.lane.b32.xlu0 %v790, 21
    %v2579 = vpop.permute.xlu0 %2578
    %2580 = vrot.lane.b32.xlu0 %v791, 21
    %v2581 = vpop.permute.xlu0 %2580
    %2582 = vrot.lane.b32.xlu0 %v792, 21
    %v2583 = vpop.permute.xlu0 %2582
    %2584 = vrot.lane.b32.xlu0 %v793, 21
    %v2585 = vpop.permute.xlu0 %2584
    %2714 = vrot.lane.b32.xlu0 %v794, 24
    %v2715 = vpop.permute.xlu0 %2714
    %2716 = vrot.lane.b32.xlu0 %v795, 24
    %v2717 = vpop.permute.xlu0 %2716
    %2718 = vrot.lane.b32.xlu0 %v796, 24
    %v2719 = vpop.permute.xlu0 %2718
    %2720 = vrot.lane.b32.xlu0 %v797, 24
    %v2721 = vpop.permute.xlu0 %2720
    %2722 = vrot.lane.b32.xlu0 %v798, 24
    %v2723 = vpop.permute.xlu0 %2722
    %2724 = vrot.lane.b32.xlu0 %v799, 24
    %v2725 = vpop.permute.xlu0 %2724
    %2726 = vrot.lane.b32.xlu0 %v800, 24
    %v2727 = vpop.permute.xlu0 %2726
    %2728 = vrot.lane.b32.xlu0 %v801, 24
    %v2729 = vpop.permute.xlu0 %2728
    %2730 = vrot.lane.b32.xlu0 %v802, 24
    %v2731 = vpop.permute.xlu0 %2730
    %2732 = vrot.lane.b32.xlu0 %v803, 24
    %v2733 = vpop.permute.xlu0 %2732
    %2734 = vrot.lane.b32.xlu0 %v804, 24
    %v2735 = vpop.permute.xlu0 %2734
    %2736 = vrot.lane.b32.xlu0 %v805, 24
    %v2737 = vpop.permute.xlu0 %2736
    %2738 = vrot.lane.b32.xlu0 %v806, 24
    %v2739 = vpop.permute.xlu0 %2738
    %2740 = vrot.lane.b32.xlu0 %v807, 24
    %v2741 = vpop.permute.xlu0 %2740
    %2742 = vrot.lane.b32.xlu0 %v808, 24
    %v2743 = vpop.permute.xlu0 %2742
    %2744 = vrot.lane.b32.xlu0 %v809, 24
    %v2745 = vpop.permute.xlu0 %2744
    %2746 = vrot.lane.b32.xlu0 %v810, 24
    %v2747 = vpop.permute.xlu0 %2746
    %2748 = vrot.lane.b32.xlu0 %v811, 24
    %v2749 = vpop.permute.xlu0 %2748
    %2750 = vrot.lane.b32.xlu0 %v812, 24
    %v2751 = vpop.permute.xlu0 %2750
    %2752 = vrot.lane.b32.xlu0 %v813, 24
    %v2753 = vpop.permute.xlu0 %2752
    %2754 = vrot.lane.b32.xlu0 %v814, 24
    %v2755 = vpop.permute.xlu0 %2754
    %2756 = vrot.lane.b32.xlu0 %v815, 24
    %v2757 = vpop.permute.xlu0 %2756
    %2758 = vrot.lane.b32.xlu0 %v816, 24
    %v2759 = vpop.permute.xlu0 %2758
    %2760 = vrot.lane.b32.xlu0 %v817, 24
    %v2761 = vpop.permute.xlu0 %2760
    %2762 = vrot.lane.b32.xlu0 %v818, 24
    %v2763 = vpop.permute.xlu0 %2762
    %2764 = vrot.lane.b32.xlu0 %v819, 24
    %v2765 = vpop.permute.xlu0 %2764
    %2766 = vrot.lane.b32.xlu0 %v820, 24
    %v2767 = vpop.permute.xlu0 %2766
    %2768 = vrot.lane.b32.xlu0 %v821, 24
    %v2769 = vpop.permute.xlu0 %2768
    %2770 = vrot.lane.b32.xlu0 %v822, 24
    %v2771 = vpop.permute.xlu0 %2770
    %2772 = vrot.lane.b32.xlu0 %v823, 24
    %v2773 = vpop.permute.xlu0 %2772
    %2774 = vrot.lane.b32.xlu0 %v824, 24
    %v2775 = vpop.permute.xlu0 %2774
    %2776 = vrot.lane.b32.xlu0 %v825, 24
    %v2777 = vpop.permute.xlu0 %2776
    %2778 = vrot.lane.b32.xlu0 %v826, 24
    %v2779 = vpop.permute.xlu0 %2778
    %2780 = vrot.lane.b32.xlu0 %v827, 24
    %v2781 = vpop.permute.xlu0 %2780
    %2782 = vrot.lane.b32.xlu0 %v828, 24
    %v2783 = vpop.permute.xlu0 %2782
    %2784 = vrot.lane.b32.xlu0 %v829, 24
    %v2785 = vpop.permute.xlu0 %2784
    %2786 = vrot.lane.b32.xlu0 %v830, 24
    %v2787 = vpop.permute.xlu0 %2786
    %2788 = vrot.lane.b32.xlu0 %v831, 24
    %v2789 = vpop.permute.xlu0 %2788
    %2790 = vrot.lane.b32.xlu0 %v832, 24
    %v2791 = vpop.permute.xlu0 %2790
    %2792 = vrot.lane.b32.xlu0 %v833, 24
    %v2793 = vpop.permute.xlu0 %2792
    %2794 = vrot.lane.b32.xlu0 %v834, 24
    %v2795 = vpop.permute.xlu0 %2794
    %2796 = vrot.lane.b32.xlu0 %v835, 24
    %v2797 = vpop.permute.xlu0 %2796
    %2798 = vrot.lane.b32.xlu0 %v836, 24
    %v2799 = vpop.permute.xlu0 %2798
    %2800 = vrot.lane.b32.xlu0 %v837, 24
    %v2801 = vpop.permute.xlu0 %2800
    %2802 = vrot.lane.b32.xlu0 %v838, 24
    %v2803 = vpop.permute.xlu0 %2802
    %2804 = vrot.lane.b32.xlu0 %v839, 24
    %v2805 = vpop.permute.xlu0 %2804
    %2806 = vrot.lane.b32.xlu0 %v840, 24
    %v2807 = vpop.permute.xlu0 %2806
    %2808 = vrot.lane.b32.xlu0 %v841, 24
    %v2809 = vpop.permute.xlu0 %2808
    %2810 = vrot.lane.b32.xlu0 %v842, 24
    %v2811 = vpop.permute.xlu0 %2810
    %2812 = vrot.lane.b32.xlu0 %v843, 24
    %v2813 = vpop.permute.xlu0 %2812
    %2814 = vrot.lane.b32.xlu0 %v844, 24
    %v2815 = vpop.permute.xlu0 %2814
    %2816 = vrot.lane.b32.xlu0 %v845, 24
    %v2817 = vpop.permute.xlu0 %2816
    %2818 = vrot.lane.b32.xlu0 %v846, 24
    %v2819 = vpop.permute.xlu0 %2818
    %2820 = vrot.lane.b32.xlu0 %v847, 24
    %v2821 = vpop.permute.xlu0 %2820
    %2822 = vrot.lane.b32.xlu0 %v848, 24
    %v2823 = vpop.permute.xlu0 %2822
    %2824 = vrot.lane.b32.xlu0 %v849, 24
    %v2825 = vpop.permute.xlu0 %2824
    %2826 = vrot.lane.b32.xlu0 %v850, 24
    %v2827 = vpop.permute.xlu0 %2826
    %2828 = vrot.lane.b32.xlu0 %v851, 24
    %v2829 = vpop.permute.xlu0 %2828
    %2830 = vrot.lane.b32.xlu0 %v852, 24
    %v2831 = vpop.permute.xlu0 %2830
    %2832 = vrot.lane.b32.xlu0 %v853, 24
    %v2833 = vpop.permute.xlu0 %2832
    %2834 = vrot.lane.b32.xlu0 %v854, 24
    %v2835 = vpop.permute.xlu0 %2834
    %2836 = vrot.lane.b32.xlu0 %v855, 24
    %v2837 = vpop.permute.xlu0 %2836
    %2838 = vrot.lane.b32.xlu0 %v856, 24
    %v2839 = vpop.permute.xlu0 %2838
    %2840 = vrot.lane.b32.xlu0 %v857, 24
    %v2841 = vpop.permute.xlu0 %2840
    %v2906 = vsel %vm216, %v281, %v923
    %v2907 = vsel %vm216, %v282, %v925
    %v2908 = vsel %vm216, %v283, %v927
    %v2909 = vsel %vm216, %v284, %v929
    %v2910 = vsel %vm216, %v285, %v931
    %v2911 = vsel %vm216, %v286, %v933
    %v2912 = vsel %vm216, %v287, %v935
    %v2913 = vsel %vm216, %v288, %v937
    %v2914 = vsel %vm216, %v289, %v939
    %v2915 = vsel %vm216, %v290, %v941
    %v2916 = vsel %vm216, %v291, %v943
    %v2917 = vsel %vm216, %v292, %v945
    %v2918 = vsel %vm216, %v293, %v947
    %v2919 = vsel %vm216, %v294, %v949
    %v2920 = vsel %vm216, %v295, %v951
    %v2921 = vsel %vm216, %v296, %v953
    %v2922 = vsel %vm216, %v297, %v955
    %v2923 = vsel %vm216, %v298, %v957
    %v2924 = vsel %vm216, %v299, %v959
    %v2925 = vsel %vm216, %v300, %v961
    %v2926 = vsel %vm216, %v301, %v963
    %v2927 = vsel %vm216, %v302, %v965
    %v2928 = vsel %vm216, %v303, %v967
    %v2929 = vsel %vm216, %v304, %v969
    %v2930 = vsel %vm216, %v305, %v971
    %v2931 = vsel %vm216, %v306, %v973
    %v2932 = vsel %vm216, %v307, %v975
    %v2933 = vsel %vm216, %v308, %v977
    %v2934 = vsel %vm216, %v309, %v979
    %v2935 = vsel %vm216, %v310, %v981
    %v2936 = vsel %vm216, %v311, %v983
    %v2937 = vsel %vm216, %v312, %v985
    %v2938 = vsel %vm216, %v313, %v987
    %v2939 = vsel %vm216, %v314, %v989
    %v2940 = vsel %vm216, %v315, %v991
    %v2941 = vsel %vm216, %v316, %v993
    %v2942 = vsel %vm216, %v317, %v995
    %v2943 = vsel %vm216, %v318, %v997
    %v2944 = vsel %vm216, %v319, %v999
    %v2945 = vsel %vm216, %v320, %v1001
    %v2946 = vsel %vm216, %v321, %v1003
    %v2947 = vsel %vm216, %v322, %v1005
    %v2948 = vsel %vm216, %v323, %v1007
    %v2949 = vsel %vm216, %v324, %v1009
    %v2950 = vsel %vm216, %v325, %v1011
    %v2951 = vsel %vm216, %v326, %v1013
    %v2952 = vsel %vm216, %v327, %v1015
    %v2953 = vsel %vm216, %v328, %v1017
    %v2954 = vsel %vm216, %v329, %v1019
    %v2955 = vsel %vm216, %v330, %v1021
    %v2956 = vsel %vm216, %v331, %v1023
    %v2957 = vsel %vm216, %v332, %v1025
    %v2958 = vsel %vm216, %v333, %v1027
    %v2959 = vsel %vm216, %v334, %v1029
    %v2960 = vsel %vm216, %v335, %v1031
    %v2961 = vsel %vm216, %v336, %v1033
    %v2962 = vsel %vm216, %v337, %v1035
    %v2963 = vsel %vm216, %v338, %v1037
    %v2964 = vsel %vm216, %v339, %v1039
    %v2965 = vsel %vm216, %v340, %v1041
    %v2966 = vsel %vm216, %v341, %v1043
    %v2967 = vsel %vm216, %v342, %v1045
    %v2968 = vsel %vm216, %v343, %v1047
    %v2969 = vsel %vm216, %v344, %v1049
    %vm2970 = vcmask 48128
    %v2971 = vsel %vm2970, %v2906, %v1179
    %v2972 = vsel %vm2970, %v2907, %v1181
    %v2973 = vsel %vm2970, %v2908, %v1183
    %v2974 = vsel %vm2970, %v2909, %v1185
    %v2975 = vsel %vm2970, %v2910, %v1187
    %v2976 = vsel %vm2970, %v2911, %v1189
    %v2977 = vsel %vm2970, %v2912, %v1191
    %v2978 = vsel %vm2970, %v2913, %v1193
    %v2979 = vsel %vm2970, %v2914, %v1195
    %v2980 = vsel %vm2970, %v2915, %v1197
    %v2981 = vsel %vm2970, %v2916, %v1199
    %v2982 = vsel %vm2970, %v2917, %v1201
    %v2983 = vsel %vm2970, %v2918, %v1203
    %v2984 = vsel %vm2970, %v2919, %v1205
    %v2985 = vsel %vm2970, %v2920, %v1207
    %v2986 = vsel %vm2970, %v2921, %v1209
    %v2987 = vsel %vm2970, %v2922, %v1211
    %v2988 = vsel %vm2970, %v2923, %v1213
    %v2989 = vsel %vm2970, %v2924, %v1215
    %v2990 = vsel %vm2970, %v2925, %v1217
    %v2991 = vsel %vm2970, %v2926, %v1219
    %v2992 = vsel %vm2970, %v2927, %v1221
    %v2993 = vsel %vm2970, %v2928, %v1223
    %v2994 = vsel %vm2970, %v2929, %v1225
    %v2995 = vsel %vm2970, %v2930, %v1227
    %v2996 = vsel %vm2970, %v2931, %v1229
    %v2997 = vsel %vm2970, %v2932, %v1231
    %v2998 = vsel %vm2970, %v2933, %v1233
    %v2999 = vsel %vm2970, %v2934, %v1235
    %v3000 = vsel %vm2970, %v2935, %v1237
    %v3001 = vsel %vm2970, %v2936, %v1239
    %v3002 = vsel %vm2970, %v2937, %v1241
    %v3003 = vsel %vm2970, %v2938, %v1243
    %v3004 = vsel %vm2970, %v2939, %v1245
    %v3005 = vsel %vm2970, %v2940, %v1247
    %v3006 = vsel %vm2970, %v2941, %v1249
    %v3007 = vsel %vm2970, %v2942, %v1251
    %v3008 = vsel %vm2970, %v2943, %v1253
    %v3009 = vsel %vm2970, %v2944, %v1255
    %v3010 = vsel %vm2970, %v2945, %v1257
    %v3011 = vsel %vm2970, %v2946, %v1259
    %v3012 = vsel %vm2970, %v2947, %v1261
    %v3013 = vsel %vm2970, %v2948, %v1263
    %v3014 = vsel %vm2970, %v2949, %v1265
    %v3015 = vsel %vm2970, %v2950, %v1267
    %v3016 = vsel %vm2970, %v2951, %v1269
    %v3017 = vsel %vm2970, %v2952, %v1271
    %v3018 = vsel %vm2970, %v2953, %v1273
    %v3019 = vsel %vm2970, %v2954, %v1275
    %v3020 = vsel %vm2970, %v2955, %v1277
    %v3021 = vsel %vm2970, %v2956, %v1279
    %v3022 = vsel %vm2970, %v2957, %v1281
    %v3023 = vsel %vm2970, %v2958, %v1283
    %v3024 = vsel %vm2970, %v2959, %v1285
    %v3025 = vsel %vm2970, %v2960, %v1287
    %v3026 = vsel %vm2970, %v2961, %v1289
    %v3027 = vsel %vm2970, %v2962, %v1291
    %v3028 = vsel %vm2970, %v2963, %v1293
    %v3029 = vsel %vm2970, %v2964, %v1295
    %v3030 = vsel %vm2970, %v2965, %v1297
    %v3031 = vsel %vm2970, %v2966, %v1299
    %v3032 = vsel %vm2970, %v2967, %v1301
    %v3033 = vsel %vm2970, %v2968, %v1303
    %v3034 = vsel %vm2970, %v2969, %v1305
    %vm3035 = vcmask 72704
    %v3036 = vsel %vm3035, %v2971, %v1435
    %v3037 = vsel %vm3035, %v2972, %v1437
    %v3038 = vsel %vm3035, %v2973, %v1439
    %v3039 = vsel %vm3035, %v2974, %v1441
    %v3040 = vsel %vm3035, %v2975, %v1443
    %v3041 = vsel %vm3035, %v2976, %v1445
    %v3042 = vsel %vm3035, %v2977, %v1447
    %v3043 = vsel %vm3035, %v2978, %v1449
    %v3044 = vsel %vm3035, %v2979, %v1451
    %v3045 = vsel %vm3035, %v2980, %v1453
    %v3046 = vsel %vm3035, %v2981, %v1455
    %v3047 = vsel %vm3035, %v2982, %v1457
    %v3048 = vsel %vm3035, %v2983, %v1459
    %v3049 = vsel %vm3035, %v2984, %v1461
    %v3050 = vsel %vm3035, %v2985, %v1463
    %v3051 = vsel %vm3035, %v2986, %v1465
    %v3052 = vsel %vm3035, %v2987, %v1467
    %v3053 = vsel %vm3035, %v2988, %v1469
    %v3054 = vsel %vm3035, %v2989, %v1471
    %v3055 = vsel %vm3035, %v2990, %v1473
    %v3056 = vsel %vm3035, %v2991, %v1475
    %v3057 = vsel %vm3035, %v2992, %v1477
    %v3058 = vsel %vm3035, %v2993, %v1479
    %v3059 = vsel %vm3035, %v2994, %v1481
    %v3060 = vsel %vm3035, %v2995, %v1483
    %v3061 = vsel %vm3035, %v2996, %v1485
    %v3062 = vsel %vm3035, %v2997, %v1487
    %v3063 = vsel %vm3035, %v2998, %v1489
    %v3064 = vsel %vm3035, %v2999, %v1491
    %v3065 = vsel %vm3035, %v3000, %v1493
    %v3066 = vsel %vm3035, %v3001, %v1495
    %v3067 = vsel %vm3035, %v3002, %v1497
    %v3068 = vsel %vm3035, %v3003, %v1499
    %v3069 = vsel %vm3035, %v3004, %v1501
    %v3070 = vsel %vm3035, %v3005, %v1503
    %v3071 = vsel %vm3035, %v3006, %v1505
    %v3072 = vsel %vm3035, %v3007, %v1507
    %v3073 = vsel %vm3035, %v3008, %v1509
    %v3074 = vsel %vm3035, %v3009, %v1511
    %v3075 = vsel %vm3035, %v3010, %v1513
    %v3076 = vsel %vm3035, %v3011, %v1515
    %v3077 = vsel %vm3035, %v3012, %v1517
    %v3078 = vsel %vm3035, %v3013, %v1519
    %v3079 = vsel %vm3035, %v3014, %v1521
    %v3080 = vsel %vm3035, %v3015, %v1523
    %v3081 = vsel %vm3035, %v3016, %v1525
    %v3082 = vsel %vm3035, %v3017, %v1527
    %v3083 = vsel %vm3035, %v3018, %v1529
    %v3084 = vsel %vm3035, %v3019, %v1531
    %v3085 = vsel %vm3035, %v3020, %v1533
    %v3086 = vsel %vm3035, %v3021, %v1535
    %v3087 = vsel %vm3035, %v3022, %v1537
    %v3088 = vsel %vm3035, %v3023, %v1539
    %v3089 = vsel %vm3035, %v3024, %v1541
    %v3090 = vsel %vm3035, %v3025, %v1543
    %v3091 = vsel %vm3035, %v3026, %v1545
    %v3092 = vsel %vm3035, %v3027, %v1547
    %v3093 = vsel %vm3035, %v3028, %v1549
    %v3094 = vsel %vm3035, %v3029, %v1551
    %v3095 = vsel %vm3035, %v3030, %v1553
    %v3096 = vsel %vm3035, %v3031, %v1555
    %v3097 = vsel %vm3035, %v3032, %v1557
    %v3098 = vsel %vm3035, %v3033, %v1559
    %v3099 = vsel %vm3035, %v3034, %v1561
    %vm3100 = vcmask 97280
    %v3101 = vsel %vm3100, %v3036, %v1691
    %v3102 = vsel %vm3100, %v3037, %v1693
    %v3103 = vsel %vm3100, %v3038, %v1695
    %v3104 = vsel %vm3100, %v3039, %v1697
    %v3105 = vsel %vm3100, %v3040, %v1699
    %v3106 = vsel %vm3100, %v3041, %v1701
    %v3107 = vsel %vm3100, %v3042, %v1703
    %v3108 = vsel %vm3100, %v3043, %v1705
    %v3109 = vsel %vm3100, %v3044, %v1707
    %v3110 = vsel %vm3100, %v3045, %v1709
    %v3111 = vsel %vm3100, %v3046, %v1711
    %v3112 = vsel %vm3100, %v3047, %v1713
    %v3113 = vsel %vm3100, %v3048, %v1715
    %v3114 = vsel %vm3100, %v3049, %v1717
    %v3115 = vsel %vm3100, %v3050, %v1719
    %v3116 = vsel %vm3100, %v3051, %v1721
    %v3117 = vsel %vm3100, %v3052, %v1723
    %v3118 = vsel %vm3100, %v3053, %v1725
    %v3119 = vsel %vm3100, %v3054, %v1727
    %v3120 = vsel %vm3100, %v3055, %v1729
    %v3121 = vsel %vm3100, %v3056, %v1731
    %v3122 = vsel %vm3100, %v3057, %v1733
    %v3123 = vsel %vm3100, %v3058, %v1735
    %v3124 = vsel %vm3100, %v3059, %v1737
    %v3125 = vsel %vm3100, %v3060, %v1739
    %v3126 = vsel %vm3100, %v3061, %v1741
    %v3127 = vsel %vm3100, %v3062, %v1743
    %v3128 = vsel %vm3100, %v3063, %v1745
    %v3129 = vsel %vm3100, %v3064, %v1747
    %v3130 = vsel %vm3100, %v3065, %v1749
    %v3131 = vsel %vm3100, %v3066, %v1751
    %v3132 = vsel %vm3100, %v3067, %v1753
    %v3133 = vsel %vm3100, %v3068, %v1755
    %v3134 = vsel %vm3100, %v3069, %v1757
    %v3135 = vsel %vm3100, %v3070, %v1759
    %v3136 = vsel %vm3100, %v3071, %v1761
    %v3137 = vsel %vm3100, %v3072, %v1763
    %v3138 = vsel %vm3100, %v3073, %v1765
    %v3139 = vsel %vm3100, %v3074, %v1767
    %v3140 = vsel %vm3100, %v3075, %v1769
    %v3141 = vsel %vm3100, %v3076, %v1771
    %v3142 = vsel %vm3100, %v3077, %v1773
    %v3143 = vsel %vm3100, %v3078, %v1775
    %v3144 = vsel %vm3100, %v3079, %v1777
    %v3145 = vsel %vm3100, %v3080, %v1779
    %v3146 = vsel %vm3100, %v3081, %v1781
    %v3147 = vsel %vm3100, %v3082, %v1783
    %v3148 = vsel %vm3100, %v3083, %v1785
    %v3149 = vsel %vm3100, %v3084, %v1787
    %v3150 = vsel %vm3100, %v3085, %v1789
    %v3151 = vsel %vm3100, %v3086, %v1791
    %v3152 = vsel %vm3100, %v3087, %v1793
    %v3153 = vsel %vm3100, %v3088, %v1795
    %v3154 = vsel %vm3100, %v3089, %v1797
    %v3155 = vsel %vm3100, %v3090, %v1799
    %v3156 = vsel %vm3100, %v3091, %v1801
    %v3157 = vsel %vm3100, %v3092, %v1803
    %v3158 = vsel %vm3100, %v3093, %v1805
    %v3159 = vsel %vm3100, %v3094, %v1807
    %v3160 = vsel %vm3100, %v3095, %v1809
    %v3161 = vsel %vm3100, %v3096, %v1811
    %v3162 = vsel %vm3100, %v3097, %v1813
    %v3163 = vsel %vm3100, %v3098, %v1815
    %v3164 = vsel %vm3100, %v3099, %v1817
    %vm3165 = vcmask 121856
    %v3166 = vsel %vm3165, %v3101, %v1947
    %v3167 = vsel %vm3165, %v3102, %v1949
    %v3168 = vsel %vm3165, %v3103, %v1951
    %v3169 = vsel %vm3165, %v3104, %v1953
    %v3170 = vsel %vm3165, %v3105, %v1955
    %v3171 = vsel %vm3165, %v3106, %v1957
    %v3172 = vsel %vm3165, %v3107, %v1959
    %v3173 = vsel %vm3165, %v3108, %v1961
    %v3174 = vsel %vm3165, %v3109, %v1963
    %v3175 = vsel %vm3165, %v3110, %v1965
    %v3176 = vsel %vm3165, %v3111, %v1967
    %v3177 = vsel %vm3165, %v3112, %v1969
    %v3178 = vsel %vm3165, %v3113, %v1971
    %v3179 = vsel %vm3165, %v3114, %v1973
    %v3180 = vsel %vm3165, %v3115, %v1975
    %v3181 = vsel %vm3165, %v3116, %v1977
    %v3182 = vsel %vm3165, %v3117, %v1979
    %v3183 = vsel %vm3165, %v3118, %v1981
    %v3184 = vsel %vm3165, %v3119, %v1983
    %v3185 = vsel %vm3165, %v3120, %v1985
    %v3186 = vsel %vm3165, %v3121, %v1987
    %v3187 = vsel %vm3165, %v3122, %v1989
    %v3188 = vsel %vm3165, %v3123, %v1991
    %v3189 = vsel %vm3165, %v3124, %v1993
    %v3190 = vsel %vm3165, %v3125, %v1995
    %v3191 = vsel %vm3165, %v3126, %v1997
    %v3192 = vsel %vm3165, %v3127, %v1999
    %v3193 = vsel %vm3165, %v3128, %v2001
    %v3194 = vsel %vm3165, %v3129, %v2003
    %v3195 = vsel %vm3165, %v3130, %v2005
    %v3196 = vsel %vm3165, %v3131, %v2007
    %v3197 = vsel %vm3165, %v3132, %v2009
    %v3198 = vsel %vm3165, %v3133, %v2011
    %v3199 = vsel %vm3165, %v3134, %v2013
    %v3200 = vsel %vm3165, %v3135, %v2015
    %v3201 = vsel %vm3165, %v3136, %v2017
    %v3202 = vsel %vm3165, %v3137, %v2019
    %v3203 = vsel %vm3165, %v3138, %v2021
    %v3204 = vsel %vm3165, %v3139, %v2023
    %v3205 = vsel %vm3165, %v3140, %v2025
    %v3206 = vsel %vm3165, %v3141, %v2027
    %v3207 = vsel %vm3165, %v3142, %v2029
    %v3208 = vsel %vm3165, %v3143, %v2031
    %v3209 = vsel %vm3165, %v3144, %v2033
    %v3210 = vsel %vm3165, %v3145, %v2035
    %v3211 = vsel %vm3165, %v3146, %v2037
    %v3212 = vsel %vm3165, %v3147, %v2039
    %v3213 = vsel %vm3165, %v3148, %v2041
    %v3214 = vsel %vm3165, %v3149, %v2043
    %v3215 = vsel %vm3165, %v3150, %v2045
    %v3216 = vsel %vm3165, %v3151, %v2047
    %v3217 = vsel %vm3165, %v3152, %v2049
    %v3218 = vsel %vm3165, %v3153, %v2051
    %v3219 = vsel %vm3165, %v3154, %v2053
    %v3220 = vsel %vm3165, %v3155, %v2055
    %v3221 = vsel %vm3165, %v3156, %v2057
    %v3222 = vsel %vm3165, %v3157, %v2059
    %v3223 = vsel %vm3165, %v3158, %v2061
    %v3224 = vsel %vm3165, %v3159, %v2063
    %v3225 = vsel %vm3165, %v3160, %v2065
    %v3226 = vsel %vm3165, %v3161, %v2067
    %v3227 = vsel %vm3165, %v3162, %v2069
    %v3228 = vsel %vm3165, %v3163, %v2071
    %v3229 = vsel %vm3165, %v3164, %v2073
    %vm3230 = vcmask 146432
    %v3231 = vsel %vm3230, %v3166, %v2203
    %v3232 = vsel %vm3230, %v3167, %v2205
    %v3233 = vsel %vm3230, %v3168, %v2207
    %v3234 = vsel %vm3230, %v3169, %v2209
    %v3235 = vsel %vm3230, %v3170, %v2211
    %v3236 = vsel %vm3230, %v3171, %v2213
    %v3237 = vsel %vm3230, %v3172, %v2215
    %v3238 = vsel %vm3230, %v3173, %v2217
    %v3239 = vsel %vm3230, %v3174, %v2219
    %v3240 = vsel %vm3230, %v3175, %v2221
    %v3241 = vsel %vm3230, %v3176, %v2223
    %v3242 = vsel %vm3230, %v3177, %v2225
    %v3243 = vsel %vm3230, %v3178, %v2227
    %v3244 = vsel %vm3230, %v3179, %v2229
    %v3245 = vsel %vm3230, %v3180, %v2231
    %v3246 = vsel %vm3230, %v3181, %v2233
    %v3247 = vsel %vm3230, %v3182, %v2235
    %v3248 = vsel %vm3230, %v3183, %v2237
    %v3249 = vsel %vm3230, %v3184, %v2239
    %v3250 = vsel %vm3230, %v3185, %v2241
    %v3251 = vsel %vm3230, %v3186, %v2243
    %v3252 = vsel %vm3230, %v3187, %v2245
    %v3253 = vsel %vm3230, %v3188, %v2247
    %v3254 = vsel %vm3230, %v3189, %v2249
    %v3255 = vsel %vm3230, %v3190, %v2251
    %v3256 = vsel %vm3230, %v3191, %v2253
    %v3257 = vsel %vm3230, %v3192, %v2255
    %v3258 = vsel %vm3230, %v3193, %v2257
    %v3259 = vsel %vm3230, %v3194, %v2259
    %v3260 = vsel %vm3230, %v3195, %v2261
    %v3261 = vsel %vm3230, %v3196, %v2263
    %v3262 = vsel %vm3230, %v3197, %v2265
    %v3263 = vsel %vm3230, %v3198, %v2267
    %v3264 = vsel %vm3230, %v3199, %v2269
    %v3265 = vsel %vm3230, %v3200, %v2271
    %v3266 = vsel %vm3230, %v3201, %v2273
    %v3267 = vsel %vm3230, %v3202, %v2275
    %v3268 = vsel %vm3230, %v3203, %v2277
    %v3269 = vsel %vm3230, %v3204, %v2279
    %v3270 = vsel %vm3230, %v3205, %v2281
    %v3271 = vsel %vm3230, %v3206, %v2283
    %v3272 = vsel %vm3230, %v3207, %v2285
    %v3273 = vsel %vm3230, %v3208, %v2287
    %v3274 = vsel %vm3230, %v3209, %v2289
    %v3275 = vsel %vm3230, %v3210, %v2291
    %v3276 = vsel %vm3230, %v3211, %v2293
    %v3277 = vsel %vm3230, %v3212, %v2295
    %v3278 = vsel %vm3230, %v3213, %v2297
    %v3279 = vsel %vm3230, %v3214, %v2299
    %v3280 = vsel %vm3230, %v3215, %v2301
    %v3281 = vsel %vm3230, %v3216, %v2303
    %v3282 = vsel %vm3230, %v3217, %v2305
    %v3283 = vsel %vm3230, %v3218, %v2307
    %v3284 = vsel %vm3230, %v3219, %v2309
    %v3285 = vsel %vm3230, %v3220, %v2311
    %v3286 = vsel %vm3230, %v3221, %v2313
    %v3287 = vsel %vm3230, %v3222, %v2315
    %v3288 = vsel %vm3230, %v3223, %v2317
    %v3289 = vsel %vm3230, %v3224, %v2319
    %v3290 = vsel %vm3230, %v3225, %v2321
    %v3291 = vsel %vm3230, %v3226, %v2323
    %v3292 = vsel %vm3230, %v3227, %v2325
    %v3293 = vsel %vm3230, %v3228, %v2327
    %v3294 = vsel %vm3230, %v3229, %v2329
    %vm3295 = vcmask 171008
    %v3296 = vsel %vm3295, %v3231, %v2459
    %v3297 = vsel %vm3295, %v3232, %v2461
    %v3298 = vsel %vm3295, %v3233, %v2463
    %v3299 = vsel %vm3295, %v3234, %v2465
    %v3300 = vsel %vm3295, %v3235, %v2467
    %v3301 = vsel %vm3295, %v3236, %v2469
    %v3302 = vsel %vm3295, %v3237, %v2471
    %v3303 = vsel %vm3295, %v3238, %v2473
    %v3304 = vsel %vm3295, %v3239, %v2475
    %v3305 = vsel %vm3295, %v3240, %v2477
    %v3306 = vsel %vm3295, %v3241, %v2479
    %v3307 = vsel %vm3295, %v3242, %v2481
    %v3308 = vsel %vm3295, %v3243, %v2483
    %v3309 = vsel %vm3295, %v3244, %v2485
    %v3310 = vsel %vm3295, %v3245, %v2487
    %v3311 = vsel %vm3295, %v3246, %v2489
    %v3312 = vsel %vm3295, %v3247, %v2491
    %v3313 = vsel %vm3295, %v3248, %v2493
    %v3314 = vsel %vm3295, %v3249, %v2495
    %v3315 = vsel %vm3295, %v3250, %v2497
    %v3316 = vsel %vm3295, %v3251, %v2499
    %v3317 = vsel %vm3295, %v3252, %v2501
    %v3318 = vsel %vm3295, %v3253, %v2503
    %v3319 = vsel %vm3295, %v3254, %v2505
    %v3320 = vsel %vm3295, %v3255, %v2507
    %v3321 = vsel %vm3295, %v3256, %v2509
    %v3322 = vsel %vm3295, %v3257, %v2511
    %v3323 = vsel %vm3295, %v3258, %v2513
    %v3324 = vsel %vm3295, %v3259, %v2515
    %v3325 = vsel %vm3295, %v3260, %v2517
    %v3326 = vsel %vm3295, %v3261, %v2519
    %v3327 = vsel %vm3295, %v3262, %v2521
    %v3328 = vsel %vm3295, %v3263, %v2523
    %v3329 = vsel %vm3295, %v3264, %v2525
    %v3330 = vsel %vm3295, %v3265, %v2527
    %v3331 = vsel %vm3295, %v3266, %v2529
    %v3332 = vsel %vm3295, %v3267, %v2531
    %v3333 = vsel %vm3295, %v3268, %v2533
    %v3334 = vsel %vm3295, %v3269, %v2535
    %v3335 = vsel %vm3295, %v3270, %v2537
    %v3336 = vsel %vm3295, %v3271, %v2539
    %v3337 = vsel %vm3295, %v3272, %v2541
    %v3338 = vsel %vm3295, %v3273, %v2543
    %v3339 = vsel %vm3295, %v3274, %v2545
    %v3340 = vsel %vm3295, %v3275, %v2547
    %v3341 = vsel %vm3295, %v3276, %v2549
    %v3342 = vsel %vm3295, %v3277, %v2551
    %v3343 = vsel %vm3295, %v3278, %v2553
    %v3344 = vsel %vm3295, %v3279, %v2555
    %v3345 = vsel %vm3295, %v3280, %v2557
    %v3346 = vsel %vm3295, %v3281, %v2559
    %v3347 = vsel %vm3295, %v3282, %v2561
    %v3348 = vsel %vm3295, %v3283, %v2563
    %v3349 = vsel %vm3295, %v3284, %v2565
    %v3350 = vsel %vm3295, %v3285, %v2567
    %v3351 = vsel %vm3295, %v3286, %v2569
    %v3352 = vsel %vm3295, %v3287, %v2571
    %v3353 = vsel %vm3295, %v3288, %v2573
    %v3354 = vsel %vm3295, %v3289, %v2575
    %v3355 = vsel %vm3295, %v3290, %v2577
    %v3356 = vsel %vm3295, %v3291, %v2579
    %v3357 = vsel %vm3295, %v3292, %v2581
    %v3358 = vsel %vm3295, %v3293, %v2583
    %v3359 = vsel %vm3295, %v3294, %v2585
    %vm3360 = vcmask 195584
    %v3361 = vsel %vm3360, %v3296, %v2715
    %v3362 = vsel %vm3360, %v3297, %v2717
    %v3363 = vsel %vm3360, %v3298, %v2719
    %v3364 = vsel %vm3360, %v3299, %v2721
    %v3365 = vsel %vm3360, %v3300, %v2723
    %v3366 = vsel %vm3360, %v3301, %v2725
    %v3367 = vsel %vm3360, %v3302, %v2727
    %v3368 = vsel %vm3360, %v3303, %v2729
    %v3369 = vsel %vm3360, %v3304, %v2731
    %v3370 = vsel %vm3360, %v3305, %v2733
    %v3371 = vsel %vm3360, %v3306, %v2735
    %v3372 = vsel %vm3360, %v3307, %v2737
    %v3373 = vsel %vm3360, %v3308, %v2739
    %v3374 = vsel %vm3360, %v3309, %v2741
    %v3375 = vsel %vm3360, %v3310, %v2743
    %v3376 = vsel %vm3360, %v3311, %v2745
    %v3377 = vsel %vm3360, %v3312, %v2747
    %v3378 = vsel %vm3360, %v3313, %v2749
    %v3379 = vsel %vm3360, %v3314, %v2751
    %v3380 = vsel %vm3360, %v3315, %v2753
    %v3381 = vsel %vm3360, %v3316, %v2755
    %v3382 = vsel %vm3360, %v3317, %v2757
    %v3383 = vsel %vm3360, %v3318, %v2759
    %v3384 = vsel %vm3360, %v3319, %v2761
    %v3385 = vsel %vm3360, %v3320, %v2763
    %v3386 = vsel %vm3360, %v3321, %v2765
    %v3387 = vsel %vm3360, %v3322, %v2767
    %v3388 = vsel %vm3360, %v3323, %v2769
    %v3389 = vsel %vm3360, %v3324, %v2771
    %v3390 = vsel %vm3360, %v3325, %v2773
    %v3391 = vsel %vm3360, %v3326, %v2775
    %v3392 = vsel %vm3360, %v3327, %v2777
    %v3393 = vsel %vm3360, %v3328, %v2779
    %v3394 = vsel %vm3360, %v3329, %v2781
    %v3395 = vsel %vm3360, %v3330, %v2783
    %v3396 = vsel %vm3360, %v3331, %v2785
    %v3397 = vsel %vm3360, %v3332, %v2787
    %v3398 = vsel %vm3360, %v3333, %v2789
    %v3399 = vsel %vm3360, %v3334, %v2791
    %v3400 = vsel %vm3360, %v3335, %v2793
    %v3401 = vsel %vm3360, %v3336, %v2795
    %v3402 = vsel %vm3360, %v3337, %v2797
    %v3403 = vsel %vm3360, %v3338, %v2799
    %v3404 = vsel %vm3360, %v3339, %v2801
    %v3405 = vsel %vm3360, %v3340, %v2803
    %v3406 = vsel %vm3360, %v3341, %v2805
    %v3407 = vsel %vm3360, %v3342, %v2807
    %v3408 = vsel %vm3360, %v3343, %v2809
    %v3409 = vsel %vm3360, %v3344, %v2811
    %v3410 = vsel %vm3360, %v3345, %v2813
    %v3411 = vsel %vm3360, %v3346, %v2815
    %v3412 = vsel %vm3360, %v3347, %v2817
    %v3413 = vsel %vm3360, %v3348, %v2819
    %v3414 = vsel %vm3360, %v3349, %v2821
    %v3415 = vsel %vm3360, %v3350, %v2823
    %v3416 = vsel %vm3360, %v3351, %v2825
    %v3417 = vsel %vm3360, %v3352, %v2827
    %v3418 = vsel %vm3360, %v3353, %v2829
    %v3419 = vsel %vm3360, %v3354, %v2831
    %v3420 = vsel %vm3360, %v3355, %v2833
    %v3421 = vsel %vm3360, %v3356, %v2835
    %v3422 = vsel %vm3360, %v3357, %v2837
    %v3423 = vsel %vm3360, %v3358, %v2839
    %v3424 = vsel %vm3360, %v3359, %v2841
    %v3425 = vpack.c.bf16 %v3362, %v3361
    %v3426 = vpack.c.bf16 %v3364, %v3363
    %v3427 = vpack.c.bf16 %v3366, %v3365
    %v3428 = vpack.c.bf16 %v3368, %v3367
    %v3429 = vpack.c.bf16 %v3370, %v3369
    %v3430 = vpack.c.bf16 %v3372, %v3371
    %v3431 = vpack.c.bf16 %v3374, %v3373
    %v3432 = vpack.c.bf16 %v3376, %v3375
    %v3433 = vpack.c.bf16 %v3378, %v3377
    %v3434 = vpack.c.bf16 %v3380, %v3379
    %v3435 = vpack.c.bf16 %v3382, %v3381
    %v3436 = vpack.c.bf16 %v3384, %v3383
    %v3437 = vpack.c.bf16 %v3386, %v3385
    %v3438 = vpack.c.bf16 %v3388, %v3387
    %v3439 = vpack.c.bf16 %v3390, %v3389
    %v3440 = vpack.c.bf16 %v3392, %v3391
    %v3441 = vpack.c.bf16 %v3394, %v3393
    %v3442 = vpack.c.bf16 %v3396, %v3395
    %v3443 = vpack.c.bf16 %v3398, %v3397
    %v3444 = vpack.c.bf16 %v3400, %v3399
    %v3445 = vpack.c.bf16 %v3402, %v3401
    %v3446 = vpack.c.bf16 %v3404, %v3403
    %v3447 = vpack.c.bf16 %v3406, %v3405
    %v3448 = vpack.c.bf16 %v3408, %v3407
    %v3449 = vpack.c.bf16 %v3410, %v3409
    %v3450 = vpack.c.bf16 %v3412, %v3411
    %v3451 = vpack.c.bf16 %v3414, %v3413
    %v3452 = vpack.c.bf16 %v3416, %v3415
    %v3453 = vpack.c.bf16 %v3418, %v3417
    %v3454 = vpack.c.bf16 %v3420, %v3419
    %v3455 = vpack.c.bf16 %v3422, %v3421
    %v3456 = vpack.c.bf16 %v3424, %v3423
    %v3457 = vld [vmem:[%s2] sm:$0xf]
    %v3458 = vld [vmem:[%s2 + $0x4] sm:$0xf]
    %v3459 = vld [vmem:[%s2 + $0x8] sm:$0xf]
    %v3460 = vld [vmem:[%s2 + $0xc] sm:$0x3]
    %v3461 = vld [vmem:[%s3] sm:$0x1]
    %v3463 = vlaneseq
    %v3464 = vshrl.u32 %v3463, 7
    %v3465 = vsub.s32 0, %v3464
    %v3466 = vrot.slane %v3461, %v3465
    %v3472 = vunpack.c.l.b16 %v3457
    %v3473 = vunpack.c.l.b16 %v3458
    %v3474 = vunpack.c.l.b16 %v3459
    %v3475 = vunpack.c.l.b16 %v3460
    %v3476 = vpack.c.b16 %v3473, %v3472
    %v3477 = vpack.c.b16 %v3475, %v3474
    %vm3479 = vcmask 220160
    %v3481 = vsel %vm3479, %v3425, 0
    %v3484 = vsel %vm3479, %v3426, 0
    %v3487 = vsel %vm3479, %v3427, 0
    %v3490 = vsel %vm3479, %v3428, 0
    %v3493 = vsel %vm3479, %v3429, 0
    %v3496 = vsel %vm3479, %v3430, 0
    %v3499 = vsel %vm3479, %v3431, 0
    %v3502 = vsel %vm3479, %v3432, 0
    %v3505 = vsel %vm3479, %v3433, 0
    %v3508 = vsel %vm3479, %v3434, 0
    %v3511 = vsel %vm3479, %v3435, 0
    %v3514 = vsel %vm3479, %v3436, 0
    %v3517 = vsel %vm3479, %v3437, 0
    %v3520 = vsel %vm3479, %v3438, 0
    %v3523 = vsel %vm3479, %v3439, 0
    %v3526 = vsel %vm3479, %v3440, 0
    %v3529 = vsel %vm3479, %v3441, 0
    %v3532 = vsel %vm3479, %v3442, 0
    %v3535 = vsel %vm3479, %v3443, 0
    %v3538 = vsel %vm3479, %v3444, 0
    %v3541 = vsel %vm3479, %v3445, 0
    %v3544 = vsel %vm3479, %v3446, 0
    %v3547 = vsel %vm3479, %v3447, 0
    %v3550 = vsel %vm3479, %v3448, 0
    %v3553 = vsel %vm3479, %v3449, 0
    %v3556 = vsel %vm3479, %v3450, 0
    %v3559 = vsel %vm3479, %v3451, 0
    %v3562 = vsel %vm3479, %v3452, 0
    %v3565 = vsel %vm3479, %v3453, 0
    %v3568 = vsel %vm3479, %v3454, 0
    %v3571 = vsel %vm3479, %v3455, 0
    %v3574 = vsel %vm3479, %v3456, 0
    %vm3576 = vcmask 1044480
    %vm3577 = vcmask 1045504
    %v3578 = vsel %vm3576, 4294967295, 65535
    %v3579 = vsel %vm3577, %v3578, 0
    %v3581 = vand.u32 %v3477, %v3579
    %3583 = vmatprep.subr.bf16.mxu0 0
    %3584 = vmatpush1.bf16.msra.mxu0 %v3476
    %3585 = vmatprep.subr.bf16.mxu0 0
    %3586 = vmatpush1.bf16.msra.mxu0 %v3581
    %3587 = vmatprep.subr.bf16.mxu0 0
    %3588 = vmatpush1.bf16.msra.mxu0 0
    %3589 = vmatprep.subr.bf16.mxu0 0
    %3590 = vmatpush1.bf16.msra.mxu0 0
    %3591 = vmatprep.subr.bf16.mxu0 0
    %3592 = vmatpush1.bf16.msra.mxu0 0
    %3593 = vmatprep.subr.bf16.mxu0 0
    %3594 = vmatpush1.bf16.msra.mxu0 0
    %3595 = vmatprep.subr.bf16.mxu0 0
    %3596 = vmatpush1.bf16.msra.mxu0 0
    %3597 = vmatprep.subr.bf16.mxu0 0
    %3598 = vmatpush1.bf16.msra.mxu0 0
    %3599 = vmatprep.subr.bf16.mxu0 0
    %3600 = vmatpush1.bf16.msra.mxu0 0
    %3601 = vmatprep.subr.bf16.mxu0 0
    %3602 = vmatpush1.bf16.msra.mxu0 0
    %3603 = vmatprep.subr.bf16.mxu0 0
    %3604 = vmatpush1.bf16.msra.mxu0 0
    %3605 = vmatprep.subr.bf16.mxu0 0
    %3606 = vmatpush1.bf16.msra.mxu0 0
    %3607 = vmatprep.subr.bf16.mxu0 0
    %3608 = vmatpush1.bf16.msra.mxu0 0
    %3609 = vmatprep.subr.bf16.mxu0 0
    %3610 = vmatpush1.bf16.msra.mxu0 0
    %3611 = vmatprep.subr.bf16.mxu0 0
    %3612 = vmatpush1.bf16.msra.mxu0 0
    %3613 = vmatprep.subr.bf16.mxu0 0
    %3614 = vmatpush1.bf16.msra.mxu0 0
    %3615 = vmatprep.mubr.bf16.mxu0 0
    %3616 = vmatmul.mubr.bf16.gmra.mrb[0].mxu0 %v3481
    %v3617 = vpop.f32.mrb[0].mxu0
    %v3618 = vadd.f32 %v3466, %v3617
    %v3619 = vpop.f32.mrb[0].mxu0
    %v3620 = vpop.f32.mrb[0].mxu0
    %v3621 = vadd.f32 %v3466, %v3620
    %v3622 = vpop.f32.mrb[0].mxu0
    %3623 = vmatprep.mubr.bf16.mxu0 0
    %3624 = vmatmul.mubr.bf16.gmra.mrb[0].mxu0 %v3484
    %v3625 = vpop.f32.mrb[0].mxu0
    %v3626 = vadd.f32 %v3466, %v3625
    %v3627 = vpop.f32.mrb[0].mxu0
    %v3628 = vpop.f32.mrb[0].mxu0
    %v3629 = vadd.f32 %v3466, %v3628
    %v3630 = vpop.f32.mrb[0].mxu0
    %3631 = vmatprep.mubr.bf16.mxu0 0
    %3632 = vmatmul.mubr.bf16.gmra.mrb[0].mxu0 %v3487
    %v3633 = vpop.f32.mrb[0].mxu0
    %v3634 = vadd.f32 %v3466, %v3633
    %v3635 = vpop.f32.mrb[0].mxu0
    %v3636 = vpop.f32.mrb[0].mxu0
    %v3637 = vadd.f32 %v3466, %v3636
    %v3638 = vpop.f32.mrb[0].mxu0
    %3639 = vmatprep.mubr.bf16.mxu0 0
    %3640 = vmatmul.mubr.bf16.gmra.mrb[0].mxu0 %v3490
    %v3641 = vpop.f32.mrb[0].mxu0
    %v3642 = vadd.f32 %v3466, %v3641
    %v3643 = vpop.f32.mrb[0].mxu0
    %v3644 = vpop.f32.mrb[0].mxu0
    %v3645 = vadd.f32 %v3466, %v3644
    %v3646 = vpop.f32.mrb[0].mxu0
    %3647 = vmatprep.mubr.bf16.mxu0 0
    %3648 = vmatmul.mubr.bf16.gmra.mrb[0].mxu0 %v3493
    %v3649 = vpop.f32.mrb[0].mxu0
    %v3650 = vadd.f32 %v3466, %v3649
    %v3651 = vpop.f32.mrb[0].mxu0
    %v3652 = vpop.f32.mrb[0].mxu0
    %v3653 = vadd.f32 %v3466, %v3652
    %v3654 = vpop.f32.mrb[0].mxu0
    %3655 = vmatprep.mubr.bf16.mxu0 0
    %3656 = vmatmul.mubr.bf16.gmra.mrb[0].mxu0 %v3496
    %v3657 = vpop.f32.mrb[0].mxu0
    %v3658 = vadd.f32 %v3466, %v3657
    %v3659 = vpop.f32.mrb[0].mxu0
    %v3660 = vpop.f32.mrb[0].mxu0
    %v3661 = vadd.f32 %v3466, %v3660
    %v3662 = vpop.f32.mrb[0].mxu0
    %3663 = vmatprep.mubr.bf16.mxu0 0
    %3664 = vmatmul.mubr.bf16.gmra.mrb[0].mxu0 %v3499
    %v3665 = vpop.f32.mrb[0].mxu0
    %v3666 = vadd.f32 %v3466, %v3665
    %v3667 = vpop.f32.mrb[0].mxu0
    %v3668 = vpop.f32.mrb[0].mxu0
    %v3669 = vadd.f32 %v3466, %v3668
    %v3670 = vpop.f32.mrb[0].mxu0
    %3671 = vmatprep.mubr.bf16.mxu0 0
    %3672 = vmatmul.mubr.bf16.gmra.mrb[0].mxu0 %v3502
    %v3673 = vpop.f32.mrb[0].mxu0
    %v3674 = vadd.f32 %v3466, %v3673
    %v3675 = vpop.f32.mrb[0].mxu0
    %v3676 = vpop.f32.mrb[0].mxu0
    %v3677 = vadd.f32 %v3466, %v3676
    %v3678 = vpop.f32.mrb[0].mxu0
    %3679 = vmatprep.mubr.bf16.mxu0 0
    %3680 = vmatmul.mubr.bf16.gmra.mrb[0].mxu0 %v3505
    %v3681 = vpop.f32.mrb[0].mxu0
    %v3682 = vadd.f32 %v3466, %v3681
    %v3683 = vpop.f32.mrb[0].mxu0
    %v3684 = vpop.f32.mrb[0].mxu0
    %v3685 = vadd.f32 %v3466, %v3684
    %v3686 = vpop.f32.mrb[0].mxu0
    %3687 = vmatprep.mubr.bf16.mxu0 0
    %3688 = vmatmul.mubr.bf16.gmra.mrb[0].mxu0 %v3508
    %v3689 = vpop.f32.mrb[0].mxu0
    %v3690 = vadd.f32 %v3466, %v3689
    %v3691 = vpop.f32.mrb[0].mxu0
    %v3692 = vpop.f32.mrb[0].mxu0
    %v3693 = vadd.f32 %v3466, %v3692
    %v3694 = vpop.f32.mrb[0].mxu0
    %3695 = vmatprep.mubr.bf16.mxu0 0
    %3696 = vmatmul.mubr.bf16.gmra.mrb[0].mxu0 %v3511
    %v3697 = vpop.f32.mrb[0].mxu0
    %v3698 = vadd.f32 %v3466, %v3697
    %v3699 = vpop.f32.mrb[0].mxu0
    %v3700 = vpop.f32.mrb[0].mxu0
    %v3701 = vadd.f32 %v3466, %v3700
    %v3702 = vpop.f32.mrb[0].mxu0
    %3703 = vmatprep.mubr.bf16.mxu0 0
    %3704 = vmatmul.mubr.bf16.gmra.mrb[0].mxu0 %v3514
    %v3705 = vpop.f32.mrb[0].mxu0
    %v3706 = vadd.f32 %v3466, %v3705
    %v3707 = vpop.f32.mrb[0].mxu0
    %v3708 = vpop.f32.mrb[0].mxu0
    %v3709 = vadd.f32 %v3466, %v3708
    %v3710 = vpop.f32.mrb[0].mxu0
    %3711 = vmatprep.mubr.bf16.mxu0 0
    %3712 = vmatmul.mubr.bf16.gmra.mrb[0].mxu0 %v3517
    %v3713 = vpop.f32.mrb[0].mxu0
    %v3714 = vadd.f32 %v3466, %v3713
    %v3715 = vpop.f32.mrb[0].mxu0
    %v3716 = vpop.f32.mrb[0].mxu0
    %v3717 = vadd.f32 %v3466, %v3716
    %v3718 = vpop.f32.mrb[0].mxu0
    %3719 = vmatprep.mubr.bf16.mxu0 0
    %3720 = vmatmul.mubr.bf16.gmra.mrb[0].mxu0 %v3520
    %v3721 = vpop.f32.mrb[0].mxu0
    %v3722 = vadd.f32 %v3466, %v3721
    %v3723 = vpop.f32.mrb[0].mxu0
    %v3724 = vpop.f32.mrb[0].mxu0
    %v3725 = vadd.f32 %v3466, %v3724
    %v3726 = vpop.f32.mrb[0].mxu0
    %3727 = vmatprep.mubr.bf16.mxu0 0
    %3728 = vmatmul.mubr.bf16.gmra.mrb[0].mxu0 %v3523
    %v3729 = vpop.f32.mrb[0].mxu0
    %v3730 = vadd.f32 %v3466, %v3729
    %v3731 = vpop.f32.mrb[0].mxu0
    %v3732 = vpop.f32.mrb[0].mxu0
    %v3733 = vadd.f32 %v3466, %v3732
    %v3734 = vpop.f32.mrb[0].mxu0
    %3735 = vmatprep.mubr.bf16.mxu0 0
    %3736 = vmatmul.mubr.bf16.gmra.mrb[0].mxu0 %v3526
    %v3737 = vpop.f32.mrb[0].mxu0
    %v3738 = vadd.f32 %v3466, %v3737
    %v3739 = vpop.f32.mrb[0].mxu0
    %v3740 = vpop.f32.mrb[0].mxu0
    %v3741 = vadd.f32 %v3466, %v3740
    %v3742 = vpop.f32.mrb[0].mxu0
    %3743 = vmatprep.mubr.bf16.mxu0 0
    %3744 = vmatmul.mubr.bf16.gmra.mrb[0].mxu0 %v3529
    %v3745 = vpop.f32.mrb[0].mxu0
    %v3746 = vadd.f32 %v3466, %v3745
    %v3747 = vpop.f32.mrb[0].mxu0
    %v3748 = vpop.f32.mrb[0].mxu0
    %v3749 = vadd.f32 %v3466, %v3748
    %v3750 = vpop.f32.mrb[0].mxu0
    %3751 = vmatprep.mubr.bf16.mxu0 0
    %3752 = vmatmul.mubr.bf16.gmra.mrb[0].mxu0 %v3532
    %v3753 = vpop.f32.mrb[0].mxu0
    %v3754 = vadd.f32 %v3466, %v3753
    %v3755 = vpop.f32.mrb[0].mxu0
    %v3756 = vpop.f32.mrb[0].mxu0
    %v3757 = vadd.f32 %v3466, %v3756
    %v3758 = vpop.f32.mrb[0].mxu0
    %3759 = vmatprep.mubr.bf16.mxu0 0
    %3760 = vmatmul.mubr.bf16.gmra.mrb[0].mxu0 %v3535
    %v3761 = vpop.f32.mrb[0].mxu0
    %v3762 = vadd.f32 %v3466, %v3761
    %v3763 = vpop.f32.mrb[0].mxu0
    %v3764 = vpop.f32.mrb[0].mxu0
    %v3765 = vadd.f32 %v3466, %v3764
    %v3766 = vpop.f32.mrb[0].mxu0
    %3767 = vmatprep.mubr.bf16.mxu0 0
    %3768 = vmatmul.mubr.bf16.gmra.mrb[0].mxu0 %v3538
    %v3769 = vpop.f32.mrb[0].mxu0
    %v3770 = vadd.f32 %v3466, %v3769
    %v3771 = vpop.f32.mrb[0].mxu0
    %v3772 = vpop.f32.mrb[0].mxu0
    %v3773 = vadd.f32 %v3466, %v3772
    %v3774 = vpop.f32.mrb[0].mxu0
    %3775 = vmatprep.mubr.bf16.mxu0 0
    %3776 = vmatmul.mubr.bf16.gmra.mrb[0].mxu0 %v3541
    %v3777 = vpop.f32.mrb[0].mxu0
    %v3778 = vadd.f32 %v3466, %v3777
    %v3779 = vpop.f32.mrb[0].mxu0
    %v3780 = vpop.f32.mrb[0].mxu0
    %v3781 = vadd.f32 %v3466, %v3780
    %v3782 = vpop.f32.mrb[0].mxu0
    %3783 = vmatprep.mubr.bf16.mxu0 0
    %3784 = vmatmul.mubr.bf16.gmra.mrb[0].mxu0 %v3544
    %v3785 = vpop.f32.mrb[0].mxu0
    %v3786 = vadd.f32 %v3466, %v3785
    %v3787 = vpop.f32.mrb[0].mxu0
    %v3788 = vpop.f32.mrb[0].mxu0
    %v3789 = vadd.f32 %v3466, %v3788
    %v3790 = vpop.f32.mrb[0].mxu0
    %3791 = vmatprep.mubr.bf16.mxu0 0
    %3792 = vmatmul.mubr.bf16.gmra.mrb[0].mxu0 %v3547
    %v3793 = vpop.f32.mrb[0].mxu0
    %v3794 = vadd.f32 %v3466, %v3793
    %v3795 = vpop.f32.mrb[0].mxu0
    %v3796 = vpop.f32.mrb[0].mxu0
    %v3797 = vadd.f32 %v3466, %v3796
    %v3798 = vpop.f32.mrb[0].mxu0
    %3799 = vmatprep.mubr.bf16.mxu0 0
    %3800 = vmatmul.mubr.bf16.gmra.mrb[0].mxu0 %v3550
    %v3801 = vpop.f32.mrb[0].mxu0
    %v3802 = vadd.f32 %v3466, %v3801
    %v3803 = vpop.f32.mrb[0].mxu0
    %v3804 = vpop.f32.mrb[0].mxu0
    %v3805 = vadd.f32 %v3466, %v3804
    %v3806 = vpop.f32.mrb[0].mxu0
    %3807 = vmatprep.mubr.bf16.mxu0 0
    %3808 = vmatmul.mubr.bf16.gmra.mrb[0].mxu0 %v3553
    %v3809 = vpop.f32.mrb[0].mxu0
    %v3810 = vadd.f32 %v3466, %v3809
    %v3811 = vpop.f32.mrb[0].mxu0
    %v3812 = vpop.f32.mrb[0].mxu0
    %v3813 = vadd.f32 %v3466, %v3812
    %v3814 = vpop.f32.mrb[0].mxu0
    %3815 = vmatprep.mubr.bf16.mxu0 0
    %3816 = vmatmul.mubr.bf16.gmra.mrb[0].mxu0 %v3556
    %v3817 = vpop.f32.mrb[0].mxu0
    %v3818 = vadd.f32 %v3466, %v3817
    %v3819 = vpop.f32.mrb[0].mxu0
    %v3820 = vpop.f32.mrb[0].mxu0
    %v3821 = vadd.f32 %v3466, %v3820
    %v3822 = vpop.f32.mrb[0].mxu0
    %3823 = vmatprep.mubr.bf16.mxu0 0
    %3824 = vmatmul.mubr.bf16.gmra.mrb[0].mxu0 %v3559
    %v3825 = vpop.f32.mrb[0].mxu0
    %v3826 = vadd.f32 %v3466, %v3825
    %v3827 = vpop.f32.mrb[0].mxu0
    %v3828 = vpop.f32.mrb[0].mxu0
    %v3829 = vadd.f32 %v3466, %v3828
    %v3830 = vpop.f32.mrb[0].mxu0
    %3831 = vmatprep.mubr.bf16.mxu0 0
    %3832 = vmatmul.mubr.bf16.gmra.mrb[0].mxu0 %v3562
    %v3833 = vpop.f32.mrb[0].mxu0
    %v3834 = vadd.f32 %v3466, %v3833
    %v3835 = vpop.f32.mrb[0].mxu0
    %v3836 = vpop.f32.mrb[0].mxu0
    %v3837 = vadd.f32 %v3466, %v3836
    %v3838 = vpop.f32.mrb[0].mxu0
    %3839 = vmatprep.mubr.bf16.mxu0 0
    %3840 = vmatmul.mubr.bf16.gmra.mrb[0].mxu0 %v3565
    %v3841 = vpop.f32.mrb[0].mxu0
    %v3842 = vadd.f32 %v3466, %v3841
    %v3843 = vpop.f32.mrb[0].mxu0
    %v3844 = vpop.f32.mrb[0].mxu0
    %v3845 = vadd.f32 %v3466, %v3844
    %v3846 = vpop.f32.mrb[0].mxu0
    %3847 = vmatprep.mubr.bf16.mxu0 0
    %3848 = vmatmul.mubr.bf16.gmra.mrb[0].mxu0 %v3568
    %v3849 = vpop.f32.mrb[0].mxu0
    %v3850 = vadd.f32 %v3466, %v3849
    %v3851 = vpop.f32.mrb[0].mxu0
    %v3852 = vpop.f32.mrb[0].mxu0
    %v3853 = vadd.f32 %v3466, %v3852
    %v3854 = vpop.f32.mrb[0].mxu0
    %3855 = vmatprep.mubr.bf16.mxu0 0
    %3856 = vmatmul.mubr.bf16.gmra.mrb[0].mxu0 %v3571
    %v3857 = vpop.f32.mrb[0].mxu0
    %v3858 = vadd.f32 %v3466, %v3857
    %v3859 = vpop.f32.mrb[0].mxu0
    %v3860 = vpop.f32.mrb[0].mxu0
    %v3861 = vadd.f32 %v3466, %v3860
    %v3862 = vpop.f32.mrb[0].mxu0
    %3863 = vmatprep.mubr.bf16.mxu0 0
    %3864 = vmatmul.mubr.bf16.gmra.mrb[0].mxu0 %v3574
    %v3865 = vpop.f32.mrb[0].mxu0
    %v3866 = vadd.f32 %v3466, %v3865
    %v3867 = vpop.f32.mrb[0].mxu0
    %v3868 = vpop.f32.mrb[0].mxu0
    %v3869 = vadd.f32 %v3466, %v3868
    %v3870 = vpop.f32.mrb[0].mxu0
    %3871 = vdwg.mxu0
    %v3872 = vmax.f32 %v3618, 0.0
    %v3873 = vmax.f32 %v3621, 0.0
    %v3874 = vmax.f32 %v3626, 0.0
    %v3875 = vmax.f32 %v3629, 0.0
    %v3876 = vmax.f32 %v3634, 0.0
    %v3877 = vmax.f32 %v3637, 0.0
    %v3878 = vmax.f32 %v3642, 0.0
    %v3879 = vmax.f32 %v3645, 0.0
    %v3880 = vmax.f32 %v3650, 0.0
    %v3881 = vmax.f32 %v3653, 0.0
    %v3882 = vmax.f32 %v3658, 0.0
    %v3883 = vmax.f32 %v3661, 0.0
    %v3884 = vmax.f32 %v3666, 0.0
    %v3885 = vmax.f32 %v3669, 0.0
    %v3886 = vmax.f32 %v3674, 0.0
    %v3887 = vmax.f32 %v3677, 0.0
    %v3888 = vmax.f32 %v3682, 0.0
    %v3889 = vmax.f32 %v3685, 0.0
    %v3890 = vmax.f32 %v3690, 0.0
    %v3891 = vmax.f32 %v3693, 0.0
    %v3892 = vmax.f32 %v3698, 0.0
    %v3893 = vmax.f32 %v3701, 0.0
    %v3894 = vmax.f32 %v3706, 0.0
    %v3895 = vmax.f32 %v3709, 0.0
    %v3896 = vmax.f32 %v3714, 0.0
    %v3897 = vmax.f32 %v3717, 0.0
    %v3898 = vmax.f32 %v3722, 0.0
    %v3899 = vmax.f32 %v3725, 0.0
    %v3900 = vmax.f32 %v3730, 0.0
    %v3901 = vmax.f32 %v3733, 0.0
    %v3902 = vmax.f32 %v3738, 0.0
    %v3903 = vmax.f32 %v3741, 0.0
    %v3904 = vmax.f32 %v3746, 0.0
    %v3905 = vmax.f32 %v3749, 0.0
    %v3906 = vmax.f32 %v3754, 0.0
    %v3907 = vmax.f32 %v3757, 0.0
    %v3908 = vmax.f32 %v3762, 0.0
    %v3909 = vmax.f32 %v3765, 0.0
    %v3910 = vmax.f32 %v3770, 0.0
    %v3911 = vmax.f32 %v3773, 0.0
    %v3912 = vmax.f32 %v3778, 0.0
    %v3913 = vmax.f32 %v3781, 0.0
    %v3914 = vmax.f32 %v3786, 0.0
    %v3915 = vmax.f32 %v3789, 0.0
    %v3916 = vmax.f32 %v3794, 0.0
    %v3917 = vmax.f32 %v3797, 0.0
    %v3918 = vmax.f32 %v3802, 0.0
    %v3919 = vmax.f32 %v3805, 0.0
    %v3920 = vmax.f32 %v3810, 0.0
    %v3921 = vmax.f32 %v3813, 0.0
    %v3922 = vmax.f32 %v3818, 0.0
    %v3923 = vmax.f32 %v3821, 0.0
    %v3924 = vmax.f32 %v3826, 0.0
    %v3925 = vmax.f32 %v3829, 0.0
    %v3926 = vmax.f32 %v3834, 0.0
    %v3927 = vmax.f32 %v3837, 0.0
    %v3928 = vmax.f32 %v3842, 0.0
    %v3929 = vmax.f32 %v3845, 0.0
    %v3930 = vmax.f32 %v3850, 0.0
    %v3931 = vmax.f32 %v3853, 0.0
    %v3932 = vmax.f32 %v3858, 0.0
    %v3933 = vmax.f32 %v3861, 0.0
    %v3934 = vmax.f32 %v3866, 0.0
    %v3935 = vmax.f32 %v3869, 0.0
    %3936 = vst.msk [vmem:[%s215 + $0x1] sm:$0xff] %vm41, %v3872
    %3937 = vst.msk [vmem:[%s215 + $0x9] sm:$0xff] %vm41, %v3873
    %3938 = vst.msk [vmem:[%s215 + $0x19] sm:$0xff] %vm41, %v3874
    %3939 = vst.msk [vmem:[%s215 + $0x21] sm:$0xff] %vm41, %v3875
    %3940 = vst.msk [vmem:[%s215 + $0x31] sm:$0xff] %vm41, %v3876
    %3941 = vst.msk [vmem:[%s215 + $0x39] sm:$0xff] %vm41, %v3877
    %3942 = vst.msk [vmem:[%s215 + $0x49] sm:$0xff] %vm41, %v3878
    %3943 = vst.msk [vmem:[%s215 + $0x51] sm:$0xff] %vm41, %v3879
    %3944 = vst.msk [vmem:[%s215 + $0x61] sm:$0xff] %vm41, %v3880
    %3945 = vst.msk [vmem:[%s215 + $0x69] sm:$0xff] %vm41, %v3881
    %3946 = vst.msk [vmem:[%s215 + $0x79] sm:$0xff] %vm41, %v3882
    %3947 = vst.msk [vmem:[%s215 + $0x81] sm:$0xff] %vm41, %v3883
    %3948 = vst.msk [vmem:[%s215 + $0x91] sm:$0xff] %vm41, %v3884
    %3949 = vst.msk [vmem:[%s215 + $0x99] sm:$0xff] %vm41, %v3885
    %3950 = vst.msk [vmem:[%s215 + $0xa9] sm:$0xff] %vm41, %v3886
    %3951 = vst.msk [vmem:[%s215 + $0xb1] sm:$0xff] %vm41, %v3887
    %3952 = vst.msk [vmem:[%s215 + $0xc1] sm:$0xff] %vm41, %v3888
    %3953 = vst.msk [vmem:[%s215 + $0xc9] sm:$0xff] %vm41, %v3889
    %3954 = vst.msk [vmem:[%s215 + $0xd9] sm:$0xff] %vm41, %v3890
    %3955 = vst.msk [vmem:[%s215 + $0xe1] sm:$0xff] %vm41, %v3891
    %3956 = vst.msk [vmem:[%s215 + $0xf1] sm:$0xff] %vm41, %v3892
    %3957 = vst.msk [vmem:[%s215 + $0xf9] sm:$0xff] %vm41, %v3893
    %3958 = vst.msk [vmem:[%s215 + $0x109] sm:$0xff] %vm41, %v3894
    %3959 = vst.msk [vmem:[%s215 + $0x111] sm:$0xff] %vm41, %v3895
    %3960 = vst.msk [vmem:[%s215 + $0x121] sm:$0xff] %vm41, %v3896
    %3961 = vst.msk [vmem:[%s215 + $0x129] sm:$0xff] %vm41, %v3897
    %3962 = vst.msk [vmem:[%s215 + $0x139] sm:$0xff] %vm41, %v3898
    %3963 = vst.msk [vmem:[%s215 + $0x141] sm:$0xff] %vm41, %v3899
    %3964 = vst.msk [vmem:[%s215 + $0x151] sm:$0xff] %vm41, %v3900
    %3965 = vst.msk [vmem:[%s215 + $0x159] sm:$0xff] %vm41, %v3901
    %3966 = vst.msk [vmem:[%s215 + $0x169] sm:$0xff] %vm41, %v3902
    %3967 = vst.msk [vmem:[%s215 + $0x171] sm:$0xff] %vm41, %v3903
    %3968 = vst.msk [vmem:[%s215 + $0x1b1] sm:$0xff] %vm41, %v3904
    %3969 = vst.msk [vmem:[%s215 + $0x1b9] sm:$0xff] %vm41, %v3905
    %3970 = vst.msk [vmem:[%s215 + $0x1c9] sm:$0xff] %vm41, %v3906
    %3971 = vst.msk [vmem:[%s215 + $0x1d1] sm:$0xff] %vm41, %v3907
    %3972 = vst.msk [vmem:[%s215 + $0x1e1] sm:$0xff] %vm41, %v3908
    %3973 = vst.msk [vmem:[%s215 + $0x1e9] sm:$0xff] %vm41, %v3909
    %3974 = vst.msk [vmem:[%s215 + $0x1f9] sm:$0xff] %vm41, %v3910
    %3975 = vst.msk [vmem:[%s215 + $0x201] sm:$0xff] %vm41, %v3911
    %3976 = vst.msk [vmem:[%s215 + $0x211] sm:$0xff] %vm41, %v3912
    %3977 = vst.msk [vmem:[%s215 + $0x219] sm:$0xff] %vm41, %v3913
    %3978 = vst.msk [vmem:[%s215 + $0x229] sm:$0xff] %vm41, %v3914
    %3979 = vst.msk [vmem:[%s215 + $0x231] sm:$0xff] %vm41, %v3915
    %3980 = vst.msk [vmem:[%s215 + $0x241] sm:$0xff] %vm41, %v3916
    %3981 = vst.msk [vmem:[%s215 + $0x249] sm:$0xff] %vm41, %v3917
    %3982 = vst.msk [vmem:[%s215 + $0x259] sm:$0xff] %vm41, %v3918
    %3983 = vst.msk [vmem:[%s215 + $0x261] sm:$0xff] %vm41, %v3919
    %3984 = vst.msk [vmem:[%s215 + $0x271] sm:$0xff] %vm41, %v3920
    %3985 = vst.msk [vmem:[%s215 + $0x279] sm:$0xff] %vm41, %v3921
    %3986 = vst.msk [vmem:[%s215 + $0x289] sm:$0xff] %vm41, %v3922
    %3987 = vst.msk [vmem:[%s215 + $0x291] sm:$0xff] %vm41, %v3923
    %3988 = vst.msk [vmem:[%s215 + $0x2a1] sm:$0xff] %vm41, %v3924
    %3989 = vst.msk [vmem:[%s215 + $0x2a9] sm:$0xff] %vm41, %v3925
    %3990 = vst.msk [vmem:[%s215 + $0x2b9] sm:$0xff] %vm41, %v3926
    %3991 = vst.msk [vmem:[%s215 + $0x2c1] sm:$0xff] %vm41, %v3927
    %3992 = vst.msk [vmem:[%s215 + $0x2d1] sm:$0xff] %vm41, %v3928
    %3993 = vst.msk [vmem:[%s215 + $0x2d9] sm:$0xff] %vm41, %v3929
    %3994 = vst.msk [vmem:[%s215 + $0x2e9] sm:$0xff] %vm41, %v3930
    %3995 = vst.msk [vmem:[%s215 + $0x2f1] sm:$0xff] %vm41, %v3931
    %3996 = vst.msk [vmem:[%s215 + $0x301] sm:$0xff] %vm41, %v3932
    %3997 = vst.msk [vmem:[%s215 + $0x309] sm:$0xff] %vm41, %v3933
    %3998 = vst.msk [vmem:[%s215 + $0x319] sm:$0xff] %vm41, %v3934
    %3999 = vst.msk [vmem:[%s215 + $0x321] sm:$0xff] %vm41, %v3935
    %v4000 = vld [vmem:[#allocation2] sm:$0xff]
    %v4001 = vld [vmem:[#allocation2 + $0x8] sm:$0xff]
    %v4002 = vld [vmem:[#allocation2 + $0x18] sm:$0xff]
    %v4003 = vld [vmem:[#allocation2 + $0x20] sm:$0xff]
    %v4004 = vld [vmem:[#allocation2 + $0x30] sm:$0xff]
    %v4005 = vld [vmem:[#allocation2 + $0x38] sm:$0xff]
    %v4006 = vld [vmem:[#allocation2 + $0x48] sm:$0xff]
    %v4007 = vld [vmem:[#allocation2 + $0x50] sm:$0xff]
    %v4008 = vld [vmem:[#allocation2 + $0x60] sm:$0xff]
    %v4009 = vld [vmem:[#allocation2 + $0x68] sm:$0xff]
    %v4010 = vld [vmem:[#allocation2 + $0x78] sm:$0xff]
    %v4011 = vld [vmem:[#allocation2 + $0x80] sm:$0xff]
    %v4012 = vld [vmem:[#allocation2 + $0x90] sm:$0xff]
    %v4013 = vld [vmem:[#allocation2 + $0x98] sm:$0xff]
    %v4014 = vld [vmem:[#allocation2 + $0xa8] sm:$0xff]
    %v4015 = vld [vmem:[#allocation2 + $0xb0] sm:$0xff]
    %v4016 = vld [vmem:[#allocation2 + $0xc0] sm:$0xff]
    %v4017 = vld [vmem:[#allocation2 + $0xc8] sm:$0xff]
    %v4018 = vld [vmem:[#allocation2 + $0xd8] sm:$0xff]
    %v4019 = vld [vmem:[#allocation2 + $0xe0] sm:$0xff]
    %v4020 = vld [vmem:[#allocation2 + $0xf0] sm:$0xff]
    %v4021 = vld [vmem:[#allocation2 + $0xf8] sm:$0xff]
    %v4022 = vld [vmem:[#allocation2 + $0x108] sm:$0xff]
    %v4023 = vld [vmem:[#allocation2 + $0x110] sm:$0xff]
    %v4024 = vld [vmem:[#allocation2 + $0x120] sm:$0xff]
    %v4025 = vld [vmem:[#allocation2 + $0x128] sm:$0xff]
    %v4026 = vld [vmem:[#allocation2 + $0x138] sm:$0xff]
    %v4027 = vld [vmem:[#allocation2 + $0x140] sm:$0xff]
    %v4028 = vld [vmem:[#allocation2 + $0x150] sm:$0xff]
    %v4029 = vld [vmem:[#allocation2 + $0x158] sm:$0xff]
    %v4030 = vld [vmem:[#allocation2 + $0x168] sm:$0xff]
    %v4031 = vld [vmem:[#allocation2 + $0x170] sm:$0xff]
    %v4032 = vld [vmem:[#allocation2 + $0x1b0] sm:$0xff]
    %v4033 = vld [vmem:[#allocation2 + $0x1b8] sm:$0xff]
    %v4034 = vld [vmem:[#allocation2 + $0x1c8] sm:$0xff]
    %v4035 = vld [vmem:[#allocation2 + $0x1d0] sm:$0xff]
    %v4036 = vld [vmem:[#allocation2 + $0x1e0] sm:$0xff]
    %v4037 = vld [vmem:[#allocation2 + $0x1e8] sm:$0xff]
    %v4038 = vld [vmem:[#allocation2 + $0x1f8] sm:$0xff]
    %v4039 = vld [vmem:[#allocation2 + $0x200] sm:$0xff]
    %v4040 = vld [vmem:[#allocation2 + $0x210] sm:$0xff]
    %v4041 = vld [vmem:[#allocation2 + $0x218] sm:$0xff]
    %v4042 = vld [vmem:[#allocation2 + $0x228] sm:$0xff]
    %v4043 = vld [vmem:[#allocation2 + $0x230] sm:$0xff]
    %v4044 = vld [vmem:[#allocation2 + $0x240] sm:$0xff]
    %v4045 = vld [vmem:[#allocation2 + $0x248] sm:$0xff]
    %v4046 = vld [vmem:[#allocation2 + $0x258] sm:$0xff]
    %v4047 = vld [vmem:[#allocation2 + $0x260] sm:$0xff]
    %v4048 = vld [vmem:[#allocation2 + $0x270] sm:$0xff]
    %v4049 = vld [vmem:[#allocation2 + $0x278] sm:$0xff]
    %v4050 = vld [vmem:[#allocation2 + $0x288] sm:$0xff]
    %v4051 = vld [vmem:[#allocation2 + $0x290] sm:$0xff]
    %v4052 = vld [vmem:[#allocation2 + $0x2a0] sm:$0xff]
    %v4053 = vld [vmem:[#allocation2 + $0x2a8] sm:$0xff]
    %v4054 = vld [vmem:[#allocation2 + $0x2b8] sm:$0xff]
    %v4055 = vld [vmem:[#allocation2 + $0x2c0] sm:$0xff]
    %v4056 = vld [vmem:[#allocation2 + $0x2d0] sm:$0xff]
    %v4057 = vld [vmem:[#allocation2 + $0x2d8] sm:$0xff]
    %v4058 = vld [vmem:[#allocation2 + $0x2e8] sm:$0xff]
    %v4059 = vld [vmem:[#allocation2 + $0x2f0] sm:$0xff]
    %v4060 = vld [vmem:[#allocation2 + $0x300] sm:$0xff]
    %v4061 = vld [vmem:[#allocation2 + $0x308] sm:$0xff]
    %v4062 = vld [vmem:[#allocation2 + $0x318] sm:$0xff]
    %v4063 = vld [vmem:[#allocation2 + $0x320] sm:$0xff]
    %v4064 = vld [vmem:[#allocation2 + $0x1] sm:$0xff]
    %v4065 = vld [vmem:[#allocation2 + $0x9] sm:$0xff]
    %v4066 = vld [vmem:[#allocation2 + $0x19] sm:$0xff]
    %v4067 = vld [vmem:[#allocation2 + $0x21] sm:$0xff]
    %v4068 = vld [vmem:[#allocation2 + $0x31] sm:$0xff]
    %v4069 = vld [vmem:[#allocation2 + $0x39] sm:$0xff]
    %v4070 = vld [vmem:[#allocation2 + $0x49] sm:$0xff]
    %v4071 = vld [vmem:[#allocation2 + $0x51] sm:$0xff]
    %v4072 = vld [vmem:[#allocation2 + $0x61] sm:$0xff]
    %v4073 = vld [vmem:[#allocation2 + $0x69] sm:$0xff]
    %v4074 = vld [vmem:[#allocation2 + $0x79] sm:$0xff]
    %v4075 = vld [vmem:[#allocation2 + $0x81] sm:$0xff]
    %v4076 = vld [vmem:[#allocation2 + $0x91] sm:$0xff]
    %v4077 = vld [vmem:[#allocation2 + $0x99] sm:$0xff]
    %v4078 = vld [vmem:[#allocation2 + $0xa9] sm:$0xff]
    %v4079 = vld [vmem:[#allocation2 + $0xb1] sm:$0xff]
    %v4080 = vld [vmem:[#allocation2 + $0xc1] sm:$0xff]
    %v4081 = vld [vmem:[#allocation2 + $0xc9] sm:$0xff]
    %v4082 = vld [vmem:[#allocation2 + $0xd9] sm:$0xff]
    %v4083 = vld [vmem:[#allocation2 + $0xe1] sm:$0xff]
    %v4084 = vld [vmem:[#allocation2 + $0xf1] sm:$0xff]
    %v4085 = vld [vmem:[#allocation2 + $0xf9] sm:$0xff]
    %v4086 = vld [vmem:[#allocation2 + $0x109] sm:$0xff]
    %v4087 = vld [vmem:[#allocation2 + $0x111] sm:$0xff]
    %v4088 = vld [vmem:[#allocation2 + $0x121] sm:$0xff]
    %v4089 = vld [vmem:[#allocation2 + $0x129] sm:$0xff]
    %v4090 = vld [vmem:[#allocation2 + $0x139] sm:$0xff]
    %v4091 = vld [vmem:[#allocation2 + $0x141] sm:$0xff]
    %v4092 = vld [vmem:[#allocation2 + $0x151] sm:$0xff]
    %v4093 = vld [vmem:[#allocation2 + $0x159] sm:$0xff]
    %v4094 = vld [vmem:[#allocation2 + $0x169] sm:$0xff]
    %v4095 = vld [vmem:[#allocation2 + $0x171] sm:$0xff]
    %v4096 = vld [vmem:[#allocation2 + $0x1b1] sm:$0xff]
    %v4097 = vld [vmem:[#allocation2 + $0x1b9] sm:$0xff]
    %v4098 = vld [vmem:[#allocation2 + $0x1c9] sm:$0xff]
    %v4099 = vld [vmem:[#allocation2 + $0x1d1] sm:$0xff]
    %v4100 = vld [vmem:[#allocation2 + $0x1e1] sm:$0xff]
    %v4101 = vld [vmem:[#allocation2 + $0x1e9] sm:$0xff]
    %v4102 = vld [vmem:[#allocation2 + $0x1f9] sm:$0xff]
    %v4103 = vld [vmem:[#allocation2 + $0x201] sm:$0xff]
    %v4104 = vld [vmem:[#allocation2 + $0x211] sm:$0xff]
    %v4105 = vld [vmem:[#allocation2 + $0x219] sm:$0xff]
    %v4106 = vld [vmem:[#allocation2 + $0x229] sm:$0xff]
    %v4107 = vld [vmem:[#allocation2 + $0x231] sm:$0xff]
    %v4108 = vld [vmem:[#allocation2 + $0x241] sm:$0xff]
    %v4109 = vld [vmem:[#allocation2 + $0x249] sm:$0xff]
    %v4110 = vld [vmem:[#allocation2 + $0x259] sm:$0xff]
    %v4111 = vld [vmem:[#allocation2 + $0x261] sm:$0xff]
    %v4112 = vld [vmem:[#allocation2 + $0x271] sm:$0xff]
    %v4113 = vld [vmem:[#allocation2 + $0x279] sm:$0xff]
    %v4114 = vld [vmem:[#allocation2 + $0x289] sm:$0xff]
    %v4115 = vld [vmem:[#allocation2 + $0x291] sm:$0xff]
    %v4116 = vld [vmem:[#allocation2 + $0x2a1] sm:$0xff]
    %v4117 = vld [vmem:[#allocation2 + $0x2a9] sm:$0xff]
    %v4118 = vld [vmem:[#allocation2 + $0x2b9] sm:$0xff]
    %v4119 = vld [vmem:[#allocation2 + $0x2c1] sm:$0xff]
    %v4120 = vld [vmem:[#allocation2 + $0x2d1] sm:$0xff]
    %v4121 = vld [vmem:[#allocation2 + $0x2d9] sm:$0xff]
    %v4122 = vld [vmem:[#allocation2 + $0x2e9] sm:$0xff]
    %v4123 = vld [vmem:[#allocation2 + $0x2f1] sm:$0xff]
    %v4124 = vld [vmem:[#allocation2 + $0x301] sm:$0xff]
    %v4125 = vld [vmem:[#allocation2 + $0x309] sm:$0xff]
    %v4126 = vld [vmem:[#allocation2 + $0x319] sm:$0xff]
    %v4127 = vld [vmem:[#allocation2 + $0x321] sm:$0xff]
    %v4128 = vld [vmem:[#allocation2 + $0x2] sm:$0xff]
    %v4129 = vld [vmem:[#allocation2 + $0xa] sm:$0xff]
    %v4130 = vld [vmem:[#allocation2 + $0x1a] sm:$0xff]
    %v4131 = vld [vmem:[#allocation2 + $0x22] sm:$0xff]
    %v4132 = vld [vmem:[#allocation2 + $0x32] sm:$0xff]
    %v4133 = vld [vmem:[#allocation2 + $0x3a] sm:$0xff]
    %v4134 = vld [vmem:[#allocation2 + $0x4a] sm:$0xff]
    %v4135 = vld [vmem:[#allocation2 + $0x52] sm:$0xff]
    %v4136 = vld [vmem:[#allocation2 + $0x62] sm:$0xff]
    %v4137 = vld [vmem:[#allocation2 + $0x6a] sm:$0xff]
    %v4138 = vld [vmem:[#allocation2 + $0x7a] sm:$0xff]
    %v4139 = vld [vmem:[#allocation2 + $0x82] sm:$0xff]
    %v4140 = vld [vmem:[#allocation2 + $0x92] sm:$0xff]
    %v4141 = vld [vmem:[#allocation2 + $0x9a] sm:$0xff]
    %v4142 = vld [vmem:[#allocation2 + $0xaa] sm:$0xff]
    %v4143 = vld [vmem:[#allocation2 + $0xb2] sm:$0xff]
    %v4144 = vld [vmem:[#allocation2 + $0xc2] sm:$0xff]
    %v4145 = vld [vmem:[#allocation2 + $0xca] sm:$0xff]
    %v4146 = vld [vmem:[#allocation2 + $0xda] sm:$0xff]
    %v4147 = vld [vmem:[#allocation2 + $0xe2] sm:$0xff]
    %v4148 = vld [vmem:[#allocation2 + $0xf2] sm:$0xff]
    %v4149 = vld [vmem:[#allocation2 + $0xfa] sm:$0xff]
    %v4150 = vld [vmem:[#allocation2 + $0x10a] sm:$0xff]
    %v4151 = vld [vmem:[#allocation2 + $0x112] sm:$0xff]
    %v4152 = vld [vmem:[#allocation2 + $0x122] sm:$0xff]
    %v4153 = vld [vmem:[#allocation2 + $0x12a] sm:$0xff]
    %v4154 = vld [vmem:[#allocation2 + $0x13a] sm:$0xff]
    %v4155 = vld [vmem:[#allocation2 + $0x142] sm:$0xff]
    %v4156 = vld [vmem:[#allocation2 + $0x152] sm:$0xff]
    %v4157 = vld [vmem:[#allocation2 + $0x15a] sm:$0xff]
    %v4158 = vld [vmem:[#allocation2 + $0x16a] sm:$0xff]
    %v4159 = vld [vmem:[#allocation2 + $0x172] sm:$0xff]
    %v4160 = vld [vmem:[#allocation2 + $0x1b2] sm:$0xff]
    %v4161 = vld [vmem:[#allocation2 + $0x1ba] sm:$0xff]
    %v4162 = vld [vmem:[#allocation2 + $0x1ca] sm:$0xff]
    %v4163 = vld [vmem:[#allocation2 + $0x1d2] sm:$0xff]
    %v4164 = vld [vmem:[#allocation2 + $0x1e2] sm:$0xff]
    %v4165 = vld [vmem:[#allocation2 + $0x1ea] sm:$0xff]
    %v4166 = vld [vmem:[#allocation2 + $0x1fa] sm:$0xff]
    %v4167 = vld [vmem:[#allocation2 + $0x202] sm:$0xff]
    %v4168 = vld [vmem:[#allocation2 + $0x212] sm:$0xff]
    %v4169 = vld [vmem:[#allocation2 + $0x21a] sm:$0xff]
    %v4170 = vld [vmem:[#allocation2 + $0x22a] sm:$0xff]
    %v4171 = vld [vmem:[#allocation2 + $0x232] sm:$0xff]
    %v4172 = vld [vmem:[#allocation2 + $0x242] sm:$0xff]
    %v4173 = vld [vmem:[#allocation2 + $0x24a] sm:$0xff]
    %v4174 = vld [vmem:[#allocation2 + $0x25a] sm:$0xff]
    %v4175 = vld [vmem:[#allocation2 + $0x262] sm:$0xff]
    %v4176 = vld [vmem:[#allocation2 + $0x272] sm:$0xff]
    %v4177 = vld [vmem:[#allocation2 + $0x27a] sm:$0xff]
    %v4178 = vld [vmem:[#allocation2 + $0x28a] sm:$0xff]
    %v4179 = vld [vmem:[#allocation2 + $0x292] sm:$0xff]
    %v4180 = vld [vmem:[#allocation2 + $0x2a2] sm:$0xff]
    %v4181 = vld [vmem:[#allocation2 + $0x2aa] sm:$0xff]
    %v4182 = vld [vmem:[#allocation2 + $0x2ba] sm:$0xff]
    %v4183 = vld [vmem:[#allocation2 + $0x2c2] sm:$0xff]
    %v4184 = vld [vmem:[#allocation2 + $0x2d2] sm:$0xff]
    %v4185 = vld [vmem:[#allocation2 + $0x2da] sm:$0xff]
    %v4186 = vld [vmem:[#allocation2 + $0x2ea] sm:$0xff]
    %v4187 = vld [vmem:[#allocation2 + $0x2f2] sm:$0xff]
    %v4188 = vld [vmem:[#allocation2 + $0x302] sm:$0xff]
    %v4189 = vld [vmem:[#allocation2 + $0x30a] sm:$0xff]
    %v4190 = vld [vmem:[#allocation2 + $0x31a] sm:$0xff]
    %v4191 = vld [vmem:[#allocation2 + $0x322] sm:$0xff]
    %v4192 = vld [vmem:[%s215] sm:$0xff]
    %v4193 = vld [vmem:[%s215 + $0x8] sm:$0xff]
    %v4194 = vld [vmem:[%s215 + $0x18] sm:$0xff]
    %v4195 = vld [vmem:[%s215 + $0x20] sm:$0xff]
    %v4196 = vld [vmem:[%s215 + $0x30] sm:$0xff]
    %v4197 = vld [vmem:[%s215 + $0x38] sm:$0xff]
    %v4198 = vld [vmem:[%s215 + $0x48] sm:$0xff]
    %v4199 = vld [vmem:[%s215 + $0x50] sm:$0xff]
    %v4200 = vld [vmem:[%s215 + $0x60] sm:$0xff]
    %v4201 = vld [vmem:[%s215 + $0x68] sm:$0xff]
    %v4202 = vld [vmem:[%s215 + $0x78] sm:$0xff]
    %v4203 = vld [vmem:[%s215 + $0x80] sm:$0xff]
    %v4204 = vld [vmem:[%s215 + $0x90] sm:$0xff]
    %v4205 = vld [vmem:[%s215 + $0x98] sm:$0xff]
    %v4206 = vld [vmem:[%s215 + $0xa8] sm:$0xff]
    %v4207 = vld [vmem:[%s215 + $0xb0] sm:$0xff]
    %v4208 = vld [vmem:[%s215 + $0xc0] sm:$0xff]
    %v4209 = vld [vmem:[%s215 + $0xc8] sm:$0xff]
    %v4210 = vld [vmem:[%s215 + $0xd8] sm:$0xff]
    %v4211 = vld [vmem:[%s215 + $0xe0] sm:$0xff]
    %v4212 = vld [vmem:[%s215 + $0xf0] sm:$0xff]
    %v4213 = vld [vmem:[%s215 + $0xf8] sm:$0xff]
    %v4214 = vld [vmem:[%s215 + $0x108] sm:$0xff]
    %v4215 = vld [vmem:[%s215 + $0x110] sm:$0xff]
    %v4216 = vld [vmem:[%s215 + $0x120] sm:$0xff]
    %v4217 = vld [vmem:[%s215 + $0x128] sm:$0xff]
    %v4218 = vld [vmem:[%s215 + $0x138] sm:$0xff]
    %v4219 = vld [vmem:[%s215 + $0x140] sm:$0xff]
    %v4220 = vld [vmem:[%s215 + $0x150] sm:$0xff]
    %v4221 = vld [vmem:[%s215 + $0x158] sm:$0xff]
    %v4222 = vld [vmem:[%s215 + $0x168] sm:$0xff]
    %v4223 = vld [vmem:[%s215 + $0x170] sm:$0xff]
    %v4224 = vld [vmem:[%s215 + $0x1b0] sm:$0xff]
    %v4225 = vld [vmem:[%s215 + $0x1b8] sm:$0xff]
    %v4226 = vld [vmem:[%s215 + $0x1c8] sm:$0xff]
    %v4227 = vld [vmem:[%s215 + $0x1d0] sm:$0xff]
    %v4228 = vld [vmem:[%s215 + $0x1e0] sm:$0xff]
    %v4229 = vld [vmem:[%s215 + $0x1e8] sm:$0xff]
    %v4230 = vld [vmem:[%s215 + $0x1f8] sm:$0xff]
    %v4231 = vld [vmem:[%s215 + $0x200] sm:$0xff]
    %v4232 = vld [vmem:[%s215 + $0x210] sm:$0xff]
    %v4233 = vld [vmem:[%s215 + $0x218] sm:$0xff]
    %v4234 = vld [vmem:[%s215 + $0x228] sm:$0xff]
    %v4235 = vld [vmem:[%s215 + $0x230] sm:$0xff]
    %v4236 = vld [vmem:[%s215 + $0x240] sm:$0xff]
    %v4237 = vld [vmem:[%s215 + $0x248] sm:$0xff]
    %v4238 = vld [vmem:[%s215 + $0x258] sm:$0xff]
    %v4239 = vld [vmem:[%s215 + $0x260] sm:$0xff]
    %v4240 = vld [vmem:[%s215 + $0x270] sm:$0xff]
    %v4241 = vld [vmem:[%s215 + $0x278] sm:$0xff]
    %v4242 = vld [vmem:[%s215 + $0x288] sm:$0xff]
    %v4243 = vld [vmem:[%s215 + $0x290] sm:$0xff]
    %v4244 = vld [vmem:[%s215 + $0x2a0] sm:$0xff]
    %v4245 = vld [vmem:[%s215 + $0x2a8] sm:$0xff]
    %v4246 = vld [vmem:[%s215 + $0x2b8] sm:$0xff]
    %v4247 = vld [vmem:[%s215 + $0x2c0] sm:$0xff]
    %v4248 = vld [vmem:[%s215 + $0x2d0] sm:$0xff]
    %v4249 = vld [vmem:[%s215 + $0x2d8] sm:$0xff]
    %v4250 = vld [vmem:[%s215 + $0x2e8] sm:$0xff]
    %v4251 = vld [vmem:[%s215 + $0x2f0] sm:$0xff]
    %v4252 = vld [vmem:[%s215 + $0x300] sm:$0xff]
    %v4253 = vld [vmem:[%s215 + $0x308] sm:$0xff]
    %v4254 = vld [vmem:[%s215 + $0x318] sm:$0xff]
    %v4255 = vld [vmem:[%s215 + $0x320] sm:$0xff]
    %v4256 = vld [vmem:[%s215 + $0x1] sm:$0xff]
    %v4257 = vld [vmem:[%s215 + $0x9] sm:$0xff]
    %v4258 = vld [vmem:[%s215 + $0x19] sm:$0xff]
    %v4259 = vld [vmem:[%s215 + $0x21] sm:$0xff]
    %v4260 = vld [vmem:[%s215 + $0x31] sm:$0xff]
    %v4261 = vld [vmem:[%s215 + $0x39] sm:$0xff]
    %v4262 = vld [vmem:[%s215 + $0x49] sm:$0xff]
    %v4263 = vld [vmem:[%s215 + $0x51] sm:$0xff]
    %v4264 = vld [vmem:[%s215 + $0x61] sm:$0xff]
    %v4265 = vld [vmem:[%s215 + $0x69] sm:$0xff]
    %v4266 = vld [vmem:[%s215 + $0x79] sm:$0xff]
    %v4267 = vld [vmem:[%s215 + $0x81] sm:$0xff]
    %v4268 = vld [vmem:[%s215 + $0x91] sm:$0xff]
    %v4269 = vld [vmem:[%s215 + $0x99] sm:$0xff]
    %v4270 = vld [vmem:[%s215 + $0xa9] sm:$0xff]
    %v4271 = vld [vmem:[%s215 + $0xb1] sm:$0xff]
    %v4272 = vld [vmem:[%s215 + $0xc1] sm:$0xff]
    %v4273 = vld [vmem:[%s215 + $0xc9] sm:$0xff]
    %v4274 = vld [vmem:[%s215 + $0xd9] sm:$0xff]
    %v4275 = vld [vmem:[%s215 + $0xe1] sm:$0xff]
    %v4276 = vld [vmem:[%s215 + $0xf1] sm:$0xff]
    %v4277 = vld [vmem:[%s215 + $0xf9] sm:$0xff]
    %v4278 = vld [vmem:[%s215 + $0x109] sm:$0xff]
    %v4279 = vld [vmem:[%s215 + $0x111] sm:$0xff]
    %v4280 = vld [vmem:[%s215 + $0x121] sm:$0xff]
    %v4281 = vld [vmem:[%s215 + $0x129] sm:$0xff]
    %v4282 = vld [vmem:[%s215 + $0x139] sm:$0xff]
    %v4283 = vld [vmem:[%s215 + $0x141] sm:$0xff]
    %v4284 = vld [vmem:[%s215 + $0x151] sm:$0xff]
    %v4285 = vld [vmem:[%s215 + $0x159] sm:$0xff]
    %v4286 = vld [vmem:[%s215 + $0x169] sm:$0xff]
    %v4287 = vld [vmem:[%s215 + $0x171] sm:$0xff]
    %v4288 = vld [vmem:[%s215 + $0x1b1] sm:$0xff]
    %v4289 = vld [vmem:[%s215 + $0x1b9] sm:$0xff]
    %v4290 = vld [vmem:[%s215 + $0x1c9] sm:$0xff]
    %v4291 = vld [vmem:[%s215 + $0x1d1] sm:$0xff]
    %v4292 = vld [vmem:[%s215 + $0x1e1] sm:$0xff]
    %v4293 = vld [vmem:[%s215 + $0x1e9] sm:$0xff]
    %v4294 = vld [vmem:[%s215 + $0x1f9] sm:$0xff]
    %v4295 = vld [vmem:[%s215 + $0x201] sm:$0xff]
    %v4296 = vld [vmem:[%s215 + $0x211] sm:$0xff]
    %v4297 = vld [vmem:[%s215 + $0x219] sm:$0xff]
    %v4298 = vld [vmem:[%s215 + $0x229] sm:$0xff]
    %v4299 = vld [vmem:[%s215 + $0x231] sm:$0xff]
    %v4300 = vld [vmem:[%s215 + $0x241] sm:$0xff]
    %v4301 = vld [vmem:[%s215 + $0x249] sm:$0xff]
    %v4302 = vld [vmem:[%s215 + $0x259] sm:$0xff]
    %v4303 = vld [vmem:[%s215 + $0x261] sm:$0xff]
    %v4304 = vld [vmem:[%s215 + $0x271] sm:$0xff]
    %v4305 = vld [vmem:[%s215 + $0x279] sm:$0xff]
    %v4306 = vld [vmem:[%s215 + $0x289] sm:$0xff]
    %v4307 = vld [vmem:[%s215 + $0x291] sm:$0xff]
    %v4308 = vld [vmem:[%s215 + $0x2a1] sm:$0xff]
    %v4309 = vld [vmem:[%s215 + $0x2a9] sm:$0xff]
    %v4310 = vld [vmem:[%s215 + $0x2b9] sm:$0xff]
    %v4311 = vld [vmem:[%s215 + $0x2c1] sm:$0xff]
    %v4312 = vld [vmem:[%s215 + $0x2d1] sm:$0xff]
    %v4313 = vld [vmem:[%s215 + $0x2d9] sm:$0xff]
    %v4314 = vld [vmem:[%s215 + $0x2e9] sm:$0xff]
    %v4315 = vld [vmem:[%s215 + $0x2f1] sm:$0xff]
    %v4316 = vld [vmem:[%s215 + $0x301] sm:$0xff]
    %v4317 = vld [vmem:[%s215 + $0x309] sm:$0xff]
    %v4318 = vld [vmem:[%s215 + $0x319] sm:$0xff]
    %v4319 = vld [vmem:[%s215 + $0x321] sm:$0xff]
    %v4320 = vld [vmem:[%s215 + $0x2] sm:$0xff]
    %v4321 = vld [vmem:[%s215 + $0xa] sm:$0xff]
    %v4322 = vld [vmem:[%s215 + $0x1a] sm:$0xff]
    %v4323 = vld [vmem:[%s215 + $0x22] sm:$0xff]
    %v4324 = vld [vmem:[%s215 + $0x32] sm:$0xff]
    %v4325 = vld [vmem:[%s215 + $0x3a] sm:$0xff]
    %v4326 = vld [vmem:[%s215 + $0x4a] sm:$0xff]
    %v4327 = vld [vmem:[%s215 + $0x52] sm:$0xff]
    %v4328 = vld [vmem:[%s215 + $0x62] sm:$0xff]
    %v4329 = vld [vmem:[%s215 + $0x6a] sm:$0xff]
    %v4330 = vld [vmem:[%s215 + $0x7a] sm:$0xff]
    %v4331 = vld [vmem:[%s215 + $0x82] sm:$0xff]
    %v4332 = vld [vmem:[%s215 + $0x92] sm:$0xff]
    %v4333 = vld [vmem:[%s215 + $0x9a] sm:$0xff]
    %v4334 = vld [vmem:[%s215 + $0xaa] sm:$0xff]
    %v4335 = vld [vmem:[%s215 + $0xb2] sm:$0xff]
    %v4336 = vld [vmem:[%s215 + $0xc2] sm:$0xff]
    %v4337 = vld [vmem:[%s215 + $0xca] sm:$0xff]
    %v4338 = vld [vmem:[%s215 + $0xda] sm:$0xff]
    %v4339 = vld [vmem:[%s215 + $0xe2] sm:$0xff]
    %v4340 = vld [vmem:[%s215 + $0xf2] sm:$0xff]
    %v4341 = vld [vmem:[%s215 + $0xfa] sm:$0xff]
    %v4342 = vld [vmem:[%s215 + $0x10a] sm:$0xff]
    %v4343 = vld [vmem:[%s215 + $0x112] sm:$0xff]
    %v4344 = vld [vmem:[%s215 + $0x122] sm:$0xff]
    %v4345 = vld [vmem:[%s215 + $0x12a] sm:$0xff]
    %v4346 = vld [vmem:[%s215 + $0x13a] sm:$0xff]
    %v4347 = vld [vmem:[%s215 + $0x142] sm:$0xff]
    %v4348 = vld [vmem:[%s215 + $0x152] sm:$0xff]
    %v4349 = vld [vmem:[%s215 + $0x15a] sm:$0xff]
    %v4350 = vld [vmem:[%s215 + $0x16a] sm:$0xff]
    %v4351 = vld [vmem:[%s215 + $0x172] sm:$0xff]
    %v4352 = vld [vmem:[%s215 + $0x1b2] sm:$0xff]
    %v4353 = vld [vmem:[%s215 + $0x1ba] sm:$0xff]
    %v4354 = vld [vmem:[%s215 + $0x1ca] sm:$0xff]
    %v4355 = vld [vmem:[%s215 + $0x1d2] sm:$0xff]
    %v4356 = vld [vmem:[%s215 + $0x1e2] sm:$0xff]
    %v4357 = vld [vmem:[%s215 + $0x1ea] sm:$0xff]
    %v4358 = vld [vmem:[%s215 + $0x1fa] sm:$0xff]
    %v4359 = vld [vmem:[%s215 + $0x202] sm:$0xff]
    %v4360 = vld [vmem:[%s215 + $0x212] sm:$0xff]
    %v4361 = vld [vmem:[%s215 + $0x21a] sm:$0xff]
    %v4362 = vld [vmem:[%s215 + $0x22a] sm:$0xff]
    %v4363 = vld [vmem:[%s215 + $0x232] sm:$0xff]
    %v4364 = vld [vmem:[%s215 + $0x242] sm:$0xff]
    %v4365 = vld [vmem:[%s215 + $0x24a] sm:$0xff]
    %v4366 = vld [vmem:[%s215 + $0x25a] sm:$0xff]
    %v4367 = vld [vmem:[%s215 + $0x262] sm:$0xff]
    %v4368 = vld [vmem:[%s215 + $0x272] sm:$0xff]
    %v4369 = vld [vmem:[%s215 + $0x27a] sm:$0xff]
    %v4370 = vld [vmem:[%s215 + $0x28a] sm:$0xff]
    %v4371 = vld [vmem:[%s215 + $0x292] sm:$0xff]
    %v4372 = vld [vmem:[%s215 + $0x2a2] sm:$0xff]
    %v4373 = vld [vmem:[%s215 + $0x2aa] sm:$0xff]
    %v4374 = vld [vmem:[%s215 + $0x2ba] sm:$0xff]
    %v4375 = vld [vmem:[%s215 + $0x2c2] sm:$0xff]
    %v4376 = vld [vmem:[%s215 + $0x2d2] sm:$0xff]
    %v4377 = vld [vmem:[%s215 + $0x2da] sm:$0xff]
    %v4378 = vld [vmem:[%s215 + $0x2ea] sm:$0xff]
    %v4379 = vld [vmem:[%s215 + $0x2f2] sm:$0xff]
    %v4380 = vld [vmem:[%s215 + $0x302] sm:$0xff]
    %v4381 = vld [vmem:[%s215 + $0x30a] sm:$0xff]
    %v4382 = vld [vmem:[%s215 + $0x31a] sm:$0xff]
    %v4383 = vld [vmem:[%s215 + $0x322] sm:$0xff]
    %v4384 = vld [vmem:[%s665] sm:$0xff]
    %v4385 = vld [vmem:[%s665 + $0x8] sm:$0xff]
    %v4386 = vld [vmem:[%s665 + $0x18] sm:$0xff]
    %v4387 = vld [vmem:[%s665 + $0x20] sm:$0xff]
    %v4388 = vld [vmem:[%s665 + $0x30] sm:$0xff]
    %v4389 = vld [vmem:[%s665 + $0x38] sm:$0xff]
    %v4390 = vld [vmem:[%s665 + $0x48] sm:$0xff]
    %v4391 = vld [vmem:[%s665 + $0x50] sm:$0xff]
    %v4392 = vld [vmem:[%s665 + $0x60] sm:$0xff]
    %v4393 = vld [vmem:[%s665 + $0x68] sm:$0xff]
    %v4394 = vld [vmem:[%s665 + $0x78] sm:$0xff]
    %v4395 = vld [vmem:[%s665 + $0x80] sm:$0xff]
    %v4396 = vld [vmem:[%s665 + $0x90] sm:$0xff]
    %v4397 = vld [vmem:[%s665 + $0x98] sm:$0xff]
    %v4398 = vld [vmem:[%s665 + $0xa8] sm:$0xff]
    %v4399 = vld [vmem:[%s665 + $0xb0] sm:$0xff]
    %v4400 = vld [vmem:[%s665 + $0xc0] sm:$0xff]
    %v4401 = vld [vmem:[%s665 + $0xc8] sm:$0xff]
    %v4402 = vld [vmem:[%s665 + $0xd8] sm:$0xff]
    %v4403 = vld [vmem:[%s665 + $0xe0] sm:$0xff]
    %v4404 = vld [vmem:[%s665 + $0xf0] sm:$0xff]
    %v4405 = vld [vmem:[%s665 + $0xf8] sm:$0xff]
    %v4406 = vld [vmem:[%s665 + $0x108] sm:$0xff]
    %v4407 = vld [vmem:[%s665 + $0x110] sm:$0xff]
    %v4408 = vld [vmem:[%s665 + $0x120] sm:$0xff]
    %v4409 = vld [vmem:[%s665 + $0x128] sm:$0xff]
    %v4410 = vld [vmem:[%s665 + $0x138] sm:$0xff]
    %v4411 = vld [vmem:[%s665 + $0x140] sm:$0xff]
    %v4412 = vld [vmem:[%s665 + $0x150] sm:$0xff]
    %v4413 = vld [vmem:[%s665 + $0x158] sm:$0xff]
    %v4414 = vld [vmem:[%s665 + $0x168] sm:$0xff]
    %v4415 = vld [vmem:[%s665 + $0x170] sm:$0xff]
    %v4416 = vld [vmem:[%s665 + $0x1b0] sm:$0xff]
    %v4417 = vld [vmem:[%s665 + $0x1b8] sm:$0xff]
    %v4418 = vld [vmem:[%s665 + $0x1c8] sm:$0xff]
    %v4419 = vld [vmem:[%s665 + $0x1d0] sm:$0xff]
    %v4420 = vld [vmem:[%s665 + $0x1e0] sm:$0xff]
    %v4421 = vld [vmem:[%s665 + $0x1e8] sm:$0xff]
    %v4422 = vld [vmem:[%s665 + $0x1f8] sm:$0xff]
    %v4423 = vld [vmem:[%s665 + $0x200] sm:$0xff]
    %v4424 = vld [vmem:[%s665 + $0x210] sm:$0xff]
    %v4425 = vld [vmem:[%s665 + $0x218] sm:$0xff]
    %v4426 = vld [vmem:[%s665 + $0x228] sm:$0xff]
    %v4427 = vld [vmem:[%s665 + $0x230] sm:$0xff]
    %v4428 = vld [vmem:[%s665 + $0x240] sm:$0xff]
    %v4429 = vld [vmem:[%s665 + $0x248] sm:$0xff]
    %v4430 = vld [vmem:[%s665 + $0x258] sm:$0xff]
    %v4431 = vld [vmem:[%s665 + $0x260] sm:$0xff]
    %v4432 = vld [vmem:[%s665 + $0x270] sm:$0xff]
    %v4433 = vld [vmem:[%s665 + $0x278] sm:$0xff]
    %v4434 = vld [vmem:[%s665 + $0x288] sm:$0xff]
    %v4435 = vld [vmem:[%s665 + $0x290] sm:$0xff]
    %v4436 = vld [vmem:[%s665 + $0x2a0] sm:$0xff]
    %v4437 = vld [vmem:[%s665 + $0x2a8] sm:$0xff]
    %v4438 = vld [vmem:[%s665 + $0x2b8] sm:$0xff]
    %v4439 = vld [vmem:[%s665 + $0x2c0] sm:$0xff]
    %v4440 = vld [vmem:[%s665 + $0x2d0] sm:$0xff]
    %v4441 = vld [vmem:[%s665 + $0x2d8] sm:$0xff]
    %v4442 = vld [vmem:[%s665 + $0x2e8] sm:$0xff]
    %v4443 = vld [vmem:[%s665 + $0x2f0] sm:$0xff]
    %v4444 = vld [vmem:[%s665 + $0x300] sm:$0xff]
    %v4445 = vld [vmem:[%s665 + $0x308] sm:$0xff]
    %v4446 = vld [vmem:[%s665 + $0x318] sm:$0xff]
    %v4447 = vld [vmem:[%s665 + $0x320] sm:$0xff]
    %v4448 = vld [vmem:[%s665 + $0x1] sm:$0xff]
    %v4449 = vld [vmem:[%s665 + $0x9] sm:$0xff]
    %v4450 = vld [vmem:[%s665 + $0x19] sm:$0xff]
    %v4451 = vld [vmem:[%s665 + $0x21] sm:$0xff]
    %v4452 = vld [vmem:[%s665 + $0x31] sm:$0xff]
    %v4453 = vld [vmem:[%s665 + $0x39] sm:$0xff]
    %v4454 = vld [vmem:[%s665 + $0x49] sm:$0xff]
    %v4455 = vld [vmem:[%s665 + $0x51] sm:$0xff]
    %v4456 = vld [vmem:[%s665 + $0x61] sm:$0xff]
    %v4457 = vld [vmem:[%s665 + $0x69] sm:$0xff]
    %v4458 = vld [vmem:[%s665 + $0x79] sm:$0xff]
    %v4459 = vld [vmem:[%s665 + $0x81] sm:$0xff]
    %v4460 = vld [vmem:[%s665 + $0x91] sm:$0xff]
    %v4461 = vld [vmem:[%s665 + $0x99] sm:$0xff]
    %v4462 = vld [vmem:[%s665 + $0xa9] sm:$0xff]
    %v4463 = vld [vmem:[%s665 + $0xb1] sm:$0xff]
    %v4464 = vld [vmem:[%s665 + $0xc1] sm:$0xff]
    %v4465 = vld [vmem:[%s665 + $0xc9] sm:$0xff]
    %v4466 = vld [vmem:[%s665 + $0xd9] sm:$0xff]
    %v4467 = vld [vmem:[%s665 + $0xe1] sm:$0xff]
    %v4468 = vld [vmem:[%s665 + $0xf1] sm:$0xff]
    %v4469 = vld [vmem:[%s665 + $0xf9] sm:$0xff]
    %v4470 = vld [vmem:[%s665 + $0x109] sm:$0xff]
    %v4471 = vld [vmem:[%s665 + $0x111] sm:$0xff]
    %v4472 = vld [vmem:[%s665 + $0x121] sm:$0xff]
    %v4473 = vld [vmem:[%s665 + $0x129] sm:$0xff]
    %v4474 = vld [vmem:[%s665 + $0x139] sm:$0xff]
    %v4475 = vld [vmem:[%s665 + $0x141] sm:$0xff]
    %v4476 = vld [vmem:[%s665 + $0x151] sm:$0xff]
    %v4477 = vld [vmem:[%s665 + $0x159] sm:$0xff]
    %v4478 = vld [vmem:[%s665 + $0x169] sm:$0xff]
    %v4479 = vld [vmem:[%s665 + $0x171] sm:$0xff]
    %v4480 = vld [vmem:[%s665 + $0x1b1] sm:$0xff]
    %v4481 = vld [vmem:[%s665 + $0x1b9] sm:$0xff]
    %v4482 = vld [vmem:[%s665 + $0x1c9] sm:$0xff]
    %v4483 = vld [vmem:[%s665 + $0x1d1] sm:$0xff]
    %v4484 = vld [vmem:[%s665 + $0x1e1] sm:$0xff]
    %v4485 = vld [vmem:[%s665 + $0x1e9] sm:$0xff]
    %v4486 = vld [vmem:[%s665 + $0x1f9] sm:$0xff]
    %v4487 = vld [vmem:[%s665 + $0x201] sm:$0xff]
    %v4488 = vld [vmem:[%s665 + $0x211] sm:$0xff]
    %v4489 = vld [vmem:[%s665 + $0x219] sm:$0xff]
    %v4490 = vld [vmem:[%s665 + $0x229] sm:$0xff]
    %v4491 = vld [vmem:[%s665 + $0x231] sm:$0xff]
    %v4492 = vld [vmem:[%s665 + $0x241] sm:$0xff]
    %v4493 = vld [vmem:[%s665 + $0x249] sm:$0xff]
    %v4494 = vld [vmem:[%s665 + $0x259] sm:$0xff]
    %v4495 = vld [vmem:[%s665 + $0x261] sm:$0xff]
    %v4496 = vld [vmem:[%s665 + $0x271] sm:$0xff]
    %v4497 = vld [vmem:[%s665 + $0x279] sm:$0xff]
    %v4498 = vld [vmem:[%s665 + $0x289] sm:$0xff]
    %v4499 = vld [vmem:[%s665 + $0x291] sm:$0xff]
    %v4500 = vld [vmem:[%s665 + $0x2a1] sm:$0xff]
    %v4501 = vld [vmem:[%s665 + $0x2a9] sm:$0xff]
    %v4502 = vld [vmem:[%s665 + $0x2b9] sm:$0xff]
    %v4503 = vld [vmem:[%s665 + $0x2c1] sm:$0xff]
    %v4504 = vld [vmem:[%s665 + $0x2d1] sm:$0xff]
    %v4505 = vld [vmem:[%s665 + $0x2d9] sm:$0xff]
    %v4506 = vld [vmem:[%s665 + $0x2e9] sm:$0xff]
    %v4507 = vld [vmem:[%s665 + $0x2f1] sm:$0xff]
    %v4508 = vld [vmem:[%s665 + $0x301] sm:$0xff]
    %v4509 = vld [vmem:[%s665 + $0x309] sm:$0xff]
    %v4510 = vld [vmem:[%s665 + $0x319] sm:$0xff]
    %v4511 = vld [vmem:[%s665 + $0x321] sm:$0xff]
    %v4512 = vld [vmem:[%s665 + $0x2] sm:$0xff]
    %v4513 = vld [vmem:[%s665 + $0xa] sm:$0xff]
    %v4514 = vld [vmem:[%s665 + $0x1a] sm:$0xff]
    %v4515 = vld [vmem:[%s665 + $0x22] sm:$0xff]
    %v4516 = vld [vmem:[%s665 + $0x32] sm:$0xff]
    %v4517 = vld [vmem:[%s665 + $0x3a] sm:$0xff]
    %v4518 = vld [vmem:[%s665 + $0x4a] sm:$0xff]
    %v4519 = vld [vmem:[%s665 + $0x52] sm:$0xff]
    %v4520 = vld [vmem:[%s665 + $0x62] sm:$0xff]
    %v4521 = vld [vmem:[%s665 + $0x6a] sm:$0xff]
    %v4522 = vld [vmem:[%s665 + $0x7a] sm:$0xff]
    %v4523 = vld [vmem:[%s665 + $0x82] sm:$0xff]
    %v4524 = vld [vmem:[%s665 + $0x92] sm:$0xff]
    %v4525 = vld [vmem:[%s665 + $0x9a] sm:$0xff]
    %v4526 = vld [vmem:[%s665 + $0xaa] sm:$0xff]
    %v4527 = vld [vmem:[%s665 + $0xb2] sm:$0xff]
    %v4528 = vld [vmem:[%s665 + $0xc2] sm:$0xff]
    %v4529 = vld [vmem:[%s665 + $0xca] sm:$0xff]
    %v4530 = vld [vmem:[%s665 + $0xda] sm:$0xff]
    %v4531 = vld [vmem:[%s665 + $0xe2] sm:$0xff]
    %v4532 = vld [vmem:[%s665 + $0xf2] sm:$0xff]
    %v4533 = vld [vmem:[%s665 + $0xfa] sm:$0xff]
    %v4534 = vld [vmem:[%s665 + $0x10a] sm:$0xff]
    %v4535 = vld [vmem:[%s665 + $0x112] sm:$0xff]
    %v4536 = vld [vmem:[%s665 + $0x122] sm:$0xff]
    %v4537 = vld [vmem:[%s665 + $0x12a] sm:$0xff]
    %v4538 = vld [vmem:[%s665 + $0x13a] sm:$0xff]
    %v4539 = vld [vmem:[%s665 + $0x142] sm:$0xff]
    %v4540 = vld [vmem:[%s665 + $0x152] sm:$0xff]
    %v4541 = vld [vmem:[%s665 + $0x15a] sm:$0xff]
    %v4542 = vld [vmem:[%s665 + $0x16a] sm:$0xff]
    %v4543 = vld [vmem:[%s665 + $0x172] sm:$0xff]
    %v4544 = vld [vmem:[%s665 + $0x1b2] sm:$0xff]
    %v4545 = vld [vmem:[%s665 + $0x1ba] sm:$0xff]
    %v4546 = vld [vmem:[%s665 + $0x1ca] sm:$0xff]
    %v4547 = vld [vmem:[%s665 + $0x1d2] sm:$0xff]
    %v4548 = vld [vmem:[%s665 + $0x1e2] sm:$0xff]
    %v4549 = vld [vmem:[%s665 + $0x1ea] sm:$0xff]
    %v4550 = vld [vmem:[%s665 + $0x1fa] sm:$0xff]
    %v4551 = vld [vmem:[%s665 + $0x202] sm:$0xff]
    %v4552 = vld [vmem:[%s665 + $0x212] sm:$0xff]
    %v4553 = vld [vmem:[%s665 + $0x21a] sm:$0xff]
    %v4554 = vld [vmem:[%s665 + $0x22a] sm:$0xff]
    %v4555 = vld [vmem:[%s665 + $0x232] sm:$0xff]
    %v4556 = vld [vmem:[%s665 + $0x242] sm:$0xff]
    %v4557 = vld [vmem:[%s665 + $0x24a] sm:$0xff]
    %v4558 = vld [vmem:[%s665 + $0x25a] sm:$0xff]
    %v4559 = vld [vmem:[%s665 + $0x262] sm:$0xff]
    %v4560 = vld [vmem:[%s665 + $0x272] sm:$0xff]
    %v4561 = vld [vmem:[%s665 + $0x27a] sm:$0xff]
    %v4562 = vld [vmem:[%s665 + $0x28a] sm:$0xff]
    %v4563 = vld [vmem:[%s665 + $0x292] sm:$0xff]
    %v4564 = vld [vmem:[%s665 + $0x2a2] sm:$0xff]
    %v4565 = vld [vmem:[%s665 + $0x2aa] sm:$0xff]
    %v4566 = vld [vmem:[%s665 + $0x2ba] sm:$0xff]
    %v4567 = vld [vmem:[%s665 + $0x2c2] sm:$0xff]
    %v4568 = vld [vmem:[%s665 + $0x2d2] sm:$0xff]
    %v4569 = vld [vmem:[%s665 + $0x2da] sm:$0xff]
    %v4570 = vld [vmem:[%s665 + $0x2ea] sm:$0xff]
    %v4571 = vld [vmem:[%s665 + $0x2f2] sm:$0xff]
    %v4572 = vld [vmem:[%s665 + $0x302] sm:$0xff]
    %v4573 = vld [vmem:[%s665 + $0x30a] sm:$0xff]
    %v4574 = vld [vmem:[%s665 + $0x31a] sm:$0xff]
    %v4575 = vld [vmem:[%s665 + $0x322] sm:$0xff]
    %4640 = vrot.lane.b32.xlu0 %v4064, 8
    %v4641 = vpop.permute.xlu0 %4640
    %4642 = vrot.lane.b32.xlu0 %v4065, 8
    %v4643 = vpop.permute.xlu0 %4642
    %4644 = vrot.lane.b32.xlu0 %v4066, 8
    %v4645 = vpop.permute.xlu0 %4644
    %4646 = vrot.lane.b32.xlu0 %v4067, 8
    %v4647 = vpop.permute.xlu0 %4646
    %4648 = vrot.lane.b32.xlu0 %v4068, 8
    %v4649 = vpop.permute.xlu0 %4648
    %4650 = vrot.lane.b32.xlu0 %v4069, 8
    %v4651 = vpop.permute.xlu0 %4650
    %4652 = vrot.lane.b32.xlu0 %v4070, 8
    %v4653 = vpop.permute.xlu0 %4652
    %4654 = vrot.lane.b32.xlu0 %v4071, 8
    %v4655 = vpop.permute.xlu0 %4654
    %4656 = vrot.lane.b32.xlu0 %v4072, 8
    %v4657 = vpop.permute.xlu0 %4656
    %4658 = vrot.lane.b32.xlu0 %v4073, 8
    %v4659 = vpop.permute.xlu0 %4658
    %4660 = vrot.lane.b32.xlu0 %v4074, 8
    %v4661 = vpop.permute.xlu0 %4660
    %4662 = vrot.lane.b32.xlu0 %v4075, 8
    %v4663 = vpop.permute.xlu0 %4662
    %4664 = vrot.lane.b32.xlu0 %v4076, 8
    %v4665 = vpop.permute.xlu0 %4664
    %4666 = vrot.lane.b32.xlu0 %v4077, 8
    %v4667 = vpop.permute.xlu0 %4666
    %4668 = vrot.lane.b32.xlu0 %v4078, 8
    %v4669 = vpop.permute.xlu0 %4668
    %4670 = vrot.lane.b32.xlu0 %v4079, 8
    %v4671 = vpop.permute.xlu0 %4670
    %4672 = vrot.lane.b32.xlu0 %v4080, 8
    %v4673 = vpop.permute.xlu0 %4672
    %4674 = vrot.lane.b32.xlu0 %v4081, 8
    %v4675 = vpop.permute.xlu0 %4674
    %4676 = vrot.lane.b32.xlu0 %v4082, 8
    %v4677 = vpop.permute.xlu0 %4676
    %4678 = vrot.lane.b32.xlu0 %v4083, 8
    %v4679 = vpop.permute.xlu0 %4678
    %4680 = vrot.lane.b32.xlu0 %v4084, 8
    %v4681 = vpop.permute.xlu0 %4680
    %4682 = vrot.lane.b32.xlu0 %v4085, 8
    %v4683 = vpop.permute.xlu0 %4682
    %4684 = vrot.lane.b32.xlu0 %v4086, 8
    %v4685 = vpop.permute.xlu0 %4684
    %4686 = vrot.lane.b32.xlu0 %v4087, 8
    %v4687 = vpop.permute.xlu0 %4686
    %4688 = vrot.lane.b32.xlu0 %v4088, 8
    %v4689 = vpop.permute.xlu0 %4688
    %4690 = vrot.lane.b32.xlu0 %v4089, 8
    %v4691 = vpop.permute.xlu0 %4690
    %4692 = vrot.lane.b32.xlu0 %v4090, 8
    %v4693 = vpop.permute.xlu0 %4692
    %4694 = vrot.lane.b32.xlu0 %v4091, 8
    %v4695 = vpop.permute.xlu0 %4694
    %4696 = vrot.lane.b32.xlu0 %v4092, 8
    %v4697 = vpop.permute.xlu0 %4696
    %4698 = vrot.lane.b32.xlu0 %v4093, 8
    %v4699 = vpop.permute.xlu0 %4698
    %4700 = vrot.lane.b32.xlu0 %v4094, 8
    %v4701 = vpop.permute.xlu0 %4700
    %4702 = vrot.lane.b32.xlu0 %v4095, 8
    %v4703 = vpop.permute.xlu0 %4702
    %4704 = vrot.lane.b32.xlu0 %v4096, 8
    %v4705 = vpop.permute.xlu0 %4704
    %4706 = vrot.lane.b32.xlu0 %v4097, 8
    %v4707 = vpop.permute.xlu0 %4706
    %4708 = vrot.lane.b32.xlu0 %v4098, 8
    %v4709 = vpop.permute.xlu0 %4708
    %4710 = vrot.lane.b32.xlu0 %v4099, 8
    %v4711 = vpop.permute.xlu0 %4710
    %4712 = vrot.lane.b32.xlu0 %v4100, 8
    %v4713 = vpop.permute.xlu0 %4712
    %4714 = vrot.lane.b32.xlu0 %v4101, 8
    %v4715 = vpop.permute.xlu0 %4714
    %4716 = vrot.lane.b32.xlu0 %v4102, 8
    %v4717 = vpop.permute.xlu0 %4716
    %4718 = vrot.lane.b32.xlu0 %v4103, 8
    %v4719 = vpop.permute.xlu0 %4718
    %4720 = vrot.lane.b32.xlu0 %v4104, 8
    %v4721 = vpop.permute.xlu0 %4720
    %4722 = vrot.lane.b32.xlu0 %v4105, 8
    %v4723 = vpop.permute.xlu0 %4722
    %4724 = vrot.lane.b32.xlu0 %v4106, 8
    %v4725 = vpop.permute.xlu0 %4724
    %4726 = vrot.lane.b32.xlu0 %v4107, 8
    %v4727 = vpop.permute.xlu0 %4726
    %4728 = vrot.lane.b32.xlu0 %v4108, 8
    %v4729 = vpop.permute.xlu0 %4728
    %4730 = vrot.lane.b32.xlu0 %v4109, 8
    %v4731 = vpop.permute.xlu0 %4730
    %4732 = vrot.lane.b32.xlu0 %v4110, 8
    %v4733 = vpop.permute.xlu0 %4732
    %4734 = vrot.lane.b32.xlu0 %v4111, 8
    %v4735 = vpop.permute.xlu0 %4734
    %4736 = vrot.lane.b32.xlu0 %v4112, 8
    %v4737 = vpop.permute.xlu0 %4736
    %4738 = vrot.lane.b32.xlu0 %v4113, 8
    %v4739 = vpop.permute.xlu0 %4738
    %4740 = vrot.lane.b32.xlu0 %v4114, 8
    %v4741 = vpop.permute.xlu0 %4740
    %4742 = vrot.lane.b32.xlu0 %v4115, 8
    %v4743 = vpop.permute.xlu0 %4742
    %4744 = vrot.lane.b32.xlu0 %v4116, 8
    %v4745 = vpop.permute.xlu0 %4744
    %4746 = vrot.lane.b32.xlu0 %v4117, 8
    %v4747 = vpop.permute.xlu0 %4746
    %4748 = vrot.lane.b32.xlu0 %v4118, 8
    %v4749 = vpop.permute.xlu0 %4748
    %4750 = vrot.lane.b32.xlu0 %v4119, 8
    %v4751 = vpop.permute.xlu0 %4750
    %4752 = vrot.lane.b32.xlu0 %v4120, 8
    %v4753 = vpop.permute.xlu0 %4752
    %4754 = vrot.lane.b32.xlu0 %v4121, 8
    %v4755 = vpop.permute.xlu0 %4754
    %4756 = vrot.lane.b32.xlu0 %v4122, 8
    %v4757 = vpop.permute.xlu0 %4756
    %4758 = vrot.lane.b32.xlu0 %v4123, 8
    %v4759 = vpop.permute.xlu0 %4758
    %4760 = vrot.lane.b32.xlu0 %v4124, 8
    %v4761 = vpop.permute.xlu0 %4760
    %4762 = vrot.lane.b32.xlu0 %v4125, 8
    %v4763 = vpop.permute.xlu0 %4762
    %4764 = vrot.lane.b32.xlu0 %v4126, 8
    %v4765 = vpop.permute.xlu0 %4764
    %4766 = vrot.lane.b32.xlu0 %v4127, 8
    %v4767 = vpop.permute.xlu0 %4766
    %4896 = vrot.lane.b32.xlu0 %v4128, 16
    %v4897 = vpop.permute.xlu0 %4896
    %4898 = vrot.lane.b32.xlu0 %v4129, 16
    %v4899 = vpop.permute.xlu0 %4898
    %4900 = vrot.lane.b32.xlu0 %v4130, 16
    %v4901 = vpop.permute.xlu0 %4900
    %4902 = vrot.lane.b32.xlu0 %v4131, 16
    %v4903 = vpop.permute.xlu0 %4902
    %4904 = vrot.lane.b32.xlu0 %v4132, 16
    %v4905 = vpop.permute.xlu0 %4904
    %4906 = vrot.lane.b32.xlu0 %v4133, 16
    %v4907 = vpop.permute.xlu0 %4906
    %4908 = vrot.lane.b32.xlu0 %v4134, 16
    %v4909 = vpop.permute.xlu0 %4908
    %4910 = vrot.lane.b32.xlu0 %v4135, 16
    %v4911 = vpop.permute.xlu0 %4910
    %4912 = vrot.lane.b32.xlu0 %v4136, 16
    %v4913 = vpop.permute.xlu0 %4912
    %4914 = vrot.lane.b32.xlu0 %v4137, 16
    %v4915 = vpop.permute.xlu0 %4914
    %4916 = vrot.lane.b32.xlu0 %v4138, 16
    %v4917 = vpop.permute.xlu0 %4916
    %4918 = vrot.lane.b32.xlu0 %v4139, 16
    %v4919 = vpop.permute.xlu0 %4918
    %4920 = vrot.lane.b32.xlu0 %v4140, 16
    %v4921 = vpop.permute.xlu0 %4920
    %4922 = vrot.lane.b32.xlu0 %v4141, 16
    %v4923 = vpop.permute.xlu0 %4922
    %4924 = vrot.lane.b32.xlu0 %v4142, 16
    %v4925 = vpop.permute.xlu0 %4924
    %4926 = vrot.lane.b32.xlu0 %v4143, 16
    %v4927 = vpop.permute.xlu0 %4926
    %4928 = vrot.lane.b32.xlu0 %v4144, 16
    %v4929 = vpop.permute.xlu0 %4928
    %4930 = vrot.lane.b32.xlu0 %v4145, 16
    %v4931 = vpop.permute.xlu0 %4930
    %4932 = vrot.lane.b32.xlu0 %v4146, 16
    %v4933 = vpop.permute.xlu0 %4932
    %4934 = vrot.lane.b32.xlu0 %v4147, 16
    %v4935 = vpop.permute.xlu0 %4934
    %4936 = vrot.lane.b32.xlu0 %v4148, 16
    %v4937 = vpop.permute.xlu0 %4936
    %4938 = vrot.lane.b32.xlu0 %v4149, 16
    %v4939 = vpop.permute.xlu0 %4938
    %4940 = vrot.lane.b32.xlu0 %v4150, 16
    %v4941 = vpop.permute.xlu0 %4940
    %4942 = vrot.lane.b32.xlu0 %v4151, 16
    %v4943 = vpop.permute.xlu0 %4942
    %4944 = vrot.lane.b32.xlu0 %v4152, 16
    %v4945 = vpop.permute.xlu0 %4944
    %4946 = vrot.lane.b32.xlu0 %v4153, 16
    %v4947 = vpop.permute.xlu0 %4946
    %4948 = vrot.lane.b32.xlu0 %v4154, 16
    %v4949 = vpop.permute.xlu0 %4948
    %4950 = vrot.lane.b32.xlu0 %v4155, 16
    %v4951 = vpop.permute.xlu0 %4950
    %4952 = vrot.lane.b32.xlu0 %v4156, 16
    %v4953 = vpop.permute.xlu0 %4952
    %4954 = vrot.lane.b32.xlu0 %v4157, 16
    %v4955 = vpop.permute.xlu0 %4954
    %4956 = vrot.lane.b32.xlu0 %v4158, 16
    %v4957 = vpop.permute.xlu0 %4956
    %4958 = vrot.lane.b32.xlu0 %v4159, 16
    %v4959 = vpop.permute.xlu0 %4958
    %4960 = vrot.lane.b32.xlu0 %v4160, 16
    %v4961 = vpop.permute.xlu0 %4960
    %4962 = vrot.lane.b32.xlu0 %v4161, 16
    %v4963 = vpop.permute.xlu0 %4962
    %4964 = vrot.lane.b32.xlu0 %v4162, 16
    %v4965 = vpop.permute.xlu0 %4964
    %4966 = vrot.lane.b32.xlu0 %v4163, 16
    %v4967 = vpop.permute.xlu0 %4966
    %4968 = vrot.lane.b32.xlu0 %v4164, 16
    %v4969 = vpop.permute.xlu0 %4968
    %4970 = vrot.lane.b32.xlu0 %v4165, 16
    %v4971 = vpop.permute.xlu0 %4970
    %4972 = vrot.lane.b32.xlu0 %v4166, 16
    %v4973 = vpop.permute.xlu0 %4972
    %4974 = vrot.lane.b32.xlu0 %v4167, 16
    %v4975 = vpop.permute.xlu0 %4974
    %4976 = vrot.lane.b32.xlu0 %v4168, 16
    %v4977 = vpop.permute.xlu0 %4976
    %4978 = vrot.lane.b32.xlu0 %v4169, 16
    %v4979 = vpop.permute.xlu0 %4978
    %4980 = vrot.lane.b32.xlu0 %v4170, 16
    %v4981 = vpop.permute.xlu0 %4980
    %4982 = vrot.lane.b32.xlu0 %v4171, 16
    %v4983 = vpop.permute.xlu0 %4982
    %4984 = vrot.lane.b32.xlu0 %v4172, 16
    %v4985 = vpop.permute.xlu0 %4984
    %4986 = vrot.lane.b32.xlu0 %v4173, 16
    %v4987 = vpop.permute.xlu0 %4986
    %4988 = vrot.lane.b32.xlu0 %v4174, 16
    %v4989 = vpop.permute.xlu0 %4988
    %4990 = vrot.lane.b32.xlu0 %v4175, 16
    %v4991 = vpop.permute.xlu0 %4990
    %4992 = vrot.lane.b32.xlu0 %v4176, 16
    %v4993 = vpop.permute.xlu0 %4992
    %4994 = vrot.lane.b32.xlu0 %v4177, 16
    %v4995 = vpop.permute.xlu0 %4994
    %4996 = vrot.lane.b32.xlu0 %v4178, 16
    %v4997 = vpop.permute.xlu0 %4996
    %4998 = vrot.lane.b32.xlu0 %v4179, 16
    %v4999 = vpop.permute.xlu0 %4998
    %5000 = vrot.lane.b32.xlu0 %v4180, 16
    %v5001 = vpop.permute.xlu0 %5000
    %5002 = vrot.lane.b32.xlu0 %v4181, 16
    %v5003 = vpop.permute.xlu0 %5002
    %5004 = vrot.lane.b32.xlu0 %v4182, 16
    %v5005 = vpop.permute.xlu0 %5004
    %5006 = vrot.lane.b32.xlu0 %v4183, 16
    %v5007 = vpop.permute.xlu0 %5006
    %5008 = vrot.lane.b32.xlu0 %v4184, 16
    %v5009 = vpop.permute.xlu0 %5008
    %5010 = vrot.lane.b32.xlu0 %v4185, 16
    %v5011 = vpop.permute.xlu0 %5010
    %5012 = vrot.lane.b32.xlu0 %v4186, 16
    %v5013 = vpop.permute.xlu0 %5012
    %5014 = vrot.lane.b32.xlu0 %v4187, 16
    %v5015 = vpop.permute.xlu0 %5014
    %5016 = vrot.lane.b32.xlu0 %v4188, 16
    %v5017 = vpop.permute.xlu0 %5016
    %5018 = vrot.lane.b32.xlu0 %v4189, 16
    %v5019 = vpop.permute.xlu0 %5018
    %5020 = vrot.lane.b32.xlu0 %v4190, 16
    %v5021 = vpop.permute.xlu0 %5020
    %5022 = vrot.lane.b32.xlu0 %v4191, 16
    %v5023 = vpop.permute.xlu0 %5022
    %5152 = vrot.lane.b32.xlu0 %v4192, 24
    %v5153 = vpop.permute.xlu0 %5152
    %5154 = vrot.lane.b32.xlu0 %v4193, 24
    %v5155 = vpop.permute.xlu0 %5154
    %5156 = vrot.lane.b32.xlu0 %v4194, 24
    %v5157 = vpop.permute.xlu0 %5156
    %5158 = vrot.lane.b32.xlu0 %v4195, 24
    %v5159 = vpop.permute.xlu0 %5158
    %5160 = vrot.lane.b32.xlu0 %v4196, 24
    %v5161 = vpop.permute.xlu0 %5160
    %5162 = vrot.lane.b32.xlu0 %v4197, 24
    %v5163 = vpop.permute.xlu0 %5162
    %5164 = vrot.lane.b32.xlu0 %v4198, 24
    %v5165 = vpop.permute.xlu0 %5164
    %5166 = vrot.lane.b32.xlu0 %v4199, 24
    %v5167 = vpop.permute.xlu0 %5166
    %5168 = vrot.lane.b32.xlu0 %v4200, 24
    %v5169 = vpop.permute.xlu0 %5168
    %5170 = vrot.lane.b32.xlu0 %v4201, 24
    %v5171 = vpop.permute.xlu0 %5170
    %5172 = vrot.lane.b32.xlu0 %v4202, 24
    %v5173 = vpop.permute.xlu0 %5172
    %5174 = vrot.lane.b32.xlu0 %v4203, 24
    %v5175 = vpop.permute.xlu0 %5174
    %5176 = vrot.lane.b32.xlu0 %v4204, 24
    %v5177 = vpop.permute.xlu0 %5176
    %5178 = vrot.lane.b32.xlu0 %v4205, 24
    %v5179 = vpop.permute.xlu0 %5178
    %5180 = vrot.lane.b32.xlu0 %v4206, 24
    %v5181 = vpop.permute.xlu0 %5180
    %5182 = vrot.lane.b32.xlu0 %v4207, 24
    %v5183 = vpop.permute.xlu0 %5182
    %5184 = vrot.lane.b32.xlu0 %v4208, 24
    %v5185 = vpop.permute.xlu0 %5184
    %5186 = vrot.lane.b32.xlu0 %v4209, 24
    %v5187 = vpop.permute.xlu0 %5186
    %5188 = vrot.lane.b32.xlu0 %v4210, 24
    %v5189 = vpop.permute.xlu0 %5188
    %5190 = vrot.lane.b32.xlu0 %v4211, 24
    %v5191 = vpop.permute.xlu0 %5190
    %5192 = vrot.lane.b32.xlu0 %v4212, 24
    %v5193 = vpop.permute.xlu0 %5192
    %5194 = vrot.lane.b32.xlu0 %v4213, 24
    %v5195 = vpop.permute.xlu0 %5194
    %5196 = vrot.lane.b32.xlu0 %v4214, 24
    %v5197 = vpop.permute.xlu0 %5196
    %5198 = vrot.lane.b32.xlu0 %v4215, 24
    %v5199 = vpop.permute.xlu0 %5198
    %5200 = vrot.lane.b32.xlu0 %v4216, 24
    %v5201 = vpop.permute.xlu0 %5200
    %5202 = vrot.lane.b32.xlu0 %v4217, 24
    %v5203 = vpop.permute.xlu0 %5202
    %5204 = vrot.lane.b32.xlu0 %v4218, 24
    %v5205 = vpop.permute.xlu0 %5204
    %5206 = vrot.lane.b32.xlu0 %v4219, 24
    %v5207 = vpop.permute.xlu0 %5206
    %5208 = vrot.lane.b32.xlu0 %v4220, 24
    %v5209 = vpop.permute.xlu0 %5208
    %5210 = vrot.lane.b32.xlu0 %v4221, 24
    %v5211 = vpop.permute.xlu0 %5210
    %5212 = vrot.lane.b32.xlu0 %v4222, 24
    %v5213 = vpop.permute.xlu0 %5212
    %5214 = vrot.lane.b32.xlu0 %v4223, 24
    %v5215 = vpop.permute.xlu0 %5214
    %5216 = vrot.lane.b32.xlu0 %v4224, 24
    %v5217 = vpop.permute.xlu0 %5216
    %5218 = vrot.lane.b32.xlu0 %v4225, 24
    %v5219 = vpop.permute.xlu0 %5218
    %5220 = vrot.lane.b32.xlu0 %v4226, 24
    %v5221 = vpop.permute.xlu0 %5220
    %5222 = vrot.lane.b32.xlu0 %v4227, 24
    %v5223 = vpop.permute.xlu0 %5222
    %5224 = vrot.lane.b32.xlu0 %v4228, 24
    %v5225 = vpop.permute.xlu0 %5224
    %5226 = vrot.lane.b32.xlu0 %v4229, 24
    %v5227 = vpop.permute.xlu0 %5226
    %5228 = vrot.lane.b32.xlu0 %v4230, 24
    %v5229 = vpop.permute.xlu0 %5228
    %5230 = vrot.lane.b32.xlu0 %v4231, 24
    %v5231 = vpop.permute.xlu0 %5230
    %5232 = vrot.lane.b32.xlu0 %v4232, 24
    %v5233 = vpop.permute.xlu0 %5232
    %5234 = vrot.lane.b32.xlu0 %v4233, 24
    %v5235 = vpop.permute.xlu0 %5234
    %5236 = vrot.lane.b32.xlu0 %v4234, 24
    %v5237 = vpop.permute.xlu0 %5236
    %5238 = vrot.lane.b32.xlu0 %v4235, 24
    %v5239 = vpop.permute.xlu0 %5238
    %5240 = vrot.lane.b32.xlu0 %v4236, 24
    %v5241 = vpop.permute.xlu0 %5240
    %5242 = vrot.lane.b32.xlu0 %v4237, 24
    %v5243 = vpop.permute.xlu0 %5242
    %5244 = vrot.lane.b32.xlu0 %v4238, 24
    %v5245 = vpop.permute.xlu0 %5244
    %5246 = vrot.lane.b32.xlu0 %v4239, 24
    %v5247 = vpop.permute.xlu0 %5246
    %5248 = vrot.lane.b32.xlu0 %v4240, 24
    %v5249 = vpop.permute.xlu0 %5248
    %5250 = vrot.lane.b32.xlu0 %v4241, 24
    %v5251 = vpop.permute.xlu0 %5250
    %5252 = vrot.lane.b32.xlu0 %v4242, 24
    %v5253 = vpop.permute.xlu0 %5252
    %5254 = vrot.lane.b32.xlu0 %v4243, 24
    %v5255 = vpop.permute.xlu0 %5254
    %5256 = vrot.lane.b32.xlu0 %v4244, 24
    %v5257 = vpop.permute.xlu0 %5256
    %5258 = vrot.lane.b32.xlu0 %v4245, 24
    %v5259 = vpop.permute.xlu0 %5258
    %5260 = vrot.lane.b32.xlu0 %v4246, 24
    %v5261 = vpop.permute.xlu0 %5260
    %5262 = vrot.lane.b32.xlu0 %v4247, 24
    %v5263 = vpop.permute.xlu0 %5262
    %5264 = vrot.lane.b32.xlu0 %v4248, 24
    %v5265 = vpop.permute.xlu0 %5264
    %5266 = vrot.lane.b32.xlu0 %v4249, 24
    %v5267 = vpop.permute.xlu0 %5266
    %5268 = vrot.lane.b32.xlu0 %v4250, 24
    %v5269 = vpop.permute.xlu0 %5268
    %5270 = vrot.lane.b32.xlu0 %v4251, 24
    %v5271 = vpop.permute.xlu0 %5270
    %5272 = vrot.lane.b32.xlu0 %v4252, 24
    %v5273 = vpop.permute.xlu0 %5272
    %5274 = vrot.lane.b32.xlu0 %v4253, 24
    %v5275 = vpop.permute.xlu0 %5274
    %5276 = vrot.lane.b32.xlu0 %v4254, 24
    %v5277 = vpop.permute.xlu0 %5276
    %5278 = vrot.lane.b32.xlu0 %v4255, 24
    %v5279 = vpop.permute.xlu0 %5278
    %5408 = vrot.lane.b32.xlu0 %v4256, 32
    %v5409 = vpop.permute.xlu0 %5408
    %5410 = vrot.lane.b32.xlu0 %v4257, 32
    %v5411 = vpop.permute.xlu0 %5410
    %5412 = vrot.lane.b32.xlu0 %v4258, 32
    %v5413 = vpop.permute.xlu0 %5412
    %5414 = vrot.lane.b32.xlu0 %v4259, 32
    %v5415 = vpop.permute.xlu0 %5414
    %5416 = vrot.lane.b32.xlu0 %v4260, 32
    %v5417 = vpop.permute.xlu0 %5416
    %5418 = vrot.lane.b32.xlu0 %v4261, 32
    %v5419 = vpop.permute.xlu0 %5418
    %5420 = vrot.lane.b32.xlu0 %v4262, 32
    %v5421 = vpop.permute.xlu0 %5420
    %5422 = vrot.lane.b32.xlu0 %v4263, 32
    %v5423 = vpop.permute.xlu0 %5422
    %5424 = vrot.lane.b32.xlu0 %v4264, 32
    %v5425 = vpop.permute.xlu0 %5424
    %5426 = vrot.lane.b32.xlu0 %v4265, 32
    %v5427 = vpop.permute.xlu0 %5426
    %5428 = vrot.lane.b32.xlu0 %v4266, 32
    %v5429 = vpop.permute.xlu0 %5428
    %5430 = vrot.lane.b32.xlu0 %v4267, 32
    %v5431 = vpop.permute.xlu0 %5430
    %5432 = vrot.lane.b32.xlu0 %v4268, 32
    %v5433 = vpop.permute.xlu0 %5432
    %5434 = vrot.lane.b32.xlu0 %v4269, 32
    %v5435 = vpop.permute.xlu0 %5434
    %5436 = vrot.lane.b32.xlu0 %v4270, 32
    %v5437 = vpop.permute.xlu0 %5436
    %5438 = vrot.lane.b32.xlu0 %v4271, 32
    %v5439 = vpop.permute.xlu0 %5438
    %5440 = vrot.lane.b32.xlu0 %v4272, 32
    %v5441 = vpop.permute.xlu0 %5440
    %5442 = vrot.lane.b32.xlu0 %v4273, 32
    %v5443 = vpop.permute.xlu0 %5442
    %5444 = vrot.lane.b32.xlu0 %v4274, 32
    %v5445 = vpop.permute.xlu0 %5444
    %5446 = vrot.lane.b32.xlu0 %v4275, 32
    %v5447 = vpop.permute.xlu0 %5446
    %5448 = vrot.lane.b32.xlu0 %v4276, 32
    %v5449 = vpop.permute.xlu0 %5448
    %5450 = vrot.lane.b32.xlu0 %v4277, 32
    %v5451 = vpop.permute.xlu0 %5450
    %5452 = vrot.lane.b32.xlu0 %v4278, 32
    %v5453 = vpop.permute.xlu0 %5452
    %5454 = vrot.lane.b32.xlu0 %v4279, 32
    %v5455 = vpop.permute.xlu0 %5454
    %5456 = vrot.lane.b32.xlu0 %v4280, 32
    %v5457 = vpop.permute.xlu0 %5456
    %5458 = vrot.lane.b32.xlu0 %v4281, 32
    %v5459 = vpop.permute.xlu0 %5458
    %5460 = vrot.lane.b32.xlu0 %v4282, 32
    %v5461 = vpop.permute.xlu0 %5460
    %5462 = vrot.lane.b32.xlu0 %v4283, 32
    %v5463 = vpop.permute.xlu0 %5462
    %5464 = vrot.lane.b32.xlu0 %v4284, 32
    %v5465 = vpop.permute.xlu0 %5464
    %5466 = vrot.lane.b32.xlu0 %v4285, 32
    %v5467 = vpop.permute.xlu0 %5466
    %5468 = vrot.lane.b32.xlu0 %v4286, 32
    %v5469 = vpop.permute.xlu0 %5468
    %5470 = vrot.lane.b32.xlu0 %v4287, 32
    %v5471 = vpop.permute.xlu0 %5470
    %5472 = vrot.lane.b32.xlu0 %v4288, 32
    %v5473 = vpop.permute.xlu0 %5472
    %5474 = vrot.lane.b32.xlu0 %v4289, 32
    %v5475 = vpop.permute.xlu0 %5474
    %5476 = vrot.lane.b32.xlu0 %v4290, 32
    %v5477 = vpop.permute.xlu0 %5476
    %5478 = vrot.lane.b32.xlu0 %v4291, 32
    %v5479 = vpop.permute.xlu0 %5478
    %5480 = vrot.lane.b32.xlu0 %v4292, 32
    %v5481 = vpop.permute.xlu0 %5480
    %5482 = vrot.lane.b32.xlu0 %v4293, 32
    %v5483 = vpop.permute.xlu0 %5482
    %5484 = vrot.lane.b32.xlu0 %v4294, 32
    %v5485 = vpop.permute.xlu0 %5484
    %5486 = vrot.lane.b32.xlu0 %v4295, 32
    %v5487 = vpop.permute.xlu0 %5486
    %5488 = vrot.lane.b32.xlu0 %v4296, 32
    %v5489 = vpop.permute.xlu0 %5488
    %5490 = vrot.lane.b32.xlu0 %v4297, 32
    %v5491 = vpop.permute.xlu0 %5490
    %5492 = vrot.lane.b32.xlu0 %v4298, 32
    %v5493 = vpop.permute.xlu0 %5492
    %5494 = vrot.lane.b32.xlu0 %v4299, 32
    %v5495 = vpop.permute.xlu0 %5494
    %5496 = vrot.lane.b32.xlu0 %v4300, 32
    %v5497 = vpop.permute.xlu0 %5496
    %5498 = vrot.lane.b32.xlu0 %v4301, 32
    %v5499 = vpop.permute.xlu0 %5498
    %5500 = vrot.lane.b32.xlu0 %v4302, 32
    %v5501 = vpop.permute.xlu0 %5500
    %5502 = vrot.lane.b32.xlu0 %v4303, 32
    %v5503 = vpop.permute.xlu0 %5502
    %5504 = vrot.lane.b32.xlu0 %v4304, 32
    %v5505 = vpop.permute.xlu0 %5504
    %5506 = vrot.lane.b32.xlu0 %v4305, 32
    %v5507 = vpop.permute.xlu0 %5506
    %5508 = vrot.lane.b32.xlu0 %v4306, 32
    %v5509 = vpop.permute.xlu0 %5508
    %5510 = vrot.lane.b32.xlu0 %v4307, 32
    %v5511 = vpop.permute.xlu0 %5510
    %5512 = vrot.lane.b32.xlu0 %v4308, 32
    %v5513 = vpop.permute.xlu0 %5512
    %5514 = vrot.lane.b32.xlu0 %v4309, 32
    %v5515 = vpop.permute.xlu0 %5514
    %5516 = vrot.lane.b32.xlu0 %v4310, 32
    %v5517 = vpop.permute.xlu0 %5516
    %5518 = vrot.lane.b32.xlu0 %v4311, 32
    %v5519 = vpop.permute.xlu0 %5518
    %5520 = vrot.lane.b32.xlu0 %v4312, 32
    %v5521 = vpop.permute.xlu0 %5520
    %5522 = vrot.lane.b32.xlu0 %v4313, 32
    %v5523 = vpop.permute.xlu0 %5522
    %5524 = vrot.lane.b32.xlu0 %v4314, 32
    %v5525 = vpop.permute.xlu0 %5524
    %5526 = vrot.lane.b32.xlu0 %v4315, 32
    %v5527 = vpop.permute.xlu0 %5526
    %5528 = vrot.lane.b32.xlu0 %v4316, 32
    %v5529 = vpop.permute.xlu0 %5528
    %5530 = vrot.lane.b32.xlu0 %v4317, 32
    %v5531 = vpop.permute.xlu0 %5530
    %5532 = vrot.lane.b32.xlu0 %v4318, 32
    %v5533 = vpop.permute.xlu0 %5532
    %5534 = vrot.lane.b32.xlu0 %v4319, 32
    %v5535 = vpop.permute.xlu0 %5534
    %5664 = vrot.lane.b32.xlu0 %v4320, 40
    %v5665 = vpop.permute.xlu0 %5664
    %5666 = vrot.lane.b32.xlu0 %v4321, 40
    %v5667 = vpop.permute.xlu0 %5666
    %5668 = vrot.lane.b32.xlu0 %v4322, 40
    %v5669 = vpop.permute.xlu0 %5668
    %5670 = vrot.lane.b32.xlu0 %v4323, 40
    %v5671 = vpop.permute.xlu0 %5670
    %5672 = vrot.lane.b32.xlu0 %v4324, 40
    %v5673 = vpop.permute.xlu0 %5672
    %5674 = vrot.lane.b32.xlu0 %v4325, 40
    %v5675 = vpop.permute.xlu0 %5674
    %5676 = vrot.lane.b32.xlu0 %v4326, 40
    %v5677 = vpop.permute.xlu0 %5676
    %5678 = vrot.lane.b32.xlu0 %v4327, 40
    %v5679 = vpop.permute.xlu0 %5678
    %5680 = vrot.lane.b32.xlu0 %v4328, 40
    %v5681 = vpop.permute.xlu0 %5680
    %5682 = vrot.lane.b32.xlu0 %v4329, 40
    %v5683 = vpop.permute.xlu0 %5682
    %5684 = vrot.lane.b32.xlu0 %v4330, 40
    %v5685 = vpop.permute.xlu0 %5684
    %5686 = vrot.lane.b32.xlu0 %v4331, 40
    %v5687 = vpop.permute.xlu0 %5686
    %5688 = vrot.lane.b32.xlu0 %v4332, 40
    %v5689 = vpop.permute.xlu0 %5688
    %5690 = vrot.lane.b32.xlu0 %v4333, 40
    %v5691 = vpop.permute.xlu0 %5690
    %5692 = vrot.lane.b32.xlu0 %v4334, 40
    %v5693 = vpop.permute.xlu0 %5692
    %5694 = vrot.lane.b32.xlu0 %v4335, 40
    %v5695 = vpop.permute.xlu0 %5694
    %5696 = vrot.lane.b32.xlu0 %v4336, 40
    %v5697 = vpop.permute.xlu0 %5696
    %5698 = vrot.lane.b32.xlu0 %v4337, 40
    %v5699 = vpop.permute.xlu0 %5698
    %5700 = vrot.lane.b32.xlu0 %v4338, 40
    %v5701 = vpop.permute.xlu0 %5700
    %5702 = vrot.lane.b32.xlu0 %v4339, 40
    %v5703 = vpop.permute.xlu0 %5702
    %5704 = vrot.lane.b32.xlu0 %v4340, 40
    %v5705 = vpop.permute.xlu0 %5704
    %5706 = vrot.lane.b32.xlu0 %v4341, 40
    %v5707 = vpop.permute.xlu0 %5706
    %5708 = vrot.lane.b32.xlu0 %v4342, 40
    %v5709 = vpop.permute.xlu0 %5708
    %5710 = vrot.lane.b32.xlu0 %v4343, 40
    %v5711 = vpop.permute.xlu0 %5710
    %5712 = vrot.lane.b32.xlu0 %v4344, 40
    %v5713 = vpop.permute.xlu0 %5712
    %5714 = vrot.lane.b32.xlu0 %v4345, 40
    %v5715 = vpop.permute.xlu0 %5714
    %5716 = vrot.lane.b32.xlu0 %v4346, 40
    %v5717 = vpop.permute.xlu0 %5716
    %5718 = vrot.lane.b32.xlu0 %v4347, 40
    %v5719 = vpop.permute.xlu0 %5718
    %5720 = vrot.lane.b32.xlu0 %v4348, 40
    %v5721 = vpop.permute.xlu0 %5720
    %5722 = vrot.lane.b32.xlu0 %v4349, 40
    %v5723 = vpop.permute.xlu0 %5722
    %5724 = vrot.lane.b32.xlu0 %v4350, 40
    %v5725 = vpop.permute.xlu0 %5724
    %5726 = vrot.lane.b32.xlu0 %v4351, 40
    %v5727 = vpop.permute.xlu0 %5726
    %5728 = vrot.lane.b32.xlu0 %v4352, 40
    %v5729 = vpop.permute.xlu0 %5728
    %5730 = vrot.lane.b32.xlu0 %v4353, 40
    %v5731 = vpop.permute.xlu0 %5730
    %5732 = vrot.lane.b32.xlu0 %v4354, 40
    %v5733 = vpop.permute.xlu0 %5732
    %5734 = vrot.lane.b32.xlu0 %v4355, 40
    %v5735 = vpop.permute.xlu0 %5734
    %5736 = vrot.lane.b32.xlu0 %v4356, 40
    %v5737 = vpop.permute.xlu0 %5736
    %5738 = vrot.lane.b32.xlu0 %v4357, 40
    %v5739 = vpop.permute.xlu0 %5738
    %5740 = vrot.lane.b32.xlu0 %v4358, 40
    %v5741 = vpop.permute.xlu0 %5740
    %5742 = vrot.lane.b32.xlu0 %v4359, 40
    %v5743 = vpop.permute.xlu0 %5742
    %5744 = vrot.lane.b32.xlu0 %v4360, 40
    %v5745 = vpop.permute.xlu0 %5744
    %5746 = vrot.lane.b32.xlu0 %v4361, 40
    %v5747 = vpop.permute.xlu0 %5746
    %5748 = vrot.lane.b32.xlu0 %v4362, 40
    %v5749 = vpop.permute.xlu0 %5748
    %5750 = vrot.lane.b32.xlu0 %v4363, 40
    %v5751 = vpop.permute.xlu0 %5750
    %5752 = vrot.lane.b32.xlu0 %v4364, 40
    %v5753 = vpop.permute.xlu0 %5752
    %5754 = vrot.lane.b32.xlu0 %v4365, 40
    %v5755 = vpop.permute.xlu0 %5754
    %5756 = vrot.lane.b32.xlu0 %v4366, 40
    %v5757 = vpop.permute.xlu0 %5756
    %5758 = vrot.lane.b32.xlu0 %v4367, 40
    %v5759 = vpop.permute.xlu0 %5758
    %5760 = vrot.lane.b32.xlu0 %v4368, 40
    %v5761 = vpop.permute.xlu0 %5760
    %5762 = vrot.lane.b32.xlu0 %v4369, 40
    %v5763 = vpop.permute.xlu0 %5762
    %5764 = vrot.lane.b32.xlu0 %v4370, 40
    %v5765 = vpop.permute.xlu0 %5764
    %5766 = vrot.lane.b32.xlu0 %v4371, 40
    %v5767 = vpop.permute.xlu0 %5766
    %5768 = vrot.lane.b32.xlu0 %v4372, 40
    %v5769 = vpop.permute.xlu0 %5768
    %5770 = vrot.lane.b32.xlu0 %v4373, 40
    %v5771 = vpop.permute.xlu0 %5770
    %5772 = vrot.lane.b32.xlu0 %v4374, 40
    %v5773 = vpop.permute.xlu0 %5772
    %5774 = vrot.lane.b32.xlu0 %v4375, 40
    %v5775 = vpop.permute.xlu0 %5774
    %5776 = vrot.lane.b32.xlu0 %v4376, 40
    %v5777 = vpop.permute.xlu0 %5776
    %5778 = vrot.lane.b32.xlu0 %v4377, 40
    %v5779 = vpop.permute.xlu0 %5778
    %5780 = vrot.lane.b32.xlu0 %v4378, 40
    %v5781 = vpop.permute.xlu0 %5780
    %5782 = vrot.lane.b32.xlu0 %v4379, 40
    %v5783 = vpop.permute.xlu0 %5782
    %5784 = vrot.lane.b32.xlu0 %v4380, 40
    %v5785 = vpop.permute.xlu0 %5784
    %5786 = vrot.lane.b32.xlu0 %v4381, 40
    %v5787 = vpop.permute.xlu0 %5786
    %5788 = vrot.lane.b32.xlu0 %v4382, 40
    %v5789 = vpop.permute.xlu0 %5788
    %5790 = vrot.lane.b32.xlu0 %v4383, 40
    %v5791 = vpop.permute.xlu0 %5790
    %5920 = vrot.lane.b32.xlu0 %v4384, 48
    %v5921 = vpop.permute.xlu0 %5920
    %5922 = vrot.lane.b32.xlu0 %v4385, 48
    %v5923 = vpop.permute.xlu0 %5922
    %5924 = vrot.lane.b32.xlu0 %v4386, 48
    %v5925 = vpop.permute.xlu0 %5924
    %5926 = vrot.lane.b32.xlu0 %v4387, 48
    %v5927 = vpop.permute.xlu0 %5926
    %5928 = vrot.lane.b32.xlu0 %v4388, 48
    %v5929 = vpop.permute.xlu0 %5928
    %5930 = vrot.lane.b32.xlu0 %v4389, 48
    %v5931 = vpop.permute.xlu0 %5930
    %5932 = vrot.lane.b32.xlu0 %v4390, 48
    %v5933 = vpop.permute.xlu0 %5932
    %5934 = vrot.lane.b32.xlu0 %v4391, 48
    %v5935 = vpop.permute.xlu0 %5934
    %5936 = vrot.lane.b32.xlu0 %v4392, 48
    %v5937 = vpop.permute.xlu0 %5936
    %5938 = vrot.lane.b32.xlu0 %v4393, 48
    %v5939 = vpop.permute.xlu0 %5938
    %5940 = vrot.lane.b32.xlu0 %v4394, 48
    %v5941 = vpop.permute.xlu0 %5940
    %5942 = vrot.lane.b32.xlu0 %v4395, 48
    %v5943 = vpop.permute.xlu0 %5942
    %5944 = vrot.lane.b32.xlu0 %v4396, 48
    %v5945 = vpop.permute.xlu0 %5944
    %5946 = vrot.lane.b32.xlu0 %v4397, 48
    %v5947 = vpop.permute.xlu0 %5946
    %5948 = vrot.lane.b32.xlu0 %v4398, 48
    %v5949 = vpop.permute.xlu0 %5948
    %5950 = vrot.lane.b32.xlu0 %v4399, 48
    %v5951 = vpop.permute.xlu0 %5950
    %5952 = vrot.lane.b32.xlu0 %v4400, 48
    %v5953 = vpop.permute.xlu0 %5952
    %5954 = vrot.lane.b32.xlu0 %v4401, 48
    %v5955 = vpop.permute.xlu0 %5954
    %5956 = vrot.lane.b32.xlu0 %v4402, 48
    %v5957 = vpop.permute.xlu0 %5956
    %5958 = vrot.lane.b32.xlu0 %v4403, 48
    %v5959 = vpop.permute.xlu0 %5958
    %5960 = vrot.lane.b32.xlu0 %v4404, 48
    %v5961 = vpop.permute.xlu0 %5960
    %5962 = vrot.lane.b32.xlu0 %v4405, 48
    %v5963 = vpop.permute.xlu0 %5962
    %5964 = vrot.lane.b32.xlu0 %v4406, 48
    %v5965 = vpop.permute.xlu0 %5964
    %5966 = vrot.lane.b32.xlu0 %v4407, 48
    %v5967 = vpop.permute.xlu0 %5966
    %5968 = vrot.lane.b32.xlu0 %v4408, 48
    %v5969 = vpop.permute.xlu0 %5968
    %5970 = vrot.lane.b32.xlu0 %v4409, 48
    %v5971 = vpop.permute.xlu0 %5970
    %5972 = vrot.lane.b32.xlu0 %v4410, 48
    %v5973 = vpop.permute.xlu0 %5972
    %5974 = vrot.lane.b32.xlu0 %v4411, 48
    %v5975 = vpop.permute.xlu0 %5974
    %5976 = vrot.lane.b32.xlu0 %v4412, 48
    %v5977 = vpop.permute.xlu0 %5976
    %5978 = vrot.lane.b32.xlu0 %v4413, 48
    %v5979 = vpop.permute.xlu0 %5978
    %5980 = vrot.lane.b32.xlu0 %v4414, 48
    %v5981 = vpop.permute.xlu0 %5980
    %5982 = vrot.lane.b32.xlu0 %v4415, 48
    %v5983 = vpop.permute.xlu0 %5982
    %5984 = vrot.lane.b32.xlu0 %v4416, 48
    %v5985 = vpop.permute.xlu0 %5984
    %5986 = vrot.lane.b32.xlu0 %v4417, 48
    %v5987 = vpop.permute.xlu0 %5986
    %5988 = vrot.lane.b32.xlu0 %v4418, 48
    %v5989 = vpop.permute.xlu0 %5988
    %5990 = vrot.lane.b32.xlu0 %v4419, 48
    %v5991 = vpop.permute.xlu0 %5990
    %5992 = vrot.lane.b32.xlu0 %v4420, 48
    %v5993 = vpop.permute.xlu0 %5992
    %5994 = vrot.lane.b32.xlu0 %v4421, 48
    %v5995 = vpop.permute.xlu0 %5994
    %5996 = vrot.lane.b32.xlu0 %v4422, 48
    %v5997 = vpop.permute.xlu0 %5996
    %5998 = vrot.lane.b32.xlu0 %v4423, 48
    %v5999 = vpop.permute.xlu0 %5998
    %6000 = vrot.lane.b32.xlu0 %v4424, 48
    %v6001 = vpop.permute.xlu0 %6000
    %6002 = vrot.lane.b32.xlu0 %v4425, 48
    %v6003 = vpop.permute.xlu0 %6002
    %6004 = vrot.lane.b32.xlu0 %v4426, 48
    %v6005 = vpop.permute.xlu0 %6004
    %6006 = vrot.lane.b32.xlu0 %v4427, 48
    %v6007 = vpop.permute.xlu0 %6006
    %6008 = vrot.lane.b32.xlu0 %v4428, 48
    %v6009 = vpop.permute.xlu0 %6008
    %6010 = vrot.lane.b32.xlu0 %v4429, 48
    %v6011 = vpop.permute.xlu0 %6010
    %6012 = vrot.lane.b32.xlu0 %v4430, 48
    %v6013 = vpop.permute.xlu0 %6012
    %6014 = vrot.lane.b32.xlu0 %v4431, 48
    %v6015 = vpop.permute.xlu0 %6014
    %6016 = vrot.lane.b32.xlu0 %v4432, 48
    %v6017 = vpop.permute.xlu0 %6016
    %6018 = vrot.lane.b32.xlu0 %v4433, 48
    %v6019 = vpop.permute.xlu0 %6018
    %6020 = vrot.lane.b32.xlu0 %v4434, 48
    %v6021 = vpop.permute.xlu0 %6020
    %6022 = vrot.lane.b32.xlu0 %v4435, 48
    %v6023 = vpop.permute.xlu0 %6022
    %6024 = vrot.lane.b32.xlu0 %v4436, 48
    %v6025 = vpop.permute.xlu0 %6024
    %6026 = vrot.lane.b32.xlu0 %v4437, 48
    %v6027 = vpop.permute.xlu0 %6026
    %6028 = vrot.lane.b32.xlu0 %v4438, 48
    %v6029 = vpop.permute.xlu0 %6028
    %6030 = vrot.lane.b32.xlu0 %v4439, 48
    %v6031 = vpop.permute.xlu0 %6030
    %6032 = vrot.lane.b32.xlu0 %v4440, 48
    %v6033 = vpop.permute.xlu0 %6032
    %6034 = vrot.lane.b32.xlu0 %v4441, 48
    %v6035 = vpop.permute.xlu0 %6034
    %6036 = vrot.lane.b32.xlu0 %v4442, 48
    %v6037 = vpop.permute.xlu0 %6036
    %6038 = vrot.lane.b32.xlu0 %v4443, 48
    %v6039 = vpop.permute.xlu0 %6038
    %6040 = vrot.lane.b32.xlu0 %v4444, 48
    %v6041 = vpop.permute.xlu0 %6040
    %6042 = vrot.lane.b32.xlu0 %v4445, 48
    %v6043 = vpop.permute.xlu0 %6042
    %6044 = vrot.lane.b32.xlu0 %v4446, 48
    %v6045 = vpop.permute.xlu0 %6044
    %6046 = vrot.lane.b32.xlu0 %v4447, 48
    %v6047 = vpop.permute.xlu0 %6046
    %6176 = vrot.lane.b32.xlu0 %v4448, 56
    %v6177 = vpop.permute.xlu0 %6176
    %6178 = vrot.lane.b32.xlu0 %v4449, 56
    %v6179 = vpop.permute.xlu0 %6178
    %6180 = vrot.lane.b32.xlu0 %v4450, 56
    %v6181 = vpop.permute.xlu0 %6180
    %6182 = vrot.lane.b32.xlu0 %v4451, 56
    %v6183 = vpop.permute.xlu0 %6182
    %6184 = vrot.lane.b32.xlu0 %v4452, 56
    %v6185 = vpop.permute.xlu0 %6184
    %6186 = vrot.lane.b32.xlu0 %v4453, 56
    %v6187 = vpop.permute.xlu0 %6186
    %6188 = vrot.lane.b32.xlu0 %v4454, 56
    %v6189 = vpop.permute.xlu0 %6188
    %6190 = vrot.lane.b32.xlu0 %v4455, 56
    %v6191 = vpop.permute.xlu0 %6190
    %6192 = vrot.lane.b32.xlu0 %v4456, 56
    %v6193 = vpop.permute.xlu0 %6192
    %6194 = vrot.lane.b32.xlu0 %v4457, 56
    %v6195 = vpop.permute.xlu0 %6194
    %6196 = vrot.lane.b32.xlu0 %v4458, 56
    %v6197 = vpop.permute.xlu0 %6196
    %6198 = vrot.lane.b32.xlu0 %v4459, 56
    %v6199 = vpop.permute.xlu0 %6198
    %6200 = vrot.lane.b32.xlu0 %v4460, 56
    %v6201 = vpop.permute.xlu0 %6200
    %6202 = vrot.lane.b32.xlu0 %v4461, 56
    %v6203 = vpop.permute.xlu0 %6202
    %6204 = vrot.lane.b32.xlu0 %v4462, 56
    %v6205 = vpop.permute.xlu0 %6204
    %6206 = vrot.lane.b32.xlu0 %v4463, 56
    %v6207 = vpop.permute.xlu0 %6206
    %6208 = vrot.lane.b32.xlu0 %v4464, 56
    %v6209 = vpop.permute.xlu0 %6208
    %6210 = vrot.lane.b32.xlu0 %v4465, 56
    %v6211 = vpop.permute.xlu0 %6210
    %6212 = vrot.lane.b32.xlu0 %v4466, 56
    %v6213 = vpop.permute.xlu0 %6212
    %6214 = vrot.lane.b32.xlu0 %v4467, 56
    %v6215 = vpop.permute.xlu0 %6214
    %6216 = vrot.lane.b32.xlu0 %v4468, 56
    %v6217 = vpop.permute.xlu0 %6216
    %6218 = vrot.lane.b32.xlu0 %v4469, 56
    %v6219 = vpop.permute.xlu0 %6218
    %6220 = vrot.lane.b32.xlu0 %v4470, 56
    %v6221 = vpop.permute.xlu0 %6220
    %6222 = vrot.lane.b32.xlu0 %v4471, 56
    %v6223 = vpop.permute.xlu0 %6222
    %6224 = vrot.lane.b32.xlu0 %v4472, 56
    %v6225 = vpop.permute.xlu0 %6224
    %6226 = vrot.lane.b32.xlu0 %v4473, 56
    %v6227 = vpop.permute.xlu0 %6226
    %6228 = vrot.lane.b32.xlu0 %v4474, 56
    %v6229 = vpop.permute.xlu0 %6228
    %6230 = vrot.lane.b32.xlu0 %v4475, 56
    %v6231 = vpop.permute.xlu0 %6230
    %6232 = vrot.lane.b32.xlu0 %v4476, 56
    %v6233 = vpop.permute.xlu0 %6232
    %6234 = vrot.lane.b32.xlu0 %v4477, 56
    %v6235 = vpop.permute.xlu0 %6234
    %6236 = vrot.lane.b32.xlu0 %v4478, 56
    %v6237 = vpop.permute.xlu0 %6236
    %6238 = vrot.lane.b32.xlu0 %v4479, 56
    %v6239 = vpop.permute.xlu0 %6238
    %6240 = vrot.lane.b32.xlu0 %v4480, 56
    %v6241 = vpop.permute.xlu0 %6240
    %6242 = vrot.lane.b32.xlu0 %v4481, 56
    %v6243 = vpop.permute.xlu0 %6242
    %6244 = vrot.lane.b32.xlu0 %v4482, 56
    %v6245 = vpop.permute.xlu0 %6244
    %6246 = vrot.lane.b32.xlu0 %v4483, 56
    %v6247 = vpop.permute.xlu0 %6246
    %6248 = vrot.lane.b32.xlu0 %v4484, 56
    %v6249 = vpop.permute.xlu0 %6248
    %6250 = vrot.lane.b32.xlu0 %v4485, 56
    %v6251 = vpop.permute.xlu0 %6250
    %6252 = vrot.lane.b32.xlu0 %v4486, 56
    %v6253 = vpop.permute.xlu0 %6252
    %6254 = vrot.lane.b32.xlu0 %v4487, 56
    %v6255 = vpop.permute.xlu0 %6254
    %6256 = vrot.lane.b32.xlu0 %v4488, 56
    %v6257 = vpop.permute.xlu0 %6256
    %6258 = vrot.lane.b32.xlu0 %v4489, 56
    %v6259 = vpop.permute.xlu0 %6258
    %6260 = vrot.lane.b32.xlu0 %v4490, 56
    %v6261 = vpop.permute.xlu0 %6260
    %6262 = vrot.lane.b32.xlu0 %v4491, 56
    %v6263 = vpop.permute.xlu0 %6262
    %6264 = vrot.lane.b32.xlu0 %v4492, 56
    %v6265 = vpop.permute.xlu0 %6264
    %6266 = vrot.lane.b32.xlu0 %v4493, 56
    %v6267 = vpop.permute.xlu0 %6266
    %6268 = vrot.lane.b32.xlu0 %v4494, 56
    %v6269 = vpop.permute.xlu0 %6268
    %6270 = vrot.lane.b32.xlu0 %v4495, 56
    %v6271 = vpop.permute.xlu0 %6270
    %6272 = vrot.lane.b32.xlu0 %v4496, 56
    %v6273 = vpop.permute.xlu0 %6272
    %6274 = vrot.lane.b32.xlu0 %v4497, 56
    %v6275 = vpop.permute.xlu0 %6274
    %6276 = vrot.lane.b32.xlu0 %v4498, 56
    %v6277 = vpop.permute.xlu0 %6276
    %6278 = vrot.lane.b32.xlu0 %v4499, 56
    %v6279 = vpop.permute.xlu0 %6278
    %6280 = vrot.lane.b32.xlu0 %v4500, 56
    %v6281 = vpop.permute.xlu0 %6280
    %6282 = vrot.lane.b32.xlu0 %v4501, 56
    %v6283 = vpop.permute.xlu0 %6282
    %6284 = vrot.lane.b32.xlu0 %v4502, 56
    %v6285 = vpop.permute.xlu0 %6284
    %6286 = vrot.lane.b32.xlu0 %v4503, 56
    %v6287 = vpop.permute.xlu0 %6286
    %6288 = vrot.lane.b32.xlu0 %v4504, 56
    %v6289 = vpop.permute.xlu0 %6288
    %6290 = vrot.lane.b32.xlu0 %v4505, 56
    %v6291 = vpop.permute.xlu0 %6290
    %6292 = vrot.lane.b32.xlu0 %v4506, 56
    %v6293 = vpop.permute.xlu0 %6292
    %6294 = vrot.lane.b32.xlu0 %v4507, 56
    %v6295 = vpop.permute.xlu0 %6294
    %6296 = vrot.lane.b32.xlu0 %v4508, 56
    %v6297 = vpop.permute.xlu0 %6296
    %6298 = vrot.lane.b32.xlu0 %v4509, 56
    %v6299 = vpop.permute.xlu0 %6298
    %6300 = vrot.lane.b32.xlu0 %v4510, 56
    %v6301 = vpop.permute.xlu0 %6300
    %6302 = vrot.lane.b32.xlu0 %v4511, 56
    %v6303 = vpop.permute.xlu0 %6302
    %6432 = vrot.lane.b32.xlu0 %v4512, 64
    %v6433 = vpop.permute.xlu0 %6432
    %6434 = vrot.lane.b32.xlu0 %v4513, 64
    %v6435 = vpop.permute.xlu0 %6434
    %6436 = vrot.lane.b32.xlu0 %v4514, 64
    %v6437 = vpop.permute.xlu0 %6436
    %6438 = vrot.lane.b32.xlu0 %v4515, 64
    %v6439 = vpop.permute.xlu0 %6438
    %6440 = vrot.lane.b32.xlu0 %v4516, 64
    %v6441 = vpop.permute.xlu0 %6440
    %6442 = vrot.lane.b32.xlu0 %v4517, 64
    %v6443 = vpop.permute.xlu0 %6442
    %6444 = vrot.lane.b32.xlu0 %v4518, 64
    %v6445 = vpop.permute.xlu0 %6444
    %6446 = vrot.lane.b32.xlu0 %v4519, 64
    %v6447 = vpop.permute.xlu0 %6446
    %6448 = vrot.lane.b32.xlu0 %v4520, 64
    %v6449 = vpop.permute.xlu0 %6448
    %6450 = vrot.lane.b32.xlu0 %v4521, 64
    %v6451 = vpop.permute.xlu0 %6450
    %6452 = vrot.lane.b32.xlu0 %v4522, 64
    %v6453 = vpop.permute.xlu0 %6452
    %6454 = vrot.lane.b32.xlu0 %v4523, 64
    %v6455 = vpop.permute.xlu0 %6454
    %6456 = vrot.lane.b32.xlu0 %v4524, 64
    %v6457 = vpop.permute.xlu0 %6456
    %6458 = vrot.lane.b32.xlu0 %v4525, 64
    %v6459 = vpop.permute.xlu0 %6458
    %6460 = vrot.lane.b32.xlu0 %v4526, 64
    %v6461 = vpop.permute.xlu0 %6460
    %6462 = vrot.lane.b32.xlu0 %v4527, 64
    %v6463 = vpop.permute.xlu0 %6462
    %6464 = vrot.lane.b32.xlu0 %v4528, 64
    %v6465 = vpop.permute.xlu0 %6464
    %6466 = vrot.lane.b32.xlu0 %v4529, 64
    %v6467 = vpop.permute.xlu0 %6466
    %6468 = vrot.lane.b32.xlu0 %v4530, 64
    %v6469 = vpop.permute.xlu0 %6468
    %6470 = vrot.lane.b32.xlu0 %v4531, 64
    %v6471 = vpop.permute.xlu0 %6470
    %6472 = vrot.lane.b32.xlu0 %v4532, 64
    %v6473 = vpop.permute.xlu0 %6472
    %6474 = vrot.lane.b32.xlu0 %v4533, 64
    %v6475 = vpop.permute.xlu0 %6474
    %6476 = vrot.lane.b32.xlu0 %v4534, 64
    %v6477 = vpop.permute.xlu0 %6476
    %6478 = vrot.lane.b32.xlu0 %v4535, 64
    %v6479 = vpop.permute.xlu0 %6478
    %6480 = vrot.lane.b32.xlu0 %v4536, 64
    %v6481 = vpop.permute.xlu0 %6480
    %6482 = vrot.lane.b32.xlu0 %v4537, 64
    %v6483 = vpop.permute.xlu0 %6482
    %6484 = vrot.lane.b32.xlu0 %v4538, 64
    %v6485 = vpop.permute.xlu0 %6484
    %6486 = vrot.lane.b32.xlu0 %v4539, 64
    %v6487 = vpop.permute.xlu0 %6486
    %6488 = vrot.lane.b32.xlu0 %v4540, 64
    %v6489 = vpop.permute.xlu0 %6488
    %6490 = vrot.lane.b32.xlu0 %v4541, 64
    %v6491 = vpop.permute.xlu0 %6490
    %6492 = vrot.lane.b32.xlu0 %v4542, 64
    %v6493 = vpop.permute.xlu0 %6492
    %6494 = vrot.lane.b32.xlu0 %v4543, 64
    %v6495 = vpop.permute.xlu0 %6494
    %6496 = vrot.lane.b32.xlu0 %v4544, 64
    %v6497 = vpop.permute.xlu0 %6496
    %6498 = vrot.lane.b32.xlu0 %v4545, 64
    %v6499 = vpop.permute.xlu0 %6498
    %6500 = vrot.lane.b32.xlu0 %v4546, 64
    %v6501 = vpop.permute.xlu0 %6500
    %6502 = vrot.lane.b32.xlu0 %v4547, 64
    %v6503 = vpop.permute.xlu0 %6502
    %6504 = vrot.lane.b32.xlu0 %v4548, 64
    %v6505 = vpop.permute.xlu0 %6504
    %6506 = vrot.lane.b32.xlu0 %v4549, 64
    %v6507 = vpop.permute.xlu0 %6506
    %6508 = vrot.lane.b32.xlu0 %v4550, 64
    %v6509 = vpop.permute.xlu0 %6508
    %6510 = vrot.lane.b32.xlu0 %v4551, 64
    %v6511 = vpop.permute.xlu0 %6510
    %6512 = vrot.lane.b32.xlu0 %v4552, 64
    %v6513 = vpop.permute.xlu0 %6512
    %6514 = vrot.lane.b32.xlu0 %v4553, 64
    %v6515 = vpop.permute.xlu0 %6514
    %6516 = vrot.lane.b32.xlu0 %v4554, 64
    %v6517 = vpop.permute.xlu0 %6516
    %6518 = vrot.lane.b32.xlu0 %v4555, 64
    %v6519 = vpop.permute.xlu0 %6518
    %6520 = vrot.lane.b32.xlu0 %v4556, 64
    %v6521 = vpop.permute.xlu0 %6520
    %6522 = vrot.lane.b32.xlu0 %v4557, 64
    %v6523 = vpop.permute.xlu0 %6522
    %6524 = vrot.lane.b32.xlu0 %v4558, 64
    %v6525 = vpop.permute.xlu0 %6524
    %6526 = vrot.lane.b32.xlu0 %v4559, 64
    %v6527 = vpop.permute.xlu0 %6526
    %6528 = vrot.lane.b32.xlu0 %v4560, 64
    %v6529 = vpop.permute.xlu0 %6528
    %6530 = vrot.lane.b32.xlu0 %v4561, 64
    %v6531 = vpop.permute.xlu0 %6530
    %6532 = vrot.lane.b32.xlu0 %v4562, 64
    %v6533 = vpop.permute.xlu0 %6532
    %6534 = vrot.lane.b32.xlu0 %v4563, 64
    %v6535 = vpop.permute.xlu0 %6534
    %6536 = vrot.lane.b32.xlu0 %v4564, 64
    %v6537 = vpop.permute.xlu0 %6536
    %6538 = vrot.lane.b32.xlu0 %v4565, 64
    %v6539 = vpop.permute.xlu0 %6538
    %6540 = vrot.lane.b32.xlu0 %v4566, 64
    %v6541 = vpop.permute.xlu0 %6540
    %6542 = vrot.lane.b32.xlu0 %v4567, 64
    %v6543 = vpop.permute.xlu0 %6542
    %6544 = vrot.lane.b32.xlu0 %v4568, 64
    %v6545 = vpop.permute.xlu0 %6544
    %6546 = vrot.lane.b32.xlu0 %v4569, 64
    %v6547 = vpop.permute.xlu0 %6546
    %6548 = vrot.lane.b32.xlu0 %v4570, 64
    %v6549 = vpop.permute.xlu0 %6548
    %6550 = vrot.lane.b32.xlu0 %v4571, 64
    %v6551 = vpop.permute.xlu0 %6550
    %6552 = vrot.lane.b32.xlu0 %v4572, 64
    %v6553 = vpop.permute.xlu0 %6552
    %6554 = vrot.lane.b32.xlu0 %v4573, 64
    %v6555 = vpop.permute.xlu0 %6554
    %6556 = vrot.lane.b32.xlu0 %v4574, 64
    %v6557 = vpop.permute.xlu0 %6556
    %6558 = vrot.lane.b32.xlu0 %v4575, 64
    %v6559 = vpop.permute.xlu0 %6558
    %v6624 = vsel %vm41, %v4000, %v4641
    %v6625 = vsel %vm41, %v4001, %v4643
    %v6626 = vsel %vm41, %v4002, %v4645
    %v6627 = vsel %vm41, %v4003, %v4647
    %v6628 = vsel %vm41, %v4004, %v4649
    %v6629 = vsel %vm41, %v4005, %v4651
    %v6630 = vsel %vm41, %v4006, %v4653
    %v6631 = vsel %vm41, %v4007, %v4655
    %v6632 = vsel %vm41, %v4008, %v4657
    %v6633 = vsel %vm41, %v4009, %v4659
    %v6634 = vsel %vm41, %v4010, %v4661
    %v6635 = vsel %vm41, %v4011, %v4663
    %v6636 = vsel %vm41, %v4012, %v4665
    %v6637 = vsel %vm41, %v4013, %v4667
    %v6638 = vsel %vm41, %v4014, %v4669
    %v6639 = vsel %vm41, %v4015, %v4671
    %v6640 = vsel %vm41, %v4016, %v4673
    %v6641 = vsel %vm41, %v4017, %v4675
    %v6642 = vsel %vm41, %v4018, %v4677
    %v6643 = vsel %vm41, %v4019, %v4679
    %v6644 = vsel %vm41, %v4020, %v4681
    %v6645 = vsel %vm41, %v4021, %v4683
    %v6646 = vsel %vm41, %v4022, %v4685
    %v6647 = vsel %vm41, %v4023, %v4687
    %v6648 = vsel %vm41, %v4024, %v4689
    %v6649 = vsel %vm41, %v4025, %v4691
    %v6650 = vsel %vm41, %v4026, %v4693
    %v6651 = vsel %vm41, %v4027, %v4695
    %v6652 = vsel %vm41, %v4028, %v4697
    %v6653 = vsel %vm41, %v4029, %v4699
    %v6654 = vsel %vm41, %v4030, %v4701
    %v6655 = vsel %vm41, %v4031, %v4703
    %v6656 = vsel %vm41, %v4032, %v4705
    %v6657 = vsel %vm41, %v4033, %v4707
    %v6658 = vsel %vm41, %v4034, %v4709
    %v6659 = vsel %vm41, %v4035, %v4711
    %v6660 = vsel %vm41, %v4036, %v4713
    %v6661 = vsel %vm41, %v4037, %v4715
    %v6662 = vsel %vm41, %v4038, %v4717
    %v6663 = vsel %vm41, %v4039, %v4719
    %v6664 = vsel %vm41, %v4040, %v4721
    %v6665 = vsel %vm41, %v4041, %v4723
    %v6666 = vsel %vm41, %v4042, %v4725
    %v6667 = vsel %vm41, %v4043, %v4727
    %v6668 = vsel %vm41, %v4044, %v4729
    %v6669 = vsel %vm41, %v4045, %v4731
    %v6670 = vsel %vm41, %v4046, %v4733
    %v6671 = vsel %vm41, %v4047, %v4735
    %v6672 = vsel %vm41, %v4048, %v4737
    %v6673 = vsel %vm41, %v4049, %v4739
    %v6674 = vsel %vm41, %v4050, %v4741
    %v6675 = vsel %vm41, %v4051, %v4743
    %v6676 = vsel %vm41, %v4052, %v4745
    %v6677 = vsel %vm41, %v4053, %v4747
    %v6678 = vsel %vm41, %v4054, %v4749
    %v6679 = vsel %vm41, %v4055, %v4751
    %v6680 = vsel %vm41, %v4056, %v4753
    %v6681 = vsel %vm41, %v4057, %v4755
    %v6682 = vsel %vm41, %v4058, %v4757
    %v6683 = vsel %vm41, %v4059, %v4759
    %v6684 = vsel %vm41, %v4060, %v4761
    %v6685 = vsel %vm41, %v4061, %v4763
    %v6686 = vsel %vm41, %v4062, %v4765
    %v6687 = vsel %vm41, %v4063, %v4767
    %vm6688 = vcmask 130048
    %v6689 = vsel %vm6688, %v6624, %v4897
    %v6690 = vsel %vm6688, %v6625, %v4899
    %v6691 = vsel %vm6688, %v6626, %v4901
    %v6692 = vsel %vm6688, %v6627, %v4903
    %v6693 = vsel %vm6688, %v6628, %v4905
    %v6694 = vsel %vm6688, %v6629, %v4907
    %v6695 = vsel %vm6688, %v6630, %v4909
    %v6696 = vsel %vm6688, %v6631, %v4911
    %v6697 = vsel %vm6688, %v6632, %v4913
    %v6698 = vsel %vm6688, %v6633, %v4915
    %v6699 = vsel %vm6688, %v6634, %v4917
    %v6700 = vsel %vm6688, %v6635, %v4919
    %v6701 = vsel %vm6688, %v6636, %v4921
    %v6702 = vsel %vm6688, %v6637, %v4923
    %v6703 = vsel %vm6688, %v6638, %v4925
    %v6704 = vsel %vm6688, %v6639, %v4927
    %v6705 = vsel %vm6688, %v6640, %v4929
    %v6706 = vsel %vm6688, %v6641, %v4931
    %v6707 = vsel %vm6688, %v6642, %v4933
    %v6708 = vsel %vm6688, %v6643, %v4935
    %v6709 = vsel %vm6688, %v6644, %v4937
    %v6710 = vsel %vm6688, %v6645, %v4939
    %v6711 = vsel %vm6688, %v6646, %v4941
    %v6712 = vsel %vm6688, %v6647, %v4943
    %v6713 = vsel %vm6688, %v6648, %v4945
    %v6714 = vsel %vm6688, %v6649, %v4947
    %v6715 = vsel %vm6688, %v6650, %v4949
    %v6716 = vsel %vm6688, %v6651, %v4951
    %v6717 = vsel %vm6688, %v6652, %v4953
    %v6718 = vsel %vm6688, %v6653, %v4955
    %v6719 = vsel %vm6688, %v6654, %v4957
    %v6720 = vsel %vm6688, %v6655, %v4959
    %v6721 = vsel %vm6688, %v6656, %v4961
    %v6722 = vsel %vm6688, %v6657, %v4963
    %v6723 = vsel %vm6688, %v6658, %v4965
    %v6724 = vsel %vm6688, %v6659, %v4967
    %v6725 = vsel %vm6688, %v6660, %v4969
    %v6726 = vsel %vm6688, %v6661, %v4971
    %v6727 = vsel %vm6688, %v6662, %v4973
    %v6728 = vsel %vm6688, %v6663, %v4975
    %v6729 = vsel %vm6688, %v6664, %v4977
    %v6730 = vsel %vm6688, %v6665, %v4979
    %v6731 = vsel %vm6688, %v6666, %v4981
    %v6732 = vsel %vm6688, %v6667, %v4983
    %v6733 = vsel %vm6688, %v6668, %v4985
    %v6734 = vsel %vm6688, %v6669, %v4987
    %v6735 = vsel %vm6688, %v6670, %v4989
    %v6736 = vsel %vm6688, %v6671, %v4991
    %v6737 = vsel %vm6688, %v6672, %v4993
    %v6738 = vsel %vm6688, %v6673, %v4995
    %v6739 = vsel %vm6688, %v6674, %v4997
    %v6740 = vsel %vm6688, %v6675, %v4999
    %v6741 = vsel %vm6688, %v6676, %v5001
    %v6742 = vsel %vm6688, %v6677, %v5003
    %v6743 = vsel %vm6688, %v6678, %v5005
    %v6744 = vsel %vm6688, %v6679, %v5007
    %v6745 = vsel %vm6688, %v6680, %v5009
    %v6746 = vsel %vm6688, %v6681, %v5011
    %v6747 = vsel %vm6688, %v6682, %v5013
    %v6748 = vsel %vm6688, %v6683, %v5015
    %v6749 = vsel %vm6688, %v6684, %v5017
    %v6750 = vsel %vm6688, %v6685, %v5019
    %v6751 = vsel %vm6688, %v6686, %v5021
    %v6752 = vsel %vm6688, %v6687, %v5023
    %v6753 = vsel %vm3360, %v6689, %v5153
    %v6754 = vsel %vm3360, %v6690, %v5155
    %v6755 = vsel %vm3360, %v6691, %v5157
    %v6756 = vsel %vm3360, %v6692, %v5159
    %v6757 = vsel %vm3360, %v6693, %v5161
    %v6758 = vsel %vm3360, %v6694, %v5163
    %v6759 = vsel %vm3360, %v6695, %v5165
    %v6760 = vsel %vm3360, %v6696, %v5167
    %v6761 = vsel %vm3360, %v6697, %v5169
    %v6762 = vsel %vm3360, %v6698, %v5171
    %v6763 = vsel %vm3360, %v6699, %v5173
    %v6764 = vsel %vm3360, %v6700, %v5175
    %v6765 = vsel %vm3360, %v6701, %v5177
    %v6766 = vsel %vm3360, %v6702, %v5179
    %v6767 = vsel %vm3360, %v6703, %v5181
    %v6768 = vsel %vm3360, %v6704, %v5183
    %v6769 = vsel %vm3360, %v6705, %v5185
    %v6770 = vsel %vm3360, %v6706, %v5187
    %v6771 = vsel %vm3360, %v6707, %v5189
    %v6772 = vsel %vm3360, %v6708, %v5191
    %v6773 = vsel %vm3360, %v6709, %v5193
    %v6774 = vsel %vm3360, %v6710, %v5195
    %v6775 = vsel %vm3360, %v6711, %v5197
    %v6776 = vsel %vm3360, %v6712, %v5199
    %v6777 = vsel %vm3360, %v6713, %v5201
    %v6778 = vsel %vm3360, %v6714, %v5203
    %v6779 = vsel %vm3360, %v6715, %v5205
    %v6780 = vsel %vm3360, %v6716, %v5207
    %v6781 = vsel %vm3360, %v6717, %v5209
    %v6782 = vsel %vm3360, %v6718, %v5211
    %v6783 = vsel %vm3360, %v6719, %v5213
    %v6784 = vsel %vm3360, %v6720, %v5215
    %v6785 = vsel %vm3360, %v6721, %v5217
    %v6786 = vsel %vm3360, %v6722, %v5219
    %v6787 = vsel %vm3360, %v6723, %v5221
    %v6788 = vsel %vm3360, %v6724, %v5223
    %v6789 = vsel %vm3360, %v6725, %v5225
    %v6790 = vsel %vm3360, %v6726, %v5227
    %v6791 = vsel %vm3360, %v6727, %v5229
    %v6792 = vsel %vm3360, %v6728, %v5231
    %v6793 = vsel %vm3360, %v6729, %v5233
    %v6794 = vsel %vm3360, %v6730, %v5235
    %v6795 = vsel %vm3360, %v6731, %v5237
    %v6796 = vsel %vm3360, %v6732, %v5239
    %v6797 = vsel %vm3360, %v6733, %v5241
    %v6798 = vsel %vm3360, %v6734, %v5243
    %v6799 = vsel %vm3360, %v6735, %v5245
    %v6800 = vsel %vm3360, %v6736, %v5247
    %v6801 = vsel %vm3360, %v6737, %v5249
    %v6802 = vsel %vm3360, %v6738, %v5251
    %v6803 = vsel %vm3360, %v6739, %v5253
    %v6804 = vsel %vm3360, %v6740, %v5255
    %v6805 = vsel %vm3360, %v6741, %v5257
    %v6806 = vsel %vm3360, %v6742, %v5259
    %v6807 = vsel %vm3360, %v6743, %v5261
    %v6808 = vsel %vm3360, %v6744, %v5263
    %v6809 = vsel %vm3360, %v6745, %v5265
    %v6810 = vsel %vm3360, %v6746, %v5267
    %v6811 = vsel %vm3360, %v6747, %v5269
    %v6812 = vsel %vm3360, %v6748, %v5271
    %v6813 = vsel %vm3360, %v6749, %v5273
    %v6814 = vsel %vm3360, %v6750, %v5275
    %v6815 = vsel %vm3360, %v6751, %v5277
    %v6816 = vsel %vm3360, %v6752, %v5279
    %vm6817 = vcmask 261120
    %v6818 = vsel %vm6817, %v6753, %v5409
    %v6819 = vsel %vm6817, %v6754, %v5411
    %v6820 = vsel %vm6817, %v6755, %v5413
    %v6821 = vsel %vm6817, %v6756, %v5415
    %v6822 = vsel %vm6817, %v6757, %v5417
    %v6823 = vsel %vm6817, %v6758, %v5419
    %v6824 = vsel %vm6817, %v6759, %v5421
    %v6825 = vsel %vm6817, %v6760, %v5423
    %v6826 = vsel %vm6817, %v6761, %v5425
    %v6827 = vsel %vm6817, %v6762, %v5427
    %v6828 = vsel %vm6817, %v6763, %v5429
    %v6829 = vsel %vm6817, %v6764, %v5431
    %v6830 = vsel %vm6817, %v6765, %v5433
    %v6831 = vsel %vm6817, %v6766, %v5435
    %v6832 = vsel %vm6817, %v6767, %v5437
    %v6833 = vsel %vm6817, %v6768, %v5439
    %v6834 = vsel %vm6817, %v6769, %v5441
    %v6835 = vsel %vm6817, %v6770, %v5443
    %v6836 = vsel %vm6817, %v6771, %v5445
    %v6837 = vsel %vm6817, %v6772, %v5447
    %v6838 = vsel %vm6817, %v6773, %v5449
    %v6839 = vsel %vm6817, %v6774, %v5451
    %v6840 = vsel %vm6817, %v6775, %v5453
    %v6841 = vsel %vm6817, %v6776, %v5455
    %v6842 = vsel %vm6817, %v6777, %v5457
    %v6843 = vsel %vm6817, %v6778, %v5459
    %v6844 = vsel %vm6817, %v6779, %v5461
    %v6845 = vsel %vm6817, %v6780, %v5463
    %v6846 = vsel %vm6817, %v6781, %v5465
    %v6847 = vsel %vm6817, %v6782, %v5467
    %v6848 = vsel %vm6817, %v6783, %v5469
    %v6849 = vsel %vm6817, %v6784, %v5471
    %v6850 = vsel %vm6817, %v6785, %v5473
    %v6851 = vsel %vm6817, %v6786, %v5475
    %v6852 = vsel %vm6817, %v6787, %v5477
    %v6853 = vsel %vm6817, %v6788, %v5479
    %v6854 = vsel %vm6817, %v6789, %v5481
    %v6855 = vsel %vm6817, %v6790, %v5483
    %v6856 = vsel %vm6817, %v6791, %v5485
    %v6857 = vsel %vm6817, %v6792, %v5487
    %v6858 = vsel %vm6817, %v6793, %v5489
    %v6859 = vsel %vm6817, %v6794, %v5491
    %v6860 = vsel %vm6817, %v6795, %v5493
    %v6861 = vsel %vm6817, %v6796, %v5495
    %v6862 = vsel %vm6817, %v6797, %v5497
    %v6863 = vsel %vm6817, %v6798, %v5499
    %v6864 = vsel %vm6817, %v6799, %v5501
    %v6865 = vsel %vm6817, %v6800, %v5503
    %v6866 = vsel %vm6817, %v6801, %v5505
    %v6867 = vsel %vm6817, %v6802, %v5507
    %v6868 = vsel %vm6817, %v6803, %v5509
    %v6869 = vsel %vm6817, %v6804, %v5511
    %v6870 = vsel %vm6817, %v6805, %v5513
    %v6871 = vsel %vm6817, %v6806, %v5515
    %v6872 = vsel %vm6817, %v6807, %v5517
    %v6873 = vsel %vm6817, %v6808, %v5519
    %v6874 = vsel %vm6817, %v6809, %v5521
    %v6875 = vsel %vm6817, %v6810, %v5523
    %v6876 = vsel %vm6817, %v6811, %v5525
    %v6877 = vsel %vm6817, %v6812, %v5527
    %v6878 = vsel %vm6817, %v6813, %v5529
    %v6879 = vsel %vm6817, %v6814, %v5531
    %v6880 = vsel %vm6817, %v6815, %v5533
    %v6881 = vsel %vm6817, %v6816, %v5535
    %vm6882 = vcmask 326656
    %v6883 = vsel %vm6882, %v6818, %v5665
    %v6884 = vsel %vm6882, %v6819, %v5667
    %v6885 = vsel %vm6882, %v6820, %v5669
    %v6886 = vsel %vm6882, %v6821, %v5671
    %v6887 = vsel %vm6882, %v6822, %v5673
    %v6888 = vsel %vm6882, %v6823, %v5675
    %v6889 = vsel %vm6882, %v6824, %v5677
    %v6890 = vsel %vm6882, %v6825, %v5679
    %v6891 = vsel %vm6882, %v6826, %v5681
    %v6892 = vsel %vm6882, %v6827, %v5683
    %v6893 = vsel %vm6882, %v6828, %v5685
    %v6894 = vsel %vm6882, %v6829, %v5687
    %v6895 = vsel %vm6882, %v6830, %v5689
    %v6896 = vsel %vm6882, %v6831, %v5691
    %v6897 = vsel %vm6882, %v6832, %v5693
    %v6898 = vsel %vm6882, %v6833, %v5695
    %v6899 = vsel %vm6882, %v6834, %v5697
    %v6900 = vsel %vm6882, %v6835, %v5699
    %v6901 = vsel %vm6882, %v6836, %v5701
    %v6902 = vsel %vm6882, %v6837, %v5703
    %v6903 = vsel %vm6882, %v6838, %v5705
    %v6904 = vsel %vm6882, %v6839, %v5707
    %v6905 = vsel %vm6882, %v6840, %v5709
    %v6906 = vsel %vm6882, %v6841, %v5711
    %v6907 = vsel %vm6882, %v6842, %v5713
    %v6908 = vsel %vm6882, %v6843, %v5715
    %v6909 = vsel %vm6882, %v6844, %v5717
    %v6910 = vsel %vm6882, %v6845, %v5719
    %v6911 = vsel %vm6882, %v6846, %v5721
    %v6912 = vsel %vm6882, %v6847, %v5723
    %v6913 = vsel %vm6882, %v6848, %v5725
    %v6914 = vsel %vm6882, %v6849, %v5727
    %v6915 = vsel %vm6882, %v6850, %v5729
    %v6916 = vsel %vm6882, %v6851, %v5731
    %v6917 = vsel %vm6882, %v6852, %v5733
    %v6918 = vsel %vm6882, %v6853, %v5735
    %v6919 = vsel %vm6882, %v6854, %v5737
    %v6920 = vsel %vm6882, %v6855, %v5739
    %v6921 = vsel %vm6882, %v6856, %v5741
    %v6922 = vsel %vm6882, %v6857, %v5743
    %v6923 = vsel %vm6882, %v6858, %v5745
    %v6924 = vsel %vm6882, %v6859, %v5747
    %v6925 = vsel %vm6882, %v6860, %v5749
    %v6926 = vsel %vm6882, %v6861, %v5751
    %v6927 = vsel %vm6882, %v6862, %v5753
    %v6928 = vsel %vm6882, %v6863, %v5755
    %v6929 = vsel %vm6882, %v6864, %v5757
    %v6930 = vsel %vm6882, %v6865, %v5759
    %v6931 = vsel %vm6882, %v6866, %v5761
    %v6932 = vsel %vm6882, %v6867, %v5763
    %v6933 = vsel %vm6882, %v6868, %v5765
    %v6934 = vsel %vm6882, %v6869, %v5767
    %v6935 = vsel %vm6882, %v6870, %v5769
    %v6936 = vsel %vm6882, %v6871, %v5771
    %v6937 = vsel %vm6882, %v6872, %v5773
    %v6938 = vsel %vm6882, %v6873, %v5775
    %v6939 = vsel %vm6882, %v6874, %v5777
    %v6940 = vsel %vm6882, %v6875, %v5779
    %v6941 = vsel %vm6882, %v6876, %v5781
    %v6942 = vsel %vm6882, %v6877, %v5783
    %v6943 = vsel %vm6882, %v6878, %v5785
    %v6944 = vsel %vm6882, %v6879, %v5787
    %v6945 = vsel %vm6882, %v6880, %v5789
    %v6946 = vsel %vm6882, %v6881, %v5791
    %vm6947 = vcmask 392192
    %v6948 = vsel %vm6947, %v6883, %v5921
    %v6949 = vsel %vm6947, %v6884, %v5923
    %v6950 = vsel %vm6947, %v6885, %v5925
    %v6951 = vsel %vm6947, %v6886, %v5927
    %v6952 = vsel %vm6947, %v6887, %v5929
    %v6953 = vsel %vm6947, %v6888, %v5931
    %v6954 = vsel %vm6947, %v6889, %v5933
    %v6955 = vsel %vm6947, %v6890, %v5935
    %v6956 = vsel %vm6947, %v6891, %v5937
    %v6957 = vsel %vm6947, %v6892, %v5939
    %v6958 = vsel %vm6947, %v6893, %v5941
    %v6959 = vsel %vm6947, %v6894, %v5943
    %v6960 = vsel %vm6947, %v6895, %v5945
    %v6961 = vsel %vm6947, %v6896, %v5947
    %v6962 = vsel %vm6947, %v6897, %v5949
    %v6963 = vsel %vm6947, %v6898, %v5951
    %v6964 = vsel %vm6947, %v6899, %v5953
    %v6965 = vsel %vm6947, %v6900, %v5955
    %v6966 = vsel %vm6947, %v6901, %v5957
    %v6967 = vsel %vm6947, %v6902, %v5959
    %v6968 = vsel %vm6947, %v6903, %v5961
    %v6969 = vsel %vm6947, %v6904, %v5963
    %v6970 = vsel %vm6947, %v6905, %v5965
    %v6971 = vsel %vm6947, %v6906, %v5967
    %v6972 = vsel %vm6947, %v6907, %v5969
    %v6973 = vsel %vm6947, %v6908, %v5971
    %v6974 = vsel %vm6947, %v6909, %v5973
    %v6975 = vsel %vm6947, %v6910, %v5975
    %v6976 = vsel %vm6947, %v6911, %v5977
    %v6977 = vsel %vm6947, %v6912, %v5979
    %v6978 = vsel %vm6947, %v6913, %v5981
    %v6979 = vsel %vm6947, %v6914, %v5983
    %v6980 = vsel %vm6947, %v6915, %v5985
    %v6981 = vsel %vm6947, %v6916, %v5987
    %v6982 = vsel %vm6947, %v6917, %v5989
    %v6983 = vsel %vm6947, %v6918, %v5991
    %v6984 = vsel %vm6947, %v6919, %v5993
    %v6985 = vsel %vm6947, %v6920, %v5995
    %v6986 = vsel %vm6947, %v6921, %v5997
    %v6987 = vsel %vm6947, %v6922, %v5999
    %v6988 = vsel %vm6947, %v6923, %v6001
    %v6989 = vsel %vm6947, %v6924, %v6003
    %v6990 = vsel %vm6947, %v6925, %v6005
    %v6991 = vsel %vm6947, %v6926, %v6007
    %v6992 = vsel %vm6947, %v6927, %v6009
    %v6993 = vsel %vm6947, %v6928, %v6011
    %v6994 = vsel %vm6947, %v6929, %v6013
    %v6995 = vsel %vm6947, %v6930, %v6015
    %v6996 = vsel %vm6947, %v6931, %v6017
    %v6997 = vsel %vm6947, %v6932, %v6019
    %v6998 = vsel %vm6947, %v6933, %v6021
    %v6999 = vsel %vm6947, %v6934, %v6023
    %v7000 = vsel %vm6947, %v6935, %v6025
    %v7001 = vsel %vm6947, %v6936, %v6027
    %v7002 = vsel %vm6947, %v6937, %v6029
    %v7003 = vsel %vm6947, %v6938, %v6031
    %v7004 = vsel %vm6947, %v6939, %v6033
    %v7005 = vsel %vm6947, %v6940, %v6035
    %v7006 = vsel %vm6947, %v6941, %v6037
    %v7007 = vsel %vm6947, %v6942, %v6039
    %v7008 = vsel %vm6947, %v6943, %v6041
    %v7009 = vsel %vm6947, %v6944, %v6043
    %v7010 = vsel %vm6947, %v6945, %v6045
    %v7011 = vsel %vm6947, %v6946, %v6047
    %vm7012 = vcmask 457728
    %v7013 = vsel %vm7012, %v6948, %v6177
    %v7014 = vsel %vm7012, %v6949, %v6179
    %v7015 = vsel %vm7012, %v6950, %v6181
    %v7016 = vsel %vm7012, %v6951, %v6183
    %v7017 = vsel %vm7012, %v6952, %v6185
    %v7018 = vsel %vm7012, %v6953, %v6187
    %v7019 = vsel %vm7012, %v6954, %v6189
    %v7020 = vsel %vm7012, %v6955, %v6191
    %v7021 = vsel %vm7012, %v6956, %v6193
    %v7022 = vsel %vm7012, %v6957, %v6195
    %v7023 = vsel %vm7012, %v6958, %v6197
    %v7024 = vsel %vm7012, %v6959, %v6199
    %v7025 = vsel %vm7012, %v6960, %v6201
    %v7026 = vsel %vm7012, %v6961, %v6203
    %v7027 = vsel %vm7012, %v6962, %v6205
    %v7028 = vsel %vm7012, %v6963, %v6207
    %v7029 = vsel %vm7012, %v6964, %v6209
    %v7030 = vsel %vm7012, %v6965, %v6211
    %v7031 = vsel %vm7012, %v6966, %v6213
    %v7032 = vsel %vm7012, %v6967, %v6215
    %v7033 = vsel %vm7012, %v6968, %v6217
    %v7034 = vsel %vm7012, %v6969, %v6219
    %v7035 = vsel %vm7012, %v6970, %v6221
    %v7036 = vsel %vm7012, %v6971, %v6223
    %v7037 = vsel %vm7012, %v6972, %v6225
    %v7038 = vsel %vm7012, %v6973, %v6227
    %v7039 = vsel %vm7012, %v6974, %v6229
    %v7040 = vsel %vm7012, %v6975, %v6231
    %v7041 = vsel %vm7012, %v6976, %v6233
    %v7042 = vsel %vm7012, %v6977, %v6235
    %v7043 = vsel %vm7012, %v6978, %v6237
    %v7044 = vsel %vm7012, %v6979, %v6239
    %v7045 = vsel %vm7012, %v6980, %v6241
    %v7046 = vsel %vm7012, %v6981, %v6243
    %v7047 = vsel %vm7012, %v6982, %v6245
    %v7048 = vsel %vm7012, %v6983, %v6247
    %v7049 = vsel %vm7012, %v6984, %v6249
    %v7050 = vsel %vm7012, %v6985, %v6251
    %v7051 = vsel %vm7012, %v6986, %v6253
    %v7052 = vsel %vm7012, %v6987, %v6255
    %v7053 = vsel %vm7012, %v6988, %v6257
    %v7054 = vsel %vm7012, %v6989, %v6259
    %v7055 = vsel %vm7012, %v6990, %v6261
    %v7056 = vsel %vm7012, %v6991, %v6263
    %v7057 = vsel %vm7012, %v6992, %v6265
    %v7058 = vsel %vm7012, %v6993, %v6267
    %v7059 = vsel %vm7012, %v6994, %v6269
    %v7060 = vsel %vm7012, %v6995, %v6271
    %v7061 = vsel %vm7012, %v6996, %v6273
    %v7062 = vsel %vm7012, %v6997, %v6275
    %v7063 = vsel %vm7012, %v6998, %v6277
    %v7064 = vsel %vm7012, %v6999, %v6279
    %v7065 = vsel %vm7012, %v7000, %v6281
    %v7066 = vsel %vm7012, %v7001, %v6283
    %v7067 = vsel %vm7012, %v7002, %v6285
    %v7068 = vsel %vm7012, %v7003, %v6287
    %v7069 = vsel %vm7012, %v7004, %v6289
    %v7070 = vsel %vm7012, %v7005, %v6291
    %v7071 = vsel %vm7012, %v7006, %v6293
    %v7072 = vsel %vm7012, %v7007, %v6295
    %v7073 = vsel %vm7012, %v7008, %v6297
    %v7074 = vsel %vm7012, %v7009, %v6299
    %v7075 = vsel %vm7012, %v7010, %v6301
    %v7076 = vsel %vm7012, %v7011, %v6303
    %vm7077 = vcmask 523264
    %v7078 = vsel %vm7077, %v7013, %v6433
    %v7079 = vsel %vm7077, %v7014, %v6435
    %v7080 = vsel %vm7077, %v7015, %v6437
    %v7081 = vsel %vm7077, %v7016, %v6439
    %v7082 = vsel %vm7077, %v7017, %v6441
    %v7083 = vsel %vm7077, %v7018, %v6443
    %v7084 = vsel %vm7077, %v7019, %v6445
    %v7085 = vsel %vm7077, %v7020, %v6447
    %v7086 = vsel %vm7077, %v7021, %v6449
    %v7087 = vsel %vm7077, %v7022, %v6451
    %v7088 = vsel %vm7077, %v7023, %v6453
    %v7089 = vsel %vm7077, %v7024, %v6455
    %v7090 = vsel %vm7077, %v7025, %v6457
    %v7091 = vsel %vm7077, %v7026, %v6459
    %v7092 = vsel %vm7077, %v7027, %v6461
    %v7093 = vsel %vm7077, %v7028, %v6463
    %v7094 = vsel %vm7077, %v7029, %v6465
    %v7095 = vsel %vm7077, %v7030, %v6467
    %v7096 = vsel %vm7077, %v7031, %v6469
    %v7097 = vsel %vm7077, %v7032, %v6471
    %v7098 = vsel %vm7077, %v7033, %v6473
    %v7099 = vsel %vm7077, %v7034, %v6475
    %v7100 = vsel %vm7077, %v7035, %v6477
    %v7101 = vsel %vm7077, %v7036, %v6479
    %v7102 = vsel %vm7077, %v7037, %v6481
    %v7103 = vsel %vm7077, %v7038, %v6483
    %v7104 = vsel %vm7077, %v7039, %v6485
    %v7105 = vsel %vm7077, %v7040, %v6487
    %v7106 = vsel %vm7077, %v7041, %v6489
    %v7107 = vsel %vm7077, %v7042, %v6491
    %v7108 = vsel %vm7077, %v7043, %v6493
    %v7109 = vsel %vm7077, %v7044, %v6495
    %v7110 = vsel %vm7077, %v7045, %v6497
    %v7111 = vsel %vm7077, %v7046, %v6499
    %v7112 = vsel %vm7077, %v7047, %v6501
    %v7113 = vsel %vm7077, %v7048, %v6503
    %v7114 = vsel %vm7077, %v7049, %v6505
    %v7115 = vsel %vm7077, %v7050, %v6507
    %v7116 = vsel %vm7077, %v7051, %v6509
    %v7117 = vsel %vm7077, %v7052, %v6511
    %v7118 = vsel %vm7077, %v7053, %v6513
    %v7119 = vsel %vm7077, %v7054, %v6515
    %v7120 = vsel %vm7077, %v7055, %v6517
    %v7121 = vsel %vm7077, %v7056, %v6519
    %v7122 = vsel %vm7077, %v7057, %v6521
    %v7123 = vsel %vm7077, %v7058, %v6523
    %v7124 = vsel %vm7077, %v7059, %v6525
    %v7125 = vsel %vm7077, %v7060, %v6527
    %v7126 = vsel %vm7077, %v7061, %v6529
    %v7127 = vsel %vm7077, %v7062, %v6531
    %v7128 = vsel %vm7077, %v7063, %v6533
    %v7129 = vsel %vm7077, %v7064, %v6535
    %v7130 = vsel %vm7077, %v7065, %v6537
    %v7131 = vsel %vm7077, %v7066, %v6539
    %v7132 = vsel %vm7077, %v7067, %v6541
    %v7133 = vsel %vm7077, %v7068, %v6543
    %v7134 = vsel %vm7077, %v7069, %v6545
    %v7135 = vsel %vm7077, %v7070, %v6547
    %v7136 = vsel %vm7077, %v7071, %v6549
    %v7137 = vsel %vm7077, %v7072, %v6551
    %v7138 = vsel %vm7077, %v7073, %v6553
    %v7139 = vsel %vm7077, %v7074, %v6555
    %v7140 = vsel %vm7077, %v7075, %v6557
    %v7141 = vsel %vm7077, %v7076, %v6559
    %v7142 = vpack.c.bf16 %v7079, %v7078
    %v7143 = vpack.c.bf16 %v7081, %v7080
    %v7144 = vpack.c.bf16 %v7083, %v7082
    %v7145 = vpack.c.bf16 %v7085, %v7084
    %v7146 = vpack.c.bf16 %v7087, %v7086
    %v7147 = vpack.c.bf16 %v7089, %v7088
    %v7148 = vpack.c.bf16 %v7091, %v7090
    %v7149 = vpack.c.bf16 %v7093, %v7092
    %v7150 = vpack.c.bf16 %v7095, %v7094
    %v7151 = vpack.c.bf16 %v7097, %v7096
    %v7152 = vpack.c.bf16 %v7099, %v7098
    %v7153 = vpack.c.bf16 %v7101, %v7100
    %v7154 = vpack.c.bf16 %v7103, %v7102
    %v7155 = vpack.c.bf16 %v7105, %v7104
    %v7156 = vpack.c.bf16 %v7107, %v7106
    %v7157 = vpack.c.bf16 %v7109, %v7108
    %v7158 = vpack.c.bf16 %v7111, %v7110
    %v7159 = vpack.c.bf16 %v7113, %v7112
    %v7160 = vpack.c.bf16 %v7115, %v7114
    %v7161 = vpack.c.bf16 %v7117, %v7116
    %v7162 = vpack.c.bf16 %v7119, %v7118
    %v7163 = vpack.c.bf16 %v7121, %v7120
    %v7164 = vpack.c.bf16 %v7123, %v7122
    %v7165 = vpack.c.bf16 %v7125, %v7124
    %v7166 = vpack.c.bf16 %v7127, %v7126
    %v7167 = vpack.c.bf16 %v7129, %v7128
    %v7168 = vpack.c.bf16 %v7131, %v7130
    %v7169 = vpack.c.bf16 %v7133, %v7132
    %v7170 = vpack.c.bf16 %v7135, %v7134
    %v7171 = vpack.c.bf16 %v7137, %v7136
    %v7172 = vpack.c.bf16 %v7139, %v7138
    %v7173 = vpack.c.bf16 %v7141, %v7140
    %v7174 = vld [vmem:[%s4] sm:$0xf]
    %v7175 = vld [vmem:[%s4 + $0x4] sm:$0xf]
    %v7176 = vld [vmem:[%s4 + $0x8] sm:$0xf]
    %v7177 = vld [vmem:[%s4 + $0xc] sm:$0xf]
    %v7178 = vld [vmem:[%s4 + $0x10] sm:$0xf]
    %v7179 = vld [vmem:[%s4 + $0x14] sm:$0xf]
    %v7180 = vld [vmem:[%s4 + $0x18] sm:$0xf]
    %v7181 = vld [vmem:[%s4 + $0x1c] sm:$0xf]
    %v7182 = vld [vmem:[%s4 + $0x20] sm:$0xf]
    %v7183 = vld [vmem:[%s5] sm:$0x1]
    %v7185 = vlaneseq
    %v7186 = vshrl.u32 %v7185, 7
    %v7187 = vsub.s32 0, %v7186
    %v7188 = vrot.slane %v7183, %v7187
    %v7199 = vunpack.c.l.b16 %v7174
    %v7200 = vunpack.c.l.b16 %v7175
    %v7201 = vunpack.c.l.b16 %v7176
    %v7202 = vunpack.c.l.b16 %v7177
    %v7203 = vunpack.c.l.b16 %v7178
    %v7204 = vunpack.c.l.b16 %v7179
    %v7205 = vunpack.c.l.b16 %v7180
    %v7206 = vunpack.c.l.b16 %v7181
    %v7207 = vunpack.c.l.b16 %v7182
    %v7208 = vpack.c.b16 %v7200, %v7199
    %v7209 = vpack.c.b16 %v7202, %v7201
    %v7210 = vpack.c.b16 %v7204, %v7203
    %v7211 = vpack.c.b16 %v7206, %v7205
    %v7212 = vpack.c.b16 %v7207, %v7207
    %vm7217 = vcmask 588800
    %v7219 = vsel %vm7217, %v7142, 0
    %v7222 = vsel %vm7217, %v7143, 0
    %v7225 = vsel %vm7217, %v7144, 0
    %v7228 = vsel %vm7217, %v7145, 0
    %v7231 = vsel %vm7217, %v7146, 0
    %v7234 = vsel %vm7217, %v7147, 0
    %v7237 = vsel %vm7217, %v7148, 0
    %v7240 = vsel %vm7217, %v7149, 0
    %v7243 = vsel %vm7217, %v7150, 0
    %v7246 = vsel %vm7217, %v7151, 0
    %v7249 = vsel %vm7217, %v7152, 0
    %v7252 = vsel %vm7217, %v7153, 0
    %v7255 = vsel %vm7217, %v7154, 0
    %v7258 = vsel %vm7217, %v7155, 0
    %v7261 = vsel %vm7217, %v7156, 0
    %v7264 = vsel %vm7217, %v7157, 0
    %v7267 = vsel %vm7217, %v7158, 0
    %v7270 = vsel %vm7217, %v7159, 0
    %v7273 = vsel %vm7217, %v7160, 0
    %v7276 = vsel %vm7217, %v7161, 0
    %v7279 = vsel %vm7217, %v7162, 0
    %v7282 = vsel %vm7217, %v7163, 0
    %v7285 = vsel %vm7217, %v7164, 0
    %v7288 = vsel %vm7217, %v7165, 0
    %v7291 = vsel %vm7217, %v7166, 0
    %v7294 = vsel %vm7217, %v7167, 0
    %v7297 = vsel %vm7217, %v7168, 0
    %v7300 = vsel %vm7217, %v7169, 0
    %v7303 = vsel %vm7217, %v7170, 0
    %v7306 = vsel %vm7217, %v7171, 0
    %v7309 = vsel %vm7217, %v7172, 0
    %v7312 = vsel %vm7217, %v7173, 0
    %vm7314 = vcmask 1043456
    %v7316 = vsel %vm7314, %v7212, 0
    %7318 = vmatprep.subr.bf16.mxu0 0
    %7319 = vmatpush1.bf16.msra.mxu0 %v7208
    %7320 = vmatprep.subr.bf16.mxu0 0
    %7321 = vmatpush1.bf16.msra.mxu0 %v7209
    %7322 = vmatprep.subr.bf16.mxu0 0
    %7323 = vmatpush1.bf16.msra.mxu0 %v7210
    %7324 = vmatprep.subr.bf16.mxu0 0
    %7325 = vmatpush1.bf16.msra.mxu0 %v7211
    %7326 = vmatprep.subr.bf16.mxu0 0
    %7327 = vmatpush1.bf16.msra.mxu0 %v7316
    %7328 = vmatprep.subr.bf16.mxu0 0
    %7329 = vmatpush1.bf16.msra.mxu0 0
    %7330 = vmatprep.subr.bf16.mxu0 0
    %7331 = vmatpush1.bf16.msra.mxu0 0
    %7332 = vmatprep.subr.bf16.mxu0 0
    %7333 = vmatpush1.bf16.msra.mxu0 0
    %7334 = vmatprep.subr.bf16.mxu0 0
    %7335 = vmatpush1.bf16.msra.mxu0 0
    %7336 = vmatprep.subr.bf16.mxu0 0
    %7337 = vmatpush1.bf16.msra.mxu0 0
    %7338 = vmatprep.subr.bf16.mxu0 0
    %7339 = vmatpush1.bf16.msra.mxu0 0
    %7340 = vmatprep.subr.bf16.mxu0 0
    %7341 = vmatpush1.bf16.msra.mxu0 0
    %7342 = vmatprep.subr.bf16.mxu0 0
    %7343 = vmatpush1.bf16.msra.mxu0 0
    %7344 = vmatprep.subr.bf16.mxu0 0
    %7345 = vmatpush1.bf16.msra.mxu0 0
    %7346 = vmatprep.subr.bf16.mxu0 0
    %7347 = vmatpush1.bf16.msra.mxu0 0
    %7348 = vmatprep.subr.bf16.mxu0 0
    %7349 = vmatpush1.bf16.msra.mxu0 0
    %7350 = vmatprep.mubr.bf16.mxu0 0
    %7351 = vmatmul.mubr.bf16.gmra.mrb[0].mxu0 %v7219
    %v7352 = vpop.f32.mrb[0].mxu0
    %v7353 = vadd.f32 %v7188, %v7352
    %v7354 = vpop.f32.mrb[0].mxu0
    %v7355 = vpop.f32.mrb[0].mxu0
    %v7356 = vadd.f32 %v7188, %v7355
    %v7357 = vpop.f32.mrb[0].mxu0
    %7358 = vmatprep.mubr.bf16.mxu0 0
    %7359 = vmatmul.mubr.bf16.gmra.mrb[0].mxu0 %v7222
    %v7360 = vpop.f32.mrb[0].mxu0
    %v7361 = vadd.f32 %v7188, %v7360
    %v7362 = vpop.f32.mrb[0].mxu0
    %v7363 = vpop.f32.mrb[0].mxu0
    %v7364 = vadd.f32 %v7188, %v7363
    %v7365 = vpop.f32.mrb[0].mxu0
    %7366 = vmatprep.mubr.bf16.mxu0 0
    %7367 = vmatmul.mubr.bf16.gmra.mrb[0].mxu0 %v7225
    %v7368 = vpop.f32.mrb[0].mxu0
    %v7369 = vadd.f32 %v7188, %v7368
    %v7370 = vpop.f32.mrb[0].mxu0
    %v7371 = vpop.f32.mrb[0].mxu0
    %v7372 = vadd.f32 %v7188, %v7371
    %v7373 = vpop.f32.mrb[0].mxu0
    %7374 = vmatprep.mubr.bf16.mxu0 0
    %7375 = vmatmul.mubr.bf16.gmra.mrb[0].mxu0 %v7228
    %v7376 = vpop.f32.mrb[0].mxu0
    %v7377 = vadd.f32 %v7188, %v7376
    %v7378 = vpop.f32.mrb[0].mxu0
    %v7379 = vpop.f32.mrb[0].mxu0
    %v7380 = vadd.f32 %v7188, %v7379
    %v7381 = vpop.f32.mrb[0].mxu0
    %7382 = vmatprep.mubr.bf16.mxu0 0
    %7383 = vmatmul.mubr.bf16.gmra.mrb[0].mxu0 %v7231
    %v7384 = vpop.f32.mrb[0].mxu0
    %v7385 = vadd.f32 %v7188, %v7384
    %v7386 = vpop.f32.mrb[0].mxu0
    %v7387 = vpop.f32.mrb[0].mxu0
    %v7388 = vadd.f32 %v7188, %v7387
    %v7389 = vpop.f32.mrb[0].mxu0
    %7390 = vmatprep.mubr.bf16.mxu0 0
    %7391 = vmatmul.mubr.bf16.gmra.mrb[0].mxu0 %v7234
    %v7392 = vpop.f32.mrb[0].mxu0
    %v7393 = vadd.f32 %v7188, %v7392
    %v7394 = vpop.f32.mrb[0].mxu0
    %v7395 = vpop.f32.mrb[0].mxu0
    %v7396 = vadd.f32 %v7188, %v7395
    %v7397 = vpop.f32.mrb[0].mxu0
    %7398 = vmatprep.mubr.bf16.mxu0 0
    %7399 = vmatmul.mubr.bf16.gmra.mrb[0].mxu0 %v7237
    %v7400 = vpop.f32.mrb[0].mxu0
    %v7401 = vadd.f32 %v7188, %v7400
    %v7402 = vpop.f32.mrb[0].mxu0
    %v7403 = vpop.f32.mrb[0].mxu0
    %v7404 = vadd.f32 %v7188, %v7403
    %v7405 = vpop.f32.mrb[0].mxu0
    %7406 = vmatprep.mubr.bf16.mxu0 0
    %7407 = vmatmul.mubr.bf16.gmra.mrb[0].mxu0 %v7240
    %v7408 = vpop.f32.mrb[0].mxu0
    %v7409 = vadd.f32 %v7188, %v7408
    %v7410 = vpop.f32.mrb[0].mxu0
    %v7411 = vpop.f32.mrb[0].mxu0
    %v7412 = vadd.f32 %v7188, %v7411
    %v7413 = vpop.f32.mrb[0].mxu0
    %7414 = vmatprep.mubr.bf16.mxu0 0
    %7415 = vmatmul.mubr.bf16.gmra.mrb[0].mxu0 %v7243
    %v7416 = vpop.f32.mrb[0].mxu0
    %v7417 = vadd.f32 %v7188, %v7416
    %v7418 = vpop.f32.mrb[0].mxu0
    %v7419 = vpop.f32.mrb[0].mxu0
    %v7420 = vadd.f32 %v7188, %v7419
    %v7421 = vpop.f32.mrb[0].mxu0
    %7422 = vmatprep.mubr.bf16.mxu0 0
    %7423 = vmatmul.mubr.bf16.gmra.mrb[0].mxu0 %v7246
    %v7424 = vpop.f32.mrb[0].mxu0
    %v7425 = vadd.f32 %v7188, %v7424
    %v7426 = vpop.f32.mrb[0].mxu0
    %v7427 = vpop.f32.mrb[0].mxu0
    %v7428 = vadd.f32 %v7188, %v7427
    %v7429 = vpop.f32.mrb[0].mxu0
    %7430 = vmatprep.mubr.bf16.mxu0 0
    %7431 = vmatmul.mubr.bf16.gmra.mrb[0].mxu0 %v7249
    %v7432 = vpop.f32.mrb[0].mxu0
    %v7433 = vadd.f32 %v7188, %v7432
    %v7434 = vpop.f32.mrb[0].mxu0
    %v7435 = vpop.f32.mrb[0].mxu0
    %v7436 = vadd.f32 %v7188, %v7435
    %v7437 = vpop.f32.mrb[0].mxu0
    %7438 = vmatprep.mubr.bf16.mxu0 0
    %7439 = vmatmul.mubr.bf16.gmra.mrb[0].mxu0 %v7252
    %v7440 = vpop.f32.mrb[0].mxu0
    %v7441 = vadd.f32 %v7188, %v7440
    %v7442 = vpop.f32.mrb[0].mxu0
    %v7443 = vpop.f32.mrb[0].mxu0
    %v7444 = vadd.f32 %v7188, %v7443
    %v7445 = vpop.f32.mrb[0].mxu0
    %7446 = vmatprep.mubr.bf16.mxu0 0
    %7447 = vmatmul.mubr.bf16.gmra.mrb[0].mxu0 %v7255
    %v7448 = vpop.f32.mrb[0].mxu0
    %v7449 = vadd.f32 %v7188, %v7448
    %v7450 = vpop.f32.mrb[0].mxu0
    %v7451 = vpop.f32.mrb[0].mxu0
    %v7452 = vadd.f32 %v7188, %v7451
    %v7453 = vpop.f32.mrb[0].mxu0
    %7454 = vmatprep.mubr.bf16.mxu0 0
    %7455 = vmatmul.mubr.bf16.gmra.mrb[0].mxu0 %v7258
    %v7456 = vpop.f32.mrb[0].mxu0
    %v7457 = vadd.f32 %v7188, %v7456
    %v7458 = vpop.f32.mrb[0].mxu0
    %v7459 = vpop.f32.mrb[0].mxu0
    %v7460 = vadd.f32 %v7188, %v7459
    %v7461 = vpop.f32.mrb[0].mxu0
    %7462 = vmatprep.mubr.bf16.mxu0 0
    %7463 = vmatmul.mubr.bf16.gmra.mrb[0].mxu0 %v7261
    %v7464 = vpop.f32.mrb[0].mxu0
    %v7465 = vadd.f32 %v7188, %v7464
    %v7466 = vpop.f32.mrb[0].mxu0
    %v7467 = vpop.f32.mrb[0].mxu0
    %v7468 = vadd.f32 %v7188, %v7467
    %v7469 = vpop.f32.mrb[0].mxu0
    %7470 = vmatprep.mubr.bf16.mxu0 0
    %7471 = vmatmul.mubr.bf16.gmra.mrb[0].mxu0 %v7264
    %v7472 = vpop.f32.mrb[0].mxu0
    %v7473 = vadd.f32 %v7188, %v7472
    %v7474 = vpop.f32.mrb[0].mxu0
    %v7475 = vpop.f32.mrb[0].mxu0
    %v7476 = vadd.f32 %v7188, %v7475
    %v7477 = vpop.f32.mrb[0].mxu0
    %7478 = vmatprep.mubr.bf16.mxu0 0
    %7479 = vmatmul.mubr.bf16.gmra.mrb[0].mxu0 %v7267
    %v7480 = vpop.f32.mrb[0].mxu0
    %v7481 = vadd.f32 %v7188, %v7480
    %v7482 = vpop.f32.mrb[0].mxu0
    %v7483 = vpop.f32.mrb[0].mxu0
    %v7484 = vadd.f32 %v7188, %v7483
    %v7485 = vpop.f32.mrb[0].mxu0
    %7486 = vmatprep.mubr.bf16.mxu0 0
    %7487 = vmatmul.mubr.bf16.gmra.mrb[0].mxu0 %v7270
    %v7488 = vpop.f32.mrb[0].mxu0
    %v7489 = vadd.f32 %v7188, %v7488
    %v7490 = vpop.f32.mrb[0].mxu0
    %v7491 = vpop.f32.mrb[0].mxu0
    %v7492 = vadd.f32 %v7188, %v7491
    %v7493 = vpop.f32.mrb[0].mxu0
    %7494 = vmatprep.mubr.bf16.mxu0 0
    %7495 = vmatmul.mubr.bf16.gmra.mrb[0].mxu0 %v7273
    %v7496 = vpop.f32.mrb[0].mxu0
    %v7497 = vadd.f32 %v7188, %v7496
    %v7498 = vpop.f32.mrb[0].mxu0
    %v7499 = vpop.f32.mrb[0].mxu0
    %v7500 = vadd.f32 %v7188, %v7499
    %v7501 = vpop.f32.mrb[0].mxu0
    %7502 = vmatprep.mubr.bf16.mxu0 0
    %7503 = vmatmul.mubr.bf16.gmra.mrb[0].mxu0 %v7276
    %v7504 = vpop.f32.mrb[0].mxu0
    %v7505 = vadd.f32 %v7188, %v7504
    %v7506 = vpop.f32.mrb[0].mxu0
    %v7507 = vpop.f32.mrb[0].mxu0
    %v7508 = vadd.f32 %v7188, %v7507
    %v7509 = vpop.f32.mrb[0].mxu0
    %7510 = vmatprep.mubr.bf16.mxu0 0
    %7511 = vmatmul.mubr.bf16.gmra.mrb[0].mxu0 %v7279
    %v7512 = vpop.f32.mrb[0].mxu0
    %v7513 = vadd.f32 %v7188, %v7512
    %v7514 = vpop.f32.mrb[0].mxu0
    %v7515 = vpop.f32.mrb[0].mxu0
    %v7516 = vadd.f32 %v7188, %v7515
    %v7517 = vpop.f32.mrb[0].mxu0
    %7518 = vmatprep.mubr.bf16.mxu0 0
    %7519 = vmatmul.mubr.bf16.gmra.mrb[0].mxu0 %v7282
    %v7520 = vpop.f32.mrb[0].mxu0
    %v7521 = vadd.f32 %v7188, %v7520
    %v7522 = vpop.f32.mrb[0].mxu0
    %v7523 = vpop.f32.mrb[0].mxu0
    %v7524 = vadd.f32 %v7188, %v7523
    %v7525 = vpop.f32.mrb[0].mxu0
    %7526 = vmatprep.mubr.bf16.mxu0 0
    %7527 = vmatmul.mubr.bf16.gmra.mrb[0].mxu0 %v7285
    %v7528 = vpop.f32.mrb[0].mxu0
    %v7529 = vadd.f32 %v7188, %v7528
    %v7530 = vpop.f32.mrb[0].mxu0
    %v7531 = vpop.f32.mrb[0].mxu0
    %v7532 = vadd.f32 %v7188, %v7531
    %v7533 = vpop.f32.mrb[0].mxu0
    %7534 = vmatprep.mubr.bf16.mxu0 0
    %7535 = vmatmul.mubr.bf16.gmra.mrb[0].mxu0 %v7288
    %v7536 = vpop.f32.mrb[0].mxu0
    %v7537 = vadd.f32 %v7188, %v7536
    %v7538 = vpop.f32.mrb[0].mxu0
    %v7539 = vpop.f32.mrb[0].mxu0
    %v7540 = vadd.f32 %v7188, %v7539
    %v7541 = vpop.f32.mrb[0].mxu0
    %7542 = vmatprep.mubr.bf16.mxu0 0
    %7543 = vmatmul.mubr.bf16.gmra.mrb[0].mxu0 %v7291
    %v7544 = vpop.f32.mrb[0].mxu0
    %v7545 = vadd.f32 %v7188, %v7544
    %v7546 = vpop.f32.mrb[0].mxu0
    %v7547 = vpop.f32.mrb[0].mxu0
    %v7548 = vadd.f32 %v7188, %v7547
    %v7549 = vpop.f32.mrb[0].mxu0
    %7550 = vmatprep.mubr.bf16.mxu0 0
    %7551 = vmatmul.mubr.bf16.gmra.mrb[0].mxu0 %v7294
    %v7552 = vpop.f32.mrb[0].mxu0
    %v7553 = vadd.f32 %v7188, %v7552
    %v7554 = vpop.f32.mrb[0].mxu0
    %v7555 = vpop.f32.mrb[0].mxu0
    %v7556 = vadd.f32 %v7188, %v7555
    %v7557 = vpop.f32.mrb[0].mxu0
    %7558 = vmatprep.mubr.bf16.mxu0 0
    %7559 = vmatmul.mubr.bf16.gmra.mrb[0].mxu0 %v7297
    %v7560 = vpop.f32.mrb[0].mxu0
    %v7561 = vadd.f32 %v7188, %v7560
    %v7562 = vpop.f32.mrb[0].mxu0
    %v7563 = vpop.f32.mrb[0].mxu0
    %v7564 = vadd.f32 %v7188, %v7563
    %v7565 = vpop.f32.mrb[0].mxu0
    %7566 = vmatprep.mubr.bf16.mxu0 0
    %7567 = vmatmul.mubr.bf16.gmra.mrb[0].mxu0 %v7300
    %v7568 = vpop.f32.mrb[0].mxu0
    %v7569 = vadd.f32 %v7188, %v7568
    %v7570 = vpop.f32.mrb[0].mxu0
    %v7571 = vpop.f32.mrb[0].mxu0
    %v7572 = vadd.f32 %v7188, %v7571
    %v7573 = vpop.f32.mrb[0].mxu0
    %7574 = vmatprep.mubr.bf16.mxu0 0
    %7575 = vmatmul.mubr.bf16.gmra.mrb[0].mxu0 %v7303
    %v7576 = vpop.f32.mrb[0].mxu0
    %v7577 = vadd.f32 %v7188, %v7576
    %v7578 = vpop.f32.mrb[0].mxu0
    %v7579 = vpop.f32.mrb[0].mxu0
    %v7580 = vadd.f32 %v7188, %v7579
    %v7581 = vpop.f32.mrb[0].mxu0
    %7582 = vmatprep.mubr.bf16.mxu0 0
    %7583 = vmatmul.mubr.bf16.gmra.mrb[0].mxu0 %v7306
    %v7584 = vpop.f32.mrb[0].mxu0
    %v7585 = vadd.f32 %v7188, %v7584
    %v7586 = vpop.f32.mrb[0].mxu0
    %v7587 = vpop.f32.mrb[0].mxu0
    %v7588 = vadd.f32 %v7188, %v7587
    %v7589 = vpop.f32.mrb[0].mxu0
    %7590 = vmatprep.mubr.bf16.mxu0 0
    %7591 = vmatmul.mubr.bf16.gmra.mrb[0].mxu0 %v7309
    %v7592 = vpop.f32.mrb[0].mxu0
    %v7593 = vadd.f32 %v7188, %v7592
    %v7594 = vpop.f32.mrb[0].mxu0
    %v7595 = vpop.f32.mrb[0].mxu0
    %v7596 = vadd.f32 %v7188, %v7595
    %v7597 = vpop.f32.mrb[0].mxu0
    %7598 = vmatprep.mubr.bf16.mxu0 0
    %7599 = vmatmul.mubr.bf16.gmra.mrb[0].mxu0 %v7312
    %v7600 = vpop.f32.mrb[0].mxu0
    %v7601 = vadd.f32 %v7188, %v7600
    %v7602 = vpop.f32.mrb[0].mxu0
    %v7603 = vpop.f32.mrb[0].mxu0
    %v7604 = vadd.f32 %v7188, %v7603
    %v7605 = vpop.f32.mrb[0].mxu0
    %7606 = vdwg.mxu0
    %v7607 = vmax.f32 %v7353, 0.0
    %v7608 = vmax.f32 %v7356, 0.0
    %v7609 = vmax.f32 %v7361, 0.0
    %v7610 = vmax.f32 %v7364, 0.0
    %v7611 = vmax.f32 %v7369, 0.0
    %v7612 = vmax.f32 %v7372, 0.0
    %v7613 = vmax.f32 %v7377, 0.0
    %v7614 = vmax.f32 %v7380, 0.0
    %v7615 = vmax.f32 %v7385, 0.0
    %v7616 = vmax.f32 %v7388, 0.0
    %v7617 = vmax.f32 %v7393, 0.0
    %v7618 = vmax.f32 %v7396, 0.0
    %v7619 = vmax.f32 %v7401, 0.0
    %v7620 = vmax.f32 %v7404, 0.0
    %v7621 = vmax.f32 %v7409, 0.0
    %v7622 = vmax.f32 %v7412, 0.0
    %v7623 = vmax.f32 %v7417, 0.0
    %v7624 = vmax.f32 %v7420, 0.0
    %v7625 = vmax.f32 %v7425, 0.0
    %v7626 = vmax.f32 %v7428, 0.0
    %v7627 = vmax.f32 %v7433, 0.0
    %v7628 = vmax.f32 %v7436, 0.0
    %v7629 = vmax.f32 %v7441, 0.0
    %v7630 = vmax.f32 %v7444, 0.0
    %v7631 = vmax.f32 %v7449, 0.0
    %v7632 = vmax.f32 %v7452, 0.0
    %v7633 = vmax.f32 %v7457, 0.0
    %v7634 = vmax.f32 %v7460, 0.0
    %v7635 = vmax.f32 %v7465, 0.0
    %v7636 = vmax.f32 %v7468, 0.0
    %v7637 = vmax.f32 %v7473, 0.0
    %v7638 = vmax.f32 %v7476, 0.0
    %v7639 = vmax.f32 %v7481, 0.0
    %v7640 = vmax.f32 %v7484, 0.0
    %v7641 = vmax.f32 %v7489, 0.0
    %v7642 = vmax.f32 %v7492, 0.0
    %v7643 = vmax.f32 %v7497, 0.0
    %v7644 = vmax.f32 %v7500, 0.0
    %v7645 = vmax.f32 %v7505, 0.0
    %v7646 = vmax.f32 %v7508, 0.0
    %v7647 = vmax.f32 %v7513, 0.0
    %v7648 = vmax.f32 %v7516, 0.0
    %v7649 = vmax.f32 %v7521, 0.0
    %v7650 = vmax.f32 %v7524, 0.0
    %v7651 = vmax.f32 %v7529, 0.0
    %v7652 = vmax.f32 %v7532, 0.0
    %v7653 = vmax.f32 %v7537, 0.0
    %v7654 = vmax.f32 %v7540, 0.0
    %v7655 = vmax.f32 %v7545, 0.0
    %v7656 = vmax.f32 %v7548, 0.0
    %v7657 = vmax.f32 %v7553, 0.0
    %v7658 = vmax.f32 %v7556, 0.0
    %v7659 = vmax.f32 %v7561, 0.0
    %v7660 = vmax.f32 %v7564, 0.0
    %v7661 = vmax.f32 %v7569, 0.0
    %v7662 = vmax.f32 %v7572, 0.0
    %v7663 = vmax.f32 %v7577, 0.0
    %v7664 = vmax.f32 %v7580, 0.0
    %v7665 = vmax.f32 %v7585, 0.0
    %v7666 = vmax.f32 %v7588, 0.0
    %v7667 = vmax.f32 %v7593, 0.0
    %v7668 = vmax.f32 %v7596, 0.0
    %v7669 = vmax.f32 %v7601, 0.0
    %v7670 = vmax.f32 %v7604, 0.0
    %7671 = vst.msk [vmem:[%s215 + $0x1] sm:$0xff] %vm41, %v7607
    %7672 = vst.msk [vmem:[%s215 + $0x9] sm:$0xff] %vm41, %v7608
    %7673 = vst.msk [vmem:[%s215 + $0x19] sm:$0xff] %vm41, %v7609
    %7674 = vst.msk [vmem:[%s215 + $0x21] sm:$0xff] %vm41, %v7610
    %7675 = vst.msk [vmem:[%s215 + $0x31] sm:$0xff] %vm41, %v7611
    %7676 = vst.msk [vmem:[%s215 + $0x39] sm:$0xff] %vm41, %v7612
    %7677 = vst.msk [vmem:[%s215 + $0x49] sm:$0xff] %vm41, %v7613
    %7678 = vst.msk [vmem:[%s215 + $0x51] sm:$0xff] %vm41, %v7614
    %7679 = vst.msk [vmem:[%s215 + $0x61] sm:$0xff] %vm41, %v7615
    %7680 = vst.msk [vmem:[%s215 + $0x69] sm:$0xff] %vm41, %v7616
    %7681 = vst.msk [vmem:[%s215 + $0x79] sm:$0xff] %vm41, %v7617
    %7682 = vst.msk [vmem:[%s215 + $0x81] sm:$0xff] %vm41, %v7618
    %7683 = vst.msk [vmem:[%s215 + $0x91] sm:$0xff] %vm41, %v7619
    %7684 = vst.msk [vmem:[%s215 + $0x99] sm:$0xff] %vm41, %v7620
    %7685 = vst.msk [vmem:[%s215 + $0xa9] sm:$0xff] %vm41, %v7621
    %7686 = vst.msk [vmem:[%s215 + $0xb1] sm:$0xff] %vm41, %v7622
    %7687 = vst.msk [vmem:[%s215 + $0xc1] sm:$0xff] %vm41, %v7623
    %7688 = vst.msk [vmem:[%s215 + $0xc9] sm:$0xff] %vm41, %v7624
    %7689 = vst.msk [vmem:[%s215 + $0xd9] sm:$0xff] %vm41, %v7625
    %7690 = vst.msk [vmem:[%s215 + $0xe1] sm:$0xff] %vm41, %v7626
    %7691 = vst.msk [vmem:[%s215 + $0xf1] sm:$0xff] %vm41, %v7627
    %7692 = vst.msk [vmem:[%s215 + $0xf9] sm:$0xff] %vm41, %v7628
    %7693 = vst.msk [vmem:[%s215 + $0x109] sm:$0xff] %vm41, %v7629
    %7694 = vst.msk [vmem:[%s215 + $0x111] sm:$0xff] %vm41, %v7630
    %7695 = vst.msk [vmem:[%s215 + $0x121] sm:$0xff] %vm41, %v7631
    %7696 = vst.msk [vmem:[%s215 + $0x129] sm:$0xff] %vm41, %v7632
    %7697 = vst.msk [vmem:[%s215 + $0x139] sm:$0xff] %vm41, %v7633
    %7698 = vst.msk [vmem:[%s215 + $0x141] sm:$0xff] %vm41, %v7634
    %7699 = vst.msk [vmem:[%s215 + $0x151] sm:$0xff] %vm41, %v7635
    %7700 = vst.msk [vmem:[%s215 + $0x159] sm:$0xff] %vm41, %v7636
    %7701 = vst.msk [vmem:[%s215 + $0x169] sm:$0xff] %vm41, %v7637
    %7702 = vst.msk [vmem:[%s215 + $0x171] sm:$0xff] %vm41, %v7638
    %7703 = vst.msk [vmem:[%s215 + $0x1b1] sm:$0xff] %vm41, %v7639
    %7704 = vst.msk [vmem:[%s215 + $0x1b9] sm:$0xff] %vm41, %v7640
    %7705 = vst.msk [vmem:[%s215 + $0x1c9] sm:$0xff] %vm41, %v7641
    %7706 = vst.msk [vmem:[%s215 + $0x1d1] sm:$0xff] %vm41, %v7642
    %7707 = vst.msk [vmem:[%s215 + $0x1e1] sm:$0xff] %vm41, %v7643
    %7708 = vst.msk [vmem:[%s215 + $0x1e9] sm:$0xff] %vm41, %v7644
    %7709 = vst.msk [vmem:[%s215 + $0x1f9] sm:$0xff] %vm41, %v7645
    %7710 = vst.msk [vmem:[%s215 + $0x201] sm:$0xff] %vm41, %v7646
    %7711 = vst.msk [vmem:[%s215 + $0x211] sm:$0xff] %vm41, %v7647
    %7712 = vst.msk [vmem:[%s215 + $0x219] sm:$0xff] %vm41, %v7648
    %7713 = vst.msk [vmem:[%s215 + $0x229] sm:$0xff] %vm41, %v7649
    %7714 = vst.msk [vmem:[%s215 + $0x231] sm:$0xff] %vm41, %v7650
    %7715 = vst.msk [vmem:[%s215 + $0x241] sm:$0xff] %vm41, %v7651
    %7716 = vst.msk [vmem:[%s215 + $0x249] sm:$0xff] %vm41, %v7652
    %7717 = vst.msk [vmem:[%s215 + $0x259] sm:$0xff] %vm41, %v7653
    %7718 = vst.msk [vmem:[%s215 + $0x261] sm:$0xff] %vm41, %v7654
    %7719 = vst.msk [vmem:[%s215 + $0x271] sm:$0xff] %vm41, %v7655
    %7720 = vst.msk [vmem:[%s215 + $0x279] sm:$0xff] %vm41, %v7656
    %7721 = vst.msk [vmem:[%s215 + $0x289] sm:$0xff] %vm41, %v7657
    %7722 = vst.msk [vmem:[%s215 + $0x291] sm:$0xff] %vm41, %v7658
    %7723 = vst.msk [vmem:[%s215 + $0x2a1] sm:$0xff] %vm41, %v7659
    %7724 = vst.msk [vmem:[%s215 + $0x2a9] sm:$0xff] %vm41, %v7660
    %7725 = vst.msk [vmem:[%s215 + $0x2b9] sm:$0xff] %vm41, %v7661
    %7726 = vst.msk [vmem:[%s215 + $0x2c1] sm:$0xff] %vm41, %v7662
    %7727 = vst.msk [vmem:[%s215 + $0x2d1] sm:$0xff] %vm41, %v7663
    %7728 = vst.msk [vmem:[%s215 + $0x2d9] sm:$0xff] %vm41, %v7664
    %7729 = vst.msk [vmem:[%s215 + $0x2e9] sm:$0xff] %vm41, %v7665
    %7730 = vst.msk [vmem:[%s215 + $0x2f1] sm:$0xff] %vm41, %v7666
    %7731 = vst.msk [vmem:[%s215 + $0x301] sm:$0xff] %vm41, %v7667
    %7732 = vst.msk [vmem:[%s215 + $0x309] sm:$0xff] %vm41, %v7668
    %7733 = vst.msk [vmem:[%s215 + $0x319] sm:$0xff] %vm41, %v7669
    %7734 = vst.msk [vmem:[%s215 + $0x321] sm:$0xff] %vm41, %v7670
    %v7735 = vld [vmem:[#allocation2] sm:$0xff]
    %v7736 = vld [vmem:[#allocation2 + $0x8] sm:$0xff]
    %v7737 = vld [vmem:[#allocation2 + $0x18] sm:$0xff]
    %v7738 = vld [vmem:[#allocation2 + $0x20] sm:$0xff]
    %v7739 = vld [vmem:[#allocation2 + $0x30] sm:$0xff]
    %v7740 = vld [vmem:[#allocation2 + $0x38] sm:$0xff]
    %v7741 = vld [vmem:[#allocation2 + $0x48] sm:$0xff]
    %v7742 = vld [vmem:[#allocation2 + $0x50] sm:$0xff]
    %v7743 = vld [vmem:[#allocation2 + $0x60] sm:$0xff]
    %v7744 = vld [vmem:[#allocation2 + $0x68] sm:$0xff]
    %v7745 = vld [vmem:[#allocation2 + $0x78] sm:$0xff]
    %v7746 = vld [vmem:[#allocation2 + $0x80] sm:$0xff]
    %v7747 = vld [vmem:[#allocation2 + $0x90] sm:$0xff]
    %v7748 = vld [vmem:[#allocation2 + $0x98] sm:$0xff]
    %v7749 = vld [vmem:[#allocation2 + $0xa8] sm:$0xff]
    %v7750 = vld [vmem:[#allocation2 + $0xb0] sm:$0xff]
    %v7751 = vld [vmem:[#allocation2 + $0xc0] sm:$0xff]
    %v7752 = vld [vmem:[#allocation2 + $0xc8] sm:$0xff]
    %v7753 = vld [vmem:[#allocation2 + $0xd8] sm:$0xff]
    %v7754 = vld [vmem:[#allocation2 + $0xe0] sm:$0xff]
    %v7755 = vld [vmem:[#allocation2 + $0xf0] sm:$0xff]
    %v7756 = vld [vmem:[#allocation2 + $0xf8] sm:$0xff]
    %v7757 = vld [vmem:[#allocation2 + $0x108] sm:$0xff]
    %v7758 = vld [vmem:[#allocation2 + $0x110] sm:$0xff]
    %v7759 = vld [vmem:[#allocation2 + $0x120] sm:$0xff]
    %v7760 = vld [vmem:[#allocation2 + $0x128] sm:$0xff]
    %v7761 = vld [vmem:[#allocation2 + $0x138] sm:$0xff]
    %v7762 = vld [vmem:[#allocation2 + $0x140] sm:$0xff]
    %v7763 = vld [vmem:[#allocation2 + $0x150] sm:$0xff]
    %v7764 = vld [vmem:[#allocation2 + $0x158] sm:$0xff]
    %v7765 = vld [vmem:[#allocation2 + $0x168] sm:$0xff]
    %v7766 = vld [vmem:[#allocation2 + $0x170] sm:$0xff]
    %v7767 = vld [vmem:[#allocation2 + $0x1b0] sm:$0xff]
    %v7768 = vld [vmem:[#allocation2 + $0x1b8] sm:$0xff]
    %v7769 = vld [vmem:[#allocation2 + $0x1c8] sm:$0xff]
    %v7770 = vld [vmem:[#allocation2 + $0x1d0] sm:$0xff]
    %v7771 = vld [vmem:[#allocation2 + $0x1e0] sm:$0xff]
    %v7772 = vld [vmem:[#allocation2 + $0x1e8] sm:$0xff]
    %v7773 = vld [vmem:[#allocation2 + $0x1f8] sm:$0xff]
    %v7774 = vld [vmem:[#allocation2 + $0x200] sm:$0xff]
    %v7775 = vld [vmem:[#allocation2 + $0x210] sm:$0xff]
    %v7776 = vld [vmem:[#allocation2 + $0x218] sm:$0xff]
    %v7777 = vld [vmem:[#allocation2 + $0x228] sm:$0xff]
    %v7778 = vld [vmem:[#allocation2 + $0x230] sm:$0xff]
    %v7779 = vld [vmem:[#allocation2 + $0x240] sm:$0xff]
    %v7780 = vld [vmem:[#allocation2 + $0x248] sm:$0xff]
    %v7781 = vld [vmem:[#allocation2 + $0x258] sm:$0xff]
    %v7782 = vld [vmem:[#allocation2 + $0x260] sm:$0xff]
    %v7783 = vld [vmem:[#allocation2 + $0x270] sm:$0xff]
    %v7784 = vld [vmem:[#allocation2 + $0x278] sm:$0xff]
    %v7785 = vld [vmem:[#allocation2 + $0x288] sm:$0xff]
    %v7786 = vld [vmem:[#allocation2 + $0x290] sm:$0xff]
    %v7787 = vld [vmem:[#allocation2 + $0x2a0] sm:$0xff]
    %v7788 = vld [vmem:[#allocation2 + $0x2a8] sm:$0xff]
    %v7789 = vld [vmem:[#allocation2 + $0x2b8] sm:$0xff]
    %v7790 = vld [vmem:[#allocation2 + $0x2c0] sm:$0xff]
    %v7791 = vld [vmem:[#allocation2 + $0x2d0] sm:$0xff]
    %v7792 = vld [vmem:[#allocation2 + $0x2d8] sm:$0xff]
    %v7793 = vld [vmem:[#allocation2 + $0x2e8] sm:$0xff]
    %v7794 = vld [vmem:[#allocation2 + $0x2f0] sm:$0xff]
    %v7795 = vld [vmem:[#allocation2 + $0x300] sm:$0xff]
    %v7796 = vld [vmem:[#allocation2 + $0x308] sm:$0xff]
    %v7797 = vld [vmem:[#allocation2 + $0x318] sm:$0xff]
    %v7798 = vld [vmem:[#allocation2 + $0x320] sm:$0xff]
    %v7799 = vld [vmem:[#allocation2 + $0x1] sm:$0xff]
    %v7800 = vld [vmem:[#allocation2 + $0x9] sm:$0xff]
    %v7801 = vld [vmem:[#allocation2 + $0x19] sm:$0xff]
    %v7802 = vld [vmem:[#allocation2 + $0x21] sm:$0xff]
    %v7803 = vld [vmem:[#allocation2 + $0x31] sm:$0xff]
    %v7804 = vld [vmem:[#allocation2 + $0x39] sm:$0xff]
    %v7805 = vld [vmem:[#allocation2 + $0x49] sm:$0xff]
    %v7806 = vld [vmem:[#allocation2 + $0x51] sm:$0xff]
    %v7807 = vld [vmem:[#allocation2 + $0x61] sm:$0xff]
    %v7808 = vld [vmem:[#allocation2 + $0x69] sm:$0xff]
    %v7809 = vld [vmem:[#allocation2 + $0x79] sm:$0xff]
    %v7810 = vld [vmem:[#allocation2 + $0x81] sm:$0xff]
    %v7811 = vld [vmem:[#allocation2 + $0x91] sm:$0xff]
    %v7812 = vld [vmem:[#allocation2 + $0x99] sm:$0xff]
    %v7813 = vld [vmem:[#allocation2 + $0xa9] sm:$0xff]
    %v7814 = vld [vmem:[#allocation2 + $0xb1] sm:$0xff]
    %v7815 = vld [vmem:[#allocation2 + $0xc1] sm:$0xff]
    %v7816 = vld [vmem:[#allocation2 + $0xc9] sm:$0xff]
    %v7817 = vld [vmem:[#allocation2 + $0xd9] sm:$0xff]
    %v7818 = vld [vmem:[#allocation2 + $0xe1] sm:$0xff]
    %v7819 = vld [vmem:[#allocation2 + $0xf1] sm:$0xff]
    %v7820 = vld [vmem:[#allocation2 + $0xf9] sm:$0xff]
    %v7821 = vld [vmem:[#allocation2 + $0x109] sm:$0xff]
    %v7822 = vld [vmem:[#allocation2 + $0x111] sm:$0xff]
    %v7823 = vld [vmem:[#allocation2 + $0x121] sm:$0xff]
    %v7824 = vld [vmem:[#allocation2 + $0x129] sm:$0xff]
    %v7825 = vld [vmem:[#allocation2 + $0x139] sm:$0xff]
    %v7826 = vld [vmem:[#allocation2 + $0x141] sm:$0xff]
    %v7827 = vld [vmem:[#allocation2 + $0x151] sm:$0xff]
    %v7828 = vld [vmem:[#allocation2 + $0x159] sm:$0xff]
    %v7829 = vld [vmem:[#allocation2 + $0x169] sm:$0xff]
    %v7830 = vld [vmem:[#allocation2 + $0x171] sm:$0xff]
    %v7831 = vld [vmem:[#allocation2 + $0x1b1] sm:$0xff]
    %v7832 = vld [vmem:[#allocation2 + $0x1b9] sm:$0xff]
    %v7833 = vld [vmem:[#allocation2 + $0x1c9] sm:$0xff]
    %v7834 = vld [vmem:[#allocation2 + $0x1d1] sm:$0xff]
    %v7835 = vld [vmem:[#allocation2 + $0x1e1] sm:$0xff]
    %v7836 = vld [vmem:[#allocation2 + $0x1e9] sm:$0xff]
    %v7837 = vld [vmem:[#allocation2 + $0x1f9] sm:$0xff]
    %v7838 = vld [vmem:[#allocation2 + $0x201] sm:$0xff]
    %v7839 = vld [vmem:[#allocation2 + $0x211] sm:$0xff]
    %v7840 = vld [vmem:[#allocation2 + $0x219] sm:$0xff]
    %v7841 = vld [vmem:[#allocation2 + $0x229] sm:$0xff]
    %v7842 = vld [vmem:[#allocation2 + $0x231] sm:$0xff]
    %v7843 = vld [vmem:[#allocation2 + $0x241] sm:$0xff]
    %v7844 = vld [vmem:[#allocation2 + $0x249] sm:$0xff]
    %v7845 = vld [vmem:[#allocation2 + $0x259] sm:$0xff]
    %v7846 = vld [vmem:[#allocation2 + $0x261] sm:$0xff]
    %v7847 = vld [vmem:[#allocation2 + $0x271] sm:$0xff]
    %v7848 = vld [vmem:[#allocation2 + $0x279] sm:$0xff]
    %v7849 = vld [vmem:[#allocation2 + $0x289] sm:$0xff]
    %v7850 = vld [vmem:[#allocation2 + $0x291] sm:$0xff]
    %v7851 = vld [vmem:[#allocation2 + $0x2a1] sm:$0xff]
    %v7852 = vld [vmem:[#allocation2 + $0x2a9] sm:$0xff]
    %v7853 = vld [vmem:[#allocation2 + $0x2b9] sm:$0xff]
    %v7854 = vld [vmem:[#allocation2 + $0x2c1] sm:$0xff]
    %v7855 = vld [vmem:[#allocation2 + $0x2d1] sm:$0xff]
    %v7856 = vld [vmem:[#allocation2 + $0x2d9] sm:$0xff]
    %v7857 = vld [vmem:[#allocation2 + $0x2e9] sm:$0xff]
    %v7858 = vld [vmem:[#allocation2 + $0x2f1] sm:$0xff]
    %v7859 = vld [vmem:[#allocation2 + $0x301] sm:$0xff]
    %v7860 = vld [vmem:[#allocation2 + $0x309] sm:$0xff]
    %v7861 = vld [vmem:[#allocation2 + $0x319] sm:$0xff]
    %v7862 = vld [vmem:[#allocation2 + $0x321] sm:$0xff]
    %v7863 = vld [vmem:[#allocation2 + $0x2] sm:$0xff]
    %v7864 = vld [vmem:[#allocation2 + $0xa] sm:$0xff]
    %v7865 = vld [vmem:[#allocation2 + $0x1a] sm:$0xff]
    %v7866 = vld [vmem:[#allocation2 + $0x22] sm:$0xff]
    %v7867 = vld [vmem:[#allocation2 + $0x32] sm:$0xff]
    %v7868 = vld [vmem:[#allocation2 + $0x3a] sm:$0xff]
    %v7869 = vld [vmem:[#allocation2 + $0x4a] sm:$0xff]
    %v7870 = vld [vmem:[#allocation2 + $0x52] sm:$0xff]
    %v7871 = vld [vmem:[#allocation2 + $0x62] sm:$0xff]
    %v7872 = vld [vmem:[#allocation2 + $0x6a] sm:$0xff]
    %v7873 = vld [vmem:[#allocation2 + $0x7a] sm:$0xff]
    %v7874 = vld [vmem:[#allocation2 + $0x82] sm:$0xff]
    %v7875 = vld [vmem:[#allocation2 + $0x92] sm:$0xff]
    %v7876 = vld [vmem:[#allocation2 + $0x9a] sm:$0xff]
    %v7877 = vld [vmem:[#allocation2 + $0xaa] sm:$0xff]
    %v7878 = vld [vmem:[#allocation2 + $0xb2] sm:$0xff]
    %v7879 = vld [vmem:[#allocation2 + $0xc2] sm:$0xff]
    %v7880 = vld [vmem:[#allocation2 + $0xca] sm:$0xff]
    %v7881 = vld [vmem:[#allocation2 + $0xda] sm:$0xff]
    %v7882 = vld [vmem:[#allocation2 + $0xe2] sm:$0xff]
    %v7883 = vld [vmem:[#allocation2 + $0xf2] sm:$0xff]
    %v7884 = vld [vmem:[#allocation2 + $0xfa] sm:$0xff]
    %v7885 = vld [vmem:[#allocation2 + $0x10a] sm:$0xff]
    %v7886 = vld [vmem:[#allocation2 + $0x112] sm:$0xff]
    %v7887 = vld [vmem:[#allocation2 + $0x122] sm:$0xff]
    %v7888 = vld [vmem:[#allocation2 + $0x12a] sm:$0xff]
    %v7889 = vld [vmem:[#allocation2 + $0x13a] sm:$0xff]
    %v7890 = vld [vmem:[#allocation2 + $0x142] sm:$0xff]
    %v7891 = vld [vmem:[#allocation2 + $0x152] sm:$0xff]
    %v7892 = vld [vmem:[#allocation2 + $0x15a] sm:$0xff]
    %v7893 = vld [vmem:[#allocation2 + $0x16a] sm:$0xff]
    %v7894 = vld [vmem:[#allocation2 + $0x172] sm:$0xff]
    %v7895 = vld [vmem:[#allocation2 + $0x1b2] sm:$0xff]
    %v7896 = vld [vmem:[#allocation2 + $0x1ba] sm:$0xff]
    %v7897 = vld [vmem:[#allocation2 + $0x1ca] sm:$0xff]
    %v7898 = vld [vmem:[#allocation2 + $0x1d2] sm:$0xff]
    %v7899 = vld [vmem:[#allocation2 + $0x1e2] sm:$0xff]
    %v7900 = vld [vmem:[#allocation2 + $0x1ea] sm:$0xff]
    %v7901 = vld [vmem:[#allocation2 + $0x1fa] sm:$0xff]
    %v7902 = vld [vmem:[#allocation2 + $0x202] sm:$0xff]
    %v7903 = vld [vmem:[#allocation2 + $0x212] sm:$0xff]
    %v7904 = vld [vmem:[#allocation2 + $0x21a] sm:$0xff]
    %v7905 = vld [vmem:[#allocation2 + $0x22a] sm:$0xff]
    %v7906 = vld [vmem:[#allocation2 + $0x232] sm:$0xff]
    %v7907 = vld [vmem:[#allocation2 + $0x242] sm:$0xff]
    %v7908 = vld [vmem:[#allocation2 + $0x24a] sm:$0xff]
    %v7909 = vld [vmem:[#allocation2 + $0x25a] sm:$0xff]
    %v7910 = vld [vmem:[#allocation2 + $0x262] sm:$0xff]
    %v7911 = vld [vmem:[#allocation2 + $0x272] sm:$0xff]
    %v7912 = vld [vmem:[#allocation2 + $0x27a] sm:$0xff]
    %v7913 = vld [vmem:[#allocation2 + $0x28a] sm:$0xff]
    %v7914 = vld [vmem:[#allocation2 + $0x292] sm:$0xff]
    %v7915 = vld [vmem:[#allocation2 + $0x2a2] sm:$0xff]
    %v7916 = vld [vmem:[#allocation2 + $0x2aa] sm:$0xff]
    %v7917 = vld [vmem:[#allocation2 + $0x2ba] sm:$0xff]
    %v7918 = vld [vmem:[#allocation2 + $0x2c2] sm:$0xff]
    %v7919 = vld [vmem:[#allocation2 + $0x2d2] sm:$0xff]
    %v7920 = vld [vmem:[#allocation2 + $0x2da] sm:$0xff]
    %v7921 = vld [vmem:[#allocation2 + $0x2ea] sm:$0xff]
    %v7922 = vld [vmem:[#allocation2 + $0x2f2] sm:$0xff]
    %v7923 = vld [vmem:[#allocation2 + $0x302] sm:$0xff]
    %v7924 = vld [vmem:[#allocation2 + $0x30a] sm:$0xff]
    %v7925 = vld [vmem:[#allocation2 + $0x31a] sm:$0xff]
    %v7926 = vld [vmem:[#allocation2 + $0x322] sm:$0xff]
    %v7927 = vld [vmem:[%s215] sm:$0xff]
    %v7928 = vld [vmem:[%s215 + $0x8] sm:$0xff]
    %v7929 = vld [vmem:[%s215 + $0x18] sm:$0xff]
    %v7930 = vld [vmem:[%s215 + $0x20] sm:$0xff]
    %v7931 = vld [vmem:[%s215 + $0x30] sm:$0xff]
    %v7932 = vld [vmem:[%s215 + $0x38] sm:$0xff]
    %v7933 = vld [vmem:[%s215 + $0x48] sm:$0xff]
    %v7934 = vld [vmem:[%s215 + $0x50] sm:$0xff]
    %v7935 = vld [vmem:[%s215 + $0x60] sm:$0xff]
    %v7936 = vld [vmem:[%s215 + $0x68] sm:$0xff]
    %v7937 = vld [vmem:[%s215 + $0x78] sm:$0xff]
    %v7938 = vld [vmem:[%s215 + $0x80] sm:$0xff]
    %v7939 = vld [vmem:[%s215 + $0x90] sm:$0xff]
    %v7940 = vld [vmem:[%s215 + $0x98] sm:$0xff]
    %v7941 = vld [vmem:[%s215 + $0xa8] sm:$0xff]
    %v7942 = vld [vmem:[%s215 + $0xb0] sm:$0xff]
    %v7943 = vld [vmem:[%s215 + $0xc0] sm:$0xff]
    %v7944 = vld [vmem:[%s215 + $0xc8] sm:$0xff]
    %v7945 = vld [vmem:[%s215 + $0xd8] sm:$0xff]
    %v7946 = vld [vmem:[%s215 + $0xe0] sm:$0xff]
    %v7947 = vld [vmem:[%s215 + $0xf0] sm:$0xff]
    %v7948 = vld [vmem:[%s215 + $0xf8] sm:$0xff]
    %v7949 = vld [vmem:[%s215 + $0x108] sm:$0xff]
    %v7950 = vld [vmem:[%s215 + $0x110] sm:$0xff]
    %v7951 = vld [vmem:[%s215 + $0x120] sm:$0xff]
    %v7952 = vld [vmem:[%s215 + $0x128] sm:$0xff]
    %v7953 = vld [vmem:[%s215 + $0x138] sm:$0xff]
    %v7954 = vld [vmem:[%s215 + $0x140] sm:$0xff]
    %v7955 = vld [vmem:[%s215 + $0x150] sm:$0xff]
    %v7956 = vld [vmem:[%s215 + $0x158] sm:$0xff]
    %v7957 = vld [vmem:[%s215 + $0x168] sm:$0xff]
    %v7958 = vld [vmem:[%s215 + $0x170] sm:$0xff]
    %v7959 = vld [vmem:[%s215 + $0x1b0] sm:$0xff]
    %v7960 = vld [vmem:[%s215 + $0x1b8] sm:$0xff]
    %v7961 = vld [vmem:[%s215 + $0x1c8] sm:$0xff]
    %v7962 = vld [vmem:[%s215 + $0x1d0] sm:$0xff]
    %v7963 = vld [vmem:[%s215 + $0x1e0] sm:$0xff]
    %v7964 = vld [vmem:[%s215 + $0x1e8] sm:$0xff]
    %v7965 = vld [vmem:[%s215 + $0x1f8] sm:$0xff]
    %v7966 = vld [vmem:[%s215 + $0x200] sm:$0xff]
    %v7967 = vld [vmem:[%s215 + $0x210] sm:$0xff]
    %v7968 = vld [vmem:[%s215 + $0x218] sm:$0xff]
    %v7969 = vld [vmem:[%s215 + $0x228] sm:$0xff]
    %v7970 = vld [vmem:[%s215 + $0x230] sm:$0xff]
    %v7971 = vld [vmem:[%s215 + $0x240] sm:$0xff]
    %v7972 = vld [vmem:[%s215 + $0x248] sm:$0xff]
    %v7973 = vld [vmem:[%s215 + $0x258] sm:$0xff]
    %v7974 = vld [vmem:[%s215 + $0x260] sm:$0xff]
    %v7975 = vld [vmem:[%s215 + $0x270] sm:$0xff]
    %v7976 = vld [vmem:[%s215 + $0x278] sm:$0xff]
    %v7977 = vld [vmem:[%s215 + $0x288] sm:$0xff]
    %v7978 = vld [vmem:[%s215 + $0x290] sm:$0xff]
    %v7979 = vld [vmem:[%s215 + $0x2a0] sm:$0xff]
    %v7980 = vld [vmem:[%s215 + $0x2a8] sm:$0xff]
    %v7981 = vld [vmem:[%s215 + $0x2b8] sm:$0xff]
    %v7982 = vld [vmem:[%s215 + $0x2c0] sm:$0xff]
    %v7983 = vld [vmem:[%s215 + $0x2d0] sm:$0xff]
    %v7984 = vld [vmem:[%s215 + $0x2d8] sm:$0xff]
    %v7985 = vld [vmem:[%s215 + $0x2e8] sm:$0xff]
    %v7986 = vld [vmem:[%s215 + $0x2f0] sm:$0xff]
    %v7987 = vld [vmem:[%s215 + $0x300] sm:$0xff]
    %v7988 = vld [vmem:[%s215 + $0x308] sm:$0xff]
    %v7989 = vld [vmem:[%s215 + $0x318] sm:$0xff]
    %v7990 = vld [vmem:[%s215 + $0x320] sm:$0xff]
    %v7991 = vld [vmem:[%s215 + $0x1] sm:$0xff]
    %v7992 = vld [vmem:[%s215 + $0x9] sm:$0xff]
    %v7993 = vld [vmem:[%s215 + $0x19] sm:$0xff]
    %v7994 = vld [vmem:[%s215 + $0x21] sm:$0xff]
    %v7995 = vld [vmem:[%s215 + $0x31] sm:$0xff]
    %v7996 = vld [vmem:[%s215 + $0x39] sm:$0xff]
    %v7997 = vld [vmem:[%s215 + $0x49] sm:$0xff]
    %v7998 = vld [vmem:[%s215 + $0x51] sm:$0xff]
    %v7999 = vld [vmem:[%s215 + $0x61] sm:$0xff]
    %v8000 = vld [vmem:[%s215 + $0x69] sm:$0xff]
    %v8001 = vld [vmem:[%s215 + $0x79] sm:$0xff]
    %v8002 = vld [vmem:[%s215 + $0x81] sm:$0xff]
    %v8003 = vld [vmem:[%s215 + $0x91] sm:$0xff]
    %v8004 = vld [vmem:[%s215 + $0x99] sm:$0xff]
    %v8005 = vld [vmem:[%s215 + $0xa9] sm:$0xff]
    %v8006 = vld [vmem:[%s215 + $0xb1] sm:$0xff]
    %v8007 = vld [vmem:[%s215 + $0xc1] sm:$0xff]
    %v8008 = vld [vmem:[%s215 + $0xc9] sm:$0xff]
    %v8009 = vld [vmem:[%s215 + $0xd9] sm:$0xff]
    %v8010 = vld [vmem:[%s215 + $0xe1] sm:$0xff]
    %v8011 = vld [vmem:[%s215 + $0xf1] sm:$0xff]
    %v8012 = vld [vmem:[%s215 + $0xf9] sm:$0xff]
    %v8013 = vld [vmem:[%s215 + $0x109] sm:$0xff]
    %v8014 = vld [vmem:[%s215 + $0x111] sm:$0xff]
    %v8015 = vld [vmem:[%s215 + $0x121] sm:$0xff]
    %v8016 = vld [vmem:[%s215 + $0x129] sm:$0xff]
    %v8017 = vld [vmem:[%s215 + $0x139] sm:$0xff]
    %v8018 = vld [vmem:[%s215 + $0x141] sm:$0xff]
    %v8019 = vld [vmem:[%s215 + $0x151] sm:$0xff]
    %v8020 = vld [vmem:[%s215 + $0x159] sm:$0xff]
    %v8021 = vld [vmem:[%s215 + $0x169] sm:$0xff]
    %v8022 = vld [vmem:[%s215 + $0x171] sm:$0xff]
    %v8023 = vld [vmem:[%s215 + $0x1b1] sm:$0xff]
    %v8024 = vld [vmem:[%s215 + $0x1b9] sm:$0xff]
    %v8025 = vld [vmem:[%s215 + $0x1c9] sm:$0xff]
    %v8026 = vld [vmem:[%s215 + $0x1d1] sm:$0xff]
    %v8027 = vld [vmem:[%s215 + $0x1e1] sm:$0xff]
    %v8028 = vld [vmem:[%s215 + $0x1e9] sm:$0xff]
    %v8029 = vld [vmem:[%s215 + $0x1f9] sm:$0xff]
    %v8030 = vld [vmem:[%s215 + $0x201] sm:$0xff]
    %v8031 = vld [vmem:[%s215 + $0x211] sm:$0xff]
    %v8032 = vld [vmem:[%s215 + $0x219] sm:$0xff]
    %v8033 = vld [vmem:[%s215 + $0x229] sm:$0xff]
    %v8034 = vld [vmem:[%s215 + $0x231] sm:$0xff]
    %v8035 = vld [vmem:[%s215 + $0x241] sm:$0xff]
    %v8036 = vld [vmem:[%s215 + $0x249] sm:$0xff]
    %v8037 = vld [vmem:[%s215 + $0x259] sm:$0xff]
    %v8038 = vld [vmem:[%s215 + $0x261] sm:$0xff]
    %v8039 = vld [vmem:[%s215 + $0x271] sm:$0xff]
    %v8040 = vld [vmem:[%s215 + $0x279] sm:$0xff]
    %v8041 = vld [vmem:[%s215 + $0x289] sm:$0xff]
    %v8042 = vld [vmem:[%s215 + $0x291] sm:$0xff]
    %v8043 = vld [vmem:[%s215 + $0x2a1] sm:$0xff]
    %v8044 = vld [vmem:[%s215 + $0x2a9] sm:$0xff]
    %v8045 = vld [vmem:[%s215 + $0x2b9] sm:$0xff]
    %v8046 = vld [vmem:[%s215 + $0x2c1] sm:$0xff]
    %v8047 = vld [vmem:[%s215 + $0x2d1] sm:$0xff]
    %v8048 = vld [vmem:[%s215 + $0x2d9] sm:$0xff]
    %v8049 = vld [vmem:[%s215 + $0x2e9] sm:$0xff]
    %v8050 = vld [vmem:[%s215 + $0x2f1] sm:$0xff]
    %v8051 = vld [vmem:[%s215 + $0x301] sm:$0xff]
    %v8052 = vld [vmem:[%s215 + $0x309] sm:$0xff]
    %v8053 = vld [vmem:[%s215 + $0x319] sm:$0xff]
    %v8054 = vld [vmem:[%s215 + $0x321] sm:$0xff]
    %v8055 = vld [vmem:[%s215 + $0x2] sm:$0xff]
    %v8056 = vld [vmem:[%s215 + $0xa] sm:$0xff]
    %v8057 = vld [vmem:[%s215 + $0x1a] sm:$0xff]
    %v8058 = vld [vmem:[%s215 + $0x22] sm:$0xff]
    %v8059 = vld [vmem:[%s215 + $0x32] sm:$0xff]
    %v8060 = vld [vmem:[%s215 + $0x3a] sm:$0xff]
    %v8061 = vld [vmem:[%s215 + $0x4a] sm:$0xff]
    %v8062 = vld [vmem:[%s215 + $0x52] sm:$0xff]
    %v8063 = vld [vmem:[%s215 + $0x62] sm:$0xff]
    %v8064 = vld [vmem:[%s215 + $0x6a] sm:$0xff]
    %v8065 = vld [vmem:[%s215 + $0x7a] sm:$0xff]
    %v8066 = vld [vmem:[%s215 + $0x82] sm:$0xff]
    %v8067 = vld [vmem:[%s215 + $0x92] sm:$0xff]
    %v8068 = vld [vmem:[%s215 + $0x9a] sm:$0xff]
    %v8069 = vld [vmem:[%s215 + $0xaa] sm:$0xff]
    %v8070 = vld [vmem:[%s215 + $0xb2] sm:$0xff]
    %v8071 = vld [vmem:[%s215 + $0xc2] sm:$0xff]
    %v8072 = vld [vmem:[%s215 + $0xca] sm:$0xff]
    %v8073 = vld [vmem:[%s215 + $0xda] sm:$0xff]
    %v8074 = vld [vmem:[%s215 + $0xe2] sm:$0xff]
    %v8075 = vld [vmem:[%s215 + $0xf2] sm:$0xff]
    %v8076 = vld [vmem:[%s215 + $0xfa] sm:$0xff]
    %v8077 = vld [vmem:[%s215 + $0x10a] sm:$0xff]
    %v8078 = vld [vmem:[%s215 + $0x112] sm:$0xff]
    %v8079 = vld [vmem:[%s215 + $0x122] sm:$0xff]
    %v8080 = vld [vmem:[%s215 + $0x12a] sm:$0xff]
    %v8081 = vld [vmem:[%s215 + $0x13a] sm:$0xff]
    %v8082 = vld [vmem:[%s215 + $0x142] sm:$0xff]
    %v8083 = vld [vmem:[%s215 + $0x152] sm:$0xff]
    %v8084 = vld [vmem:[%s215 + $0x15a] sm:$0xff]
    %v8085 = vld [vmem:[%s215 + $0x16a] sm:$0xff]
    %v8086 = vld [vmem:[%s215 + $0x172] sm:$0xff]
    %v8087 = vld [vmem:[%s215 + $0x1b2] sm:$0xff]
    %v8088 = vld [vmem:[%s215 + $0x1ba] sm:$0xff]
    %v8089 = vld [vmem:[%s215 + $0x1ca] sm:$0xff]
    %v8090 = vld [vmem:[%s215 + $0x1d2] sm:$0xff]
    %v8091 = vld [vmem:[%s215 + $0x1e2] sm:$0xff]
    %v8092 = vld [vmem:[%s215 + $0x1ea] sm:$0xff]
    %v8093 = vld [vmem:[%s215 + $0x1fa] sm:$0xff]
    %v8094 = vld [vmem:[%s215 + $0x202] sm:$0xff]
    %v8095 = vld [vmem:[%s215 + $0x212] sm:$0xff]
    %v8096 = vld [vmem:[%s215 + $0x21a] sm:$0xff]
    %v8097 = vld [vmem:[%s215 + $0x22a] sm:$0xff]
    %v8098 = vld [vmem:[%s215 + $0x232] sm:$0xff]
    %v8099 = vld [vmem:[%s215 + $0x242] sm:$0xff]
    %v8100 = vld [vmem:[%s215 + $0x24a] sm:$0xff]
    %v8101 = vld [vmem:[%s215 + $0x25a] sm:$0xff]
    %v8102 = vld [vmem:[%s215 + $0x262] sm:$0xff]
    %v8103 = vld [vmem:[%s215 + $0x272] sm:$0xff]
    %v8104 = vld [vmem:[%s215 + $0x27a] sm:$0xff]
    %v8105 = vld [vmem:[%s215 + $0x28a] sm:$0xff]
    %v8106 = vld [vmem:[%s215 + $0x292] sm:$0xff]
    %v8107 = vld [vmem:[%s215 + $0x2a2] sm:$0xff]
    %v8108 = vld [vmem:[%s215 + $0x2aa] sm:$0xff]
    %v8109 = vld [vmem:[%s215 + $0x2ba] sm:$0xff]
    %v8110 = vld [vmem:[%s215 + $0x2c2] sm:$0xff]
    %v8111 = vld [vmem:[%s215 + $0x2d2] sm:$0xff]
    %v8112 = vld [vmem:[%s215 + $0x2da] sm:$0xff]
    %v8113 = vld [vmem:[%s215 + $0x2ea] sm:$0xff]
    %v8114 = vld [vmem:[%s215 + $0x2f2] sm:$0xff]
    %v8115 = vld [vmem:[%s215 + $0x302] sm:$0xff]
    %v8116 = vld [vmem:[%s215 + $0x30a] sm:$0xff]
    %v8117 = vld [vmem:[%s215 + $0x31a] sm:$0xff]
    %v8118 = vld [vmem:[%s215 + $0x322] sm:$0xff]
    %v8119 = vld [vmem:[%s665] sm:$0xff]
    %v8120 = vld [vmem:[%s665 + $0x8] sm:$0xff]
    %v8121 = vld [vmem:[%s665 + $0x18] sm:$0xff]
    %v8122 = vld [vmem:[%s665 + $0x20] sm:$0xff]
    %v8123 = vld [vmem:[%s665 + $0x30] sm:$0xff]
    %v8124 = vld [vmem:[%s665 + $0x38] sm:$0xff]
    %v8125 = vld [vmem:[%s665 + $0x48] sm:$0xff]
    %v8126 = vld [vmem:[%s665 + $0x50] sm:$0xff]
    %v8127 = vld [vmem:[%s665 + $0x60] sm:$0xff]
    %v8128 = vld [vmem:[%s665 + $0x68] sm:$0xff]
    %v8129 = vld [vmem:[%s665 + $0x78] sm:$0xff]
    %v8130 = vld [vmem:[%s665 + $0x80] sm:$0xff]
    %v8131 = vld [vmem:[%s665 + $0x90] sm:$0xff]
    %v8132 = vld [vmem:[%s665 + $0x98] sm:$0xff]
    %v8133 = vld [vmem:[%s665 + $0xa8] sm:$0xff]
    %v8134 = vld [vmem:[%s665 + $0xb0] sm:$0xff]
    %v8135 = vld [vmem:[%s665 + $0xc0] sm:$0xff]
    %v8136 = vld [vmem:[%s665 + $0xc8] sm:$0xff]
    %v8137 = vld [vmem:[%s665 + $0xd8] sm:$0xff]
    %v8138 = vld [vmem:[%s665 + $0xe0] sm:$0xff]
    %v8139 = vld [vmem:[%s665 + $0xf0] sm:$0xff]
    %v8140 = vld [vmem:[%s665 + $0xf8] sm:$0xff]
    %v8141 = vld [vmem:[%s665 + $0x108] sm:$0xff]
    %v8142 = vld [vmem:[%s665 + $0x110] sm:$0xff]
    %v8143 = vld [vmem:[%s665 + $0x120] sm:$0xff]
    %v8144 = vld [vmem:[%s665 + $0x128] sm:$0xff]
    %v8145 = vld [vmem:[%s665 + $0x138] sm:$0xff]
    %v8146 = vld [vmem:[%s665 + $0x140] sm:$0xff]
    %v8147 = vld [vmem:[%s665 + $0x150] sm:$0xff]
    %v8148 = vld [vmem:[%s665 + $0x158] sm:$0xff]
    %v8149 = vld [vmem:[%s665 + $0x168] sm:$0xff]
    %v8150 = vld [vmem:[%s665 + $0x170] sm:$0xff]
    %v8151 = vld [vmem:[%s665 + $0x1b0] sm:$0xff]
    %v8152 = vld [vmem:[%s665 + $0x1b8] sm:$0xff]
    %v8153 = vld [vmem:[%s665 + $0x1c8] sm:$0xff]
    %v8154 = vld [vmem:[%s665 + $0x1d0] sm:$0xff]
    %v8155 = vld [vmem:[%s665 + $0x1e0] sm:$0xff]
    %v8156 = vld [vmem:[%s665 + $0x1e8] sm:$0xff]
    %v8157 = vld [vmem:[%s665 + $0x1f8] sm:$0xff]
    %v8158 = vld [vmem:[%s665 + $0x200] sm:$0xff]
    %v8159 = vld [vmem:[%s665 + $0x210] sm:$0xff]
    %v8160 = vld [vmem:[%s665 + $0x218] sm:$0xff]
    %v8161 = vld [vmem:[%s665 + $0x228] sm:$0xff]
    %v8162 = vld [vmem:[%s665 + $0x230] sm:$0xff]
    %v8163 = vld [vmem:[%s665 + $0x240] sm:$0xff]
    %v8164 = vld [vmem:[%s665 + $0x248] sm:$0xff]
    %v8165 = vld [vmem:[%s665 + $0x258] sm:$0xff]
    %v8166 = vld [vmem:[%s665 + $0x260] sm:$0xff]
    %v8167 = vld [vmem:[%s665 + $0x270] sm:$0xff]
    %v8168 = vld [vmem:[%s665 + $0x278] sm:$0xff]
    %v8169 = vld [vmem:[%s665 + $0x288] sm:$0xff]
    %v8170 = vld [vmem:[%s665 + $0x290] sm:$0xff]
    %v8171 = vld [vmem:[%s665 + $0x2a0] sm:$0xff]
    %v8172 = vld [vmem:[%s665 + $0x2a8] sm:$0xff]
    %v8173 = vld [vmem:[%s665 + $0x2b8] sm:$0xff]
    %v8174 = vld [vmem:[%s665 + $0x2c0] sm:$0xff]
    %v8175 = vld [vmem:[%s665 + $0x2d0] sm:$0xff]
    %v8176 = vld [vmem:[%s665 + $0x2d8] sm:$0xff]
    %v8177 = vld [vmem:[%s665 + $0x2e8] sm:$0xff]
    %v8178 = vld [vmem:[%s665 + $0x2f0] sm:$0xff]
    %v8179 = vld [vmem:[%s665 + $0x300] sm:$0xff]
    %v8180 = vld [vmem:[%s665 + $0x308] sm:$0xff]
    %v8181 = vld [vmem:[%s665 + $0x318] sm:$0xff]
    %v8182 = vld [vmem:[%s665 + $0x320] sm:$0xff]
    %v8183 = vld [vmem:[%s665 + $0x1] sm:$0xff]
    %v8184 = vld [vmem:[%s665 + $0x9] sm:$0xff]
    %v8185 = vld [vmem:[%s665 + $0x19] sm:$0xff]
    %v8186 = vld [vmem:[%s665 + $0x21] sm:$0xff]
    %v8187 = vld [vmem:[%s665 + $0x31] sm:$0xff]
    %v8188 = vld [vmem:[%s665 + $0x39] sm:$0xff]
    %v8189 = vld [vmem:[%s665 + $0x49] sm:$0xff]
    %v8190 = vld [vmem:[%s665 + $0x51] sm:$0xff]
    %v8191 = vld [vmem:[%s665 + $0x61] sm:$0xff]
    %v8192 = vld [vmem:[%s665 + $0x69] sm:$0xff]
    %v8193 = vld [vmem:[%s665 + $0x79] sm:$0xff]
    %v8194 = vld [vmem:[%s665 + $0x81] sm:$0xff]
    %v8195 = vld [vmem:[%s665 + $0x91] sm:$0xff]
    %v8196 = vld [vmem:[%s665 + $0x99] sm:$0xff]
    %v8197 = vld [vmem:[%s665 + $0xa9] sm:$0xff]
    %v8198 = vld [vmem:[%s665 + $0xb1] sm:$0xff]
    %v8199 = vld [vmem:[%s665 + $0xc1] sm:$0xff]
    %v8200 = vld [vmem:[%s665 + $0xc9] sm:$0xff]
    %v8201 = vld [vmem:[%s665 + $0xd9] sm:$0xff]
    %v8202 = vld [vmem:[%s665 + $0xe1] sm:$0xff]
    %v8203 = vld [vmem:[%s665 + $0xf1] sm:$0xff]
    %v8204 = vld [vmem:[%s665 + $0xf9] sm:$0xff]
    %v8205 = vld [vmem:[%s665 + $0x109] sm:$0xff]
    %v8206 = vld [vmem:[%s665 + $0x111] sm:$0xff]
    %v8207 = vld [vmem:[%s665 + $0x121] sm:$0xff]
    %v8208 = vld [vmem:[%s665 + $0x129] sm:$0xff]
    %v8209 = vld [vmem:[%s665 + $0x139] sm:$0xff]
    %v8210 = vld [vmem:[%s665 + $0x141] sm:$0xff]
    %v8211 = vld [vmem:[%s665 + $0x151] sm:$0xff]
    %v8212 = vld [vmem:[%s665 + $0x159] sm:$0xff]
    %v8213 = vld [vmem:[%s665 + $0x169] sm:$0xff]
    %v8214 = vld [vmem:[%s665 + $0x171] sm:$0xff]
    %v8215 = vld [vmem:[%s665 + $0x1b1] sm:$0xff]
    %v8216 = vld [vmem:[%s665 + $0x1b9] sm:$0xff]
    %v8217 = vld [vmem:[%s665 + $0x1c9] sm:$0xff]
    %v8218 = vld [vmem:[%s665 + $0x1d1] sm:$0xff]
    %v8219 = vld [vmem:[%s665 + $0x1e1] sm:$0xff]
    %v8220 = vld [vmem:[%s665 + $0x1e9] sm:$0xff]
    %v8221 = vld [vmem:[%s665 + $0x1f9] sm:$0xff]
    %v8222 = vld [vmem:[%s665 + $0x201] sm:$0xff]
    %v8223 = vld [vmem:[%s665 + $0x211] sm:$0xff]
    %v8224 = vld [vmem:[%s665 + $0x219] sm:$0xff]
    %v8225 = vld [vmem:[%s665 + $0x229] sm:$0xff]
    %v8226 = vld [vmem:[%s665 + $0x231] sm:$0xff]
    %v8227 = vld [vmem:[%s665 + $0x241] sm:$0xff]
    %v8228 = vld [vmem:[%s665 + $0x249] sm:$0xff]
    %v8229 = vld [vmem:[%s665 + $0x259] sm:$0xff]
    %v8230 = vld [vmem:[%s665 + $0x261] sm:$0xff]
    %v8231 = vld [vmem:[%s665 + $0x271] sm:$0xff]
    %v8232 = vld [vmem:[%s665 + $0x279] sm:$0xff]
    %v8233 = vld [vmem:[%s665 + $0x289] sm:$0xff]
    %v8234 = vld [vmem:[%s665 + $0x291] sm:$0xff]
    %v8235 = vld [vmem:[%s665 + $0x2a1] sm:$0xff]
    %v8236 = vld [vmem:[%s665 + $0x2a9] sm:$0xff]
    %v8237 = vld [vmem:[%s665 + $0x2b9] sm:$0xff]
    %v8238 = vld [vmem:[%s665 + $0x2c1] sm:$0xff]
    %v8239 = vld [vmem:[%s665 + $0x2d1] sm:$0xff]
    %v8240 = vld [vmem:[%s665 + $0x2d9] sm:$0xff]
    %v8241 = vld [vmem:[%s665 + $0x2e9] sm:$0xff]
    %v8242 = vld [vmem:[%s665 + $0x2f1] sm:$0xff]
    %v8243 = vld [vmem:[%s665 + $0x301] sm:$0xff]
    %v8244 = vld [vmem:[%s665 + $0x309] sm:$0xff]
    %v8245 = vld [vmem:[%s665 + $0x319] sm:$0xff]
    %v8246 = vld [vmem:[%s665 + $0x321] sm:$0xff]
    %v8247 = vld [vmem:[%s665 + $0x2] sm:$0xff]
    %v8248 = vld [vmem:[%s665 + $0xa] sm:$0xff]
    %v8249 = vld [vmem:[%s665 + $0x1a] sm:$0xff]
    %v8250 = vld [vmem:[%s665 + $0x22] sm:$0xff]
    %v8251 = vld [vmem:[%s665 + $0x32] sm:$0xff]
    %v8252 = vld [vmem:[%s665 + $0x3a] sm:$0xff]
    %v8253 = vld [vmem:[%s665 + $0x4a] sm:$0xff]
    %v8254 = vld [vmem:[%s665 + $0x52] sm:$0xff]
    %v8255 = vld [vmem:[%s665 + $0x62] sm:$0xff]
    %v8256 = vld [vmem:[%s665 + $0x6a] sm:$0xff]
    %v8257 = vld [vmem:[%s665 + $0x7a] sm:$0xff]
    %v8258 = vld [vmem:[%s665 + $0x82] sm:$0xff]
    %v8259 = vld [vmem:[%s665 + $0x92] sm:$0xff]
    %v8260 = vld [vmem:[%s665 + $0x9a] sm:$0xff]
    %v8261 = vld [vmem:[%s665 + $0xaa] sm:$0xff]
    %v8262 = vld [vmem:[%s665 + $0xb2] sm:$0xff]
    %v8263 = vld [vmem:[%s665 + $0xc2] sm:$0xff]
    %v8264 = vld [vmem:[%s665 + $0xca] sm:$0xff]
    %v8265 = vld [vmem:[%s665 + $0xda] sm:$0xff]
    %v8266 = vld [vmem:[%s665 + $0xe2] sm:$0xff]
    %v8267 = vld [vmem:[%s665 + $0xf2] sm:$0xff]
    %v8268 = vld [vmem:[%s665 + $0xfa] sm:$0xff]
    %v8269 = vld [vmem:[%s665 + $0x10a] sm:$0xff]
    %v8270 = vld [vmem:[%s665 + $0x112] sm:$0xff]
    %v8271 = vld [vmem:[%s665 + $0x122] sm:$0xff]
    %v8272 = vld [vmem:[%s665 + $0x12a] sm:$0xff]
    %v8273 = vld [vmem:[%s665 + $0x13a] sm:$0xff]
    %v8274 = vld [vmem:[%s665 + $0x142] sm:$0xff]
    %v8275 = vld [vmem:[%s665 + $0x152] sm:$0xff]
    %v8276 = vld [vmem:[%s665 + $0x15a] sm:$0xff]
    %v8277 = vld [vmem:[%s665 + $0x16a] sm:$0xff]
    %v8278 = vld [vmem:[%s665 + $0x172] sm:$0xff]
    %v8279 = vld [vmem:[%s665 + $0x1b2] sm:$0xff]
    %v8280 = vld [vmem:[%s665 + $0x1ba] sm:$0xff]
    %v8281 = vld [vmem:[%s665 + $0x1ca] sm:$0xff]
    %v8282 = vld [vmem:[%s665 + $0x1d2] sm:$0xff]
    %v8283 = vld [vmem:[%s665 + $0x1e2] sm:$0xff]
    %v8284 = vld [vmem:[%s665 + $0x1ea] sm:$0xff]
    %v8285 = vld [vmem:[%s665 + $0x1fa] sm:$0xff]
    %v8286 = vld [vmem:[%s665 + $0x202] sm:$0xff]
    %v8287 = vld [vmem:[%s665 + $0x212] sm:$0xff]
    %v8288 = vld [vmem:[%s665 + $0x21a] sm:$0xff]
    %v8289 = vld [vmem:[%s665 + $0x22a] sm:$0xff]
    %v8290 = vld [vmem:[%s665 + $0x232] sm:$0xff]
    %v8291 = vld [vmem:[%s665 + $0x242] sm:$0xff]
    %v8292 = vld [vmem:[%s665 + $0x24a] sm:$0xff]
    %v8293 = vld [vmem:[%s665 + $0x25a] sm:$0xff]
    %v8294 = vld [vmem:[%s665 + $0x262] sm:$0xff]
    %v8295 = vld [vmem:[%s665 + $0x272] sm:$0xff]
    %v8296 = vld [vmem:[%s665 + $0x27a] sm:$0xff]
    %v8297 = vld [vmem:[%s665 + $0x28a] sm:$0xff]
    %v8298 = vld [vmem:[%s665 + $0x292] sm:$0xff]
    %v8299 = vld [vmem:[%s665 + $0x2a2] sm:$0xff]
    %v8300 = vld [vmem:[%s665 + $0x2aa] sm:$0xff]
    %v8301 = vld [vmem:[%s665 + $0x2ba] sm:$0xff]
    %v8302 = vld [vmem:[%s665 + $0x2c2] sm:$0xff]
    %v8303 = vld [vmem:[%s665 + $0x2d2] sm:$0xff]
    %v8304 = vld [vmem:[%s665 + $0x2da] sm:$0xff]
    %v8305 = vld [vmem:[%s665 + $0x2ea] sm:$0xff]
    %v8306 = vld [vmem:[%s665 + $0x2f2] sm:$0xff]
    %v8307 = vld [vmem:[%s665 + $0x302] sm:$0xff]
    %v8308 = vld [vmem:[%s665 + $0x30a] sm:$0xff]
    %v8309 = vld [vmem:[%s665 + $0x31a] sm:$0xff]
    %v8310 = vld [vmem:[%s665 + $0x322] sm:$0xff]
    %8375 = vrot.lane.b32.xlu0 %v7799, 8
    %v8376 = vpop.permute.xlu0 %8375
    %8377 = vrot.lane.b32.xlu0 %v7800, 8
    %v8378 = vpop.permute.xlu0 %8377
    %8379 = vrot.lane.b32.xlu0 %v7801, 8
    %v8380 = vpop.permute.xlu0 %8379
    %8381 = vrot.lane.b32.xlu0 %v7802, 8
    %v8382 = vpop.permute.xlu0 %8381
    %8383 = vrot.lane.b32.xlu0 %v7803, 8
    %v8384 = vpop.permute.xlu0 %8383
    %8385 = vrot.lane.b32.xlu0 %v7804, 8
    %v8386 = vpop.permute.xlu0 %8385
    %8387 = vrot.lane.b32.xlu0 %v7805, 8
    %v8388 = vpop.permute.xlu0 %8387
    %8389 = vrot.lane.b32.xlu0 %v7806, 8
    %v8390 = vpop.permute.xlu0 %8389
    %8391 = vrot.lane.b32.xlu0 %v7807, 8
    %v8392 = vpop.permute.xlu0 %8391
    %8393 = vrot.lane.b32.xlu0 %v7808, 8
    %v8394 = vpop.permute.xlu0 %8393
    %8395 = vrot.lane.b32.xlu0 %v7809, 8
    %v8396 = vpop.permute.xlu0 %8395
    %8397 = vrot.lane.b32.xlu0 %v7810, 8
    %v8398 = vpop.permute.xlu0 %8397
    %8399 = vrot.lane.b32.xlu0 %v7811, 8
    %v8400 = vpop.permute.xlu0 %8399
    %8401 = vrot.lane.b32.xlu0 %v7812, 8
    %v8402 = vpop.permute.xlu0 %8401
    %8403 = vrot.lane.b32.xlu0 %v7813, 8
    %v8404 = vpop.permute.xlu0 %8403
    %8405 = vrot.lane.b32.xlu0 %v7814, 8
    %v8406 = vpop.permute.xlu0 %8405
    %8407 = vrot.lane.b32.xlu0 %v7815, 8
    %v8408 = vpop.permute.xlu0 %8407
    %8409 = vrot.lane.b32.xlu0 %v7816, 8
    %v8410 = vpop.permute.xlu0 %8409
    %8411 = vrot.lane.b32.xlu0 %v7817, 8
    %v8412 = vpop.permute.xlu0 %8411
    %8413 = vrot.lane.b32.xlu0 %v7818, 8
    %v8414 = vpop.permute.xlu0 %8413
    %8415 = vrot.lane.b32.xlu0 %v7819, 8
    %v8416 = vpop.permute.xlu0 %8415
    %8417 = vrot.lane.b32.xlu0 %v7820, 8
    %v8418 = vpop.permute.xlu0 %8417
    %8419 = vrot.lane.b32.xlu0 %v7821, 8
    %v8420 = vpop.permute.xlu0 %8419
    %8421 = vrot.lane.b32.xlu0 %v7822, 8
    %v8422 = vpop.permute.xlu0 %8421
    %8423 = vrot.lane.b32.xlu0 %v7823, 8
    %v8424 = vpop.permute.xlu0 %8423
    %8425 = vrot.lane.b32.xlu0 %v7824, 8
    %v8426 = vpop.permute.xlu0 %8425
    %8427 = vrot.lane.b32.xlu0 %v7825, 8
    %v8428 = vpop.permute.xlu0 %8427
    %8429 = vrot.lane.b32.xlu0 %v7826, 8
    %v8430 = vpop.permute.xlu0 %8429
    %8431 = vrot.lane.b32.xlu0 %v7827, 8
    %v8432 = vpop.permute.xlu0 %8431
    %8433 = vrot.lane.b32.xlu0 %v7828, 8
    %v8434 = vpop.permute.xlu0 %8433
    %8435 = vrot.lane.b32.xlu0 %v7829, 8
    %v8436 = vpop.permute.xlu0 %8435
    %8437 = vrot.lane.b32.xlu0 %v7830, 8
    %v8438 = vpop.permute.xlu0 %8437
    %8439 = vrot.lane.b32.xlu0 %v7831, 8
    %v8440 = vpop.permute.xlu0 %8439
    %8441 = vrot.lane.b32.xlu0 %v7832, 8
    %v8442 = vpop.permute.xlu0 %8441
    %8443 = vrot.lane.b32.xlu0 %v7833, 8
    %v8444 = vpop.permute.xlu0 %8443
    %8445 = vrot.lane.b32.xlu0 %v7834, 8
    %v8446 = vpop.permute.xlu0 %8445
    %8447 = vrot.lane.b32.xlu0 %v7835, 8
    %v8448 = vpop.permute.xlu0 %8447
    %8449 = vrot.lane.b32.xlu0 %v7836, 8
    %v8450 = vpop.permute.xlu0 %8449
    %8451 = vrot.lane.b32.xlu0 %v7837, 8
    %v8452 = vpop.permute.xlu0 %8451
    %8453 = vrot.lane.b32.xlu0 %v7838, 8
    %v8454 = vpop.permute.xlu0 %8453
    %8455 = vrot.lane.b32.xlu0 %v7839, 8
    %v8456 = vpop.permute.xlu0 %8455
    %8457 = vrot.lane.b32.xlu0 %v7840, 8
    %v8458 = vpop.permute.xlu0 %8457
    %8459 = vrot.lane.b32.xlu0 %v7841, 8
    %v8460 = vpop.permute.xlu0 %8459
    %8461 = vrot.lane.b32.xlu0 %v7842, 8
    %v8462 = vpop.permute.xlu0 %8461
    %8463 = vrot.lane.b32.xlu0 %v7843, 8
    %v8464 = vpop.permute.xlu0 %8463
    %8465 = vrot.lane.b32.xlu0 %v7844, 8
    %v8466 = vpop.permute.xlu0 %8465
    %8467 = vrot.lane.b32.xlu0 %v7845, 8
    %v8468 = vpop.permute.xlu0 %8467
    %8469 = vrot.lane.b32.xlu0 %v7846, 8
    %v8470 = vpop.permute.xlu0 %8469
    %8471 = vrot.lane.b32.xlu0 %v7847, 8
    %v8472 = vpop.permute.xlu0 %8471
    %8473 = vrot.lane.b32.xlu0 %v7848, 8
    %v8474 = vpop.permute.xlu0 %8473
    %8475 = vrot.lane.b32.xlu0 %v7849, 8
    %v8476 = vpop.permute.xlu0 %8475
    %8477 = vrot.lane.b32.xlu0 %v7850, 8
    %v8478 = vpop.permute.xlu0 %8477
    %8479 = vrot.lane.b32.xlu0 %v7851, 8
    %v8480 = vpop.permute.xlu0 %8479
    %8481 = vrot.lane.b32.xlu0 %v7852, 8
    %v8482 = vpop.permute.xlu0 %8481
    %8483 = vrot.lane.b32.xlu0 %v7853, 8
    %v8484 = vpop.permute.xlu0 %8483
    %8485 = vrot.lane.b32.xlu0 %v7854, 8
    %v8486 = vpop.permute.xlu0 %8485
    %8487 = vrot.lane.b32.xlu0 %v7855, 8
    %v8488 = vpop.permute.xlu0 %8487
    %8489 = vrot.lane.b32.xlu0 %v7856, 8
    %v8490 = vpop.permute.xlu0 %8489
    %8491 = vrot.lane.b32.xlu0 %v7857, 8
    %v8492 = vpop.permute.xlu0 %8491
    %8493 = vrot.lane.b32.xlu0 %v7858, 8
    %v8494 = vpop.permute.xlu0 %8493
    %8495 = vrot.lane.b32.xlu0 %v7859, 8
    %v8496 = vpop.permute.xlu0 %8495
    %8497 = vrot.lane.b32.xlu0 %v7860, 8
    %v8498 = vpop.permute.xlu0 %8497
    %8499 = vrot.lane.b32.xlu0 %v7861, 8
    %v8500 = vpop.permute.xlu0 %8499
    %8501 = vrot.lane.b32.xlu0 %v7862, 8
    %v8502 = vpop.permute.xlu0 %8501
    %8631 = vrot.lane.b32.xlu0 %v7863, 16
    %v8632 = vpop.permute.xlu0 %8631
    %8633 = vrot.lane.b32.xlu0 %v7864, 16
    %v8634 = vpop.permute.xlu0 %8633
    %8635 = vrot.lane.b32.xlu0 %v7865, 16
    %v8636 = vpop.permute.xlu0 %8635
    %8637 = vrot.lane.b32.xlu0 %v7866, 16
    %v8638 = vpop.permute.xlu0 %8637
    %8639 = vrot.lane.b32.xlu0 %v7867, 16
    %v8640 = vpop.permute.xlu0 %8639
    %8641 = vrot.lane.b32.xlu0 %v7868, 16
    %v8642 = vpop.permute.xlu0 %8641
    %8643 = vrot.lane.b32.xlu0 %v7869, 16
    %v8644 = vpop.permute.xlu0 %8643
    %8645 = vrot.lane.b32.xlu0 %v7870, 16
    %v8646 = vpop.permute.xlu0 %8645
    %8647 = vrot.lane.b32.xlu0 %v7871, 16
    %v8648 = vpop.permute.xlu0 %8647
    %8649 = vrot.lane.b32.xlu0 %v7872, 16
    %v8650 = vpop.permute.xlu0 %8649
    %8651 = vrot.lane.b32.xlu0 %v7873, 16
    %v8652 = vpop.permute.xlu0 %8651
    %8653 = vrot.lane.b32.xlu0 %v7874, 16
    %v8654 = vpop.permute.xlu0 %8653
    %8655 = vrot.lane.b32.xlu0 %v7875, 16
    %v8656 = vpop.permute.xlu0 %8655
    %8657 = vrot.lane.b32.xlu0 %v7876, 16
    %v8658 = vpop.permute.xlu0 %8657
    %8659 = vrot.lane.b32.xlu0 %v7877, 16
    %v8660 = vpop.permute.xlu0 %8659
    %8661 = vrot.lane.b32.xlu0 %v7878, 16
    %v8662 = vpop.permute.xlu0 %8661
    %8663 = vrot.lane.b32.xlu0 %v7879, 16
    %v8664 = vpop.permute.xlu0 %8663
    %8665 = vrot.lane.b32.xlu0 %v7880, 16
    %v8666 = vpop.permute.xlu0 %8665
    %8667 = vrot.lane.b32.xlu0 %v7881, 16
    %v8668 = vpop.permute.xlu0 %8667
    %8669 = vrot.lane.b32.xlu0 %v7882, 16
    %v8670 = vpop.permute.xlu0 %8669
    %8671 = vrot.lane.b32.xlu0 %v7883, 16
    %v8672 = vpop.permute.xlu0 %8671
    %8673 = vrot.lane.b32.xlu0 %v7884, 16
    %v8674 = vpop.permute.xlu0 %8673
    %8675 = vrot.lane.b32.xlu0 %v7885, 16
    %v8676 = vpop.permute.xlu0 %8675
    %8677 = vrot.lane.b32.xlu0 %v7886, 16
    %v8678 = vpop.permute.xlu0 %8677
    %8679 = vrot.lane.b32.xlu0 %v7887, 16
    %v8680 = vpop.permute.xlu0 %8679
    %8681 = vrot.lane.b32.xlu0 %v7888, 16
    %v8682 = vpop.permute.xlu0 %8681
    %8683 = vrot.lane.b32.xlu0 %v7889, 16
    %v8684 = vpop.permute.xlu0 %8683
    %8685 = vrot.lane.b32.xlu0 %v7890, 16
    %v8686 = vpop.permute.xlu0 %8685
    %8687 = vrot.lane.b32.xlu0 %v7891, 16
    %v8688 = vpop.permute.xlu0 %8687
    %8689 = vrot.lane.b32.xlu0 %v7892, 16
    %v8690 = vpop.permute.xlu0 %8689
    %8691 = vrot.lane.b32.xlu0 %v7893, 16
    %v8692 = vpop.permute.xlu0 %8691
    %8693 = vrot.lane.b32.xlu0 %v7894, 16
    %v8694 = vpop.permute.xlu0 %8693
    %8695 = vrot.lane.b32.xlu0 %v7895, 16
    %v8696 = vpop.permute.xlu0 %8695
    %8697 = vrot.lane.b32.xlu0 %v7896, 16
    %v8698 = vpop.permute.xlu0 %8697
    %8699 = vrot.lane.b32.xlu0 %v7897, 16
    %v8700 = vpop.permute.xlu0 %8699
    %8701 = vrot.lane.b32.xlu0 %v7898, 16
    %v8702 = vpop.permute.xlu0 %8701
    %8703 = vrot.lane.b32.xlu0 %v7899, 16
    %v8704 = vpop.permute.xlu0 %8703
    %8705 = vrot.lane.b32.xlu0 %v7900, 16
    %v8706 = vpop.permute.xlu0 %8705
    %8707 = vrot.lane.b32.xlu0 %v7901, 16
    %v8708 = vpop.permute.xlu0 %8707
    %8709 = vrot.lane.b32.xlu0 %v7902, 16
    %v8710 = vpop.permute.xlu0 %8709
    %8711 = vrot.lane.b32.xlu0 %v7903, 16
    %v8712 = vpop.permute.xlu0 %8711
    %8713 = vrot.lane.b32.xlu0 %v7904, 16
    %v8714 = vpop.permute.xlu0 %8713
    %8715 = vrot.lane.b32.xlu0 %v7905, 16
    %v8716 = vpop.permute.xlu0 %8715
    %8717 = vrot.lane.b32.xlu0 %v7906, 16
    %v8718 = vpop.permute.xlu0 %8717
    %8719 = vrot.lane.b32.xlu0 %v7907, 16
    %v8720 = vpop.permute.xlu0 %8719
    %8721 = vrot.lane.b32.xlu0 %v7908, 16
    %v8722 = vpop.permute.xlu0 %8721
    %8723 = vrot.lane.b32.xlu0 %v7909, 16
    %v8724 = vpop.permute.xlu0 %8723
    %8725 = vrot.lane.b32.xlu0 %v7910, 16
    %v8726 = vpop.permute.xlu0 %8725
    %8727 = vrot.lane.b32.xlu0 %v7911, 16
    %v8728 = vpop.permute.xlu0 %8727
    %8729 = vrot.lane.b32.xlu0 %v7912, 16
    %v8730 = vpop.permute.xlu0 %8729
    %8731 = vrot.lane.b32.xlu0 %v7913, 16
    %v8732 = vpop.permute.xlu0 %8731
    %8733 = vrot.lane.b32.xlu0 %v7914, 16
    %v8734 = vpop.permute.xlu0 %8733
    %8735 = vrot.lane.b32.xlu0 %v7915, 16
    %v8736 = vpop.permute.xlu0 %8735
    %8737 = vrot.lane.b32.xlu0 %v7916, 16
    %v8738 = vpop.permute.xlu0 %8737
    %8739 = vrot.lane.b32.xlu0 %v7917, 16
    %v8740 = vpop.permute.xlu0 %8739
    %8741 = vrot.lane.b32.xlu0 %v7918, 16
    %v8742 = vpop.permute.xlu0 %8741
    %8743 = vrot.lane.b32.xlu0 %v7919, 16
    %v8744 = vpop.permute.xlu0 %8743
    %8745 = vrot.lane.b32.xlu0 %v7920, 16
    %v8746 = vpop.permute.xlu0 %8745
    %8747 = vrot.lane.b32.xlu0 %v7921, 16
    %v8748 = vpop.permute.xlu0 %8747
    %8749 = vrot.lane.b32.xlu0 %v7922, 16
    %v8750 = vpop.permute.xlu0 %8749
    %8751 = vrot.lane.b32.xlu0 %v7923, 16
    %v8752 = vpop.permute.xlu0 %8751
    %8753 = vrot.lane.b32.xlu0 %v7924, 16
    %v8754 = vpop.permute.xlu0 %8753
    %8755 = vrot.lane.b32.xlu0 %v7925, 16
    %v8756 = vpop.permute.xlu0 %8755
    %8757 = vrot.lane.b32.xlu0 %v7926, 16
    %v8758 = vpop.permute.xlu0 %8757
    %8887 = vrot.lane.b32.xlu0 %v7927, 24
    %v8888 = vpop.permute.xlu0 %8887
    %8889 = vrot.lane.b32.xlu0 %v7928, 24
    %v8890 = vpop.permute.xlu0 %8889
    %8891 = vrot.lane.b32.xlu0 %v7929, 24
    %v8892 = vpop.permute.xlu0 %8891
    %8893 = vrot.lane.b32.xlu0 %v7930, 24
    %v8894 = vpop.permute.xlu0 %8893
    %8895 = vrot.lane.b32.xlu0 %v7931, 24
    %v8896 = vpop.permute.xlu0 %8895
    %8897 = vrot.lane.b32.xlu0 %v7932, 24
    %v8898 = vpop.permute.xlu0 %8897
    %8899 = vrot.lane.b32.xlu0 %v7933, 24
    %v8900 = vpop.permute.xlu0 %8899
    %8901 = vrot.lane.b32.xlu0 %v7934, 24
    %v8902 = vpop.permute.xlu0 %8901
    %8903 = vrot.lane.b32.xlu0 %v7935, 24
    %v8904 = vpop.permute.xlu0 %8903
    %8905 = vrot.lane.b32.xlu0 %v7936, 24
    %v8906 = vpop.permute.xlu0 %8905
    %8907 = vrot.lane.b32.xlu0 %v7937, 24
    %v8908 = vpop.permute.xlu0 %8907
    %8909 = vrot.lane.b32.xlu0 %v7938, 24
    %v8910 = vpop.permute.xlu0 %8909
    %8911 = vrot.lane.b32.xlu0 %v7939, 24
    %v8912 = vpop.permute.xlu0 %8911
    %8913 = vrot.lane.b32.xlu0 %v7940, 24
    %v8914 = vpop.permute.xlu0 %8913
    %8915 = vrot.lane.b32.xlu0 %v7941, 24
    %v8916 = vpop.permute.xlu0 %8915
    %8917 = vrot.lane.b32.xlu0 %v7942, 24
    %v8918 = vpop.permute.xlu0 %8917
    %8919 = vrot.lane.b32.xlu0 %v7943, 24
    %v8920 = vpop.permute.xlu0 %8919
    %8921 = vrot.lane.b32.xlu0 %v7944, 24
    %v8922 = vpop.permute.xlu0 %8921
    %8923 = vrot.lane.b32.xlu0 %v7945, 24
    %v8924 = vpop.permute.xlu0 %8923
    %8925 = vrot.lane.b32.xlu0 %v7946, 24
    %v8926 = vpop.permute.xlu0 %8925
    %8927 = vrot.lane.b32.xlu0 %v7947, 24
    %v8928 = vpop.permute.xlu0 %8927
    %8929 = vrot.lane.b32.xlu0 %v7948, 24
    %v8930 = vpop.permute.xlu0 %8929
    %8931 = vrot.lane.b32.xlu0 %v7949, 24
    %v8932 = vpop.permute.xlu0 %8931
    %8933 = vrot.lane.b32.xlu0 %v7950, 24
    %v8934 = vpop.permute.xlu0 %8933
    %8935 = vrot.lane.b32.xlu0 %v7951, 24
    %v8936 = vpop.permute.xlu0 %8935
    %8937 = vrot.lane.b32.xlu0 %v7952, 24
    %v8938 = vpop.permute.xlu0 %8937
    %8939 = vrot.lane.b32.xlu0 %v7953, 24
    %v8940 = vpop.permute.xlu0 %8939
    %8941 = vrot.lane.b32.xlu0 %v7954, 24
    %v8942 = vpop.permute.xlu0 %8941
    %8943 = vrot.lane.b32.xlu0 %v7955, 24
    %v8944 = vpop.permute.xlu0 %8943
    %8945 = vrot.lane.b32.xlu0 %v7956, 24
    %v8946 = vpop.permute.xlu0 %8945
    %8947 = vrot.lane.b32.xlu0 %v7957, 24
    %v8948 = vpop.permute.xlu0 %8947
    %8949 = vrot.lane.b32.xlu0 %v7958, 24
    %v8950 = vpop.permute.xlu0 %8949
    %8951 = vrot.lane.b32.xlu0 %v7959, 24
    %v8952 = vpop.permute.xlu0 %8951
    %8953 = vrot.lane.b32.xlu0 %v7960, 24
    %v8954 = vpop.permute.xlu0 %8953
    %8955 = vrot.lane.b32.xlu0 %v7961, 24
    %v8956 = vpop.permute.xlu0 %8955
    %8957 = vrot.lane.b32.xlu0 %v7962, 24
    %v8958 = vpop.permute.xlu0 %8957
    %8959 = vrot.lane.b32.xlu0 %v7963, 24
    %v8960 = vpop.permute.xlu0 %8959
    %8961 = vrot.lane.b32.xlu0 %v7964, 24
    %v8962 = vpop.permute.xlu0 %8961
    %8963 = vrot.lane.b32.xlu0 %v7965, 24
    %v8964 = vpop.permute.xlu0 %8963
    %8965 = vrot.lane.b32.xlu0 %v7966, 24
    %v8966 = vpop.permute.xlu0 %8965
    %8967 = vrot.lane.b32.xlu0 %v7967, 24
    %v8968 = vpop.permute.xlu0 %8967
    %8969 = vrot.lane.b32.xlu0 %v7968, 24
    %v8970 = vpop.permute.xlu0 %8969
    %8971 = vrot.lane.b32.xlu0 %v7969, 24
    %v8972 = vpop.permute.xlu0 %8971
    %8973 = vrot.lane.b32.xlu0 %v7970, 24
    %v8974 = vpop.permute.xlu0 %8973
    %8975 = vrot.lane.b32.xlu0 %v7971, 24
    %v8976 = vpop.permute.xlu0 %8975
    %8977 = vrot.lane.b32.xlu0 %v7972, 24
    %v8978 = vpop.permute.xlu0 %8977
    %8979 = vrot.lane.b32.xlu0 %v7973, 24
    %v8980 = vpop.permute.xlu0 %8979
    %8981 = vrot.lane.b32.xlu0 %v7974, 24
    %v8982 = vpop.permute.xlu0 %8981
    %8983 = vrot.lane.b32.xlu0 %v7975, 24
    %v8984 = vpop.permute.xlu0 %8983
    %8985 = vrot.lane.b32.xlu0 %v7976, 24
    %v8986 = vpop.permute.xlu0 %8985
    %8987 = vrot.lane.b32.xlu0 %v7977, 24
    %v8988 = vpop.permute.xlu0 %8987
    %8989 = vrot.lane.b32.xlu0 %v7978, 24
    %v8990 = vpop.permute.xlu0 %8989
    %8991 = vrot.lane.b32.xlu0 %v7979, 24
    %v8992 = vpop.permute.xlu0 %8991
    %8993 = vrot.lane.b32.xlu0 %v7980, 24
    %v8994 = vpop.permute.xlu0 %8993
    %8995 = vrot.lane.b32.xlu0 %v7981, 24
    %v8996 = vpop.permute.xlu0 %8995
    %8997 = vrot.lane.b32.xlu0 %v7982, 24
    %v8998 = vpop.permute.xlu0 %8997
    %8999 = vrot.lane.b32.xlu0 %v7983, 24
    %v9000 = vpop.permute.xlu0 %8999
    %9001 = vrot.lane.b32.xlu0 %v7984, 24
    %v9002 = vpop.permute.xlu0 %9001
    %9003 = vrot.lane.b32.xlu0 %v7985, 24
    %v9004 = vpop.permute.xlu0 %9003
    %9005 = vrot.lane.b32.xlu0 %v7986, 24
    %v9006 = vpop.permute.xlu0 %9005
    %9007 = vrot.lane.b32.xlu0 %v7987, 24
    %v9008 = vpop.permute.xlu0 %9007
    %9009 = vrot.lane.b32.xlu0 %v7988, 24
    %v9010 = vpop.permute.xlu0 %9009
    %9011 = vrot.lane.b32.xlu0 %v7989, 24
    %v9012 = vpop.permute.xlu0 %9011
    %9013 = vrot.lane.b32.xlu0 %v7990, 24
    %v9014 = vpop.permute.xlu0 %9013
    %9143 = vrot.lane.b32.xlu0 %v7991, 32
    %v9144 = vpop.permute.xlu0 %9143
    %9145 = vrot.lane.b32.xlu0 %v7992, 32
    %v9146 = vpop.permute.xlu0 %9145
    %9147 = vrot.lane.b32.xlu0 %v7993, 32
    %v9148 = vpop.permute.xlu0 %9147
    %9149 = vrot.lane.b32.xlu0 %v7994, 32
    %v9150 = vpop.permute.xlu0 %9149
    %9151 = vrot.lane.b32.xlu0 %v7995, 32
    %v9152 = vpop.permute.xlu0 %9151
    %9153 = vrot.lane.b32.xlu0 %v7996, 32
    %v9154 = vpop.permute.xlu0 %9153
    %9155 = vrot.lane.b32.xlu0 %v7997, 32
    %v9156 = vpop.permute.xlu0 %9155
    %9157 = vrot.lane.b32.xlu0 %v7998, 32
    %v9158 = vpop.permute.xlu0 %9157
    %9159 = vrot.lane.b32.xlu0 %v7999, 32
    %v9160 = vpop.permute.xlu0 %9159
    %9161 = vrot.lane.b32.xlu0 %v8000, 32
    %v9162 = vpop.permute.xlu0 %9161
    %9163 = vrot.lane.b32.xlu0 %v8001, 32
    %v9164 = vpop.permute.xlu0 %9163
    %9165 = vrot.lane.b32.xlu0 %v8002, 32
    %v9166 = vpop.permute.xlu0 %9165
    %9167 = vrot.lane.b32.xlu0 %v8003, 32
    %v9168 = vpop.permute.xlu0 %9167
    %9169 = vrot.lane.b32.xlu0 %v8004, 32
    %v9170 = vpop.permute.xlu0 %9169
    %9171 = vrot.lane.b32.xlu0 %v8005, 32
    %v9172 = vpop.permute.xlu0 %9171
    %9173 = vrot.lane.b32.xlu0 %v8006, 32
    %v9174 = vpop.permute.xlu0 %9173
    %9175 = vrot.lane.b32.xlu0 %v8007, 32
    %v9176 = vpop.permute.xlu0 %9175
    %9177 = vrot.lane.b32.xlu0 %v8008, 32
    %v9178 = vpop.permute.xlu0 %9177
    %9179 = vrot.lane.b32.xlu0 %v8009, 32
    %v9180 = vpop.permute.xlu0 %9179
    %9181 = vrot.lane.b32.xlu0 %v8010, 32
    %v9182 = vpop.permute.xlu0 %9181
    %9183 = vrot.lane.b32.xlu0 %v8011, 32
    %v9184 = vpop.permute.xlu0 %9183
    %9185 = vrot.lane.b32.xlu0 %v8012, 32
    %v9186 = vpop.permute.xlu0 %9185
    %9187 = vrot.lane.b32.xlu0 %v8013, 32
    %v9188 = vpop.permute.xlu0 %9187
    %9189 = vrot.lane.b32.xlu0 %v8014, 32
    %v9190 = vpop.permute.xlu0 %9189
    %9191 = vrot.lane.b32.xlu0 %v8015, 32
    %v9192 = vpop.permute.xlu0 %9191
    %9193 = vrot.lane.b32.xlu0 %v8016, 32
    %v9194 = vpop.permute.xlu0 %9193
    %9195 = vrot.lane.b32.xlu0 %v8017, 32
    %v9196 = vpop.permute.xlu0 %9195
    %9197 = vrot.lane.b32.xlu0 %v8018, 32
    %v9198 = vpop.permute.xlu0 %9197
    %9199 = vrot.lane.b32.xlu0 %v8019, 32
    %v9200 = vpop.permute.xlu0 %9199
    %9201 = vrot.lane.b32.xlu0 %v8020, 32
    %v9202 = vpop.permute.xlu0 %9201
    %9203 = vrot.lane.b32.xlu0 %v8021, 32
    %v9204 = vpop.permute.xlu0 %9203
    %9205 = vrot.lane.b32.xlu0 %v8022, 32
    %v9206 = vpop.permute.xlu0 %9205
    %9207 = vrot.lane.b32.xlu0 %v8023, 32
    %v9208 = vpop.permute.xlu0 %9207
    %9209 = vrot.lane.b32.xlu0 %v8024, 32
    %v9210 = vpop.permute.xlu0 %9209
    %9211 = vrot.lane.b32.xlu0 %v8025, 32
    %v9212 = vpop.permute.xlu0 %9211
    %9213 = vrot.lane.b32.xlu0 %v8026, 32
    %v9214 = vpop.permute.xlu0 %9213
    %9215 = vrot.lane.b32.xlu0 %v8027, 32
    %v9216 = vpop.permute.xlu0 %9215
    %9217 = vrot.lane.b32.xlu0 %v8028, 32
    %v9218 = vpop.permute.xlu0 %9217
    %9219 = vrot.lane.b32.xlu0 %v8029, 32
    %v9220 = vpop.permute.xlu0 %9219
    %9221 = vrot.lane.b32.xlu0 %v8030, 32
    %v9222 = vpop.permute.xlu0 %9221
    %9223 = vrot.lane.b32.xlu0 %v8031, 32
    %v9224 = vpop.permute.xlu0 %9223
    %9225 = vrot.lane.b32.xlu0 %v8032, 32
    %v9226 = vpop.permute.xlu0 %9225
    %9227 = vrot.lane.b32.xlu0 %v8033, 32
    %v9228 = vpop.permute.xlu0 %9227
    %9229 = vrot.lane.b32.xlu0 %v8034, 32
    %v9230 = vpop.permute.xlu0 %9229
    %9231 = vrot.lane.b32.xlu0 %v8035, 32
    %v9232 = vpop.permute.xlu0 %9231
    %9233 = vrot.lane.b32.xlu0 %v8036, 32
    %v9234 = vpop.permute.xlu0 %9233
    %9235 = vrot.lane.b32.xlu0 %v8037, 32
    %v9236 = vpop.permute.xlu0 %9235
    %9237 = vrot.lane.b32.xlu0 %v8038, 32
    %v9238 = vpop.permute.xlu0 %9237
    %9239 = vrot.lane.b32.xlu0 %v8039, 32
    %v9240 = vpop.permute.xlu0 %9239
    %9241 = vrot.lane.b32.xlu0 %v8040, 32
    %v9242 = vpop.permute.xlu0 %9241
    %9243 = vrot.lane.b32.xlu0 %v8041, 32
    %v9244 = vpop.permute.xlu0 %9243
    %9245 = vrot.lane.b32.xlu0 %v8042, 32
    %v9246 = vpop.permute.xlu0 %9245
    %9247 = vrot.lane.b32.xlu0 %v8043, 32
    %v9248 = vpop.permute.xlu0 %9247
    %9249 = vrot.lane.b32.xlu0 %v8044, 32
    %v9250 = vpop.permute.xlu0 %9249
    %9251 = vrot.lane.b32.xlu0 %v8045, 32
    %v9252 = vpop.permute.xlu0 %9251
    %9253 = vrot.lane.b32.xlu0 %v8046, 32
    %v9254 = vpop.permute.xlu0 %9253
    %9255 = vrot.lane.b32.xlu0 %v8047, 32
    %v9256 = vpop.permute.xlu0 %9255
    %9257 = vrot.lane.b32.xlu0 %v8048, 32
    %v9258 = vpop.permute.xlu0 %9257
    %9259 = vrot.lane.b32.xlu0 %v8049, 32
    %v9260 = vpop.permute.xlu0 %9259
    %9261 = vrot.lane.b32.xlu0 %v8050, 32
    %v9262 = vpop.permute.xlu0 %9261
    %9263 = vrot.lane.b32.xlu0 %v8051, 32
    %v9264 = vpop.permute.xlu0 %9263
    %9265 = vrot.lane.b32.xlu0 %v8052, 32
    %v9266 = vpop.permute.xlu0 %9265
    %9267 = vrot.lane.b32.xlu0 %v8053, 32
    %v9268 = vpop.permute.xlu0 %9267
    %9269 = vrot.lane.b32.xlu0 %v8054, 32
    %v9270 = vpop.permute.xlu0 %9269
    %9399 = vrot.lane.b32.xlu0 %v8055, 40
    %v9400 = vpop.permute.xlu0 %9399
    %9401 = vrot.lane.b32.xlu0 %v8056, 40
    %v9402 = vpop.permute.xlu0 %9401
    %9403 = vrot.lane.b32.xlu0 %v8057, 40
    %v9404 = vpop.permute.xlu0 %9403
    %9405 = vrot.lane.b32.xlu0 %v8058, 40
    %v9406 = vpop.permute.xlu0 %9405
    %9407 = vrot.lane.b32.xlu0 %v8059, 40
    %v9408 = vpop.permute.xlu0 %9407
    %9409 = vrot.lane.b32.xlu0 %v8060, 40
    %v9410 = vpop.permute.xlu0 %9409
    %9411 = vrot.lane.b32.xlu0 %v8061, 40
    %v9412 = vpop.permute.xlu0 %9411
    %9413 = vrot.lane.b32.xlu0 %v8062, 40
    %v9414 = vpop.permute.xlu0 %9413
    %9415 = vrot.lane.b32.xlu0 %v8063, 40
    %v9416 = vpop.permute.xlu0 %9415
    %9417 = vrot.lane.b32.xlu0 %v8064, 40
    %v9418 = vpop.permute.xlu0 %9417
    %9419 = vrot.lane.b32.xlu0 %v8065, 40
    %v9420 = vpop.permute.xlu0 %9419
    %9421 = vrot.lane.b32.xlu0 %v8066, 40
    %v9422 = vpop.permute.xlu0 %9421
    %9423 = vrot.lane.b32.xlu0 %v8067, 40
    %v9424 = vpop.permute.xlu0 %9423
    %9425 = vrot.lane.b32.xlu0 %v8068, 40
    %v9426 = vpop.permute.xlu0 %9425
    %9427 = vrot.lane.b32.xlu0 %v8069, 40
    %v9428 = vpop.permute.xlu0 %9427
    %9429 = vrot.lane.b32.xlu0 %v8070, 40
    %v9430 = vpop.permute.xlu0 %9429
    %9431 = vrot.lane.b32.xlu0 %v8071, 40
    %v9432 = vpop.permute.xlu0 %9431
    %9433 = vrot.lane.b32.xlu0 %v8072, 40
    %v9434 = vpop.permute.xlu0 %9433
    %9435 = vrot.lane.b32.xlu0 %v8073, 40
    %v9436 = vpop.permute.xlu0 %9435
    %9437 = vrot.lane.b32.xlu0 %v8074, 40
    %v9438 = vpop.permute.xlu0 %9437
    %9439 = vrot.lane.b32.xlu0 %v8075, 40
    %v9440 = vpop.permute.xlu0 %9439
    %9441 = vrot.lane.b32.xlu0 %v8076, 40
    %v9442 = vpop.permute.xlu0 %9441
    %9443 = vrot.lane.b32.xlu0 %v8077, 40
    %v9444 = vpop.permute.xlu0 %9443
    %9445 = vrot.lane.b32.xlu0 %v8078, 40
    %v9446 = vpop.permute.xlu0 %9445
    %9447 = vrot.lane.b32.xlu0 %v8079, 40
    %v9448 = vpop.permute.xlu0 %9447
    %9449 = vrot.lane.b32.xlu0 %v8080, 40
    %v9450 = vpop.permute.xlu0 %9449
    %9451 = vrot.lane.b32.xlu0 %v8081, 40
    %v9452 = vpop.permute.xlu0 %9451
    %9453 = vrot.lane.b32.xlu0 %v8082, 40
    %v9454 = vpop.permute.xlu0 %9453
    %9455 = vrot.lane.b32.xlu0 %v8083, 40
    %v9456 = vpop.permute.xlu0 %9455
    %9457 = vrot.lane.b32.xlu0 %v8084, 40
    %v9458 = vpop.permute.xlu0 %9457
    %9459 = vrot.lane.b32.xlu0 %v8085, 40
    %v9460 = vpop.permute.xlu0 %9459
    %9461 = vrot.lane.b32.xlu0 %v8086, 40
    %v9462 = vpop.permute.xlu0 %9461
    %9463 = vrot.lane.b32.xlu0 %v8087, 40
    %v9464 = vpop.permute.xlu0 %9463
    %9465 = vrot.lane.b32.xlu0 %v8088, 40
    %v9466 = vpop.permute.xlu0 %9465
    %9467 = vrot.lane.b32.xlu0 %v8089, 40
    %v9468 = vpop.permute.xlu0 %9467
    %9469 = vrot.lane.b32.xlu0 %v8090, 40
    %v9470 = vpop.permute.xlu0 %9469
    %9471 = vrot.lane.b32.xlu0 %v8091, 40
    %v9472 = vpop.permute.xlu0 %9471
    %9473 = vrot.lane.b32.xlu0 %v8092, 40
    %v9474 = vpop.permute.xlu0 %9473
    %9475 = vrot.lane.b32.xlu0 %v8093, 40
    %v9476 = vpop.permute.xlu0 %9475
    %9477 = vrot.lane.b32.xlu0 %v8094, 40
    %v9478 = vpop.permute.xlu0 %9477
    %9479 = vrot.lane.b32.xlu0 %v8095, 40
    %v9480 = vpop.permute.xlu0 %9479
    %9481 = vrot.lane.b32.xlu0 %v8096, 40
    %v9482 = vpop.permute.xlu0 %9481
    %9483 = vrot.lane.b32.xlu0 %v8097, 40
    %v9484 = vpop.permute.xlu0 %9483
    %9485 = vrot.lane.b32.xlu0 %v8098, 40
    %v9486 = vpop.permute.xlu0 %9485
    %9487 = vrot.lane.b32.xlu0 %v8099, 40
    %v9488 = vpop.permute.xlu0 %9487
    %9489 = vrot.lane.b32.xlu0 %v8100, 40
    %v9490 = vpop.permute.xlu0 %9489
    %9491 = vrot.lane.b32.xlu0 %v8101, 40
    %v9492 = vpop.permute.xlu0 %9491
    %9493 = vrot.lane.b32.xlu0 %v8102, 40
    %v9494 = vpop.permute.xlu0 %9493
    %9495 = vrot.lane.b32.xlu0 %v8103, 40
    %v9496 = vpop.permute.xlu0 %9495
    %9497 = vrot.lane.b32.xlu0 %v8104, 40
    %v9498 = vpop.permute.xlu0 %9497
    %9499 = vrot.lane.b32.xlu0 %v8105, 40
    %v9500 = vpop.permute.xlu0 %9499
    %9501 = vrot.lane.b32.xlu0 %v8106, 40
    %v9502 = vpop.permute.xlu0 %9501
    %9503 = vrot.lane.b32.xlu0 %v8107, 40
    %v9504 = vpop.permute.xlu0 %9503
    %9505 = vrot.lane.b32.xlu0 %v8108, 40
    %v9506 = vpop.permute.xlu0 %9505
    %9507 = vrot.lane.b32.xlu0 %v8109, 40
    %v9508 = vpop.permute.xlu0 %9507
    %9509 = vrot.lane.b32.xlu0 %v8110, 40
    %v9510 = vpop.permute.xlu0 %9509
    %9511 = vrot.lane.b32.xlu0 %v8111, 40
    %v9512 = vpop.permute.xlu0 %9511
    %9513 = vrot.lane.b32.xlu0 %v8112, 40
    %v9514 = vpop.permute.xlu0 %9513
    %9515 = vrot.lane.b32.xlu0 %v8113, 40
    %v9516 = vpop.permute.xlu0 %9515
    %9517 = vrot.lane.b32.xlu0 %v8114, 40
    %v9518 = vpop.permute.xlu0 %9517
    %9519 = vrot.lane.b32.xlu0 %v8115, 40
    %v9520 = vpop.permute.xlu0 %9519
    %9521 = vrot.lane.b32.xlu0 %v8116, 40
    %v9522 = vpop.permute.xlu0 %9521
    %9523 = vrot.lane.b32.xlu0 %v8117, 40
    %v9524 = vpop.permute.xlu0 %9523
    %9525 = vrot.lane.b32.xlu0 %v8118, 40
    %v9526 = vpop.permute.xlu0 %9525
    %9655 = vrot.lane.b32.xlu0 %v8119, 48
    %v9656 = vpop.permute.xlu0 %9655
    %9657 = vrot.lane.b32.xlu0 %v8120, 48
    %v9658 = vpop.permute.xlu0 %9657
    %9659 = vrot.lane.b32.xlu0 %v8121, 48
    %v9660 = vpop.permute.xlu0 %9659
    %9661 = vrot.lane.b32.xlu0 %v8122, 48
    %v9662 = vpop.permute.xlu0 %9661
    %9663 = vrot.lane.b32.xlu0 %v8123, 48
    %v9664 = vpop.permute.xlu0 %9663
    %9665 = vrot.lane.b32.xlu0 %v8124, 48
    %v9666 = vpop.permute.xlu0 %9665
    %9667 = vrot.lane.b32.xlu0 %v8125, 48
    %v9668 = vpop.permute.xlu0 %9667
    %9669 = vrot.lane.b32.xlu0 %v8126, 48
    %v9670 = vpop.permute.xlu0 %9669
    %9671 = vrot.lane.b32.xlu0 %v8127, 48
    %v9672 = vpop.permute.xlu0 %9671
    %9673 = vrot.lane.b32.xlu0 %v8128, 48
    %v9674 = vpop.permute.xlu0 %9673
    %9675 = vrot.lane.b32.xlu0 %v8129, 48
    %v9676 = vpop.permute.xlu0 %9675
    %9677 = vrot.lane.b32.xlu0 %v8130, 48
    %v9678 = vpop.permute.xlu0 %9677
    %9679 = vrot.lane.b32.xlu0 %v8131, 48
    %v9680 = vpop.permute.xlu0 %9679
    %9681 = vrot.lane.b32.xlu0 %v8132, 48
    %v9682 = vpop.permute.xlu0 %9681
    %9683 = vrot.lane.b32.xlu0 %v8133, 48
    %v9684 = vpop.permute.xlu0 %9683
    %9685 = vrot.lane.b32.xlu0 %v8134, 48
    %v9686 = vpop.permute.xlu0 %9685
    %9687 = vrot.lane.b32.xlu0 %v8135, 48
    %v9688 = vpop.permute.xlu0 %9687
    %9689 = vrot.lane.b32.xlu0 %v8136, 48
    %v9690 = vpop.permute.xlu0 %9689
    %9691 = vrot.lane.b32.xlu0 %v8137, 48
    %v9692 = vpop.permute.xlu0 %9691
    %9693 = vrot.lane.b32.xlu0 %v8138, 48
    %v9694 = vpop.permute.xlu0 %9693
    %9695 = vrot.lane.b32.xlu0 %v8139, 48
    %v9696 = vpop.permute.xlu0 %9695
    %9697 = vrot.lane.b32.xlu0 %v8140, 48
    %v9698 = vpop.permute.xlu0 %9697
    %9699 = vrot.lane.b32.xlu0 %v8141, 48
    %v9700 = vpop.permute.xlu0 %9699
    %9701 = vrot.lane.b32.xlu0 %v8142, 48
    %v9702 = vpop.permute.xlu0 %9701
    %9703 = vrot.lane.b32.xlu0 %v8143, 48
    %v9704 = vpop.permute.xlu0 %9703
    %9705 = vrot.lane.b32.xlu0 %v8144, 48
    %v9706 = vpop.permute.xlu0 %9705
    %9707 = vrot.lane.b32.xlu0 %v8145, 48
    %v9708 = vpop.permute.xlu0 %9707
    %9709 = vrot.lane.b32.xlu0 %v8146, 48
    %v9710 = vpop.permute.xlu0 %9709
    %9711 = vrot.lane.b32.xlu0 %v8147, 48
    %v9712 = vpop.permute.xlu0 %9711
    %9713 = vrot.lane.b32.xlu0 %v8148, 48
    %v9714 = vpop.permute.xlu0 %9713
    %9715 = vrot.lane.b32.xlu0 %v8149, 48
    %v9716 = vpop.permute.xlu0 %9715
    %9717 = vrot.lane.b32.xlu0 %v8150, 48
    %v9718 = vpop.permute.xlu0 %9717
    %9719 = vrot.lane.b32.xlu0 %v8151, 48
    %v9720 = vpop.permute.xlu0 %9719
    %9721 = vrot.lane.b32.xlu0 %v8152, 48
    %v9722 = vpop.permute.xlu0 %9721
    %9723 = vrot.lane.b32.xlu0 %v8153, 48
    %v9724 = vpop.permute.xlu0 %9723
    %9725 = vrot.lane.b32.xlu0 %v8154, 48
    %v9726 = vpop.permute.xlu0 %9725
    %9727 = vrot.lane.b32.xlu0 %v8155, 48
    %v9728 = vpop.permute.xlu0 %9727
    %9729 = vrot.lane.b32.xlu0 %v8156, 48
    %v9730 = vpop.permute.xlu0 %9729
    %9731 = vrot.lane.b32.xlu0 %v8157, 48
    %v9732 = vpop.permute.xlu0 %9731
    %9733 = vrot.lane.b32.xlu0 %v8158, 48
    %v9734 = vpop.permute.xlu0 %9733
    %9735 = vrot.lane.b32.xlu0 %v8159, 48
    %v9736 = vpop.permute.xlu0 %9735
    %9737 = vrot.lane.b32.xlu0 %v8160, 48
    %v9738 = vpop.permute.xlu0 %9737
    %9739 = vrot.lane.b32.xlu0 %v8161, 48
    %v9740 = vpop.permute.xlu0 %9739
    %9741 = vrot.lane.b32.xlu0 %v8162, 48
    %v9742 = vpop.permute.xlu0 %9741
    %9743 = vrot.lane.b32.xlu0 %v8163, 48
    %v9744 = vpop.permute.xlu0 %9743
    %9745 = vrot.lane.b32.xlu0 %v8164, 48
    %v9746 = vpop.permute.xlu0 %9745
    %9747 = vrot.lane.b32.xlu0 %v8165, 48
    %v9748 = vpop.permute.xlu0 %9747
    %9749 = vrot.lane.b32.xlu0 %v8166, 48
    %v9750 = vpop.permute.xlu0 %9749
    %9751 = vrot.lane.b32.xlu0 %v8167, 48
    %v9752 = vpop.permute.xlu0 %9751
    %9753 = vrot.lane.b32.xlu0 %v8168, 48
    %v9754 = vpop.permute.xlu0 %9753
    %9755 = vrot.lane.b32.xlu0 %v8169, 48
    %v9756 = vpop.permute.xlu0 %9755
    %9757 = vrot.lane.b32.xlu0 %v8170, 48
    %v9758 = vpop.permute.xlu0 %9757
    %9759 = vrot.lane.b32.xlu0 %v8171, 48
    %v9760 = vpop.permute.xlu0 %9759
    %9761 = vrot.lane.b32.xlu0 %v8172, 48
    %v9762 = vpop.permute.xlu0 %9761
    %9763 = vrot.lane.b32.xlu0 %v8173, 48
    %v9764 = vpop.permute.xlu0 %9763
    %9765 = vrot.lane.b32.xlu0 %v8174, 48
    %v9766 = vpop.permute.xlu0 %9765
    %9767 = vrot.lane.b32.xlu0 %v8175, 48
    %v9768 = vpop.permute.xlu0 %9767
    %9769 = vrot.lane.b32.xlu0 %v8176, 48
    %v9770 = vpop.permute.xlu0 %9769
    %9771 = vrot.lane.b32.xlu0 %v8177, 48
    %v9772 = vpop.permute.xlu0 %9771
    %9773 = vrot.lane.b32.xlu0 %v8178, 48
    %v9774 = vpop.permute.xlu0 %9773
    %9775 = vrot.lane.b32.xlu0 %v8179, 48
    %v9776 = vpop.permute.xlu0 %9775
    %9777 = vrot.lane.b32.xlu0 %v8180, 48
    %v9778 = vpop.permute.xlu0 %9777
    %9779 = vrot.lane.b32.xlu0 %v8181, 48
    %v9780 = vpop.permute.xlu0 %9779
    %9781 = vrot.lane.b32.xlu0 %v8182, 48
    %v9782 = vpop.permute.xlu0 %9781
    %9911 = vrot.lane.b32.xlu0 %v8183, 56
    %v9912 = vpop.permute.xlu0 %9911
    %9913 = vrot.lane.b32.xlu0 %v8184, 56
    %v9914 = vpop.permute.xlu0 %9913
    %9915 = vrot.lane.b32.xlu0 %v8185, 56
    %v9916 = vpop.permute.xlu0 %9915
    %9917 = vrot.lane.b32.xlu0 %v8186, 56
    %v9918 = vpop.permute.xlu0 %9917
    %9919 = vrot.lane.b32.xlu0 %v8187, 56
    %v9920 = vpop.permute.xlu0 %9919
    %9921 = vrot.lane.b32.xlu0 %v8188, 56
    %v9922 = vpop.permute.xlu0 %9921
    %9923 = vrot.lane.b32.xlu0 %v8189, 56
    %v9924 = vpop.permute.xlu0 %9923
    %9925 = vrot.lane.b32.xlu0 %v8190, 56
    %v9926 = vpop.permute.xlu0 %9925
    %9927 = vrot.lane.b32.xlu0 %v8191, 56
    %v9928 = vpop.permute.xlu0 %9927
    %9929 = vrot.lane.b32.xlu0 %v8192, 56
    %v9930 = vpop.permute.xlu0 %9929
    %9931 = vrot.lane.b32.xlu0 %v8193, 56
    %v9932 = vpop.permute.xlu0 %9931
    %9933 = vrot.lane.b32.xlu0 %v8194, 56
    %v9934 = vpop.permute.xlu0 %9933
    %9935 = vrot.lane.b32.xlu0 %v8195, 56
    %v9936 = vpop.permute.xlu0 %9935
    %9937 = vrot.lane.b32.xlu0 %v8196, 56
    %v9938 = vpop.permute.xlu0 %9937
    %9939 = vrot.lane.b32.xlu0 %v8197, 56
    %v9940 = vpop.permute.xlu0 %9939
    %9941 = vrot.lane.b32.xlu0 %v8198, 56
    %v9942 = vpop.permute.xlu0 %9941
    %9943 = vrot.lane.b32.xlu0 %v8199, 56
    %v9944 = vpop.permute.xlu0 %9943
    %9945 = vrot.lane.b32.xlu0 %v8200, 56
    %v9946 = vpop.permute.xlu0 %9945
    %9947 = vrot.lane.b32.xlu0 %v8201, 56
    %v9948 = vpop.permute.xlu0 %9947
    %9949 = vrot.lane.b32.xlu0 %v8202, 56
    %v9950 = vpop.permute.xlu0 %9949
    %9951 = vrot.lane.b32.xlu0 %v8203, 56
    %v9952 = vpop.permute.xlu0 %9951
    %9953 = vrot.lane.b32.xlu0 %v8204, 56
    %v9954 = vpop.permute.xlu0 %9953
    %9955 = vrot.lane.b32.xlu0 %v8205, 56
    %v9956 = vpop.permute.xlu0 %9955
    %9957 = vrot.lane.b32.xlu0 %v8206, 56
    %v9958 = vpop.permute.xlu0 %9957
    %9959 = vrot.lane.b32.xlu0 %v8207, 56
    %v9960 = vpop.permute.xlu0 %9959
    %9961 = vrot.lane.b32.xlu0 %v8208, 56
    %v9962 = vpop.permute.xlu0 %9961
    %9963 = vrot.lane.b32.xlu0 %v8209, 56
    %v9964 = vpop.permute.xlu0 %9963
    %9965 = vrot.lane.b32.xlu0 %v8210, 56
    %v9966 = vpop.permute.xlu0 %9965
    %9967 = vrot.lane.b32.xlu0 %v8211, 56
    %v9968 = vpop.permute.xlu0 %9967
    %9969 = vrot.lane.b32.xlu0 %v8212, 56
    %v9970 = vpop.permute.xlu0 %9969
    %9971 = vrot.lane.b32.xlu0 %v8213, 56
    %v9972 = vpop.permute.xlu0 %9971
    %9973 = vrot.lane.b32.xlu0 %v8214, 56
    %v9974 = vpop.permute.xlu0 %9973
    %9975 = vrot.lane.b32.xlu0 %v8215, 56
    %v9976 = vpop.permute.xlu0 %9975
    %9977 = vrot.lane.b32.xlu0 %v8216, 56
    %v9978 = vpop.permute.xlu0 %9977
    %9979 = vrot.lane.b32.xlu0 %v8217, 56
    %v9980 = vpop.permute.xlu0 %9979
    %9981 = vrot.lane.b32.xlu0 %v8218, 56
    %v9982 = vpop.permute.xlu0 %9981
    %9983 = vrot.lane.b32.xlu0 %v8219, 56
    %v9984 = vpop.permute.xlu0 %9983
    %9985 = vrot.lane.b32.xlu0 %v8220, 56
    %v9986 = vpop.permute.xlu0 %9985
    %9987 = vrot.lane.b32.xlu0 %v8221, 56
    %v9988 = vpop.permute.xlu0 %9987
    %9989 = vrot.lane.b32.xlu0 %v8222, 56
    %v9990 = vpop.permute.xlu0 %9989
    %9991 = vrot.lane.b32.xlu0 %v8223, 56
    %v9992 = vpop.permute.xlu0 %9991
    %9993 = vrot.lane.b32.xlu0 %v8224, 56
    %v9994 = vpop.permute.xlu0 %9993
    %9995 = vrot.lane.b32.xlu0 %v8225, 56
    %v9996 = vpop.permute.xlu0 %9995
    %9997 = vrot.lane.b32.xlu0 %v8226, 56
    %v9998 = vpop.permute.xlu0 %9997
    %9999 = vrot.lane.b32.xlu0 %v8227, 56
    %v10000 = vpop.permute.xlu0 %9999
    %10001 = vrot.lane.b32.xlu0 %v8228, 56
    %v10002 = vpop.permute.xlu0 %10001
    %10003 = vrot.lane.b32.xlu0 %v8229, 56
    %v10004 = vpop.permute.xlu0 %10003
    %10005 = vrot.lane.b32.xlu0 %v8230, 56
    %v10006 = vpop.permute.xlu0 %10005
    %10007 = vrot.lane.b32.xlu0 %v8231, 56
    %v10008 = vpop.permute.xlu0 %10007
    %10009 = vrot.lane.b32.xlu0 %v8232, 56
    %v10010 = vpop.permute.xlu0 %10009
    %10011 = vrot.lane.b32.xlu0 %v8233, 56
    %v10012 = vpop.permute.xlu0 %10011
    %10013 = vrot.lane.b32.xlu0 %v8234, 56
    %v10014 = vpop.permute.xlu0 %10013
    %10015 = vrot.lane.b32.xlu0 %v8235, 56
    %v10016 = vpop.permute.xlu0 %10015
    %10017 = vrot.lane.b32.xlu0 %v8236, 56
    %v10018 = vpop.permute.xlu0 %10017
    %10019 = vrot.lane.b32.xlu0 %v8237, 56
    %v10020 = vpop.permute.xlu0 %10019
    %10021 = vrot.lane.b32.xlu0 %v8238, 56
    %v10022 = vpop.permute.xlu0 %10021
    %10023 = vrot.lane.b32.xlu0 %v8239, 56
    %v10024 = vpop.permute.xlu0 %10023
    %10025 = vrot.lane.b32.xlu0 %v8240, 56
    %v10026 = vpop.permute.xlu0 %10025
    %10027 = vrot.lane.b32.xlu0 %v8241, 56
    %v10028 = vpop.permute.xlu0 %10027
    %10029 = vrot.lane.b32.xlu0 %v8242, 56
    %v10030 = vpop.permute.xlu0 %10029
    %10031 = vrot.lane.b32.xlu0 %v8243, 56
    %v10032 = vpop.permute.xlu0 %10031
    %10033 = vrot.lane.b32.xlu0 %v8244, 56
    %v10034 = vpop.permute.xlu0 %10033
    %10035 = vrot.lane.b32.xlu0 %v8245, 56
    %v10036 = vpop.permute.xlu0 %10035
    %10037 = vrot.lane.b32.xlu0 %v8246, 56
    %v10038 = vpop.permute.xlu0 %10037
    %10167 = vrot.lane.b32.xlu0 %v8247, 64
    %v10168 = vpop.permute.xlu0 %10167
    %10169 = vrot.lane.b32.xlu0 %v8248, 64
    %v10170 = vpop.permute.xlu0 %10169
    %10171 = vrot.lane.b32.xlu0 %v8249, 64
    %v10172 = vpop.permute.xlu0 %10171
    %10173 = vrot.lane.b32.xlu0 %v8250, 64
    %v10174 = vpop.permute.xlu0 %10173
    %10175 = vrot.lane.b32.xlu0 %v8251, 64
    %v10176 = vpop.permute.xlu0 %10175
    %10177 = vrot.lane.b32.xlu0 %v8252, 64
    %v10178 = vpop.permute.xlu0 %10177
    %10179 = vrot.lane.b32.xlu0 %v8253, 64
    %v10180 = vpop.permute.xlu0 %10179
    %10181 = vrot.lane.b32.xlu0 %v8254, 64
    %v10182 = vpop.permute.xlu0 %10181
    %10183 = vrot.lane.b32.xlu0 %v8255, 64
    %v10184 = vpop.permute.xlu0 %10183
    %10185 = vrot.lane.b32.xlu0 %v8256, 64
    %v10186 = vpop.permute.xlu0 %10185
    %10187 = vrot.lane.b32.xlu0 %v8257, 64
    %v10188 = vpop.permute.xlu0 %10187
    %10189 = vrot.lane.b32.xlu0 %v8258, 64
    %v10190 = vpop.permute.xlu0 %10189
    %10191 = vrot.lane.b32.xlu0 %v8259, 64
    %v10192 = vpop.permute.xlu0 %10191
    %10193 = vrot.lane.b32.xlu0 %v8260, 64
    %v10194 = vpop.permute.xlu0 %10193
    %10195 = vrot.lane.b32.xlu0 %v8261, 64
    %v10196 = vpop.permute.xlu0 %10195
    %10197 = vrot.lane.b32.xlu0 %v8262, 64
    %v10198 = vpop.permute.xlu0 %10197
    %10199 = vrot.lane.b32.xlu0 %v8263, 64
    %v10200 = vpop.permute.xlu0 %10199
    %10201 = vrot.lane.b32.xlu0 %v8264, 64
    %v10202 = vpop.permute.xlu0 %10201
    %10203 = vrot.lane.b32.xlu0 %v8265, 64
    %v10204 = vpop.permute.xlu0 %10203
    %10205 = vrot.lane.b32.xlu0 %v8266, 64
    %v10206 = vpop.permute.xlu0 %10205
    %10207 = vrot.lane.b32.xlu0 %v8267, 64
    %v10208 = vpop.permute.xlu0 %10207
    %10209 = vrot.lane.b32.xlu0 %v8268, 64
    %v10210 = vpop.permute.xlu0 %10209
    %10211 = vrot.lane.b32.xlu0 %v8269, 64
    %v10212 = vpop.permute.xlu0 %10211
    %10213 = vrot.lane.b32.xlu0 %v8270, 64
    %v10214 = vpop.permute.xlu0 %10213
    %10215 = vrot.lane.b32.xlu0 %v8271, 64
    %v10216 = vpop.permute.xlu0 %10215
    %10217 = vrot.lane.b32.xlu0 %v8272, 64
    %v10218 = vpop.permute.xlu0 %10217
    %10219 = vrot.lane.b32.xlu0 %v8273, 64
    %v10220 = vpop.permute.xlu0 %10219
    %10221 = vrot.lane.b32.xlu0 %v8274, 64
    %v10222 = vpop.permute.xlu0 %10221
    %10223 = vrot.lane.b32.xlu0 %v8275, 64
    %v10224 = vpop.permute.xlu0 %10223
    %10225 = vrot.lane.b32.xlu0 %v8276, 64
    %v10226 = vpop.permute.xlu0 %10225
    %10227 = vrot.lane.b32.xlu0 %v8277, 64
    %v10228 = vpop.permute.xlu0 %10227
    %10229 = vrot.lane.b32.xlu0 %v8278, 64
    %v10230 = vpop.permute.xlu0 %10229
    %10231 = vrot.lane.b32.xlu0 %v8279, 64
    %v10232 = vpop.permute.xlu0 %10231
    %10233 = vrot.lane.b32.xlu0 %v8280, 64
    %v10234 = vpop.permute.xlu0 %10233
    %10235 = vrot.lane.b32.xlu0 %v8281, 64
    %v10236 = vpop.permute.xlu0 %10235
    %10237 = vrot.lane.b32.xlu0 %v8282, 64
    %v10238 = vpop.permute.xlu0 %10237
    %10239 = vrot.lane.b32.xlu0 %v8283, 64
    %v10240 = vpop.permute.xlu0 %10239
    %10241 = vrot.lane.b32.xlu0 %v8284, 64
    %v10242 = vpop.permute.xlu0 %10241
    %10243 = vrot.lane.b32.xlu0 %v8285, 64
    %v10244 = vpop.permute.xlu0 %10243
    %10245 = vrot.lane.b32.xlu0 %v8286, 64
    %v10246 = vpop.permute.xlu0 %10245
    %10247 = vrot.lane.b32.xlu0 %v8287, 64
    %v10248 = vpop.permute.xlu0 %10247
    %10249 = vrot.lane.b32.xlu0 %v8288, 64
    %v10250 = vpop.permute.xlu0 %10249
    %10251 = vrot.lane.b32.xlu0 %v8289, 64
    %v10252 = vpop.permute.xlu0 %10251
    %10253 = vrot.lane.b32.xlu0 %v8290, 64
    %v10254 = vpop.permute.xlu0 %10253
    %10255 = vrot.lane.b32.xlu0 %v8291, 64
    %v10256 = vpop.permute.xlu0 %10255
    %10257 = vrot.lane.b32.xlu0 %v8292, 64
    %v10258 = vpop.permute.xlu0 %10257
    %10259 = vrot.lane.b32.xlu0 %v8293, 64
    %v10260 = vpop.permute.xlu0 %10259
    %10261 = vrot.lane.b32.xlu0 %v8294, 64
    %v10262 = vpop.permute.xlu0 %10261
    %10263 = vrot.lane.b32.xlu0 %v8295, 64
    %v10264 = vpop.permute.xlu0 %10263
    %10265 = vrot.lane.b32.xlu0 %v8296, 64
    %v10266 = vpop.permute.xlu0 %10265
    %10267 = vrot.lane.b32.xlu0 %v8297, 64
    %v10268 = vpop.permute.xlu0 %10267
    %10269 = vrot.lane.b32.xlu0 %v8298, 64
    %v10270 = vpop.permute.xlu0 %10269
    %10271 = vrot.lane.b32.xlu0 %v8299, 64
    %v10272 = vpop.permute.xlu0 %10271
    %10273 = vrot.lane.b32.xlu0 %v8300, 64
    %v10274 = vpop.permute.xlu0 %10273
    %10275 = vrot.lane.b32.xlu0 %v8301, 64
    %v10276 = vpop.permute.xlu0 %10275
    %10277 = vrot.lane.b32.xlu0 %v8302, 64
    %v10278 = vpop.permute.xlu0 %10277
    %10279 = vrot.lane.b32.xlu0 %v8303, 64
    %v10280 = vpop.permute.xlu0 %10279
    %10281 = vrot.lane.b32.xlu0 %v8304, 64
    %v10282 = vpop.permute.xlu0 %10281
    %10283 = vrot.lane.b32.xlu0 %v8305, 64
    %v10284 = vpop.permute.xlu0 %10283
    %10285 = vrot.lane.b32.xlu0 %v8306, 64
    %v10286 = vpop.permute.xlu0 %10285
    %10287 = vrot.lane.b32.xlu0 %v8307, 64
    %v10288 = vpop.permute.xlu0 %10287
    %10289 = vrot.lane.b32.xlu0 %v8308, 64
    %v10290 = vpop.permute.xlu0 %10289
    %10291 = vrot.lane.b32.xlu0 %v8309, 64
    %v10292 = vpop.permute.xlu0 %10291
    %10293 = vrot.lane.b32.xlu0 %v8310, 64
    %v10294 = vpop.permute.xlu0 %10293
    %v10359 = vsel %vm41, %v7735, %v8376
    %v10360 = vsel %vm41, %v7736, %v8378
    %v10361 = vsel %vm41, %v7737, %v8380
    %v10362 = vsel %vm41, %v7738, %v8382
    %v10363 = vsel %vm41, %v7739, %v8384
    %v10364 = vsel %vm41, %v7740, %v8386
    %v10365 = vsel %vm41, %v7741, %v8388
    %v10366 = vsel %vm41, %v7742, %v8390
    %v10367 = vsel %vm41, %v7743, %v8392
    %v10368 = vsel %vm41, %v7744, %v8394
    %v10369 = vsel %vm41, %v7745, %v8396
    %v10370 = vsel %vm41, %v7746, %v8398
    %v10371 = vsel %vm41, %v7747, %v8400
    %v10372 = vsel %vm41, %v7748, %v8402
    %v10373 = vsel %vm41, %v7749, %v8404
    %v10374 = vsel %vm41, %v7750, %v8406
    %v10375 = vsel %vm41, %v7751, %v8408
    %v10376 = vsel %vm41, %v7752, %v8410
    %v10377 = vsel %vm41, %v7753, %v8412
    %v10378 = vsel %vm41, %v7754, %v8414
    %v10379 = vsel %vm41, %v7755, %v8416
    %v10380 = vsel %vm41, %v7756, %v8418
    %v10381 = vsel %vm41, %v7757, %v8420
    %v10382 = vsel %vm41, %v7758, %v8422
    %v10383 = vsel %vm41, %v7759, %v8424
    %v10384 = vsel %vm41, %v7760, %v8426
    %v10385 = vsel %vm41, %v7761, %v8428
    %v10386 = vsel %vm41, %v7762, %v8430
    %v10387 = vsel %vm41, %v7763, %v8432
    %v10388 = vsel %vm41, %v7764, %v8434
    %v10389 = vsel %vm41, %v7765, %v8436
    %v10390 = vsel %vm41, %v7766, %v8438
    %v10391 = vsel %vm41, %v7767, %v8440
    %v10392 = vsel %vm41, %v7768, %v8442
    %v10393 = vsel %vm41, %v7769, %v8444
    %v10394 = vsel %vm41, %v7770, %v8446
    %v10395 = vsel %vm41, %v7771, %v8448
    %v10396 = vsel %vm41, %v7772, %v8450
    %v10397 = vsel %vm41, %v7773, %v8452
    %v10398 = vsel %vm41, %v7774, %v8454
    %v10399 = vsel %vm41, %v7775, %v8456
    %v10400 = vsel %vm41, %v7776, %v8458
    %v10401 = vsel %vm41, %v7777, %v8460
    %v10402 = vsel %vm41, %v7778, %v8462
    %v10403 = vsel %vm41, %v7779, %v8464
    %v10404 = vsel %vm41, %v7780, %v8466
    %v10405 = vsel %vm41, %v7781, %v8468
    %v10406 = vsel %vm41, %v7782, %v8470
    %v10407 = vsel %vm41, %v7783, %v8472
    %v10408 = vsel %vm41, %v7784, %v8474
    %v10409 = vsel %vm41, %v7785, %v8476
    %v10410 = vsel %vm41, %v7786, %v8478
    %v10411 = vsel %vm41, %v7787, %v8480
    %v10412 = vsel %vm41, %v7788, %v8482
    %v10413 = vsel %vm41, %v7789, %v8484
    %v10414 = vsel %vm41, %v7790, %v8486
    %v10415 = vsel %vm41, %v7791, %v8488
    %v10416 = vsel %vm41, %v7792, %v8490
    %v10417 = vsel %vm41, %v7793, %v8492
    %v10418 = vsel %vm41, %v7794, %v8494
    %v10419 = vsel %vm41, %v7795, %v8496
    %v10420 = vsel %vm41, %v7796, %v8498
    %v10421 = vsel %vm41, %v7797, %v8500
    %v10422 = vsel %vm41, %v7798, %v8502
    %v10423 = vsel %vm6688, %v10359, %v8632
    %v10424 = vsel %vm6688, %v10360, %v8634
    %v10425 = vsel %vm6688, %v10361, %v8636
    %v10426 = vsel %vm6688, %v10362, %v8638
    %v10427 = vsel %vm6688, %v10363, %v8640
    %v10428 = vsel %vm6688, %v10364, %v8642
    %v10429 = vsel %vm6688, %v10365, %v8644
    %v10430 = vsel %vm6688, %v10366, %v8646
    %v10431 = vsel %vm6688, %v10367, %v8648
    %v10432 = vsel %vm6688, %v10368, %v8650
    %v10433 = vsel %vm6688, %v10369, %v8652
    %v10434 = vsel %vm6688, %v10370, %v8654
    %v10435 = vsel %vm6688, %v10371, %v8656
    %v10436 = vsel %vm6688, %v10372, %v8658
    %v10437 = vsel %vm6688, %v10373, %v8660
    %v10438 = vsel %vm6688, %v10374, %v8662
    %v10439 = vsel %vm6688, %v10375, %v8664
    %v10440 = vsel %vm6688, %v10376, %v8666
    %v10441 = vsel %vm6688, %v10377, %v8668
    %v10442 = vsel %vm6688, %v10378, %v8670
    %v10443 = vsel %vm6688, %v10379, %v8672
    %v10444 = vsel %vm6688, %v10380, %v8674
    %v10445 = vsel %vm6688, %v10381, %v8676
    %v10446 = vsel %vm6688, %v10382, %v8678
    %v10447 = vsel %vm6688, %v10383, %v8680
    %v10448 = vsel %vm6688, %v10384, %v8682
    %v10449 = vsel %vm6688, %v10385, %v8684
    %v10450 = vsel %vm6688, %v10386, %v8686
    %v10451 = vsel %vm6688, %v10387, %v8688
    %v10452 = vsel %vm6688, %v10388, %v8690
    %v10453 = vsel %vm6688, %v10389, %v8692
    %v10454 = vsel %vm6688, %v10390, %v8694
    %v10455 = vsel %vm6688, %v10391, %v8696
    %v10456 = vsel %vm6688, %v10392, %v8698
    %v10457 = vsel %vm6688, %v10393, %v8700
    %v10458 = vsel %vm6688, %v10394, %v8702
    %v10459 = vsel %vm6688, %v10395, %v8704
    %v10460 = vsel %vm6688, %v10396, %v8706
    %v10461 = vsel %vm6688, %v10397, %v8708
    %v10462 = vsel %vm6688, %v10398, %v8710
    %v10463 = vsel %vm6688, %v10399, %v8712
    %v10464 = vsel %vm6688, %v10400, %v8714
    %v10465 = vsel %vm6688, %v10401, %v8716
    %v10466 = vsel %vm6688, %v10402, %v8718
    %v10467 = vsel %vm6688, %v10403, %v8720
    %v10468 = vsel %vm6688, %v10404, %v8722
    %v10469 = vsel %vm6688, %v10405, %v8724
    %v10470 = vsel %vm6688, %v10406, %v8726
    %v10471 = vsel %vm6688, %v10407, %v8728
    %v10472 = vsel %vm6688, %v10408, %v8730
    %v10473 = vsel %vm6688, %v10409, %v8732
    %v10474 = vsel %vm6688, %v10410, %v8734
    %v10475 = vsel %vm6688, %v10411, %v8736
    %v10476 = vsel %vm6688, %v10412, %v8738
    %v10477 = vsel %vm6688, %v10413, %v8740
    %v10478 = vsel %vm6688, %v10414, %v8742
    %v10479 = vsel %vm6688, %v10415, %v8744
    %v10480 = vsel %vm6688, %v10416, %v8746
    %v10481 = vsel %vm6688, %v10417, %v8748
    %v10482 = vsel %vm6688, %v10418, %v8750
    %v10483 = vsel %vm6688, %v10419, %v8752
    %v10484 = vsel %vm6688, %v10420, %v8754
    %v10485 = vsel %vm6688, %v10421, %v8756
    %v10486 = vsel %vm6688, %v10422, %v8758
    %v10487 = vsel %vm3360, %v10423, %v8888
    %v10488 = vsel %vm3360, %v10424, %v8890
    %v10489 = vsel %vm3360, %v10425, %v8892
    %v10490 = vsel %vm3360, %v10426, %v8894
    %v10491 = vsel %vm3360, %v10427, %v8896
    %v10492 = vsel %vm3360, %v10428, %v8898
    %v10493 = vsel %vm3360, %v10429, %v8900
    %v10494 = vsel %vm3360, %v10430, %v8902
    %v10495 = vsel %vm3360, %v10431, %v8904
    %v10496 = vsel %vm3360, %v10432, %v8906
    %v10497 = vsel %vm3360, %v10433, %v8908
    %v10498 = vsel %vm3360, %v10434, %v8910
    %v10499 = vsel %vm3360, %v10435, %v8912
    %v10500 = vsel %vm3360, %v10436, %v8914
    %v10501 = vsel %vm3360, %v10437, %v8916
    %v10502 = vsel %vm3360, %v10438, %v8918
    %v10503 = vsel %vm3360, %v10439, %v8920
    %v10504 = vsel %vm3360, %v10440, %v8922
    %v10505 = vsel %vm3360, %v10441, %v8924
    %v10506 = vsel %vm3360, %v10442, %v8926
    %v10507 = vsel %vm3360, %v10443, %v8928
    %v10508 = vsel %vm3360, %v10444, %v8930
    %v10509 = vsel %vm3360, %v10445, %v8932
    %v10510 = vsel %vm3360, %v10446, %v8934
    %v10511 = vsel %vm3360, %v10447, %v8936
    %v10512 = vsel %vm3360, %v10448, %v8938
    %v10513 = vsel %vm3360, %v10449, %v8940
    %v10514 = vsel %vm3360, %v10450, %v8942
    %v10515 = vsel %vm3360, %v10451, %v8944
    %v10516 = vsel %vm3360, %v10452, %v8946
    %v10517 = vsel %vm3360, %v10453, %v8948
    %v10518 = vsel %vm3360, %v10454, %v8950
    %v10519 = vsel %vm3360, %v10455, %v8952
    %v10520 = vsel %vm3360, %v10456, %v8954
    %v10521 = vsel %vm3360, %v10457, %v8956
    %v10522 = vsel %vm3360, %v10458, %v8958
    %v10523 = vsel %vm3360, %v10459, %v8960
    %v10524 = vsel %vm3360, %v10460, %v8962
    %v10525 = vsel %vm3360, %v10461, %v8964
    %v10526 = vsel %vm3360, %v10462, %v8966
    %v10527 = vsel %vm3360, %v10463, %v8968
    %v10528 = vsel %vm3360, %v10464, %v8970
    %v10529 = vsel %vm3360, %v10465, %v8972
    %v10530 = vsel %vm3360, %v10466, %v8974
    %v10531 = vsel %vm3360, %v10467, %v8976
    %v10532 = vsel %vm3360, %v10468, %v8978
    %v10533 = vsel %vm3360, %v10469, %v8980
    %v10534 = vsel %vm3360, %v10470, %v8982
    %v10535 = vsel %vm3360, %v10471, %v8984
    %v10536 = vsel %vm3360, %v10472, %v8986
    %v10537 = vsel %vm3360, %v10473, %v8988
    %v10538 = vsel %vm3360, %v10474, %v8990
    %v10539 = vsel %vm3360, %v10475, %v8992
    %v10540 = vsel %vm3360, %v10476, %v8994
    %v10541 = vsel %vm3360, %v10477, %v8996
    %v10542 = vsel %vm3360, %v10478, %v8998
    %v10543 = vsel %vm3360, %v10479, %v9000
    %v10544 = vsel %vm3360, %v10480, %v9002
    %v10545 = vsel %vm3360, %v10481, %v9004
    %v10546 = vsel %vm3360, %v10482, %v9006
    %v10547 = vsel %vm3360, %v10483, %v9008
    %v10548 = vsel %vm3360, %v10484, %v9010
    %v10549 = vsel %vm3360, %v10485, %v9012
    %v10550 = vsel %vm3360, %v10486, %v9014
    %v10551 = vsel %vm6817, %v10487, %v9144
    %v10552 = vsel %vm6817, %v10488, %v9146
    %v10553 = vsel %vm6817, %v10489, %v9148
    %v10554 = vsel %vm6817, %v10490, %v9150
    %v10555 = vsel %vm6817, %v10491, %v9152
    %v10556 = vsel %vm6817, %v10492, %v9154
    %v10557 = vsel %vm6817, %v10493, %v9156
    %v10558 = vsel %vm6817, %v10494, %v9158
    %v10559 = vsel %vm6817, %v10495, %v9160
    %v10560 = vsel %vm6817, %v10496, %v9162
    %v10561 = vsel %vm6817, %v10497, %v9164
    %v10562 = vsel %vm6817, %v10498, %v9166
    %v10563 = vsel %vm6817, %v10499, %v9168
    %v10564 = vsel %vm6817, %v10500, %v9170
    %v10565 = vsel %vm6817, %v10501, %v9172
    %v10566 = vsel %vm6817, %v10502, %v9174
    %v10567 = vsel %vm6817, %v10503, %v9176
    %v10568 = vsel %vm6817, %v10504, %v9178
    %v10569 = vsel %vm6817, %v10505, %v9180
    %v10570 = vsel %vm6817, %v10506, %v9182
    %v10571 = vsel %vm6817, %v10507, %v9184
    %v10572 = vsel %vm6817, %v10508, %v9186
    %v10573 = vsel %vm6817, %v10509, %v9188
    %v10574 = vsel %vm6817, %v10510, %v9190
    %v10575 = vsel %vm6817, %v10511, %v9192
    %v10576 = vsel %vm6817, %v10512, %v9194
    %v10577 = vsel %vm6817, %v10513, %v9196
    %v10578 = vsel %vm6817, %v10514, %v9198
    %v10579 = vsel %vm6817, %v10515, %v9200
    %v10580 = vsel %vm6817, %v10516, %v9202
    %v10581 = vsel %vm6817, %v10517, %v9204
    %v10582 = vsel %vm6817, %v10518, %v9206
    %v10583 = vsel %vm6817, %v10519, %v9208
    %v10584 = vsel %vm6817, %v10520, %v9210
    %v10585 = vsel %vm6817, %v10521, %v9212
    %v10586 = vsel %vm6817, %v10522, %v9214
    %v10587 = vsel %vm6817, %v10523, %v9216
    %v10588 = vsel %vm6817, %v10524, %v9218
    %v10589 = vsel %vm6817, %v10525, %v9220
    %v10590 = vsel %vm6817, %v10526, %v9222
    %v10591 = vsel %vm6817, %v10527, %v9224
    %v10592 = vsel %vm6817, %v10528, %v9226
    %v10593 = vsel %vm6817, %v10529, %v9228
    %v10594 = vsel %vm6817, %v10530, %v9230
    %v10595 = vsel %vm6817, %v10531, %v9232
    %v10596 = vsel %vm6817, %v10532, %v9234
    %v10597 = vsel %vm6817, %v10533, %v9236
    %v10598 = vsel %vm6817, %v10534, %v9238
    %v10599 = vsel %vm6817, %v10535, %v9240
    %v10600 = vsel %vm6817, %v10536, %v9242
    %v10601 = vsel %vm6817, %v10537, %v9244
    %v10602 = vsel %vm6817, %v10538, %v9246
    %v10603 = vsel %vm6817, %v10539, %v9248
    %v10604 = vsel %vm6817, %v10540, %v9250
    %v10605 = vsel %vm6817, %v10541, %v9252
    %v10606 = vsel %vm6817, %v10542, %v9254
    %v10607 = vsel %vm6817, %v10543, %v9256
    %v10608 = vsel %vm6817, %v10544, %v9258
    %v10609 = vsel %vm6817, %v10545, %v9260
    %v10610 = vsel %vm6817, %v10546, %v9262
    %v10611 = vsel %vm6817, %v10547, %v9264
    %v10612 = vsel %vm6817, %v10548, %v9266
    %v10613 = vsel %vm6817, %v10549, %v9268
    %v10614 = vsel %vm6817, %v10550, %v9270
    %v10615 = vsel %vm6882, %v10551, %v9400
    %v10616 = vsel %vm6882, %v10552, %v9402
    %v10617 = vsel %vm6882, %v10553, %v9404
    %v10618 = vsel %vm6882, %v10554, %v9406
    %v10619 = vsel %vm6882, %v10555, %v9408
    %v10620 = vsel %vm6882, %v10556, %v9410
    %v10621 = vsel %vm6882, %v10557, %v9412
    %v10622 = vsel %vm6882, %v10558, %v9414
    %v10623 = vsel %vm6882, %v10559, %v9416
    %v10624 = vsel %vm6882, %v10560, %v9418
    %v10625 = vsel %vm6882, %v10561, %v9420
    %v10626 = vsel %vm6882, %v10562, %v9422
    %v10627 = vsel %vm6882, %v10563, %v9424
    %v10628 = vsel %vm6882, %v10564, %v9426
    %v10629 = vsel %vm6882, %v10565, %v9428
    %v10630 = vsel %vm6882, %v10566, %v9430
    %v10631 = vsel %vm6882, %v10567, %v9432
    %v10632 = vsel %vm6882, %v10568, %v9434
    %v10633 = vsel %vm6882, %v10569, %v9436
    %v10634 = vsel %vm6882, %v10570, %v9438
    %v10635 = vsel %vm6882, %v10571, %v9440
    %v10636 = vsel %vm6882, %v10572, %v9442
    %v10637 = vsel %vm6882, %v10573, %v9444
    %v10638 = vsel %vm6882, %v10574, %v9446
    %v10639 = vsel %vm6882, %v10575, %v9448
    %v10640 = vsel %vm6882, %v10576, %v9450
    %v10641 = vsel %vm6882, %v10577, %v9452
    %v10642 = vsel %vm6882, %v10578, %v9454
    %v10643 = vsel %vm6882, %v10579, %v9456
    %v10644 = vsel %vm6882, %v10580, %v9458
    %v10645 = vsel %vm6882, %v10581, %v9460
    %v10646 = vsel %vm6882, %v10582, %v9462
    %v10647 = vsel %vm6882, %v10583, %v9464
    %v10648 = vsel %vm6882, %v10584, %v9466
    %v10649 = vsel %vm6882, %v10585, %v9468
    %v10650 = vsel %vm6882, %v10586, %v9470
    %v10651 = vsel %vm6882, %v10587, %v9472
    %v10652 = vsel %vm6882, %v10588, %v9474
    %v10653 = vsel %vm6882, %v10589, %v9476
    %v10654 = vsel %vm6882, %v10590, %v9478
    %v10655 = vsel %vm6882, %v10591, %v9480
    %v10656 = vsel %vm6882, %v10592, %v9482
    %v10657 = vsel %vm6882, %v10593, %v9484
    %v10658 = vsel %vm6882, %v10594, %v9486
    %v10659 = vsel %vm6882, %v10595, %v9488
    %v10660 = vsel %vm6882, %v10596, %v9490
    %v10661 = vsel %vm6882, %v10597, %v9492
    %v10662 = vsel %vm6882, %v10598, %v9494
    %v10663 = vsel %vm6882, %v10599, %v9496
    %v10664 = vsel %vm6882, %v10600, %v9498
    %v10665 = vsel %vm6882, %v10601, %v9500
    %v10666 = vsel %vm6882, %v10602, %v9502
    %v10667 = vsel %vm6882, %v10603, %v9504
    %v10668 = vsel %vm6882, %v10604, %v9506
    %v10669 = vsel %vm6882, %v10605, %v9508
    %v10670 = vsel %vm6882, %v10606, %v9510
    %v10671 = vsel %vm6882, %v10607, %v9512
    %v10672 = vsel %vm6882, %v10608, %v9514
    %v10673 = vsel %vm6882, %v10609, %v9516
    %v10674 = vsel %vm6882, %v10610, %v9518
    %v10675 = vsel %vm6882, %v10611, %v9520
    %v10676 = vsel %vm6882, %v10612, %v9522
    %v10677 = vsel %vm6882, %v10613, %v9524
    %v10678 = vsel %vm6882, %v10614, %v9526
    %v10679 = vsel %vm6947, %v10615, %v9656
    %v10680 = vsel %vm6947, %v10616, %v9658
    %v10681 = vsel %vm6947, %v10617, %v9660
    %v10682 = vsel %vm6947, %v10618, %v9662
    %v10683 = vsel %vm6947, %v10619, %v9664
    %v10684 = vsel %vm6947, %v10620, %v9666
    %v10685 = vsel %vm6947, %v10621, %v9668
    %v10686 = vsel %vm6947, %v10622, %v9670
    %v10687 = vsel %vm6947, %v10623, %v9672
    %v10688 = vsel %vm6947, %v10624, %v9674
    %v10689 = vsel %vm6947, %v10625, %v9676
    %v10690 = vsel %vm6947, %v10626, %v9678
    %v10691 = vsel %vm6947, %v10627, %v9680
    %v10692 = vsel %vm6947, %v10628, %v9682
    %v10693 = vsel %vm6947, %v10629, %v9684
    %v10694 = vsel %vm6947, %v10630, %v9686
    %v10695 = vsel %vm6947, %v10631, %v9688
    %v10696 = vsel %vm6947, %v10632, %v9690
    %v10697 = vsel %vm6947, %v10633, %v9692
    %v10698 = vsel %vm6947, %v10634, %v9694
    %v10699 = vsel %vm6947, %v10635, %v9696
    %v10700 = vsel %vm6947, %v10636, %v9698
    %v10701 = vsel %vm6947, %v10637, %v9700
    %v10702 = vsel %vm6947, %v10638, %v9702
    %v10703 = vsel %vm6947, %v10639, %v9704
    %v10704 = vsel %vm6947, %v10640, %v9706
    %v10705 = vsel %vm6947, %v10641, %v9708
    %v10706 = vsel %vm6947, %v10642, %v9710
    %v10707 = vsel %vm6947, %v10643, %v9712
    %v10708 = vsel %vm6947, %v10644, %v9714
    %v10709 = vsel %vm6947, %v10645, %v9716
    %v10710 = vsel %vm6947, %v10646, %v9718
    %v10711 = vsel %vm6947, %v10647, %v9720
    %v10712 = vsel %vm6947, %v10648, %v9722
    %v10713 = vsel %vm6947, %v10649, %v9724
    %v10714 = vsel %vm6947, %v10650, %v9726
    %v10715 = vsel %vm6947, %v10651, %v9728
    %v10716 = vsel %vm6947, %v10652, %v9730
    %v10717 = vsel %vm6947, %v10653, %v9732
    %v10718 = vsel %vm6947, %v10654, %v9734
    %v10719 = vsel %vm6947, %v10655, %v9736
    %v10720 = vsel %vm6947, %v10656, %v9738
    %v10721 = vsel %vm6947, %v10657, %v9740
    %v10722 = vsel %vm6947, %v10658, %v9742
    %v10723 = vsel %vm6947, %v10659, %v9744
    %v10724 = vsel %vm6947, %v10660, %v9746
    %v10725 = vsel %vm6947, %v10661, %v9748
    %v10726 = vsel %vm6947, %v10662, %v9750
    %v10727 = vsel %vm6947, %v10663, %v9752
    %v10728 = vsel %vm6947, %v10664, %v9754
    %v10729 = vsel %vm6947, %v10665, %v9756
    %v10730 = vsel %vm6947, %v10666, %v9758
    %v10731 = vsel %vm6947, %v10667, %v9760
    %v10732 = vsel %vm6947, %v10668, %v9762
    %v10733 = vsel %vm6947, %v10669, %v9764
    %v10734 = vsel %vm6947, %v10670, %v9766
    %v10735 = vsel %vm6947, %v10671, %v9768
    %v10736 = vsel %vm6947, %v10672, %v9770
    %v10737 = vsel %vm6947, %v10673, %v9772
    %v10738 = vsel %vm6947, %v10674, %v9774
    %v10739 = vsel %vm6947, %v10675, %v9776
    %v10740 = vsel %vm6947, %v10676, %v9778
    %v10741 = vsel %vm6947, %v10677, %v9780
    %v10742 = vsel %vm6947, %v10678, %v9782
    %v10743 = vsel %vm7012, %v10679, %v9912
    %v10744 = vsel %vm7012, %v10680, %v9914
    %v10745 = vsel %vm7012, %v10681, %v9916
    %v10746 = vsel %vm7012, %v10682, %v9918
    %v10747 = vsel %vm7012, %v10683, %v9920
    %v10748 = vsel %vm7012, %v10684, %v9922
    %v10749 = vsel %vm7012, %v10685, %v9924
    %v10750 = vsel %vm7012, %v10686, %v9926
    %v10751 = vsel %vm7012, %v10687, %v9928
    %v10752 = vsel %vm7012, %v10688, %v9930
    %v10753 = vsel %vm7012, %v10689, %v9932
    %v10754 = vsel %vm7012, %v10690, %v9934
    %v10755 = vsel %vm7012, %v10691, %v9936
    %v10756 = vsel %vm7012, %v10692, %v9938
    %v10757 = vsel %vm7012, %v10693, %v9940
    %v10758 = vsel %vm7012, %v10694, %v9942
    %v10759 = vsel %vm7012, %v10695, %v9944
    %v10760 = vsel %vm7012, %v10696, %v9946
    %v10761 = vsel %vm7012, %v10697, %v9948
    %v10762 = vsel %vm7012, %v10698, %v9950
    %v10763 = vsel %vm7012, %v10699, %v9952
    %v10764 = vsel %vm7012, %v10700, %v9954
    %v10765 = vsel %vm7012, %v10701, %v9956
    %v10766 = vsel %vm7012, %v10702, %v9958
    %v10767 = vsel %vm7012, %v10703, %v9960
    %v10768 = vsel %vm7012, %v10704, %v9962
    %v10769 = vsel %vm7012, %v10705, %v9964
    %v10770 = vsel %vm7012, %v10706, %v9966
    %v10771 = vsel %vm7012, %v10707, %v9968
    %v10772 = vsel %vm7012, %v10708, %v9970
    %v10773 = vsel %vm7012, %v10709, %v9972
    %v10774 = vsel %vm7012, %v10710, %v9974
    %v10775 = vsel %vm7012, %v10711, %v9976
    %v10776 = vsel %vm7012, %v10712, %v9978
    %v10777 = vsel %vm7012, %v10713, %v9980
    %v10778 = vsel %vm7012, %v10714, %v9982
    %v10779 = vsel %vm7012, %v10715, %v9984
    %v10780 = vsel %vm7012, %v10716, %v9986
    %v10781 = vsel %vm7012, %v10717, %v9988
    %v10782 = vsel %vm7012, %v10718, %v9990
    %v10783 = vsel %vm7012, %v10719, %v9992
    %v10784 = vsel %vm7012, %v10720, %v9994
    %v10785 = vsel %vm7012, %v10721, %v9996
    %v10786 = vsel %vm7012, %v10722, %v9998
    %v10787 = vsel %vm7012, %v10723, %v10000
    %v10788 = vsel %vm7012, %v10724, %v10002
    %v10789 = vsel %vm7012, %v10725, %v10004
    %v10790 = vsel %vm7012, %v10726, %v10006
    %v10791 = vsel %vm7012, %v10727, %v10008
    %v10792 = vsel %vm7012, %v10728, %v10010
    %v10793 = vsel %vm7012, %v10729, %v10012
    %v10794 = vsel %vm7012, %v10730, %v10014
    %v10795 = vsel %vm7012, %v10731, %v10016
    %v10796 = vsel %vm7012, %v10732, %v10018
    %v10797 = vsel %vm7012, %v10733, %v10020
    %v10798 = vsel %vm7012, %v10734, %v10022
    %v10799 = vsel %vm7012, %v10735, %v10024
    %v10800 = vsel %vm7012, %v10736, %v10026
    %v10801 = vsel %vm7012, %v10737, %v10028
    %v10802 = vsel %vm7012, %v10738, %v10030
    %v10803 = vsel %vm7012, %v10739, %v10032
    %v10804 = vsel %vm7012, %v10740, %v10034
    %v10805 = vsel %vm7012, %v10741, %v10036
    %v10806 = vsel %vm7012, %v10742, %v10038
    %v10807 = vsel %vm7077, %v10743, %v10168
    %v10808 = vsel %vm7077, %v10744, %v10170
    %v10809 = vsel %vm7077, %v10745, %v10172
    %v10810 = vsel %vm7077, %v10746, %v10174
    %v10811 = vsel %vm7077, %v10747, %v10176
    %v10812 = vsel %vm7077, %v10748, %v10178
    %v10813 = vsel %vm7077, %v10749, %v10180
    %v10814 = vsel %vm7077, %v10750, %v10182
    %v10815 = vsel %vm7077, %v10751, %v10184
    %v10816 = vsel %vm7077, %v10752, %v10186
    %v10817 = vsel %vm7077, %v10753, %v10188
    %v10818 = vsel %vm7077, %v10754, %v10190
    %v10819 = vsel %vm7077, %v10755, %v10192
    %v10820 = vsel %vm7077, %v10756, %v10194
    %v10821 = vsel %vm7077, %v10757, %v10196
    %v10822 = vsel %vm7077, %v10758, %v10198
    %v10823 = vsel %vm7077, %v10759, %v10200
    %v10824 = vsel %vm7077, %v10760, %v10202
    %v10825 = vsel %vm7077, %v10761, %v10204
    %v10826 = vsel %vm7077, %v10762, %v10206
    %v10827 = vsel %vm7077, %v10763, %v10208
    %v10828 = vsel %vm7077, %v10764, %v10210
    %v10829 = vsel %vm7077, %v10765, %v10212
    %v10830 = vsel %vm7077, %v10766, %v10214
    %v10831 = vsel %vm7077, %v10767, %v10216
    %v10832 = vsel %vm7077, %v10768, %v10218
    %v10833 = vsel %vm7077, %v10769, %v10220
    %v10834 = vsel %vm7077, %v10770, %v10222
    %v10835 = vsel %vm7077, %v10771, %v10224
    %v10836 = vsel %vm7077, %v10772, %v10226
    %v10837 = vsel %vm7077, %v10773, %v10228
    %v10838 = vsel %vm7077, %v10774, %v10230
    %v10839 = vsel %vm7077, %v10775, %v10232
    %v10840 = vsel %vm7077, %v10776, %v10234
    %v10841 = vsel %vm7077, %v10777, %v10236
    %v10842 = vsel %vm7077, %v10778, %v10238
    %v10843 = vsel %vm7077, %v10779, %v10240
    %v10844 = vsel %vm7077, %v10780, %v10242
    %v10845 = vsel %vm7077, %v10781, %v10244
    %v10846 = vsel %vm7077, %v10782, %v10246
    %v10847 = vsel %vm7077, %v10783, %v10248
    %v10848 = vsel %vm7077, %v10784, %v10250
    %v10849 = vsel %vm7077, %v10785, %v10252
    %v10850 = vsel %vm7077, %v10786, %v10254
    %v10851 = vsel %vm7077, %v10787, %v10256
    %v10852 = vsel %vm7077, %v10788, %v10258
    %v10853 = vsel %vm7077, %v10789, %v10260
    %v10854 = vsel %vm7077, %v10790, %v10262
    %v10855 = vsel %vm7077, %v10791, %v10264
    %v10856 = vsel %vm7077, %v10792, %v10266
    %v10857 = vsel %vm7077, %v10793, %v10268
    %v10858 = vsel %vm7077, %v10794, %v10270
    %v10859 = vsel %vm7077, %v10795, %v10272
    %v10860 = vsel %vm7077, %v10796, %v10274
    %v10861 = vsel %vm7077, %v10797, %v10276
    %v10862 = vsel %vm7077, %v10798, %v10278
    %v10863 = vsel %vm7077, %v10799, %v10280
    %v10864 = vsel %vm7077, %v10800, %v10282
    %v10865 = vsel %vm7077, %v10801, %v10284
    %v10866 = vsel %vm7077, %v10802, %v10286
    %v10867 = vsel %vm7077, %v10803, %v10288
    %v10868 = vsel %vm7077, %v10804, %v10290
    %v10869 = vsel %vm7077, %v10805, %v10292
    %v10870 = vsel %vm7077, %v10806, %v10294
    %v10871 = vpack.c.bf16 %v10808, %v10807
    %v10872 = vpack.c.bf16 %v10810, %v10809
    %v10873 = vpack.c.bf16 %v10812, %v10811
    %v10874 = vpack.c.bf16 %v10814, %v10813
    %v10875 = vpack.c.bf16 %v10816, %v10815
    %v10876 = vpack.c.bf16 %v10818, %v10817
    %v10877 = vpack.c.bf16 %v10820, %v10819
    %v10878 = vpack.c.bf16 %v10822, %v10821
    %v10879 = vpack.c.bf16 %v10824, %v10823
    %v10880 = vpack.c.bf16 %v10826, %v10825
    %v10881 = vpack.c.bf16 %v10828, %v10827
    %v10882 = vpack.c.bf16 %v10830, %v10829
    %v10883 = vpack.c.bf16 %v10832, %v10831
    %v10884 = vpack.c.bf16 %v10834, %v10833
    %v10885 = vpack.c.bf16 %v10836, %v10835
    %v10886 = vpack.c.bf16 %v10838, %v10837
    %v10887 = vpack.c.bf16 %v10840, %v10839
    %v10888 = vpack.c.bf16 %v10842, %v10841
    %v10889 = vpack.c.bf16 %v10844, %v10843
    %v10890 = vpack.c.bf16 %v10846, %v10845
    %v10891 = vpack.c.bf16 %v10848, %v10847
    %v10892 = vpack.c.bf16 %v10850, %v10849
    %v10893 = vpack.c.bf16 %v10852, %v10851
    %v10894 = vpack.c.bf16 %v10854, %v10853
    %v10895 = vpack.c.bf16 %v10856, %v10855
    %v10896 = vpack.c.bf16 %v10858, %v10857
    %v10897 = vpack.c.bf16 %v10860, %v10859
    %v10898 = vpack.c.bf16 %v10862, %v10861
    %v10899 = vpack.c.bf16 %v10864, %v10863
    %v10900 = vpack.c.bf16 %v10866, %v10865
    %v10901 = vpack.c.bf16 %v10868, %v10867
    %v10902 = vpack.c.bf16 %v10870, %v10869
    %v10903 = vld [vmem:[%s6] sm:$0xf]
    %v10904 = vld [vmem:[%s6 + $0x4] sm:$0xf]
    %v10905 = vld [vmem:[%s6 + $0x8] sm:$0xf]
    %v10906 = vld [vmem:[%s6 + $0xc] sm:$0xf]
    %v10907 = vld [vmem:[%s6 + $0x10] sm:$0xf]
    %v10908 = vld [vmem:[%s6 + $0x14] sm:$0xf]
    %v10909 = vld [vmem:[%s6 + $0x18] sm:$0xf]
    %v10910 = vld [vmem:[%s6 + $0x1c] sm:$0xf]
    %v10911 = vld [vmem:[%s6 + $0x20] sm:$0xf]
    %v10912 = vld [vmem:[%s7] sm:$0x1]
    %v10914 = vlaneseq
    %v10915 = vshrl.u32 %v10914, 7
    %v10916 = vsub.s32 0, %v10915
    %v10917 = vrot.slane %v10912, %v10916
    %v10928 = vunpack.c.l.b16 %v10903
    %v10929 = vunpack.c.l.b16 %v10904
    %v10930 = vunpack.c.l.b16 %v10905
    %v10931 = vunpack.c.l.b16 %v10906
    %v10932 = vunpack.c.l.b16 %v10907
    %v10933 = vunpack.c.l.b16 %v10908
    %v10934 = vunpack.c.l.b16 %v10909
    %v10935 = vunpack.c.l.b16 %v10910
    %v10936 = vunpack.c.l.b16 %v10911
    %v10937 = vpack.c.b16 %v10929, %v10928
    %v10938 = vpack.c.b16 %v10931, %v10930
    %v10939 = vpack.c.b16 %v10933, %v10932
    %v10940 = vpack.c.b16 %v10935, %v10934
    %v10941 = vpack.c.b16 %v10936, %v10936
    %v10947 = vsel %vm7217, %v10871, 0
    %v10950 = vsel %vm7217, %v10872, 0
    %v10953 = vsel %vm7217, %v10873, 0
    %v10956 = vsel %vm7217, %v10874, 0
    %v10959 = vsel %vm7217, %v10875, 0
    %v10962 = vsel %vm7217, %v10876, 0
    %v10965 = vsel %vm7217, %v10877, 0
    %v10968 = vsel %vm7217, %v10878, 0
    %v10971 = vsel %vm7217, %v10879, 0
    %v10974 = vsel %vm7217, %v10880, 0
    %v10977 = vsel %vm7217, %v10881, 0
    %v10980 = vsel %vm7217, %v10882, 0
    %v10983 = vsel %vm7217, %v10883, 0
    %v10986 = vsel %vm7217, %v10884, 0
    %v10989 = vsel %vm7217, %v10885, 0
    %v10992 = vsel %vm7217, %v10886, 0
    %v10995 = vsel %vm7217, %v10887, 0
    %v10998 = vsel %vm7217, %v10888, 0
    %v11001 = vsel %vm7217, %v10889, 0
    %v11004 = vsel %vm7217, %v10890, 0
    %v11007 = vsel %vm7217, %v10891, 0
    %v11010 = vsel %vm7217, %v10892, 0
    %v11013 = vsel %vm7217, %v10893, 0
    %v11016 = vsel %vm7217, %v10894, 0
    %v11019 = vsel %vm7217, %v10895, 0
    %v11022 = vsel %vm7217, %v10896, 0
    %v11025 = vsel %vm7217, %v10897, 0
    %v11028 = vsel %vm7217, %v10898, 0
    %v11031 = vsel %vm7217, %v10899, 0
    %v11034 = vsel %vm7217, %v10900, 0
    %v11037 = vsel %vm7217, %v10901, 0
    %v11040 = vsel %vm7217, %v10902, 0
    %v11043 = vsel %vm7314, %v10941, 0
    %11045 = vmatprep.subr.bf16.mxu0 0
    %11046 = vmatpush1.bf16.msra.mxu0 %v10937
    %11047 = vmatprep.subr.bf16.mxu0 0
    %11048 = vmatpush1.bf16.msra.mxu0 %v10938
    %11049 = vmatprep.subr.bf16.mxu0 0
    %11050 = vmatpush1.bf16.msra.mxu0 %v10939
    %11051 = vmatprep.subr.bf16.mxu0 0
    %11052 = vmatpush1.bf16.msra.mxu0 %v10940
    %11053 = vmatprep.subr.bf16.mxu0 0
    %11054 = vmatpush1.bf16.msra.mxu0 %v11043
    %11055 = vmatprep.subr.bf16.mxu0 0
    %11056 = vmatpush1.bf16.msra.mxu0 0
    %11057 = vmatprep.subr.bf16.mxu0 0
    %11058 = vmatpush1.bf16.msra.mxu0 0
    %11059 = vmatprep.subr.bf16.mxu0 0
    %11060 = vmatpush1.bf16.msra.mxu0 0
    %11061 = vmatprep.subr.bf16.mxu0 0
    %11062 = vmatpush1.bf16.msra.mxu0 0
    %11063 = vmatprep.subr.bf16.mxu0 0
    %11064 = vmatpush1.bf16.msra.mxu0 0
    %11065 = vmatprep.subr.bf16.mxu0 0
    %11066 = vmatpush1.bf16.msra.mxu0 0
    %11067 = vmatprep.subr.bf16.mxu0 0
    %11068 = vmatpush1.bf16.msra.mxu0 0
    %11069 = vmatprep.subr.bf16.mxu0 0
    %11070 = vmatpush1.bf16.msra.mxu0 0
    %11071 = vmatprep.subr.bf16.mxu0 0
    %11072 = vmatpush1.bf16.msra.mxu0 0
    %11073 = vmatprep.subr.bf16.mxu0 0
    %11074 = vmatpush1.bf16.msra.mxu0 0
    %11075 = vmatprep.subr.bf16.mxu0 0
    %11076 = vmatpush1.bf16.msra.mxu0 0
    %11077 = vmatprep.mubr.bf16.mxu0 0
    %11078 = vmatmul.mubr.bf16.gmra.mrb[0].mxu0 %v10947
    %v11079 = vpop.f32.mrb[0].mxu0
    %v11080 = vadd.f32 %v10917, %v11079
    %v11081 = vpop.f32.mrb[0].mxu0
    %v11082 = vpop.f32.mrb[0].mxu0
    %v11083 = vadd.f32 %v10917, %v11082
    %v11084 = vpop.f32.mrb[0].mxu0
    %11085 = vmatprep.mubr.bf16.mxu0 0
    %11086 = vmatmul.mubr.bf16.gmra.mrb[0].mxu0 %v10950
    %v11087 = vpop.f32.mrb[0].mxu0
    %v11088 = vadd.f32 %v10917, %v11087
    %v11089 = vpop.f32.mrb[0].mxu0
    %v11090 = vpop.f32.mrb[0].mxu0
    %v11091 = vadd.f32 %v10917, %v11090
    %v11092 = vpop.f32.mrb[0].mxu0
    %11093 = vmatprep.mubr.bf16.mxu0 0
    %11094 = vmatmul.mubr.bf16.gmra.mrb[0].mxu0 %v10953
    %v11095 = vpop.f32.mrb[0].mxu0
    %v11096 = vadd.f32 %v10917, %v11095
    %v11097 = vpop.f32.mrb[0].mxu0
    %v11098 = vpop.f32.mrb[0].mxu0
    %v11099 = vadd.f32 %v10917, %v11098
    %v11100 = vpop.f32.mrb[0].mxu0
    %11101 = vmatprep.mubr.bf16.mxu0 0
    %11102 = vmatmul.mubr.bf16.gmra.mrb[0].mxu0 %v10956
    %v11103 = vpop.f32.mrb[0].mxu0
    %v11104 = vadd.f32 %v10917, %v11103
    %v11105 = vpop.f32.mrb[0].mxu0
    %v11106 = vpop.f32.mrb[0].mxu0
    %v11107 = vadd.f32 %v10917, %v11106
    %v11108 = vpop.f32.mrb[0].mxu0
    %11109 = vmatprep.mubr.bf16.mxu0 0
    %11110 = vmatmul.mubr.bf16.gmra.mrb[0].mxu0 %v10959
    %v11111 = vpop.f32.mrb[0].mxu0
    %v11112 = vadd.f32 %v10917, %v11111
    %v11113 = vpop.f32.mrb[0].mxu0
    %v11114 = vpop.f32.mrb[0].mxu0
    %v11115 = vadd.f32 %v10917, %v11114
    %v11116 = vpop.f32.mrb[0].mxu0
    %11117 = vmatprep.mubr.bf16.mxu0 0
    %11118 = vmatmul.mubr.bf16.gmra.mrb[0].mxu0 %v10962
    %v11119 = vpop.f32.mrb[0].mxu0
    %v11120 = vadd.f32 %v10917, %v11119
    %v11121 = vpop.f32.mrb[0].mxu0
    %v11122 = vpop.f32.mrb[0].mxu0
    %v11123 = vadd.f32 %v10917, %v11122
    %v11124 = vpop.f32.mrb[0].mxu0
    %11125 = vmatprep.mubr.bf16.mxu0 0
    %11126 = vmatmul.mubr.bf16.gmra.mrb[0].mxu0 %v10965
    %v11127 = vpop.f32.mrb[0].mxu0
    %v11128 = vadd.f32 %v10917, %v11127
    %v11129 = vpop.f32.mrb[0].mxu0
    %v11130 = vpop.f32.mrb[0].mxu0
    %v11131 = vadd.f32 %v10917, %v11130
    %v11132 = vpop.f32.mrb[0].mxu0
    %11133 = vmatprep.mubr.bf16.mxu0 0
    %11134 = vmatmul.mubr.bf16.gmra.mrb[0].mxu0 %v10968
    %v11135 = vpop.f32.mrb[0].mxu0
    %v11136 = vadd.f32 %v10917, %v11135
    %v11137 = vpop.f32.mrb[0].mxu0
    %v11138 = vpop.f32.mrb[0].mxu0
    %v11139 = vadd.f32 %v10917, %v11138
    %v11140 = vpop.f32.mrb[0].mxu0
    %11141 = vmatprep.mubr.bf16.mxu0 0
    %11142 = vmatmul.mubr.bf16.gmra.mrb[0].mxu0 %v10971
    %v11143 = vpop.f32.mrb[0].mxu0
    %v11144 = vadd.f32 %v10917, %v11143
    %v11145 = vpop.f32.mrb[0].mxu0
    %v11146 = vpop.f32.mrb[0].mxu0
    %v11147 = vadd.f32 %v10917, %v11146
    %v11148 = vpop.f32.mrb[0].mxu0
    %11149 = vmatprep.mubr.bf16.mxu0 0
    %11150 = vmatmul.mubr.bf16.gmra.mrb[0].mxu0 %v10974
    %v11151 = vpop.f32.mrb[0].mxu0
    %v11152 = vadd.f32 %v10917, %v11151
    %v11153 = vpop.f32.mrb[0].mxu0
    %v11154 = vpop.f32.mrb[0].mxu0
    %v11155 = vadd.f32 %v10917, %v11154
    %v11156 = vpop.f32.mrb[0].mxu0
    %11157 = vmatprep.mubr.bf16.mxu0 0
    %11158 = vmatmul.mubr.bf16.gmra.mrb[0].mxu0 %v10977
    %v11159 = vpop.f32.mrb[0].mxu0
    %v11160 = vadd.f32 %v10917, %v11159
    %v11161 = vpop.f32.mrb[0].mxu0
    %v11162 = vpop.f32.mrb[0].mxu0
    %v11163 = vadd.f32 %v10917, %v11162
    %v11164 = vpop.f32.mrb[0].mxu0
    %11165 = vmatprep.mubr.bf16.mxu0 0
    %11166 = vmatmul.mubr.bf16.gmra.mrb[0].mxu0 %v10980
    %v11167 = vpop.f32.mrb[0].mxu0
    %v11168 = vadd.f32 %v10917, %v11167
    %v11169 = vpop.f32.mrb[0].mxu0
    %v11170 = vpop.f32.mrb[0].mxu0
    %v11171 = vadd.f32 %v10917, %v11170
    %v11172 = vpop.f32.mrb[0].mxu0
    %11173 = vmatprep.mubr.bf16.mxu0 0
    %11174 = vmatmul.mubr.bf16.gmra.mrb[0].mxu0 %v10983
    %v11175 = vpop.f32.mrb[0].mxu0
    %v11176 = vadd.f32 %v10917, %v11175
    %v11177 = vpop.f32.mrb[0].mxu0
    %v11178 = vpop.f32.mrb[0].mxu0
    %v11179 = vadd.f32 %v10917, %v11178
    %v11180 = vpop.f32.mrb[0].mxu0
    %11181 = vmatprep.mubr.bf16.mxu0 0
    %11182 = vmatmul.mubr.bf16.gmra.mrb[0].mxu0 %v10986
    %v11183 = vpop.f32.mrb[0].mxu0
    %v11184 = vadd.f32 %v10917, %v11183
    %v11185 = vpop.f32.mrb[0].mxu0
    %v11186 = vpop.f32.mrb[0].mxu0
    %v11187 = vadd.f32 %v10917, %v11186
    %v11188 = vpop.f32.mrb[0].mxu0
    %11189 = vmatprep.mubr.bf16.mxu0 0
    %11190 = vmatmul.mubr.bf16.gmra.mrb[0].mxu0 %v10989
    %v11191 = vpop.f32.mrb[0].mxu0
    %v11192 = vadd.f32 %v10917, %v11191
    %v11193 = vpop.f32.mrb[0].mxu0
    %v11194 = vpop.f32.mrb[0].mxu0
    %v11195 = vadd.f32 %v10917, %v11194
    %v11196 = vpop.f32.mrb[0].mxu0
    %11197 = vmatprep.mubr.bf16.mxu0 0
    %11198 = vmatmul.mubr.bf16.gmra.mrb[0].mxu0 %v10992
    %v11199 = vpop.f32.mrb[0].mxu0
    %v11200 = vadd.f32 %v10917, %v11199
    %v11201 = vpop.f32.mrb[0].mxu0
    %v11202 = vpop.f32.mrb[0].mxu0
    %v11203 = vadd.f32 %v10917, %v11202
    %v11204 = vpop.f32.mrb[0].mxu0
    %11205 = vmatprep.mubr.bf16.mxu0 0
    %11206 = vmatmul.mubr.bf16.gmra.mrb[0].mxu0 %v10995
    %v11207 = vpop.f32.mrb[0].mxu0
    %v11208 = vadd.f32 %v10917, %v11207
    %v11209 = vpop.f32.mrb[0].mxu0
    %v11210 = vpop.f32.mrb[0].mxu0
    %v11211 = vadd.f32 %v10917, %v11210
    %v11212 = vpop.f32.mrb[0].mxu0
    %11213 = vmatprep.mubr.bf16.mxu0 0
    %11214 = vmatmul.mubr.bf16.gmra.mrb[0].mxu0 %v10998
    %v11215 = vpop.f32.mrb[0].mxu0
    %v11216 = vadd.f32 %v10917, %v11215
    %v11217 = vpop.f32.mrb[0].mxu0
    %v11218 = vpop.f32.mrb[0].mxu0
    %v11219 = vadd.f32 %v10917, %v11218
    %v11220 = vpop.f32.mrb[0].mxu0
    %11221 = vmatprep.mubr.bf16.mxu0 0
    %11222 = vmatmul.mubr.bf16.gmra.mrb[0].mxu0 %v11001
    %v11223 = vpop.f32.mrb[0].mxu0
    %v11224 = vadd.f32 %v10917, %v11223
    %v11225 = vpop.f32.mrb[0].mxu0
    %v11226 = vpop.f32.mrb[0].mxu0
    %v11227 = vadd.f32 %v10917, %v11226
    %v11228 = vpop.f32.mrb[0].mxu0
    %11229 = vmatprep.mubr.bf16.mxu0 0
    %11230 = vmatmul.mubr.bf16.gmra.mrb[0].mxu0 %v11004
    %v11231 = vpop.f32.mrb[0].mxu0
    %v11232 = vadd.f32 %v10917, %v11231
    %v11233 = vpop.f32.mrb[0].mxu0
    %v11234 = vpop.f32.mrb[0].mxu0
    %v11235 = vadd.f32 %v10917, %v11234
    %v11236 = vpop.f32.mrb[0].mxu0
    %11237 = vmatprep.mubr.bf16.mxu0 0
    %11238 = vmatmul.mubr.bf16.gmra.mrb[0].mxu0 %v11007
    %v11239 = vpop.f32.mrb[0].mxu0
    %v11240 = vadd.f32 %v10917, %v11239
    %v11241 = vpop.f32.mrb[0].mxu0
    %v11242 = vpop.f32.mrb[0].mxu0
    %v11243 = vadd.f32 %v10917, %v11242
    %v11244 = vpop.f32.mrb[0].mxu0
    %11245 = vmatprep.mubr.bf16.mxu0 0
    %11246 = vmatmul.mubr.bf16.gmra.mrb[0].mxu0 %v11010
    %v11247 = vpop.f32.mrb[0].mxu0
    %v11248 = vadd.f32 %v10917, %v11247
    %v11249 = vpop.f32.mrb[0].mxu0
    %v11250 = vpop.f32.mrb[0].mxu0
    %v11251 = vadd.f32 %v10917, %v11250
    %v11252 = vpop.f32.mrb[0].mxu0
    %11253 = vmatprep.mubr.bf16.mxu0 0
    %11254 = vmatmul.mubr.bf16.gmra.mrb[0].mxu0 %v11013
    %v11255 = vpop.f32.mrb[0].mxu0
    %v11256 = vadd.f32 %v10917, %v11255
    %v11257 = vpop.f32.mrb[0].mxu0
    %v11258 = vpop.f32.mrb[0].mxu0
    %v11259 = vadd.f32 %v10917, %v11258
    %v11260 = vpop.f32.mrb[0].mxu0
    %11261 = vmatprep.mubr.bf16.mxu0 0
    %11262 = vmatmul.mubr.bf16.gmra.mrb[0].mxu0 %v11016
    %v11263 = vpop.f32.mrb[0].mxu0
    %v11264 = vadd.f32 %v10917, %v11263
    %v11265 = vpop.f32.mrb[0].mxu0
    %v11266 = vpop.f32.mrb[0].mxu0
    %v11267 = vadd.f32 %v10917, %v11266
    %v11268 = vpop.f32.mrb[0].mxu0
    %11269 = vmatprep.mubr.bf16.mxu0 0
    %11270 = vmatmul.mubr.bf16.gmra.mrb[0].mxu0 %v11019
    %v11271 = vpop.f32.mrb[0].mxu0
    %v11272 = vadd.f32 %v10917, %v11271
    %v11273 = vpop.f32.mrb[0].mxu0
    %v11274 = vpop.f32.mrb[0].mxu0
    %v11275 = vadd.f32 %v10917, %v11274
    %v11276 = vpop.f32.mrb[0].mxu0
    %11277 = vmatprep.mubr.bf16.mxu0 0
    %11278 = vmatmul.mubr.bf16.gmra.mrb[0].mxu0 %v11022
    %v11279 = vpop.f32.mrb[0].mxu0
    %v11280 = vadd.f32 %v10917, %v11279
    %v11281 = vpop.f32.mrb[0].mxu0
    %v11282 = vpop.f32.mrb[0].mxu0
    %v11283 = vadd.f32 %v10917, %v11282
    %v11284 = vpop.f32.mrb[0].mxu0
    %11285 = vmatprep.mubr.bf16.mxu0 0
    %11286 = vmatmul.mubr.bf16.gmra.mrb[0].mxu0 %v11025
    %v11287 = vpop.f32.mrb[0].mxu0
    %v11288 = vadd.f32 %v10917, %v11287
    %v11289 = vpop.f32.mrb[0].mxu0
    %v11290 = vpop.f32.mrb[0].mxu0
    %v11291 = vadd.f32 %v10917, %v11290
    %v11292 = vpop.f32.mrb[0].mxu0
    %11293 = vmatprep.mubr.bf16.mxu0 0
    %11294 = vmatmul.mubr.bf16.gmra.mrb[0].mxu0 %v11028
    %v11295 = vpop.f32.mrb[0].mxu0
    %v11296 = vadd.f32 %v10917, %v11295
    %v11297 = vpop.f32.mrb[0].mxu0
    %v11298 = vpop.f32.mrb[0].mxu0
    %v11299 = vadd.f32 %v10917, %v11298
    %v11300 = vpop.f32.mrb[0].mxu0
    %11301 = vmatprep.mubr.bf16.mxu0 0
    %11302 = vmatmul.mubr.bf16.gmra.mrb[0].mxu0 %v11031
    %v11303 = vpop.f32.mrb[0].mxu0
    %v11304 = vadd.f32 %v10917, %v11303
    %v11305 = vpop.f32.mrb[0].mxu0
    %v11306 = vpop.f32.mrb[0].mxu0
    %v11307 = vadd.f32 %v10917, %v11306
    %v11308 = vpop.f32.mrb[0].mxu0
    %11309 = vmatprep.mubr.bf16.mxu0 0
    %11310 = vmatmul.mubr.bf16.gmra.mrb[0].mxu0 %v11034
    %v11311 = vpop.f32.mrb[0].mxu0
    %v11312 = vadd.f32 %v10917, %v11311
    %v11313 = vpop.f32.mrb[0].mxu0
    %v11314 = vpop.f32.mrb[0].mxu0
    %v11315 = vadd.f32 %v10917, %v11314
    %v11316 = vpop.f32.mrb[0].mxu0
    %11317 = vmatprep.mubr.bf16.mxu0 0
    %11318 = vmatmul.mubr.bf16.gmra.mrb[0].mxu0 %v11037
    %v11319 = vpop.f32.mrb[0].mxu0
    %v11320 = vadd.f32 %v10917, %v11319
    %v11321 = vpop.f32.mrb[0].mxu0
    %v11322 = vpop.f32.mrb[0].mxu0
    %v11323 = vadd.f32 %v10917, %v11322
    %v11324 = vpop.f32.mrb[0].mxu0
    %11325 = vmatprep.mubr.bf16.mxu0 0
    %11326 = vmatmul.mubr.bf16.gmra.mrb[0].mxu0 %v11040
    %v11327 = vpop.f32.mrb[0].mxu0
    %v11328 = vadd.f32 %v10917, %v11327
    %v11329 = vpop.f32.mrb[0].mxu0
    %v11330 = vpop.f32.mrb[0].mxu0
    %v11331 = vadd.f32 %v10917, %v11330
    %v11332 = vpop.f32.mrb[0].mxu0
    %11333 = vdwg.mxu0
    %v11334 = vadd.f32 %v11080, %v3872
    %v11335 = vadd.f32 %v11083, %v3873
    %v11336 = vadd.f32 %v11088, %v3874
    %v11337 = vadd.f32 %v11091, %v3875
    %v11338 = vadd.f32 %v11096, %v3876
    %v11339 = vadd.f32 %v11099, %v3877
    %v11340 = vadd.f32 %v11104, %v3878
    %v11341 = vadd.f32 %v11107, %v3879
    %v11342 = vadd.f32 %v11112, %v3880
    %v11343 = vadd.f32 %v11115, %v3881
    %v11344 = vadd.f32 %v11120, %v3882
    %v11345 = vadd.f32 %v11123, %v3883
    %v11346 = vadd.f32 %v11128, %v3884
    %v11347 = vadd.f32 %v11131, %v3885
    %v11348 = vadd.f32 %v11136, %v3886
    %v11349 = vadd.f32 %v11139, %v3887
    %v11350 = vadd.f32 %v11144, %v3888
    %v11351 = vadd.f32 %v11147, %v3889
    %v11352 = vadd.f32 %v11152, %v3890
    %v11353 = vadd.f32 %v11155, %v3891
    %v11354 = vadd.f32 %v11160, %v3892
    %v11355 = vadd.f32 %v11163, %v3893
    %v11356 = vadd.f32 %v11168, %v3894
    %v11357 = vadd.f32 %v11171, %v3895
    %v11358 = vadd.f32 %v11176, %v3896
    %v11359 = vadd.f32 %v11179, %v3897
    %v11360 = vadd.f32 %v11184, %v3898
    %v11361 = vadd.f32 %v11187, %v3899
    %v11362 = vadd.f32 %v11192, %v3900
    %v11363 = vadd.f32 %v11195, %v3901
    %v11364 = vadd.f32 %v11200, %v3902
    %v11365 = vadd.f32 %v11203, %v3903
    %v11366 = vadd.f32 %v11208, %v3904
    %v11367 = vadd.f32 %v11211, %v3905
    %v11368 = vadd.f32 %v11216, %v3906
    %v11369 = vadd.f32 %v11219, %v3907
    %v11370 = vadd.f32 %v11224, %v3908
    %v11371 = vadd.f32 %v11227, %v3909
    %v11372 = vadd.f32 %v11232, %v3910
    %v11373 = vadd.f32 %v11235, %v3911
    %v11374 = vadd.f32 %v11240, %v3912
    %v11375 = vadd.f32 %v11243, %v3913
    %v11376 = vadd.f32 %v11248, %v3914
    %v11377 = vadd.f32 %v11251, %v3915
    %v11378 = vadd.f32 %v11256, %v3916
    %v11379 = vadd.f32 %v11259, %v3917
    %v11380 = vadd.f32 %v11264, %v3918
    %v11381 = vadd.f32 %v11267, %v3919
    %v11382 = vadd.f32 %v11272, %v3920
    %v11383 = vadd.f32 %v11275, %v3921
    %v11384 = vadd.f32 %v11280, %v3922
    %v11385 = vadd.f32 %v11283, %v3923
    %v11386 = vadd.f32 %v11288, %v3924
    %v11387 = vadd.f32 %v11291, %v3925
    %v11388 = vadd.f32 %v11296, %v3926
    %v11389 = vadd.f32 %v11299, %v3927
    %v11390 = vadd.f32 %v11304, %v3928
    %v11391 = vadd.f32 %v11307, %v3929
    %v11392 = vadd.f32 %v11312, %v3930
    %v11393 = vadd.f32 %v11315, %v3931
    %v11394 = vadd.f32 %v11320, %v3932
    %v11395 = vadd.f32 %v11323, %v3933
    %v11396 = vadd.f32 %v11328, %v3934
    %v11397 = vadd.f32 %v11331, %v3935
    %v11398 = vmax.f32 %v11334, 0.0
    %v11399 = vmax.f32 %v11335, 0.0
    %v11400 = vmax.f32 %v11336, 0.0
    %v11401 = vmax.f32 %v11337, 0.0
    %v11402 = vmax.f32 %v11338, 0.0
    %v11403 = vmax.f32 %v11339, 0.0
    %v11404 = vmax.f32 %v11340, 0.0
    %v11405 = vmax.f32 %v11341, 0.0
    %v11406 = vmax.f32 %v11342, 0.0
    %v11407 = vmax.f32 %v11343, 0.0
    %v11408 = vmax.f32 %v11344, 0.0
    %v11409 = vmax.f32 %v11345, 0.0
    %v11410 = vmax.f32 %v11346, 0.0
    %v11411 = vmax.f32 %v11347, 0.0
    %v11412 = vmax.f32 %v11348, 0.0
    %v11413 = vmax.f32 %v11349, 0.0
    %v11414 = vmax.f32 %v11350, 0.0
    %v11415 = vmax.f32 %v11351, 0.0
    %v11416 = vmax.f32 %v11352, 0.0
    %v11417 = vmax.f32 %v11353, 0.0
    %v11418 = vmax.f32 %v11354, 0.0
    %v11419 = vmax.f32 %v11355, 0.0
    %v11420 = vmax.f32 %v11356, 0.0
    %v11421 = vmax.f32 %v11357, 0.0
    %v11422 = vmax.f32 %v11358, 0.0
    %v11423 = vmax.f32 %v11359, 0.0
    %v11424 = vmax.f32 %v11360, 0.0
    %v11425 = vmax.f32 %v11361, 0.0
    %v11426 = vmax.f32 %v11362, 0.0
    %v11427 = vmax.f32 %v11363, 0.0
    %v11428 = vmax.f32 %v11364, 0.0
    %v11429 = vmax.f32 %v11365, 0.0
    %v11430 = vmax.f32 %v11366, 0.0
    %v11431 = vmax.f32 %v11367, 0.0
    %v11432 = vmax.f32 %v11368, 0.0
    %v11433 = vmax.f32 %v11369, 0.0
    %v11434 = vmax.f32 %v11370, 0.0
    %v11435 = vmax.f32 %v11371, 0.0
    %v11436 = vmax.f32 %v11372, 0.0
    %v11437 = vmax.f32 %v11373, 0.0
    %v11438 = vmax.f32 %v11374, 0.0
    %v11439 = vmax.f32 %v11375, 0.0
    %v11440 = vmax.f32 %v11376, 0.0
    %v11441 = vmax.f32 %v11377, 0.0
    %v11442 = vmax.f32 %v11378, 0.0
    %v11443 = vmax.f32 %v11379, 0.0
    %v11444 = vmax.f32 %v11380, 0.0
    %v11445 = vmax.f32 %v11381, 0.0
    %v11446 = vmax.f32 %v11382, 0.0
    %v11447 = vmax.f32 %v11383, 0.0
    %v11448 = vmax.f32 %v11384, 0.0
    %v11449 = vmax.f32 %v11385, 0.0
    %v11450 = vmax.f32 %v11386, 0.0
    %v11451 = vmax.f32 %v11387, 0.0
    %v11452 = vmax.f32 %v11388, 0.0
    %v11453 = vmax.f32 %v11389, 0.0
    %v11454 = vmax.f32 %v11390, 0.0
    %v11455 = vmax.f32 %v11391, 0.0
    %v11456 = vmax.f32 %v11392, 0.0
    %v11457 = vmax.f32 %v11393, 0.0
    %v11458 = vmax.f32 %v11394, 0.0
    %v11459 = vmax.f32 %v11395, 0.0
    %v11460 = vmax.f32 %v11396, 0.0
    %v11461 = vmax.f32 %v11397, 0.0
    %v11462 = vsel %vm41, %v11398, 0.0
    %v11463 = vsel %vm41, %v11399, 0.0
    %v11464 = vadd.f32 %v11462, %v11463
    %v11465 = vsel %vm41, %v11400, 0.0
    %v11466 = vadd.f32 %v11464, %v11465
    %v11467 = vsel %vm41, %v11401, 0.0
    %v11468 = vadd.f32 %v11466, %v11467
    %v11469 = vsel %vm41, %v11402, 0.0
    %v11470 = vadd.f32 %v11468, %v11469
    %v11471 = vsel %vm41, %v11403, 0.0
    %v11472 = vadd.f32 %v11470, %v11471
    %v11473 = vsel %vm41, %v11404, 0.0
    %v11474 = vadd.f32 %v11472, %v11473
    %v11475 = vsel %vm41, %v11405, 0.0
    %v11476 = vadd.f32 %v11474, %v11475
    %v11477 = vsel %vm41, %v11406, 0.0
    %v11478 = vadd.f32 %v11476, %v11477
    %v11479 = vsel %vm41, %v11407, 0.0
    %v11480 = vadd.f32 %v11478, %v11479
    %v11481 = vsel %vm41, %v11408, 0.0
    %v11482 = vadd.f32 %v11480, %v11481
    %v11483 = vsel %vm41, %v11409, 0.0
    %v11484 = vadd.f32 %v11482, %v11483
    %v11485 = vsel %vm41, %v11410, 0.0
    %v11486 = vadd.f32 %v11484, %v11485
    %v11487 = vsel %vm41, %v11411, 0.0
    %v11488 = vadd.f32 %v11486, %v11487
    %v11489 = vsel %vm41, %v11412, 0.0
    %v11490 = vadd.f32 %v11488, %v11489
    %v11491 = vsel %vm41, %v11413, 0.0
    %v11492 = vadd.f32 %v11490, %v11491
    %v11493 = vsel %vm41, %v11414, 0.0
    %v11494 = vadd.f32 %v11492, %v11493
    %v11495 = vsel %vm41, %v11415, 0.0
    %v11496 = vadd.f32 %v11494, %v11495
    %v11497 = vsel %vm41, %v11416, 0.0
    %v11498 = vadd.f32 %v11496, %v11497
    %v11499 = vsel %vm41, %v11417, 0.0
    %v11500 = vadd.f32 %v11498, %v11499
    %v11501 = vsel %vm41, %v11418, 0.0
    %v11502 = vadd.f32 %v11500, %v11501
    %v11503 = vsel %vm41, %v11419, 0.0
    %v11504 = vadd.f32 %v11502, %v11503
    %v11505 = vsel %vm41, %v11420, 0.0
    %v11506 = vadd.f32 %v11504, %v11505
    %v11507 = vsel %vm41, %v11421, 0.0
    %v11508 = vadd.f32 %v11506, %v11507
    %v11509 = vsel %vm41, %v11422, 0.0
    %v11510 = vadd.f32 %v11508, %v11509
    %v11511 = vsel %vm41, %v11423, 0.0
    %v11512 = vadd.f32 %v11510, %v11511
    %v11513 = vsel %vm41, %v11424, 0.0
    %v11514 = vadd.f32 %v11512, %v11513
    %v11515 = vsel %vm41, %v11425, 0.0
    %v11516 = vadd.f32 %v11514, %v11515
    %v11517 = vsel %vm41, %v11426, 0.0
    %v11518 = vadd.f32 %v11516, %v11517
    %v11519 = vsel %vm41, %v11427, 0.0
    %v11520 = vadd.f32 %v11518, %v11519
    %v11521 = vsel %vm41, %v11428, 0.0
    %v11522 = vadd.f32 %v11520, %v11521
    %v11523 = vsel %vm41, %v11429, 0.0
    %v11524 = vadd.f32 %v11522, %v11523
    %v11525 = vrot.slane %v11524, 4
    %v11526 = vadd.f32 %v11524, %v11525
    %v11527 = vrot.slane %v11526, 2
    %v11528 = vadd.f32 %v11526, %v11527
    %v11529 = vrot.slane %v11528, 1
    %v11530 = vadd.f32 %v11528, %v11529
    %v11531 = vsel %vm41, %v11430, 0.0
    %v11532 = vsel %vm41, %v11431, 0.0
    %v11533 = vadd.f32 %v11531, %v11532
    %v11534 = vsel %vm41, %v11432, 0.0
    %v11535 = vadd.f32 %v11533, %v11534
    %v11536 = vsel %vm41, %v11433, 0.0
    %v11537 = vadd.f32 %v11535, %v11536
    %v11538 = vsel %vm41, %v11434, 0.0
    %v11539 = vadd.f32 %v11537, %v11538
    %v11540 = vsel %vm41, %v11435, 0.0
    %v11541 = vadd.f32 %v11539, %v11540
    %v11542 = vsel %vm41, %v11436, 0.0
    %v11543 = vadd.f32 %v11541, %v11542
    %v11544 = vsel %vm41, %v11437, 0.0
    %v11545 = vadd.f32 %v11543, %v11544
    %v11546 = vsel %vm41, %v11438, 0.0
    %v11547 = vadd.f32 %v11545, %v11546
    %v11548 = vsel %vm41, %v11439, 0.0
    %v11549 = vadd.f32 %v11547, %v11548
    %v11550 = vsel %vm41, %v11440, 0.0
    %v11551 = vadd.f32 %v11549, %v11550
    %v11552 = vsel %vm41, %v11441, 0.0
    %v11553 = vadd.f32 %v11551, %v11552
    %v11554 = vsel %vm41, %v11442, 0.0
    %v11555 = vadd.f32 %v11553, %v11554
    %v11556 = vsel %vm41, %v11443, 0.0
    %v11557 = vadd.f32 %v11555, %v11556
    %v11558 = vsel %vm41, %v11444, 0.0
    %v11559 = vadd.f32 %v11557, %v11558
    %v11560 = vsel %vm41, %v11445, 0.0
    %v11561 = vadd.f32 %v11559, %v11560
    %v11562 = vsel %vm41, %v11446, 0.0
    %v11563 = vadd.f32 %v11561, %v11562
    %v11564 = vsel %vm41, %v11447, 0.0
    %v11565 = vadd.f32 %v11563, %v11564
    %v11566 = vsel %vm41, %v11448, 0.0
    %v11567 = vadd.f32 %v11565, %v11566
    %v11568 = vsel %vm41, %v11449, 0.0
    %v11569 = vadd.f32 %v11567, %v11568
    %v11570 = vsel %vm41, %v11450, 0.0
    %v11571 = vadd.f32 %v11569, %v11570
    %v11572 = vsel %vm41, %v11451, 0.0
    %v11573 = vadd.f32 %v11571, %v11572
    %v11574 = vsel %vm41, %v11452, 0.0
    %v11575 = vadd.f32 %v11573, %v11574
    %v11576 = vsel %vm41, %v11453, 0.0
    %v11577 = vadd.f32 %v11575, %v11576
    %v11578 = vsel %vm41, %v11454, 0.0
    %v11579 = vadd.f32 %v11577, %v11578
    %v11580 = vsel %vm41, %v11455, 0.0
    %v11581 = vadd.f32 %v11579, %v11580
    %v11582 = vsel %vm41, %v11456, 0.0
    %v11583 = vadd.f32 %v11581, %v11582
    %v11584 = vsel %vm41, %v11457, 0.0
    %v11585 = vadd.f32 %v11583, %v11584
    %v11586 = vsel %vm41, %v11458, 0.0
    %v11587 = vadd.f32 %v11585, %v11586
    %v11588 = vsel %vm41, %v11459, 0.0
    %v11589 = vadd.f32 %v11587, %v11588
    %v11590 = vsel %vm41, %v11460, 0.0
    %v11591 = vadd.f32 %v11589, %v11590
    %v11592 = vsel %vm41, %v11461, 0.0
    %v11593 = vadd.f32 %v11591, %v11592
    %v11594 = vrot.slane %v11593, 4
    %v11595 = vadd.f32 %v11593, %v11594
    %v11596 = vrot.slane %v11595, 2
    %v11597 = vadd.f32 %v11595, %v11596
    %v11598 = vrot.slane %v11597, 1
    %v11599 = vadd.f32 %v11597, %v11598
    %v11600 = vld [vmem:[%s8] sm:$0xff]
    %v11601 = vld [vmem:[%s9] sm:$0x1]
    %v11603 = vlaneseq
    %v11604 = vshrl.u32 %v11603, 7
    %v11605 = vsub.s32 0, %v11604
    %v11606 = vrot.slane %v11601, %v11605
    %vm11610 = vcmask 1041409
    %v11611 = vsel %vm11610, %v11599, %v11530
    %v11612 = vsel %vm41, %v11611, 0
    %11614 = vmatprep.subr.mxu0 0.0
    %11615 = vmatpush1.msra.mxu0 %v11600
    %11616 = vmatprep.subr.mxu0 0.0
    %11617 = vmatpush1.msra.mxu0 0.0
    %11618 = vmatprep.subr.mxu0 0.0
    %11619 = vmatpush1.msra.mxu0 0.0
    %11620 = vmatprep.subr.mxu0 0.0
    %11621 = vmatpush1.msra.mxu0 0.0
    %11622 = vmatprep.subr.mxu0 0.0
    %11623 = vmatpush1.msra.mxu0 0.0
    %11624 = vmatprep.subr.mxu0 0.0
    %11625 = vmatpush1.msra.mxu0 0.0
    %11626 = vmatprep.subr.mxu0 0.0
    %11627 = vmatpush1.msra.mxu0 0.0
    %11628 = vmatprep.subr.mxu0 0.0
    %11629 = vmatpush1.msra.mxu0 0.0
    %11630 = vmatprep.subr.mxu0 0.0
    %11631 = vmatpush1.msra.mxu0 0.0
    %11632 = vmatprep.subr.mxu0 0.0
    %11633 = vmatpush1.msra.mxu0 0.0
    %11634 = vmatprep.subr.mxu0 0.0
    %11635 = vmatpush1.msra.mxu0 0.0
    %11636 = vmatprep.subr.mxu0 0.0
    %11637 = vmatpush1.msra.mxu0 0.0
    %11638 = vmatprep.subr.mxu0 0.0
    %11639 = vmatpush1.msra.mxu0 0.0
    %11640 = vmatprep.subr.mxu0 0.0
    %11641 = vmatpush1.msra.mxu0 0.0
    %11642 = vmatprep.subr.mxu0 0.0
    %11643 = vmatpush1.msra.mxu0 0.0
    %11644 = vmatprep.subr.mxu0 0.0
    %11645 = vmatpush1.msra.mxu0 0.0
    %11646 = vmatprep.subr.mxu0 0.0
    %11647 = vmatpush1.msra.mxu0 0.0
    %11648 = vmatprep.subr.mxu0 0.0
    %11649 = vmatpush1.msra.mxu0 0.0
    %11650 = vmatprep.subr.mxu0 0.0
    %11651 = vmatpush1.msra.mxu0 0.0
    %11652 = vmatprep.subr.mxu0 0.0
    %11653 = vmatpush1.msra.mxu0 0.0
    %11654 = vmatprep.subr.mxu0 0.0
    %11655 = vmatpush1.msra.mxu0 0.0
    %11656 = vmatprep.subr.mxu0 0.0
    %11657 = vmatpush1.msra.mxu0 0.0
    %11658 = vmatprep.subr.mxu0 0.0
    %11659 = vmatpush1.msra.mxu0 0.0
    %11660 = vmatprep.subr.mxu0 0.0
    %11661 = vmatpush1.msra.mxu0 0.0
    %11662 = vmatprep.subr.mxu0 0.0
    %11663 = vmatpush1.msra.mxu0 0.0
    %11664 = vmatprep.subr.mxu0 0.0
    %11665 = vmatpush1.msra.mxu0 0.0
    %11666 = vmatprep.subr.mxu0 0.0
    %11667 = vmatpush1.msra.mxu0 0.0
    %11668 = vmatprep.subr.mxu0 0.0
    %11669 = vmatpush1.msra.mxu0 0.0
    %11670 = vmatprep.subr.mxu0 0.0
    %11671 = vmatpush1.msra.mxu0 0.0
    %11672 = vmatprep.subr.mxu0 0.0
    %11673 = vmatpush1.msra.mxu0 0.0
    %11674 = vmatprep.subr.mxu0 0.0
    %11675 = vmatpush1.msra.mxu0 0.0
    %11676 = vmatprep.subr.mxu0 0.0
    %11677 = vmatpush1.msra.mxu0 0.0
    %11678 = vmatprep.mubr.f32.mxu0 0.0
    %11679 = vmatmul.mubr.f32.gmra.mrb[0].mxu0 %v11612
    %v11680 = vpop.f32.mrb[0].mxu0
    %v11681 = vadd.f32 %v11606, %v11680
    %v11682 = vpop.f32.mrb[0].mxu0
    %11683 = vdwg.mxu0
    %vm11684 = vcmask 74752
    %11685 = vst.msk [vmem:[#allocation3] sm:$0x3] %vm11684, %v11681
    %v11686 = vld [vmem:[%s1] sm:$0x3]
    %v11687 = vsel %vm11684, %v11681, -inf
    %11688 = vmax.xlane.f32.xlu0 %v11687
    %v11689 = vpop.xlane.xlu0 %11688
    %v11690 = vsub.f32 %v11681, %v11689
    %v11691 = vmul.f32 %v11690, 1.442695
    %v11692 = vpow.pop %v11691
    %v11693 = vsel %vm11684, %v11692, 0.0
    %11694 = vadd.xlane.f32.xlu0 %v11693
    %v11695 = vpop.xlane.xlu0 %11694
    %v11696 = vlog2.pop %v11695
    %v11697 = vmul.f32 %v11696, 0.6931472
    %v11698 = vsub.f32 %v11690, %v11697
    %v11699 = vlaneseq
    %v11700 = vand.u32 %v11699, 127
    %11701 = vset.pattern.permute.xlu0 0
    %11702 = vperm.xlu0 %11701, %v11686
    %v11703 = vpop.permute.xlu0 %11702
    %vm11704 = vcmp.eq.s32.totalorder %v11700, %v11703
    %v11705 = vsel %vm11704, 1, 0
    %v11706 = vcvt.s32.f32 %v11705
    %v11707 = vmul.f32 %v11706, %v11698
    %v11708 = vsel %vm11684, %v11707, 0.0
    %11709 = vadd.xlane.f32.xlu0 %v11708
    %v11710 = vpop.xlane.xlu0 %11709
    %v11711 = vrot.slane %v11710, 4
    %v11712 = vadd.f32 %v11710, %v11711
    %v11713 = vrot.slane %v11712, 2
    %v11714 = vadd.f32 %v11712, %v11713
    %v11715 = vrot.slane %v11714, 1
    %v11716 = vadd.f32 %v11714, %v11715
    %s11717 = vtos %v11716
    %v11718 = vstv %s11717
    %v11719 = vsub.f32 0.0, %v11718
    %vm11720 = vcmp.eq.f32.partialorder %v11681, %v11689
    %v11721 = vsel %vm11720, %v11700, 10
    %v11722 = vsel %vm11684, %v11721, 2147483647
    %v11723 = vand.u32 %v11722, 65535
    %v11724 = vshra.s32 %v11722, 16
    %v11725 = vcvt.s32.f32 %v11723
    %v11726 = vcvt.s32.f32 %v11724
    %11727 = vmin.xlane.f32.xlu0 %v11726
    %v11728 = vpop.xlane.xlu0 %11727
    %vm11729 = vcmp.eq.f32.partialorder %v11726, %v11728
    %v11730 = vsel %vm11729, %v11725, inf
    %11731 = vmin.xlane.f32.xlu0 %v11730
    %v11732 = vpop.xlane.xlu0 %11731
    %v11733 = vcvt.f32.s32 %v11732
    %v11734 = vcvt.f32.s32 %v11728
    %v11735 = vshll.u32 %v11734, 16
    %v11736 = vadd.s32 %v11735, %v11733
    %vm11737 = vcmp.eq.s32.totalorder %v11736, %v11686
    %v11738 = vsel %vm11737, 1, 0
    %v11739 = vcvt.s32.f32 %v11738
    %vm11740 = vcmask 1024
    %v11741 = vsel %vm11740, %v11739, 0.0
    %11742 = vadd.xlane.f32.xlu0 %v11741
    %v11743 = vpop.xlane.xlu0 %11742
    %v11744 = vrot.slane %v11743, 4
    %v11745 = vadd.f32 %v11743, %v11744
    %v11746 = vrot.slane %v11745, 2
    %v11747 = vadd.f32 %v11745, %v11746
    %v11748 = vrot.slane %v11747, 1
    %v11749 = vadd.f32 %v11747, %v11748
    %s11750 = vtos %v11749
    %v11751 = vstv %s11750
    %p11752 = scmp.eq.s32.totalorder 0, 0
    // Predicated region
    $region42: #{evaluator_forward.1} parent=1 // pred_check
      %p11753 = pneg %p11752
    $region43: #{evaluator_forward.1} parent=1 // pred_check_branch
      %11755 = sbr.rel (%p11753) target = $region45
    $region44: #{evaluator_forward.1} parent=1 // pred_region
      %vm11756 = vcmask 0
      %11757 = vst.msk [vmem:[#allocation5] sm:$0x1] %vm11756, 0.0
      %11758 = vst.msk [vmem:[#allocation7] sm:$0x1] %vm11756, 0.0
    $region45: #{evaluator_forward.1} parent=1 // pred_fallthru
      _
    %v11759 = vld [vmem:[#allocation5] sm:$0x1]
    %v11760 = vrcp.pop 2.0
    %v11761 = vmul.f32 %v11719, %v11760
    %v11762 = vadd.f32 %v11759, %v11761
    %vm11763 = vcmask 0
    %11764 = vst.msk [vmem:[#allocation5] sm:$0x1] %vm11763, %v11762
    %v11765 = vld [vmem:[#allocation7] sm:$0x1]
    %v11766 = vmul.f32 %v11751, %v11760
    %v11767 = vadd.f32 %v11765, %v11766
    %11768 = vst.msk [vmem:[#allocation7] sm:$0x1] %vm11763, %v11767
    // Predicated region
    $region46: #{evaluator_forward.1} parent=1 // pred_check
      _
    $region47: #{evaluator_forward.1} parent=1 // pred_check_branch
      %11770 = sbr.rel (0) target = $region49
    $region48: #{evaluator_forward.1} parent=1 // pred_region
      %s11772 = ssub.s32 32, 32
      %11773 = vsyncadd [#allocation4], %s11772
      %s11775 = sshll.u32 [#allocation3], 4
      %s11776 = int_to_ptr.vmem [resolvable:$true] %s11775
      %11778 = dma.vmem_to_hbm [thread:$0]  %s11776, 32, %s10, [#allocation4]
    $region49: #{evaluator_forward.1} parent=1 // pred_fallthru
      _
    // Predicated region
    $region50: #{evaluator_forward.1} parent=1 // pred_check
      _
    $region51: #{evaluator_forward.1} parent=1 // pred_check_branch
      %11780 = sbr.rel (0) target = $region53
    $region52: #{evaluator_forward.1} parent=1 // pred_region
      %s11782 = ssub.s32 16, 16
      %11783 = vsyncadd [#allocation6], %s11782
      %s11785 = sshll.u32 [#allocation5], 4
      %s11786 = int_to_ptr.vmem [resolvable:$true] %s11785
      %11788 = dma.vmem_to_hbm [thread:$0]  %s11786, 16, %s11, [#allocation6]
    $region53: #{evaluator_forward.1} parent=1 // pred_fallthru
      _
    // Predicated region
    $region54: #{evaluator_forward.1} parent=1 // pred_check
      _
    $region55: #{evaluator_forward.1} parent=1 // pred_check_branch
      %11790 = sbr.rel (0) target = $region57
    $region56: #{evaluator_forward.1} parent=1 // pred_region
      %s11792 = ssub.s32 16, 16
      %11793 = vsyncadd [#allocation6], %s11792
      %s11795 = sshll.u32 [#allocation7], 4
      %s11796 = int_to_ptr.vmem [resolvable:$true] %s11795
      %11798 = dma.vmem_to_hbm [thread:$0]  %s11796, 16, %s12, [#allocation6]
    $region57: #{evaluator_forward.1} parent=1 // pred_fallthru
      _
    // Predicated region
    $region58: #{evaluator_forward.1} parent=1 // pred_check
      _
    $region59: #{evaluator_forward.1} parent=1 // pred_check_branch
      %11800 = sbr.rel (0) target = $region61
    $region60: #{evaluator_forward.1} parent=1 // pred_region
      %11801 = dma.done [#allocation4], 32
    $region61: #{evaluator_forward.1} parent=1 // pred_fallthru
      _
    // Predicated region
    $region62: #{evaluator_forward.1} parent=1 // pred_check
      _
    $region63: #{evaluator_forward.1} parent=1 // pred_check_branch
      %11803 = sbr.rel (0) target = $region65
    $region64: #{evaluator_forward.1} parent=1 // pred_region
      %11804 = dma.done [#allocation6], 16
    $region65: #{evaluator_forward.1} parent=1 // pred_fallthru
      _
    // Predicated region
    $region66: #{evaluator_forward.1} parent=1 // pred_check
      _
    $region67: #{evaluator_forward.1} parent=1 // pred_check_branch
      %11806 = sbr.rel (0) target = $region69
    $region68: #{evaluator_forward.1} parent=1 // pred_region
      %11807 = dma.done [#allocation6], 16
    $region69: #{evaluator_forward.1} parent=1 // pred_fallthru
      _
    %11808 = vsyncpa [#allocation4], 1
    %11809 = vsyncpa [#allocation6], 1

</llo_original>
